<compile_context>
chip_gen: v7x
topology: tpu7x:2x2x1
jax: 0.10.0
libtpu: 0.0.40
codegen_flags: <defaults>
</compile_context>

<pallas_src>
import functools

import jax
import jax.numpy as jnp
from jax.experimental import pallas as pl
from jax.experimental.pallas import tpu as pltpu


# ---------------------------------------------------------------------------
# Fused kernel: global avg pool -> FC(512->128)+ReLU -> FC(128->512)+Sigmoid
#               -> channel-wise rescale.  One grid step == one batch element.
# ---------------------------------------------------------------------------
def _tca_kernel(x_ref, w1_ref, b1_ref, w2_ref, b2_ref, o_ref, *, inv_s):
    # x_ref block: (1, C, S) -- one batch element; channels on sublanes,
    # flattened T*H*W on lanes (lane-dense, S % 128 == 0).
    x = x_ref[0]                                            # (C, S) f32

    # Global average pool over T*H*W (lane-axis reduction) -> (C, 1) column.
    pooled = jnp.sum(x, axis=1, keepdims=True) * inv_s      # (C, 1)

    # FC1 in PyTorch nn.Linear layout (out, in): (128, C) @ (C, 1) -> (128, 1).
    h = jnp.dot(w1_ref[...], pooled, preferred_element_type=jnp.float32)
    h = jnp.maximum(h + b1_ref[...], 0.0)                   # ReLU

    # FC2: (C, 128) @ (128, 1) -> (C, 1), then Sigmoid (EUP).
    s = jnp.dot(w2_ref[...], h, preferred_element_type=jnp.float32)
    s = jax.nn.sigmoid(s + b2_ref[...])                     # (C, 1)

    # Channel-wise rescale: per-channel scalar broadcast across the lane axis.
    o_ref[0] = (x * s).astype(o_ref.dtype)


def temporal_channel_aware_block(x, w1, b1, w2, b2):
    """x: (B, C, T, H, W); w1: (128, C); b1: (128, 1); w2: (C, 128); b2: (C, 1)."""
    B, C, T, H, W = x.shape
    S = T * H * W
    # Collapsing contiguous trailing dims -- no data movement, no transpose.
    x3 = x.reshape(B, C, S)

    out = pl.pallas_call(
        functools.partial(_tca_kernel, inv_s=1.0 / S),
        out_shape=jax.ShapeDtypeStruct((B, C, S), x.dtype),
        grid_spec=pltpu.PrefetchScalarGridSpec(
            num_scalar_prefetch=0,
            grid=(B,),
            in_specs=[
                pl.BlockSpec((1, C, S), lambda b: (b, 0, 0)),
                pl.BlockSpec(w1.shape, lambda b: (0, 0)),
                pl.BlockSpec(b1.shape, lambda b: (0, 0)),
                pl.BlockSpec(w2.shape, lambda b: (0, 0)),
                pl.BlockSpec(b2.shape, lambda b: (0, 0)),
            ],
            out_specs=pl.BlockSpec((1, C, S), lambda b: (b, 0, 0)),
        ),
        compiler_params=pltpu.CompilerParams(
            # Batches are independent -> both TensorCores used on v7x.
            dimension_semantics=("parallel",),
        ),
    )(x3, w1, b1, w2, b2)

    return out.reshape(B, C, T, H, W)


# ---------------------------------------------------------------------------
# Parameters (matching PyTorch _init_weights: normal(std=0.001), bias = 0),
# stored in nn.Linear's native (out_features, in_features) layout.
# ---------------------------------------------------------------------------
def init_params(key, c=512, c_hidden=128):
    k1, k2 = jax.random.split(key)
    w1 = (0.001 * jax.random.normal(k1, (c_hidden, c))).astype(jnp.float32)
    b1 = jnp.zeros((c_hidden, 1), jnp.float32)
    w2 = (0.001 * jax.random.normal(k2, (c, c_hidden))).astype(jnp.float32)
    b2 = jnp.zeros((c, 1), jnp.float32)
    return w1, b1, w2, b2


# Pure-JAX reference (same math as the PyTorch module) for a correctness check.
def _reference(x, w1, b1, w2, b2):
    a = jnp.mean(x, axis=(2, 3, 4))                       # (B, C)
    h = jnp.maximum(a @ w1.T + b1[:, 0], 0.0)             # (B, 128)
    s = jax.nn.sigmoid(h @ w2.T + b2[:, 0])               # (B, C)
    return x * s[:, :, None, None, None]


if __name__ == "__main__":
    key = jax.random.PRNGKey(0)
    k_in, k_par = jax.random.split(key)

    # Shapes implied by the module: C must be 512 (Linear(512, 128)); small
    # batch / temporal / spatial extents.
    B, C, T, H, W = 2, 512, 8, 16, 16
    x = jax.random.normal(k_in, (B, C, T, H, W), dtype=jnp.float32)
    w1, b1, w2, b2 = init_params(k_par, c=C)

    fwd = jax.jit(temporal_channel_aware_block)
    out = jax.block_until_ready(fwd(x, w1, b1, w2, b2))

    assert out.shape == (B, C, T, H, W)
    assert bool(jnp.all(jnp.isfinite(out)))

    ref = _reference(x, w1, b1, w2, b2)
    assert bool(jnp.allclose(out, ref, rtol=1e-4, atol=1e-4))

    print("KERNEL_OK")
</pallas_src>

<mosaic_0001>
module attributes {stable_mosaic.version = 11 : i64} {
  func.func @_tca_kernel(%arg0: i32, %arg1: memref<1x512x2048xf32, #tpu.memory_space<vmem>>, %arg2: memref<128x512xf32, #tpu.memory_space<vmem>>, %arg3: memref<128x1xf32, #tpu.memory_space<vmem>>, %arg4: memref<512x128xf32, #tpu.memory_space<vmem>>, %arg5: memref<512x1xf32, #tpu.memory_space<vmem>>, %arg6: memref<1x512x2048xf32, #tpu.memory_space<vmem>>) attributes {dimension_semantics = [#tpu.dimension_semantics<parallel>], iteration_bounds = array<i64: 2>, scalar_prefetch = 0 : i64, scratch_operands = 0 : i64, tpu.core_type = #tpu.core_type<tc>, window_params = [{transform_indices = @transform_0, window_bounds = array<i64: 1, 512, 2048>}, {pipeline_mode = #tpu.pipeline_mode<synchronous>, transform_indices = @transform_1, window_bounds = array<i64: 128, 512>}, {pipeline_mode = #tpu.pipeline_mode<synchronous>, transform_indices = @transform_2, window_bounds = array<i64: 128, 1>}, {pipeline_mode = #tpu.pipeline_mode<synchronous>, transform_indices = @transform_3, window_bounds = array<i64: 512, 128>}, {pipeline_mode = #tpu.pipeline_mode<synchronous>, transform_indices = @transform_4, window_bounds = array<i64: 512, 1>}, {transform_indices = @transform_5, window_bounds = array<i64: 1, 512, 2048>}]} {
    %c0 = arith.constant 0 : index
    %c0_0 = arith.constant 0 : index
    %c0_1 = arith.constant 0 : index
    %0 = vector.load %arg1[%c0, %c0_0, %c0_1] : memref<1x512x2048xf32, #tpu.memory_space<vmem>>, vector<1x512x2048xf32>
    %1 = vector.shape_cast %0 : vector<1x512x2048xf32> to vector<512x2048xf32>
    %cst = arith.constant dense<0.000000e+00> : vector<512xf32>
    %2 = vector.multi_reduction <add>, %1, %cst [1] : vector<512x2048xf32> to vector<512xf32>
    %3 = vector.shape_cast %2 : vector<512xf32> to vector<512x1xf32>
    %cst_2 = arith.constant 4.8828125E-4 : f32
    %4 = vector.broadcast %cst_2 : f32 to vector<512x1xf32>
    %5 = arith.mulf %3, %4 : vector<512x1xf32>
    %c0_3 = arith.constant 0 : index
    %c0_4 = arith.constant 0 : index
    %6 = vector.load %arg2[%c0_3, %c0_4] : memref<128x512xf32, #tpu.memory_space<vmem>>, vector<128x512xf32>
    %cst_5 = arith.constant dense<0.000000e+00> : vector<128x1xf32>
    %7 = tpu.matmul %6, %5, %cst_5 {dimension_numbers = #tpu.dot_dimension_numbers<[1], [0], [0], [1], [0, 0, 1, 1], [], []>} : vector<128x512xf32>, vector<512x1xf32>, vector<128x1xf32> -> vector<128x1xf32>
    %c0_6 = arith.constant 0 : index
    %c0_7 = arith.constant 0 : index
    %8 = vector.load %arg3[%c0_6, %c0_7] : memref<128x1xf32, #tpu.memory_space<vmem>>, vector<128x1xf32>
    %9 = arith.addf %7, %8 : vector<128x1xf32>
    %cst_8 = arith.constant 0.000000e+00 : f32
    %10 = vector.broadcast %cst_8 : f32 to vector<128x1xf32>
    %11 = arith.maximumf %9, %10 : vector<128x1xf32>
    %c0_9 = arith.constant 0 : index
    %c0_10 = arith.constant 0 : index
    %12 = vector.load %arg4[%c0_9, %c0_10] : memref<512x128xf32, #tpu.memory_space<vmem>>, vector<512x128xf32>
    %cst_11 = arith.constant dense<0.000000e+00> : vector<512x1xf32>
    %13 = tpu.matmul %12, %11, %cst_11 {dimension_numbers = #tpu.dot_dimension_numbers<[1], [0], [0], [1], [0, 0, 1, 1], [], []>} : vector<512x128xf32>, vector<128x1xf32>, vector<512x1xf32> -> vector<512x1xf32>
    %c0_12 = arith.constant 0 : index
    %c0_13 = arith.constant 0 : index
    %14 = vector.load %arg5[%c0_12, %c0_13] : memref<512x1xf32, #tpu.memory_space<vmem>>, vector<512x1xf32>
    %15 = arith.addf %13, %14 : vector<512x1xf32>
    %16 = arith.negf %15 : vector<512x1xf32>
    %17 = math.exp %16 : vector<512x1xf32>
    %cst_14 = arith.constant 1.000000e+00 : f32
    %18 = vector.broadcast %cst_14 : f32 to vector<512x1xf32>
    %19 = arith.addf %18, %17 : vector<512x1xf32>
    %20 = arith.divf %18, %19 : vector<512x1xf32>
    %21 = vector.broadcast %20 : vector<512x1xf32> to vector<512x2048xf32>
    %22 = arith.mulf %1, %21 : vector<512x2048xf32>
    %c0_15 = arith.constant 0 : index
    %c0_16 = arith.constant 0 : index
    %c0_17 = arith.constant 0 : index
    %23 = vector.load %arg6[%c0_15, %c0_16, %c0_17] : memref<1x512x2048xf32, #tpu.memory_space<vmem>>, vector<1x512x2048xf32>
    %24 = vector.shape_cast %23 : vector<1x512x2048xf32> to vector<512x2048xf32>
    %25 = vector.shape_cast %22 : vector<512x2048xf32> to vector<1x512x2048xf32>
    tpu.vector_store %arg6[%c0_15, %c0_16, %c0_17], %25 {strides = array<i32>} : memref<1x512x2048xf32, #tpu.memory_space<vmem>>, vector<1x512x2048xf32>,
    return
  }
  func.func @transform_0(%arg0: i32) -> (i32, i32, i32) {
    %c0_i32 = arith.constant 0 : i32
    %c0_i32_0 = arith.constant 0 : i32
    %c0_i32_1 = arith.constant 0 : i32
    return %arg0, %c0_i32, %c0_i32_0 : i32, i32, i32
  }
  func.func @transform_1(%arg0: i32) -> (i32, i32) {
    %c0_i32 = arith.constant 0 : i32
    %c0_i32_0 = arith.constant 0 : i32
    %c0_i32_1 = arith.constant 0 : i32
    return %c0_i32, %c0_i32_0 : i32, i32
  }
  func.func @transform_2(%arg0: i32) -> (i32, i32) {
    %c0_i32 = arith.constant 0 : i32
    %c0_i32_0 = arith.constant 0 : i32
    %c0_i32_1 = arith.constant 0 : i32
    return %c0_i32, %c0_i32_0 : i32, i32
  }
  func.func @transform_3(%arg0: i32) -> (i32, i32) {
    %c0_i32 = arith.constant 0 : i32
    %c0_i32_0 = arith.constant 0 : i32
    %c0_i32_1 = arith.constant 0 : i32
    return %c0_i32, %c0_i32_0 : i32, i32
  }
  func.func @transform_4(%arg0: i32) -> (i32, i32) {
    %c0_i32 = arith.constant 0 : i32
    %c0_i32_0 = arith.constant 0 : i32
    %c0_i32_1 = arith.constant 0 : i32
    return %c0_i32, %c0_i32_0 : i32, i32
  }
  func.func @transform_5(%arg0: i32) -> (i32, i32, i32) {
    %c0_i32 = arith.constant 0 : i32
    %c0_i32_0 = arith.constant 0 : i32
    %c0_i32_1 = arith.constant 0 : i32
    return %arg0, %c0_i32, %c0_i32_0 : i32, i32, i32
  }
}

</mosaic_0001>

<llo_original>
// kernel: temporal_channel_aware_block.1
$region0: #{temporal_channel_aware_block.1}
  #allocation0 [shape = 'u32[]', space=smem, size = 0x4, offset = 0x4, fixed_abs, tag = 'smem constant byte address 0x4 - core index']
  #allocation1 [shape = 'u32[144,128]{1,0:T(1,128)}', space=vmem, size = 0x12000, scoped, tag = 'internal scratch']
  %s0 = inlined_call_operand.vmem [shape: f32[2,512,2048], index: 0, kind: input, shape index: {}]
  %s1 = inlined_call_operand.vmem [shape: f32[128,512], index: 1, kind: input, shape index: {}]
  %s2 = inlined_call_operand.vmem [shape: f32[128,1], index: 2, kind: input, shape index: {}]
  %s3 = inlined_call_operand.vmem [shape: f32[512,128], index: 3, kind: input, shape index: {}]
  %s4 = inlined_call_operand.vmem [shape: f32[512,1], index: 4, kind: input, shape index: {}]
  %s5 = inlined_call_operand.vmem [shape: f32[2,512,2048], index: 5, kind: output, shape index: {}]
  %s6 = sld [smem:[#allocation0]]
  $region53: #{temporal_channel_aware_block.1} parent=0
    _
  %s8 = ssub.s32 1, %s6
  %s9 = scalar_select 0, %s8, %s6
  loop: start=0, step=1, limit=4
  $region2: #{temporal_channel_aware_block.1} parent=0 // loop_pre_header
    _
  $region3: #{temporal_channel_aware_block.1} parent=0 // loop_header
    %s11 = sphi 0, %s15
    %p12 = scmp.ge.s32.totalorder %s11, 4
    %s21 = sphi 0, %s23
    %s24 = sphi 0, %s21
    %s25 = sphi 0, %s24
    %s41 = sphi 0, %s25
    %s45 = sphi 0, %s45
    %s47 = sphi 0, %s45
    %s48 = sphi 0, %s47
    %s62 = sphi 0, %s48
    %s66 = sphi 0, %s66
    %s68 = sphi 0, %s66
    %s69 = sphi 0, %s68
    %s83 = sphi 0, %s69
    %s87 = sphi 0, %s87
    %s89 = sphi 0, %s87
    %s90 = sphi 0, %s89
    %s104 = sphi 0, %s90
    %s108 = sphi 0, %s108
    %s110 = sphi 0, %s108
    %s111 = sphi 0, %s110
    %s125 = sphi 0, %s111
    %s131 = sphi 0, %s133
    %s134 = sphi 0, %s131
    %s135 = sphi 0, %s134
    %s151 = sphi 0, %s135
  $region4: #{temporal_channel_aware_block.1} parent=0 // loop_header_branch
    %14 = sbr.rel (%p12) target = $region8
  $region5: #{temporal_channel_aware_block.1} parent=0 // loop_body
    %s16 = ssub.s32 %s11, 1
    %s17 = ssub.s32 %s11, 2
    %s18 = sadd.s32 %s11, 1
    %s19 = ssub.s32 %s11, %s18
    %p20 = scmp.eq.s32.totalorder %s19, 0
    %s22 = sadd.s32 %s21, 1
    %s23 = scalar_select %p20, %s21, %s22
    %p26 = pneg %p20
    %p27 = scmp.eq.s32.totalorder %s11, 1
    %p28 = por %p26, %p27
    %p29 = scmp.ne.s32.totalorder %s21, %s24
    %p30 = scmp.eq.s32.totalorder %s11, 0
    %p31 = por %p29, %p30
    %p32 = scmp.ne.s32.totalorder %s21, %s24
    %p33 = scmp.eq.s32.totalorder %s16, 1
    %p34 = por %p32, %p33
    %p35 = scmp.ne.s32.totalorder %s24, %s25
    %p36 = scmp.eq.s32.totalorder %s16, 0
    %p37 = por %p35, %p36
    %p38 = scmp.ne.s32.totalorder %s24, %s25
    %p39 = scmp.eq.s32.totalorder %s17, 1
    %p40 = por %p38, %p39
    %p42 = scmp.ne.s32.totalorder %s25, %s41
    %p43 = scmp.eq.s32.totalorder %s17, 0
    %p44 = por %p42, %p43
    %s46 = sadd.s32 %s45, 1
    %p49 = scmp.eq.s32.totalorder %s11, 1
    %p50 = scmp.ne.s32.totalorder %s45, %s47
    %p51 = scmp.eq.s32.totalorder %s11, 0
    %p52 = por %p50, %p51
    %p53 = scmp.ne.s32.totalorder %s45, %s47
    %p54 = scmp.eq.s32.totalorder %s16, 1
    %p55 = por %p53, %p54
    %p56 = scmp.ne.s32.totalorder %s47, %s48
    %p57 = scmp.eq.s32.totalorder %s16, 0
    %p58 = por %p56, %p57
    %p59 = scmp.ne.s32.totalorder %s47, %s48
    %p60 = scmp.eq.s32.totalorder %s17, 1
    %p61 = por %p59, %p60
    %p63 = scmp.ne.s32.totalorder %s48, %s62
    %p64 = scmp.eq.s32.totalorder %s17, 0
    %p65 = por %p63, %p64
    %s67 = sadd.s32 %s66, 1
    %p70 = scmp.eq.s32.totalorder %s11, 1
    %p71 = scmp.ne.s32.totalorder %s66, %s68
    %p72 = scmp.eq.s32.totalorder %s11, 0
    %p73 = por %p71, %p72
    %p74 = scmp.ne.s32.totalorder %s66, %s68
    %p75 = scmp.eq.s32.totalorder %s16, 1
    %p76 = por %p74, %p75
    %p77 = scmp.ne.s32.totalorder %s68, %s69
    %p78 = scmp.eq.s32.totalorder %s16, 0
    %p79 = por %p77, %p78
    %p80 = scmp.ne.s32.totalorder %s68, %s69
    %p81 = scmp.eq.s32.totalorder %s17, 1
    %p82 = por %p80, %p81
    %p84 = scmp.ne.s32.totalorder %s69, %s83
    %p85 = scmp.eq.s32.totalorder %s17, 0
    %p86 = por %p84, %p85
    %s88 = sadd.s32 %s87, 1
    %p91 = scmp.eq.s32.totalorder %s11, 1
    %p92 = scmp.ne.s32.totalorder %s87, %s89
    %p93 = scmp.eq.s32.totalorder %s11, 0
    %p94 = por %p92, %p93
    %p95 = scmp.ne.s32.totalorder %s87, %s89
    %p96 = scmp.eq.s32.totalorder %s16, 1
    %p97 = por %p95, %p96
    %p98 = scmp.ne.s32.totalorder %s89, %s90
    %p99 = scmp.eq.s32.totalorder %s16, 0
    %p100 = por %p98, %p99
    %p101 = scmp.ne.s32.totalorder %s89, %s90
    %p102 = scmp.eq.s32.totalorder %s17, 1
    %p103 = por %p101, %p102
    %p105 = scmp.ne.s32.totalorder %s90, %s104
    %p106 = scmp.eq.s32.totalorder %s17, 0
    %p107 = por %p105, %p106
    %s109 = sadd.s32 %s108, 1
    %p112 = scmp.eq.s32.totalorder %s11, 1
    %p113 = scmp.ne.s32.totalorder %s108, %s110
    %p114 = scmp.eq.s32.totalorder %s11, 0
    %p115 = por %p113, %p114
    %p116 = scmp.ne.s32.totalorder %s108, %s110
    %p117 = scmp.eq.s32.totalorder %s16, 1
    %p118 = por %p116, %p117
    %p119 = scmp.ne.s32.totalorder %s110, %s111
    %p120 = scmp.eq.s32.totalorder %s16, 0
    %p121 = por %p119, %p120
    %p122 = scmp.ne.s32.totalorder %s110, %s111
    %p123 = scmp.eq.s32.totalorder %s17, 1
    %p124 = por %p122, %p123
    %p126 = scmp.ne.s32.totalorder %s111, %s125
    %p127 = scmp.eq.s32.totalorder %s17, 0
    %p128 = por %p126, %p127
    %s129 = ssub.s32 %s11, %s18
    %p130 = scmp.eq.s32.totalorder %s129, 0
    %s132 = sadd.s32 %s131, 1
    %s133 = scalar_select %p130, %s131, %s132
    %p136 = pneg %p130
    %p137 = scmp.eq.s32.totalorder %s11, 1
    %p138 = por %p136, %p137
    %p139 = scmp.ne.s32.totalorder %s131, %s134
    %p140 = scmp.eq.s32.totalorder %s11, 0
    %p141 = por %p139, %p140
    %p142 = scmp.ne.s32.totalorder %s131, %s134
    %p143 = scmp.eq.s32.totalorder %s16, 1
    %p144 = por %p142, %p143
    %p145 = scmp.ne.s32.totalorder %s134, %s135
    %p146 = scmp.eq.s32.totalorder %s16, 0
    %p147 = por %p145, %p146
    %p148 = scmp.ne.s32.totalorder %s134, %s135
    %p149 = scmp.eq.s32.totalorder %s17, 1
    %p150 = por %p148, %p149
    %p152 = scmp.ne.s32.totalorder %s135, %s151
    %p153 = scmp.eq.s32.totalorder %s17, 0
    %p154 = por %p152, %p153
    %p155 = scmp.le.s32.totalorder 1, %s11
    %p156 = scmp.lt.s32.totalorder %s11, 3
    %p157 = pnand %p155, %p156
    %p158 = pneg %p157
    // Predicated region
    $region9: #{temporal_channel_aware_block.1} parent=5 // pred_check
      _
    $region10: #{temporal_channel_aware_block.1} parent=5 // pred_check_branch
      %160 = sbr.rel (%p157) target = $region12
    $region11: #{temporal_channel_aware_block.1} parent=5 // pred_region
      %s161 = ssub.s32 %s11, 1
      // Predicated region
      $region13: #{temporal_channel_aware_block.1} parent=11 // pred_check
        %p162 = pneg %p58
      $region14: #{temporal_channel_aware_block.1} parent=11 // pred_check_branch
        %164 = sbr.rel (%p162) target = $region16
      $region15: #{temporal_channel_aware_block.1} parent=11 // pred_region
        _
      $region16: #{temporal_channel_aware_block.1} parent=11 // pred_fallthru
        _
      // Predicated region
      $region17: #{temporal_channel_aware_block.1} parent=11 // pred_check
        %p165 = pneg %p79
      $region18: #{temporal_channel_aware_block.1} parent=11 // pred_check_branch
        %167 = sbr.rel (%p165) target = $region20
      $region19: #{temporal_channel_aware_block.1} parent=11 // pred_region
        _
      $region20: #{temporal_channel_aware_block.1} parent=11 // pred_fallthru
        _
      // Predicated region
      $region21: #{temporal_channel_aware_block.1} parent=11 // pred_check
        %p168 = pneg %p100
      $region22: #{temporal_channel_aware_block.1} parent=11 // pred_check_branch
        %170 = sbr.rel (%p168) target = $region24
      $region23: #{temporal_channel_aware_block.1} parent=11 // pred_region
        _
      $region24: #{temporal_channel_aware_block.1} parent=11 // pred_fallthru
        _
      // Predicated region
      $region25: #{temporal_channel_aware_block.1} parent=11 // pred_check
        %p171 = pneg %p121
      $region26: #{temporal_channel_aware_block.1} parent=11 // pred_check_branch
        %173 = sbr.rel (%p171) target = $region28
      $region27: #{temporal_channel_aware_block.1} parent=11 // pred_region
        _
      $region28: #{temporal_channel_aware_block.1} parent=11 // pred_fallthru
        _
    $region12: #{temporal_channel_aware_block.1} parent=5 // pred_fallthru
      _
    %p174 = scmp.lt.s32.totalorder %s11, 2
    // Predicated region
    $region29: #{temporal_channel_aware_block.1} parent=5 // pred_check
      %p175 = pneg %p174
    $region30: #{temporal_channel_aware_block.1} parent=5 // pred_check_branch
      %177 = sbr.rel (%p175) target = $region32
    $region31: #{temporal_channel_aware_block.1} parent=5 // pred_region
      // Predicated region
      $region33: #{temporal_channel_aware_block.1} parent=31 // pred_check
        %p178 = pneg %p31
      $region34: #{temporal_channel_aware_block.1} parent=31 // pred_check_branch
        %180 = sbr.rel (%p178) target = $region36
      $region35: #{temporal_channel_aware_block.1} parent=31 // pred_region
        %p181 = scmp.lt.s32.totalorder %s11, 1
        %s182 = scalar_select %p181, %s11, 1
        %s183 = smul.addr %s182, 1024
        %s184 = smul.addr %s183, 8
        %s185 = scalar_lea.vmem %s0, %s184
      $region36: #{temporal_channel_aware_block.1} parent=31 // pred_fallthru
        _
    $region32: #{temporal_channel_aware_block.1} parent=5 // pred_fallthru
      _
    %p186 = scmp.le.s32.totalorder 1, %s11
    %p187 = scmp.lt.s32.totalorder %s11, 3
    %p188 = pnand %p186, %p187
    %p189 = pneg %p188
    // Predicated region
    $region37: #{temporal_channel_aware_block.1} parent=5 // pred_check
      _
    $region38: #{temporal_channel_aware_block.1} parent=5 // pred_check_branch
      %191 = sbr.rel (%p188) target = $region40
    $region39: #{temporal_channel_aware_block.1} parent=5 // pred_region
      %s192 = ssub.s32 %s11, 1
      %p193 = scmp.lt.s32.totalorder %s16, 1
      %s194 = scalar_select %p193, %s16, 1
      %s195 = smul.addr %s194, 1024
      %s196 = smul.addr %s195, 8
      %s197 = scalar_lea.vmem %s0, %s196
      %p198 = pneg %p37
      %p199 = pneg %p34
      %p200 = pneg %p58
      %p201 = pneg %p55
      %p202 = pneg %p79
      %p203 = pneg %p76
      %p204 = pneg %p100
      %p205 = pneg %p97
      %p206 = pneg %p121
      %p207 = pneg %p118
      %p208 = pneg %p147
      %p209 = pneg %p144
      %p210 = scmp.lt.s32.totalorder %s16, 1
      %s211 = scalar_select %p210, %s16, 1
      %s212 = smul.addr %s211, 1024
      %s213 = smul.addr %s212, 8
      %s214 = scalar_lea.vmem %s5, %s213
      %p215 = scmp.lt.s32.totalorder %s16, 1
      %s216 = scalar_select %p215, %s16, 1
      %s217 = smul.addr %s216, 1024
      %s218 = smul.addr %s217, 8
      %s219 = scalar_lea.vmem %s0, %s218
      %p220 = scmp.lt.s32.totalorder %s16, 1
      %s221 = scalar_select %p220, %s16, 1
      %s222 = smul.addr %s221, 1024
      %s223 = smul.addr %s222, 8
      %s224 = scalar_lea.vmem %s5, %s223
      %v225 = vld [vmem:[%s219] sm:$0xff]
      %v226 = vld [vmem:[%s219 + $0x8] sm:$0xff]
      %v227 = vld [vmem:[%s219 + $0x10] sm:$0xff]
      %v228 = vld [vmem:[%s219 + $0x18] sm:$0xff]
      %v229 = vld [vmem:[%s219 + $0x20] sm:$0xff]
      %v230 = vld [vmem:[%s219 + $0x28] sm:$0xff]
      %v231 = vld [vmem:[%s219 + $0x30] sm:$0xff]
      %v232 = vld [vmem:[%s219 + $0x38] sm:$0xff]
      %v233 = vld [vmem:[%s219 + $0x40] sm:$0xff]
      %v234 = vld [vmem:[%s219 + $0x48] sm:$0xff]
      %v235 = vld [vmem:[%s219 + $0x50] sm:$0xff]
      %v236 = vld [vmem:[%s219 + $0x58] sm:$0xff]
      %v237 = vld [vmem:[%s219 + $0x60] sm:$0xff]
      %v238 = vld [vmem:[%s219 + $0x68] sm:$0xff]
      %v239 = vld [vmem:[%s219 + $0x70] sm:$0xff]
      %v240 = vld [vmem:[%s219 + $0x78] sm:$0xff]
      %v241 = vld [vmem:[%s219 + $0x80] sm:$0xff]
      %v242 = vld [vmem:[%s219 + $0x88] sm:$0xff]
      %v243 = vld [vmem:[%s219 + $0x90] sm:$0xff]
      %v244 = vld [vmem:[%s219 + $0x98] sm:$0xff]
      %v245 = vld [vmem:[%s219 + $0xa0] sm:$0xff]
      %v246 = vld [vmem:[%s219 + $0xa8] sm:$0xff]
      %v247 = vld [vmem:[%s219 + $0xb0] sm:$0xff]
      %v248 = vld [vmem:[%s219 + $0xb8] sm:$0xff]
      %v249 = vld [vmem:[%s219 + $0xc0] sm:$0xff]
      %v250 = vld [vmem:[%s219 + $0xc8] sm:$0xff]
      %v251 = vld [vmem:[%s219 + $0xd0] sm:$0xff]
      %v252 = vld [vmem:[%s219 + $0xd8] sm:$0xff]
      %v253 = vld [vmem:[%s219 + $0xe0] sm:$0xff]
      %v254 = vld [vmem:[%s219 + $0xe8] sm:$0xff]
      %v255 = vld [vmem:[%s219 + $0xf0] sm:$0xff]
      %v256 = vld [vmem:[%s219 + $0xf8] sm:$0xff]
      %v257 = vld [vmem:[%s219 + $0x100] sm:$0xff]
      %v258 = vld [vmem:[%s219 + $0x108] sm:$0xff]
      %v259 = vld [vmem:[%s219 + $0x110] sm:$0xff]
      %v260 = vld [vmem:[%s219 + $0x118] sm:$0xff]
      %v261 = vld [vmem:[%s219 + $0x120] sm:$0xff]
      %v262 = vld [vmem:[%s219 + $0x128] sm:$0xff]
      %v263 = vld [vmem:[%s219 + $0x130] sm:$0xff]
      %v264 = vld [vmem:[%s219 + $0x138] sm:$0xff]
      %v265 = vld [vmem:[%s219 + $0x140] sm:$0xff]
      %v266 = vld [vmem:[%s219 + $0x148] sm:$0xff]
      %v267 = vld [vmem:[%s219 + $0x150] sm:$0xff]
      %v268 = vld [vmem:[%s219 + $0x158] sm:$0xff]
      %v269 = vld [vmem:[%s219 + $0x160] sm:$0xff]
      %v270 = vld [vmem:[%s219 + $0x168] sm:$0xff]
      %v271 = vld [vmem:[%s219 + $0x170] sm:$0xff]
      %v272 = vld [vmem:[%s219 + $0x178] sm:$0xff]
      %v273 = vld [vmem:[%s219 + $0x180] sm:$0xff]
      %v274 = vld [vmem:[%s219 + $0x188] sm:$0xff]
      %v275 = vld [vmem:[%s219 + $0x190] sm:$0xff]
      %v276 = vld [vmem:[%s219 + $0x198] sm:$0xff]
      %v277 = vld [vmem:[%s219 + $0x1a0] sm:$0xff]
      %v278 = vld [vmem:[%s219 + $0x1a8] sm:$0xff]
      %v279 = vld [vmem:[%s219 + $0x1b0] sm:$0xff]
      %v280 = vld [vmem:[%s219 + $0x1b8] sm:$0xff]
      %v281 = vld [vmem:[%s219 + $0x1c0] sm:$0xff]
      %v282 = vld [vmem:[%s219 + $0x1c8] sm:$0xff]
      %v283 = vld [vmem:[%s219 + $0x1d0] sm:$0xff]
      %v284 = vld [vmem:[%s219 + $0x1d8] sm:$0xff]
      %v285 = vld [vmem:[%s219 + $0x1e0] sm:$0xff]
      %v286 = vld [vmem:[%s219 + $0x1e8] sm:$0xff]
      %v287 = vld [vmem:[%s219 + $0x1f0] sm:$0xff]
      %v288 = vld [vmem:[%s219 + $0x1f8] sm:$0xff]
      %v289 = vld [vmem:[%s219 + $0x200] sm:$0xff]
      %v290 = vld [vmem:[%s219 + $0x208] sm:$0xff]
      %v291 = vld [vmem:[%s219 + $0x210] sm:$0xff]
      %v292 = vld [vmem:[%s219 + $0x218] sm:$0xff]
      %v293 = vld [vmem:[%s219 + $0x220] sm:$0xff]
      %v294 = vld [vmem:[%s219 + $0x228] sm:$0xff]
      %v295 = vld [vmem:[%s219 + $0x230] sm:$0xff]
      %v296 = vld [vmem:[%s219 + $0x238] sm:$0xff]
      %v297 = vld [vmem:[%s219 + $0x240] sm:$0xff]
      %v298 = vld [vmem:[%s219 + $0x248] sm:$0xff]
      %v299 = vld [vmem:[%s219 + $0x250] sm:$0xff]
      %v300 = vld [vmem:[%s219 + $0x258] sm:$0xff]
      %v301 = vld [vmem:[%s219 + $0x260] sm:$0xff]
      %v302 = vld [vmem:[%s219 + $0x268] sm:$0xff]
      %v303 = vld [vmem:[%s219 + $0x270] sm:$0xff]
      %v304 = vld [vmem:[%s219 + $0x278] sm:$0xff]
      %v305 = vld [vmem:[%s219 + $0x280] sm:$0xff]
      %v306 = vld [vmem:[%s219 + $0x288] sm:$0xff]
      %v307 = vld [vmem:[%s219 + $0x290] sm:$0xff]
      %v308 = vld [vmem:[%s219 + $0x298] sm:$0xff]
      %v309 = vld [vmem:[%s219 + $0x2a0] sm:$0xff]
      %v310 = vld [vmem:[%s219 + $0x2a8] sm:$0xff]
      %v311 = vld [vmem:[%s219 + $0x2b0] sm:$0xff]
      %v312 = vld [vmem:[%s219 + $0x2b8] sm:$0xff]
      %v313 = vld [vmem:[%s219 + $0x2c0] sm:$0xff]
      %v314 = vld [vmem:[%s219 + $0x2c8] sm:$0xff]
      %v315 = vld [vmem:[%s219 + $0x2d0] sm:$0xff]
      %v316 = vld [vmem:[%s219 + $0x2d8] sm:$0xff]
      %v317 = vld [vmem:[%s219 + $0x2e0] sm:$0xff]
      %v318 = vld [vmem:[%s219 + $0x2e8] sm:$0xff]
      %v319 = vld [vmem:[%s219 + $0x2f0] sm:$0xff]
      %v320 = vld [vmem:[%s219 + $0x2f8] sm:$0xff]
      %v321 = vld [vmem:[%s219 + $0x300] sm:$0xff]
      %v322 = vld [vmem:[%s219 + $0x308] sm:$0xff]
      %v323 = vld [vmem:[%s219 + $0x310] sm:$0xff]
      %v324 = vld [vmem:[%s219 + $0x318] sm:$0xff]
      %v325 = vld [vmem:[%s219 + $0x320] sm:$0xff]
      %v326 = vld [vmem:[%s219 + $0x328] sm:$0xff]
      %v327 = vld [vmem:[%s219 + $0x330] sm:$0xff]
      %v328 = vld [vmem:[%s219 + $0x338] sm:$0xff]
      %v329 = vld [vmem:[%s219 + $0x340] sm:$0xff]
      %v330 = vld [vmem:[%s219 + $0x348] sm:$0xff]
      %v331 = vld [vmem:[%s219 + $0x350] sm:$0xff]
      %v332 = vld [vmem:[%s219 + $0x358] sm:$0xff]
      %v333 = vld [vmem:[%s219 + $0x360] sm:$0xff]
      %v334 = vld [vmem:[%s219 + $0x368] sm:$0xff]
      %v335 = vld [vmem:[%s219 + $0x370] sm:$0xff]
      %v336 = vld [vmem:[%s219 + $0x378] sm:$0xff]
      %v337 = vld [vmem:[%s219 + $0x380] sm:$0xff]
      %v338 = vld [vmem:[%s219 + $0x388] sm:$0xff]
      %v339 = vld [vmem:[%s219 + $0x390] sm:$0xff]
      %v340 = vld [vmem:[%s219 + $0x398] sm:$0xff]
      %v341 = vld [vmem:[%s219 + $0x3a0] sm:$0xff]
      %v342 = vld [vmem:[%s219 + $0x3a8] sm:$0xff]
      %v343 = vld [vmem:[%s219 + $0x3b0] sm:$0xff]
      %v344 = vld [vmem:[%s219 + $0x3b8] sm:$0xff]
      %v345 = vld [vmem:[%s219 + $0x3c0] sm:$0xff]
      %v346 = vld [vmem:[%s219 + $0x3c8] sm:$0xff]
      %v347 = vld [vmem:[%s219 + $0x3d0] sm:$0xff]
      %v348 = vld [vmem:[%s219 + $0x3d8] sm:$0xff]
      %v349 = vld [vmem:[%s219 + $0x3e0] sm:$0xff]
      %v350 = vld [vmem:[%s219 + $0x3e8] sm:$0xff]
      %v351 = vld [vmem:[%s219 + $0x3f0] sm:$0xff]
      %v352 = vld [vmem:[%s219 + $0x3f8] sm:$0xff]
      %v353 = vld [vmem:[%s219 + $0x400] sm:$0xff]
      %v354 = vld [vmem:[%s219 + $0x408] sm:$0xff]
      %v355 = vld [vmem:[%s219 + $0x410] sm:$0xff]
      %v356 = vld [vmem:[%s219 + $0x418] sm:$0xff]
      %v357 = vld [vmem:[%s219 + $0x420] sm:$0xff]
      %v358 = vld [vmem:[%s219 + $0x428] sm:$0xff]
      %v359 = vld [vmem:[%s219 + $0x430] sm:$0xff]
      %v360 = vld [vmem:[%s219 + $0x438] sm:$0xff]
      %v361 = vld [vmem:[%s219 + $0x440] sm:$0xff]
      %v362 = vld [vmem:[%s219 + $0x448] sm:$0xff]
      %v363 = vld [vmem:[%s219 + $0x450] sm:$0xff]
      %v364 = vld [vmem:[%s219 + $0x458] sm:$0xff]
      %v365 = vld [vmem:[%s219 + $0x460] sm:$0xff]
      %v366 = vld [vmem:[%s219 + $0x468] sm:$0xff]
      %v367 = vld [vmem:[%s219 + $0x470] sm:$0xff]
      %v368 = vld [vmem:[%s219 + $0x478] sm:$0xff]
      %v369 = vld [vmem:[%s219 + $0x480] sm:$0xff]
      %v370 = vld [vmem:[%s219 + $0x488] sm:$0xff]
      %v371 = vld [vmem:[%s219 + $0x490] sm:$0xff]
      %v372 = vld [vmem:[%s219 + $0x498] sm:$0xff]
      %v373 = vld [vmem:[%s219 + $0x4a0] sm:$0xff]
      %v374 = vld [vmem:[%s219 + $0x4a8] sm:$0xff]
      %v375 = vld [vmem:[%s219 + $0x4b0] sm:$0xff]
      %v376 = vld [vmem:[%s219 + $0x4b8] sm:$0xff]
      %v377 = vld [vmem:[%s219 + $0x4c0] sm:$0xff]
      %v378 = vld [vmem:[%s219 + $0x4c8] sm:$0xff]
      %v379 = vld [vmem:[%s219 + $0x4d0] sm:$0xff]
      %v380 = vld [vmem:[%s219 + $0x4d8] sm:$0xff]
      %v381 = vld [vmem:[%s219 + $0x4e0] sm:$0xff]
      %v382 = vld [vmem:[%s219 + $0x4e8] sm:$0xff]
      %v383 = vld [vmem:[%s219 + $0x4f0] sm:$0xff]
      %v384 = vld [vmem:[%s219 + $0x4f8] sm:$0xff]
      %v385 = vld [vmem:[%s219 + $0x500] sm:$0xff]
      %v386 = vld [vmem:[%s219 + $0x508] sm:$0xff]
      %v387 = vld [vmem:[%s219 + $0x510] sm:$0xff]
      %v388 = vld [vmem:[%s219 + $0x518] sm:$0xff]
      %v389 = vld [vmem:[%s219 + $0x520] sm:$0xff]
      %v390 = vld [vmem:[%s219 + $0x528] sm:$0xff]
      %v391 = vld [vmem:[%s219 + $0x530] sm:$0xff]
      %v392 = vld [vmem:[%s219 + $0x538] sm:$0xff]
      %v393 = vld [vmem:[%s219 + $0x540] sm:$0xff]
      %v394 = vld [vmem:[%s219 + $0x548] sm:$0xff]
      %v395 = vld [vmem:[%s219 + $0x550] sm:$0xff]
      %v396 = vld [vmem:[%s219 + $0x558] sm:$0xff]
      %v397 = vld [vmem:[%s219 + $0x560] sm:$0xff]
      %v398 = vld [vmem:[%s219 + $0x568] sm:$0xff]
      %v399 = vld [vmem:[%s219 + $0x570] sm:$0xff]
      %v400 = vld [vmem:[%s219 + $0x578] sm:$0xff]
      %v401 = vld [vmem:[%s219 + $0x580] sm:$0xff]
      %v402 = vld [vmem:[%s219 + $0x588] sm:$0xff]
      %v403 = vld [vmem:[%s219 + $0x590] sm:$0xff]
      %v404 = vld [vmem:[%s219 + $0x598] sm:$0xff]
      %v405 = vld [vmem:[%s219 + $0x5a0] sm:$0xff]
      %v406 = vld [vmem:[%s219 + $0x5a8] sm:$0xff]
      %v407 = vld [vmem:[%s219 + $0x5b0] sm:$0xff]
      %v408 = vld [vmem:[%s219 + $0x5b8] sm:$0xff]
      %v409 = vld [vmem:[%s219 + $0x5c0] sm:$0xff]
      %v410 = vld [vmem:[%s219 + $0x5c8] sm:$0xff]
      %v411 = vld [vmem:[%s219 + $0x5d0] sm:$0xff]
      %v412 = vld [vmem:[%s219 + $0x5d8] sm:$0xff]
      %v413 = vld [vmem:[%s219 + $0x5e0] sm:$0xff]
      %v414 = vld [vmem:[%s219 + $0x5e8] sm:$0xff]
      %v415 = vld [vmem:[%s219 + $0x5f0] sm:$0xff]
      %v416 = vld [vmem:[%s219 + $0x5f8] sm:$0xff]
      %v417 = vld [vmem:[%s219 + $0x600] sm:$0xff]
      %v418 = vld [vmem:[%s219 + $0x608] sm:$0xff]
      %v419 = vld [vmem:[%s219 + $0x610] sm:$0xff]
      %v420 = vld [vmem:[%s219 + $0x618] sm:$0xff]
      %v421 = vld [vmem:[%s219 + $0x620] sm:$0xff]
      %v422 = vld [vmem:[%s219 + $0x628] sm:$0xff]
      %v423 = vld [vmem:[%s219 + $0x630] sm:$0xff]
      %v424 = vld [vmem:[%s219 + $0x638] sm:$0xff]
      %v425 = vld [vmem:[%s219 + $0x640] sm:$0xff]
      %v426 = vld [vmem:[%s219 + $0x648] sm:$0xff]
      %v427 = vld [vmem:[%s219 + $0x650] sm:$0xff]
      %v428 = vld [vmem:[%s219 + $0x658] sm:$0xff]
      %v429 = vld [vmem:[%s219 + $0x660] sm:$0xff]
      %v430 = vld [vmem:[%s219 + $0x668] sm:$0xff]
      %v431 = vld [vmem:[%s219 + $0x670] sm:$0xff]
      %v432 = vld [vmem:[%s219 + $0x678] sm:$0xff]
      %v433 = vld [vmem:[%s219 + $0x680] sm:$0xff]
      %v434 = vld [vmem:[%s219 + $0x688] sm:$0xff]
      %v435 = vld [vmem:[%s219 + $0x690] sm:$0xff]
      %v436 = vld [vmem:[%s219 + $0x698] sm:$0xff]
      %v437 = vld [vmem:[%s219 + $0x6a0] sm:$0xff]
      %v438 = vld [vmem:[%s219 + $0x6a8] sm:$0xff]
      %v439 = vld [vmem:[%s219 + $0x6b0] sm:$0xff]
      %v440 = vld [vmem:[%s219 + $0x6b8] sm:$0xff]
      %v441 = vld [vmem:[%s219 + $0x6c0] sm:$0xff]
      %v442 = vld [vmem:[%s219 + $0x6c8] sm:$0xff]
      %v443 = vld [vmem:[%s219 + $0x6d0] sm:$0xff]
      %v444 = vld [vmem:[%s219 + $0x6d8] sm:$0xff]
      %v445 = vld [vmem:[%s219 + $0x6e0] sm:$0xff]
      %v446 = vld [vmem:[%s219 + $0x6e8] sm:$0xff]
      %v447 = vld [vmem:[%s219 + $0x6f0] sm:$0xff]
      %v448 = vld [vmem:[%s219 + $0x6f8] sm:$0xff]
      %v449 = vld [vmem:[%s219 + $0x700] sm:$0xff]
      %v450 = vld [vmem:[%s219 + $0x708] sm:$0xff]
      %v451 = vld [vmem:[%s219 + $0x710] sm:$0xff]
      %v452 = vld [vmem:[%s219 + $0x718] sm:$0xff]
      %v453 = vld [vmem:[%s219 + $0x720] sm:$0xff]
      %v454 = vld [vmem:[%s219 + $0x728] sm:$0xff]
      %v455 = vld [vmem:[%s219 + $0x730] sm:$0xff]
      %v456 = vld [vmem:[%s219 + $0x738] sm:$0xff]
      %v457 = vld [vmem:[%s219 + $0x740] sm:$0xff]
      %v458 = vld [vmem:[%s219 + $0x748] sm:$0xff]
      %v459 = vld [vmem:[%s219 + $0x750] sm:$0xff]
      %v460 = vld [vmem:[%s219 + $0x758] sm:$0xff]
      %v461 = vld [vmem:[%s219 + $0x760] sm:$0xff]
      %v462 = vld [vmem:[%s219 + $0x768] sm:$0xff]
      %v463 = vld [vmem:[%s219 + $0x770] sm:$0xff]
      %v464 = vld [vmem:[%s219 + $0x778] sm:$0xff]
      %v465 = vld [vmem:[%s219 + $0x780] sm:$0xff]
      %v466 = vld [vmem:[%s219 + $0x788] sm:$0xff]
      %v467 = vld [vmem:[%s219 + $0x790] sm:$0xff]
      %v468 = vld [vmem:[%s219 + $0x798] sm:$0xff]
      %v469 = vld [vmem:[%s219 + $0x7a0] sm:$0xff]
      %v470 = vld [vmem:[%s219 + $0x7a8] sm:$0xff]
      %v471 = vld [vmem:[%s219 + $0x7b0] sm:$0xff]
      %v472 = vld [vmem:[%s219 + $0x7b8] sm:$0xff]
      %v473 = vld [vmem:[%s219 + $0x7c0] sm:$0xff]
      %v474 = vld [vmem:[%s219 + $0x7c8] sm:$0xff]
      %v475 = vld [vmem:[%s219 + $0x7d0] sm:$0xff]
      %v476 = vld [vmem:[%s219 + $0x7d8] sm:$0xff]
      %v477 = vld [vmem:[%s219 + $0x7e0] sm:$0xff]
      %v478 = vld [vmem:[%s219 + $0x7e8] sm:$0xff]
      %v479 = vld [vmem:[%s219 + $0x7f0] sm:$0xff]
      %v480 = vld [vmem:[%s219 + $0x7f8] sm:$0xff]
      %v481 = vld [vmem:[%s219 + $0x800] sm:$0xff]
      %v482 = vld [vmem:[%s219 + $0x808] sm:$0xff]
      %v483 = vld [vmem:[%s219 + $0x810] sm:$0xff]
      %v484 = vld [vmem:[%s219 + $0x818] sm:$0xff]
      %v485 = vld [vmem:[%s219 + $0x820] sm:$0xff]
      %v486 = vld [vmem:[%s219 + $0x828] sm:$0xff]
      %v487 = vld [vmem:[%s219 + $0x830] sm:$0xff]
      %v488 = vld [vmem:[%s219 + $0x838] sm:$0xff]
      %v489 = vld [vmem:[%s219 + $0x840] sm:$0xff]
      %v490 = vld [vmem:[%s219 + $0x848] sm:$0xff]
      %v491 = vld [vmem:[%s219 + $0x850] sm:$0xff]
      %v492 = vld [vmem:[%s219 + $0x858] sm:$0xff]
      %v493 = vld [vmem:[%s219 + $0x860] sm:$0xff]
      %v494 = vld [vmem:[%s219 + $0x868] sm:$0xff]
      %v495 = vld [vmem:[%s219 + $0x870] sm:$0xff]
      %v496 = vld [vmem:[%s219 + $0x878] sm:$0xff]
      %v497 = vld [vmem:[%s219 + $0x880] sm:$0xff]
      %v498 = vld [vmem:[%s219 + $0x888] sm:$0xff]
      %v499 = vld [vmem:[%s219 + $0x890] sm:$0xff]
      %v500 = vld [vmem:[%s219 + $0x898] sm:$0xff]
      %v501 = vld [vmem:[%s219 + $0x8a0] sm:$0xff]
      %v502 = vld [vmem:[%s219 + $0x8a8] sm:$0xff]
      %v503 = vld [vmem:[%s219 + $0x8b0] sm:$0xff]
      %v504 = vld [vmem:[%s219 + $0x8b8] sm:$0xff]
      %v505 = vld [vmem:[%s219 + $0x8c0] sm:$0xff]
      %v506 = vld [vmem:[%s219 + $0x8c8] sm:$0xff]
      %v507 = vld [vmem:[%s219 + $0x8d0] sm:$0xff]
      %v508 = vld [vmem:[%s219 + $0x8d8] sm:$0xff]
      %v509 = vld [vmem:[%s219 + $0x8e0] sm:$0xff]
      %v510 = vld [vmem:[%s219 + $0x8e8] sm:$0xff]
      %v511 = vld [vmem:[%s219 + $0x8f0] sm:$0xff]
      %v512 = vld [vmem:[%s219 + $0x8f8] sm:$0xff]
      %v513 = vld [vmem:[%s219 + $0x900] sm:$0xff]
      %v514 = vld [vmem:[%s219 + $0x908] sm:$0xff]
      %v515 = vld [vmem:[%s219 + $0x910] sm:$0xff]
      %v516 = vld [vmem:[%s219 + $0x918] sm:$0xff]
      %v517 = vld [vmem:[%s219 + $0x920] sm:$0xff]
      %v518 = vld [vmem:[%s219 + $0x928] sm:$0xff]
      %v519 = vld [vmem:[%s219 + $0x930] sm:$0xff]
      %v520 = vld [vmem:[%s219 + $0x938] sm:$0xff]
      %v521 = vld [vmem:[%s219 + $0x940] sm:$0xff]
      %v522 = vld [vmem:[%s219 + $0x948] sm:$0xff]
      %v523 = vld [vmem:[%s219 + $0x950] sm:$0xff]
      %v524 = vld [vmem:[%s219 + $0x958] sm:$0xff]
      %v525 = vld [vmem:[%s219 + $0x960] sm:$0xff]
      %v526 = vld [vmem:[%s219 + $0x968] sm:$0xff]
      %v527 = vld [vmem:[%s219 + $0x970] sm:$0xff]
      %v528 = vld [vmem:[%s219 + $0x978] sm:$0xff]
      %v529 = vld [vmem:[%s219 + $0x980] sm:$0xff]
      %v530 = vld [vmem:[%s219 + $0x988] sm:$0xff]
      %v531 = vld [vmem:[%s219 + $0x990] sm:$0xff]
      %v532 = vld [vmem:[%s219 + $0x998] sm:$0xff]
      %v533 = vld [vmem:[%s219 + $0x9a0] sm:$0xff]
      %v534 = vld [vmem:[%s219 + $0x9a8] sm:$0xff]
      %v535 = vld [vmem:[%s219 + $0x9b0] sm:$0xff]
      %v536 = vld [vmem:[%s219 + $0x9b8] sm:$0xff]
      %v537 = vld [vmem:[%s219 + $0x9c0] sm:$0xff]
      %v538 = vld [vmem:[%s219 + $0x9c8] sm:$0xff]
      %v539 = vld [vmem:[%s219 + $0x9d0] sm:$0xff]
      %v540 = vld [vmem:[%s219 + $0x9d8] sm:$0xff]
      %v541 = vld [vmem:[%s219 + $0x9e0] sm:$0xff]
      %v542 = vld [vmem:[%s219 + $0x9e8] sm:$0xff]
      %v543 = vld [vmem:[%s219 + $0x9f0] sm:$0xff]
      %v544 = vld [vmem:[%s219 + $0x9f8] sm:$0xff]
      %v545 = vld [vmem:[%s219 + $0xa00] sm:$0xff]
      %v546 = vld [vmem:[%s219 + $0xa08] sm:$0xff]
      %v547 = vld [vmem:[%s219 + $0xa10] sm:$0xff]
      %v548 = vld [vmem:[%s219 + $0xa18] sm:$0xff]
      %v549 = vld [vmem:[%s219 + $0xa20] sm:$0xff]
      %v550 = vld [vmem:[%s219 + $0xa28] sm:$0xff]
      %v551 = vld [vmem:[%s219 + $0xa30] sm:$0xff]
      %v552 = vld [vmem:[%s219 + $0xa38] sm:$0xff]
      %v553 = vld [vmem:[%s219 + $0xa40] sm:$0xff]
      %v554 = vld [vmem:[%s219 + $0xa48] sm:$0xff]
      %v555 = vld [vmem:[%s219 + $0xa50] sm:$0xff]
      %v556 = vld [vmem:[%s219 + $0xa58] sm:$0xff]
      %v557 = vld [vmem:[%s219 + $0xa60] sm:$0xff]
      %v558 = vld [vmem:[%s219 + $0xa68] sm:$0xff]
      %v559 = vld [vmem:[%s219 + $0xa70] sm:$0xff]
      %v560 = vld [vmem:[%s219 + $0xa78] sm:$0xff]
      %v561 = vld [vmem:[%s219 + $0xa80] sm:$0xff]
      %v562 = vld [vmem:[%s219 + $0xa88] sm:$0xff]
      %v563 = vld [vmem:[%s219 + $0xa90] sm:$0xff]
      %v564 = vld [vmem:[%s219 + $0xa98] sm:$0xff]
      %v565 = vld [vmem:[%s219 + $0xaa0] sm:$0xff]
      %v566 = vld [vmem:[%s219 + $0xaa8] sm:$0xff]
      %v567 = vld [vmem:[%s219 + $0xab0] sm:$0xff]
      %v568 = vld [vmem:[%s219 + $0xab8] sm:$0xff]
      %v569 = vld [vmem:[%s219 + $0xac0] sm:$0xff]
      %v570 = vld [vmem:[%s219 + $0xac8] sm:$0xff]
      %v571 = vld [vmem:[%s219 + $0xad0] sm:$0xff]
      %v572 = vld [vmem:[%s219 + $0xad8] sm:$0xff]
      %v573 = vld [vmem:[%s219 + $0xae0] sm:$0xff]
      %v574 = vld [vmem:[%s219 + $0xae8] sm:$0xff]
      %v575 = vld [vmem:[%s219 + $0xaf0] sm:$0xff]
      %v576 = vld [vmem:[%s219 + $0xaf8] sm:$0xff]
      %v577 = vld [vmem:[%s219 + $0xb00] sm:$0xff]
      %v578 = vld [vmem:[%s219 + $0xb08] sm:$0xff]
      %v579 = vld [vmem:[%s219 + $0xb10] sm:$0xff]
      %v580 = vld [vmem:[%s219 + $0xb18] sm:$0xff]
      %v581 = vld [vmem:[%s219 + $0xb20] sm:$0xff]
      %v582 = vld [vmem:[%s219 + $0xb28] sm:$0xff]
      %v583 = vld [vmem:[%s219 + $0xb30] sm:$0xff]
      %v584 = vld [vmem:[%s219 + $0xb38] sm:$0xff]
      %v585 = vld [vmem:[%s219 + $0xb40] sm:$0xff]
      %v586 = vld [vmem:[%s219 + $0xb48] sm:$0xff]
      %v587 = vld [vmem:[%s219 + $0xb50] sm:$0xff]
      %v588 = vld [vmem:[%s219 + $0xb58] sm:$0xff]
      %v589 = vld [vmem:[%s219 + $0xb60] sm:$0xff]
      %v590 = vld [vmem:[%s219 + $0xb68] sm:$0xff]
      %v591 = vld [vmem:[%s219 + $0xb70] sm:$0xff]
      %v592 = vld [vmem:[%s219 + $0xb78] sm:$0xff]
      %v593 = vld [vmem:[%s219 + $0xb80] sm:$0xff]
      %v594 = vld [vmem:[%s219 + $0xb88] sm:$0xff]
      %v595 = vld [vmem:[%s219 + $0xb90] sm:$0xff]
      %v596 = vld [vmem:[%s219 + $0xb98] sm:$0xff]
      %v597 = vld [vmem:[%s219 + $0xba0] sm:$0xff]
      %v598 = vld [vmem:[%s219 + $0xba8] sm:$0xff]
      %v599 = vld [vmem:[%s219 + $0xbb0] sm:$0xff]
      %v600 = vld [vmem:[%s219 + $0xbb8] sm:$0xff]
      %v601 = vld [vmem:[%s219 + $0xbc0] sm:$0xff]
      %v602 = vld [vmem:[%s219 + $0xbc8] sm:$0xff]
      %v603 = vld [vmem:[%s219 + $0xbd0] sm:$0xff]
      %v604 = vld [vmem:[%s219 + $0xbd8] sm:$0xff]
      %v605 = vld [vmem:[%s219 + $0xbe0] sm:$0xff]
      %v606 = vld [vmem:[%s219 + $0xbe8] sm:$0xff]
      %v607 = vld [vmem:[%s219 + $0xbf0] sm:$0xff]
      %v608 = vld [vmem:[%s219 + $0xbf8] sm:$0xff]
      %v609 = vld [vmem:[%s219 + $0xc00] sm:$0xff]
      %v610 = vld [vmem:[%s219 + $0xc08] sm:$0xff]
      %v611 = vld [vmem:[%s219 + $0xc10] sm:$0xff]
      %v612 = vld [vmem:[%s219 + $0xc18] sm:$0xff]
      %v613 = vld [vmem:[%s219 + $0xc20] sm:$0xff]
      %v614 = vld [vmem:[%s219 + $0xc28] sm:$0xff]
      %v615 = vld [vmem:[%s219 + $0xc30] sm:$0xff]
      %v616 = vld [vmem:[%s219 + $0xc38] sm:$0xff]
      %v617 = vld [vmem:[%s219 + $0xc40] sm:$0xff]
      %v618 = vld [vmem:[%s219 + $0xc48] sm:$0xff]
      %v619 = vld [vmem:[%s219 + $0xc50] sm:$0xff]
      %v620 = vld [vmem:[%s219 + $0xc58] sm:$0xff]
      %v621 = vld [vmem:[%s219 + $0xc60] sm:$0xff]
      %v622 = vld [vmem:[%s219 + $0xc68] sm:$0xff]
      %v623 = vld [vmem:[%s219 + $0xc70] sm:$0xff]
      %v624 = vld [vmem:[%s219 + $0xc78] sm:$0xff]
      %v625 = vld [vmem:[%s219 + $0xc80] sm:$0xff]
      %v626 = vld [vmem:[%s219 + $0xc88] sm:$0xff]
      %v627 = vld [vmem:[%s219 + $0xc90] sm:$0xff]
      %v628 = vld [vmem:[%s219 + $0xc98] sm:$0xff]
      %v629 = vld [vmem:[%s219 + $0xca0] sm:$0xff]
      %v630 = vld [vmem:[%s219 + $0xca8] sm:$0xff]
      %v631 = vld [vmem:[%s219 + $0xcb0] sm:$0xff]
      %v632 = vld [vmem:[%s219 + $0xcb8] sm:$0xff]
      %v633 = vld [vmem:[%s219 + $0xcc0] sm:$0xff]
      %v634 = vld [vmem:[%s219 + $0xcc8] sm:$0xff]
      %v635 = vld [vmem:[%s219 + $0xcd0] sm:$0xff]
      %v636 = vld [vmem:[%s219 + $0xcd8] sm:$0xff]
      %v637 = vld [vmem:[%s219 + $0xce0] sm:$0xff]
      %v638 = vld [vmem:[%s219 + $0xce8] sm:$0xff]
      %v639 = vld [vmem:[%s219 + $0xcf0] sm:$0xff]
      %v640 = vld [vmem:[%s219 + $0xcf8] sm:$0xff]
      %v641 = vld [vmem:[%s219 + $0xd00] sm:$0xff]
      %v642 = vld [vmem:[%s219 + $0xd08] sm:$0xff]
      %v643 = vld [vmem:[%s219 + $0xd10] sm:$0xff]
      %v644 = vld [vmem:[%s219 + $0xd18] sm:$0xff]
      %v645 = vld [vmem:[%s219 + $0xd20] sm:$0xff]
      %v646 = vld [vmem:[%s219 + $0xd28] sm:$0xff]
      %v647 = vld [vmem:[%s219 + $0xd30] sm:$0xff]
      %v648 = vld [vmem:[%s219 + $0xd38] sm:$0xff]
      %v649 = vld [vmem:[%s219 + $0xd40] sm:$0xff]
      %v650 = vld [vmem:[%s219 + $0xd48] sm:$0xff]
      %v651 = vld [vmem:[%s219 + $0xd50] sm:$0xff]
      %v652 = vld [vmem:[%s219 + $0xd58] sm:$0xff]
      %v653 = vld [vmem:[%s219 + $0xd60] sm:$0xff]
      %v654 = vld [vmem:[%s219 + $0xd68] sm:$0xff]
      %v655 = vld [vmem:[%s219 + $0xd70] sm:$0xff]
      %v656 = vld [vmem:[%s219 + $0xd78] sm:$0xff]
      %v657 = vld [vmem:[%s219 + $0xd80] sm:$0xff]
      %v658 = vld [vmem:[%s219 + $0xd88] sm:$0xff]
      %v659 = vld [vmem:[%s219 + $0xd90] sm:$0xff]
      %v660 = vld [vmem:[%s219 + $0xd98] sm:$0xff]
      %v661 = vld [vmem:[%s219 + $0xda0] sm:$0xff]
      %v662 = vld [vmem:[%s219 + $0xda8] sm:$0xff]
      %v663 = vld [vmem:[%s219 + $0xdb0] sm:$0xff]
      %v664 = vld [vmem:[%s219 + $0xdb8] sm:$0xff]
      %v665 = vld [vmem:[%s219 + $0xdc0] sm:$0xff]
      %v666 = vld [vmem:[%s219 + $0xdc8] sm:$0xff]
      %v667 = vld [vmem:[%s219 + $0xdd0] sm:$0xff]
      %v668 = vld [vmem:[%s219 + $0xdd8] sm:$0xff]
      %v669 = vld [vmem:[%s219 + $0xde0] sm:$0xff]
      %v670 = vld [vmem:[%s219 + $0xde8] sm:$0xff]
      %v671 = vld [vmem:[%s219 + $0xdf0] sm:$0xff]
      %v672 = vld [vmem:[%s219 + $0xdf8] sm:$0xff]
      %v673 = vld [vmem:[%s219 + $0xe00] sm:$0xff]
      %v674 = vld [vmem:[%s219 + $0xe08] sm:$0xff]
      %v675 = vld [vmem:[%s219 + $0xe10] sm:$0xff]
      %v676 = vld [vmem:[%s219 + $0xe18] sm:$0xff]
      %v677 = vld [vmem:[%s219 + $0xe20] sm:$0xff]
      %v678 = vld [vmem:[%s219 + $0xe28] sm:$0xff]
      %v679 = vld [vmem:[%s219 + $0xe30] sm:$0xff]
      %v680 = vld [vmem:[%s219 + $0xe38] sm:$0xff]
      %v681 = vld [vmem:[%s219 + $0xe40] sm:$0xff]
      %v682 = vld [vmem:[%s219 + $0xe48] sm:$0xff]
      %v683 = vld [vmem:[%s219 + $0xe50] sm:$0xff]
      %v684 = vld [vmem:[%s219 + $0xe58] sm:$0xff]
      %v685 = vld [vmem:[%s219 + $0xe60] sm:$0xff]
      %v686 = vld [vmem:[%s219 + $0xe68] sm:$0xff]
      %v687 = vld [vmem:[%s219 + $0xe70] sm:$0xff]
      %v688 = vld [vmem:[%s219 + $0xe78] sm:$0xff]
      %v689 = vld [vmem:[%s219 + $0xe80] sm:$0xff]
      %v690 = vld [vmem:[%s219 + $0xe88] sm:$0xff]
      %v691 = vld [vmem:[%s219 + $0xe90] sm:$0xff]
      %v692 = vld [vmem:[%s219 + $0xe98] sm:$0xff]
      %v693 = vld [vmem:[%s219 + $0xea0] sm:$0xff]
      %v694 = vld [vmem:[%s219 + $0xea8] sm:$0xff]
      %v695 = vld [vmem:[%s219 + $0xeb0] sm:$0xff]
      %v696 = vld [vmem:[%s219 + $0xeb8] sm:$0xff]
      %v697 = vld [vmem:[%s219 + $0xec0] sm:$0xff]
      %v698 = vld [vmem:[%s219 + $0xec8] sm:$0xff]
      %v699 = vld [vmem:[%s219 + $0xed0] sm:$0xff]
      %v700 = vld [vmem:[%s219 + $0xed8] sm:$0xff]
      %v701 = vld [vmem:[%s219 + $0xee0] sm:$0xff]
      %v702 = vld [vmem:[%s219 + $0xee8] sm:$0xff]
      %v703 = vld [vmem:[%s219 + $0xef0] sm:$0xff]
      %v704 = vld [vmem:[%s219 + $0xef8] sm:$0xff]
      %v705 = vld [vmem:[%s219 + $0xf00] sm:$0xff]
      %v706 = vld [vmem:[%s219 + $0xf08] sm:$0xff]
      %v707 = vld [vmem:[%s219 + $0xf10] sm:$0xff]
      %v708 = vld [vmem:[%s219 + $0xf18] sm:$0xff]
      %v709 = vld [vmem:[%s219 + $0xf20] sm:$0xff]
      %v710 = vld [vmem:[%s219 + $0xf28] sm:$0xff]
      %v711 = vld [vmem:[%s219 + $0xf30] sm:$0xff]
      %v712 = vld [vmem:[%s219 + $0xf38] sm:$0xff]
      %v713 = vld [vmem:[%s219 + $0xf40] sm:$0xff]
      %v714 = vld [vmem:[%s219 + $0xf48] sm:$0xff]
      %v715 = vld [vmem:[%s219 + $0xf50] sm:$0xff]
      %v716 = vld [vmem:[%s219 + $0xf58] sm:$0xff]
      %v717 = vld [vmem:[%s219 + $0xf60] sm:$0xff]
      %v718 = vld [vmem:[%s219 + $0xf68] sm:$0xff]
      %v719 = vld [vmem:[%s219 + $0xf70] sm:$0xff]
      %v720 = vld [vmem:[%s219 + $0xf78] sm:$0xff]
      %v721 = vld [vmem:[%s219 + $0xf80] sm:$0xff]
      %v722 = vld [vmem:[%s219 + $0xf88] sm:$0xff]
      %v723 = vld [vmem:[%s219 + $0xf90] sm:$0xff]
      %v724 = vld [vmem:[%s219 + $0xf98] sm:$0xff]
      %v725 = vld [vmem:[%s219 + $0xfa0] sm:$0xff]
      %v726 = vld [vmem:[%s219 + $0xfa8] sm:$0xff]
      %v727 = vld [vmem:[%s219 + $0xfb0] sm:$0xff]
      %v728 = vld [vmem:[%s219 + $0xfb8] sm:$0xff]
      %v729 = vld [vmem:[%s219 + $0xfc0] sm:$0xff]
      %v730 = vld [vmem:[%s219 + $0xfc8] sm:$0xff]
      %v731 = vld [vmem:[%s219 + $0xfd0] sm:$0xff]
      %v732 = vld [vmem:[%s219 + $0xfd8] sm:$0xff]
      %v733 = vld [vmem:[%s219 + $0xfe0] sm:$0xff]
      %v734 = vld [vmem:[%s219 + $0xfe8] sm:$0xff]
      %v735 = vld [vmem:[%s219 + $0xff0] sm:$0xff]
      %v736 = vld [vmem:[%s219 + $0xff8] sm:$0xff]
      %v737 = vld [vmem:[%s219 + $0x1000] sm:$0xff]
      %v738 = vld [vmem:[%s219 + $0x1008] sm:$0xff]
      %v739 = vld [vmem:[%s219 + $0x1010] sm:$0xff]
      %v740 = vld [vmem:[%s219 + $0x1018] sm:$0xff]
      %v741 = vld [vmem:[%s219 + $0x1020] sm:$0xff]
      %v742 = vld [vmem:[%s219 + $0x1028] sm:$0xff]
      %v743 = vld [vmem:[%s219 + $0x1030] sm:$0xff]
      %v744 = vld [vmem:[%s219 + $0x1038] sm:$0xff]
      %v745 = vld [vmem:[%s219 + $0x1040] sm:$0xff]
      %v746 = vld [vmem:[%s219 + $0x1048] sm:$0xff]
      %v747 = vld [vmem:[%s219 + $0x1050] sm:$0xff]
      %v748 = vld [vmem:[%s219 + $0x1058] sm:$0xff]
      %v749 = vld [vmem:[%s219 + $0x1060] sm:$0xff]
      %v750 = vld [vmem:[%s219 + $0x1068] sm:$0xff]
      %v751 = vld [vmem:[%s219 + $0x1070] sm:$0xff]
      %v752 = vld [vmem:[%s219 + $0x1078] sm:$0xff]
      %v753 = vld [vmem:[%s219 + $0x1080] sm:$0xff]
      %v754 = vld [vmem:[%s219 + $0x1088] sm:$0xff]
      %v755 = vld [vmem:[%s219 + $0x1090] sm:$0xff]
      %v756 = vld [vmem:[%s219 + $0x1098] sm:$0xff]
      %v757 = vld [vmem:[%s219 + $0x10a0] sm:$0xff]
      %v758 = vld [vmem:[%s219 + $0x10a8] sm:$0xff]
      %v759 = vld [vmem:[%s219 + $0x10b0] sm:$0xff]
      %v760 = vld [vmem:[%s219 + $0x10b8] sm:$0xff]
      %v761 = vld [vmem:[%s219 + $0x10c0] sm:$0xff]
      %v762 = vld [vmem:[%s219 + $0x10c8] sm:$0xff]
      %v763 = vld [vmem:[%s219 + $0x10d0] sm:$0xff]
      %v764 = vld [vmem:[%s219 + $0x10d8] sm:$0xff]
      %v765 = vld [vmem:[%s219 + $0x10e0] sm:$0xff]
      %v766 = vld [vmem:[%s219 + $0x10e8] sm:$0xff]
      %v767 = vld [vmem:[%s219 + $0x10f0] sm:$0xff]
      %v768 = vld [vmem:[%s219 + $0x10f8] sm:$0xff]
      %v769 = vld [vmem:[%s219 + $0x1100] sm:$0xff]
      %v770 = vld [vmem:[%s219 + $0x1108] sm:$0xff]
      %v771 = vld [vmem:[%s219 + $0x1110] sm:$0xff]
      %v772 = vld [vmem:[%s219 + $0x1118] sm:$0xff]
      %v773 = vld [vmem:[%s219 + $0x1120] sm:$0xff]
      %v774 = vld [vmem:[%s219 + $0x1128] sm:$0xff]
      %v775 = vld [vmem:[%s219 + $0x1130] sm:$0xff]
      %v776 = vld [vmem:[%s219 + $0x1138] sm:$0xff]
      %v777 = vld [vmem:[%s219 + $0x1140] sm:$0xff]
      %v778 = vld [vmem:[%s219 + $0x1148] sm:$0xff]
      %v779 = vld [vmem:[%s219 + $0x1150] sm:$0xff]
      %v780 = vld [vmem:[%s219 + $0x1158] sm:$0xff]
      %v781 = vld [vmem:[%s219 + $0x1160] sm:$0xff]
      %v782 = vld [vmem:[%s219 + $0x1168] sm:$0xff]
      %v783 = vld [vmem:[%s219 + $0x1170] sm:$0xff]
      %v784 = vld [vmem:[%s219 + $0x1178] sm:$0xff]
      %v785 = vld [vmem:[%s219 + $0x1180] sm:$0xff]
      %v786 = vld [vmem:[%s219 + $0x1188] sm:$0xff]
      %v787 = vld [vmem:[%s219 + $0x1190] sm:$0xff]
      %v788 = vld [vmem:[%s219 + $0x1198] sm:$0xff]
      %v789 = vld [vmem:[%s219 + $0x11a0] sm:$0xff]
      %v790 = vld [vmem:[%s219 + $0x11a8] sm:$0xff]
      %v791 = vld [vmem:[%s219 + $0x11b0] sm:$0xff]
      %v792 = vld [vmem:[%s219 + $0x11b8] sm:$0xff]
      %v793 = vld [vmem:[%s219 + $0x11c0] sm:$0xff]
      %v794 = vld [vmem:[%s219 + $0x11c8] sm:$0xff]
      %v795 = vld [vmem:[%s219 + $0x11d0] sm:$0xff]
      %v796 = vld [vmem:[%s219 + $0x11d8] sm:$0xff]
      %v797 = vld [vmem:[%s219 + $0x11e0] sm:$0xff]
      %v798 = vld [vmem:[%s219 + $0x11e8] sm:$0xff]
      %v799 = vld [vmem:[%s219 + $0x11f0] sm:$0xff]
      %v800 = vld [vmem:[%s219 + $0x11f8] sm:$0xff]
      %v801 = vld [vmem:[%s219 + $0x1200] sm:$0xff]
      %v802 = vld [vmem:[%s219 + $0x1208] sm:$0xff]
      %v803 = vld [vmem:[%s219 + $0x1210] sm:$0xff]
      %v804 = vld [vmem:[%s219 + $0x1218] sm:$0xff]
      %v805 = vld [vmem:[%s219 + $0x1220] sm:$0xff]
      %v806 = vld [vmem:[%s219 + $0x1228] sm:$0xff]
      %v807 = vld [vmem:[%s219 + $0x1230] sm:$0xff]
      %v808 = vld [vmem:[%s219 + $0x1238] sm:$0xff]
      %v809 = vld [vmem:[%s219 + $0x1240] sm:$0xff]
      %v810 = vld [vmem:[%s219 + $0x1248] sm:$0xff]
      %v811 = vld [vmem:[%s219 + $0x1250] sm:$0xff]
      %v812 = vld [vmem:[%s219 + $0x1258] sm:$0xff]
      %v813 = vld [vmem:[%s219 + $0x1260] sm:$0xff]
      %v814 = vld [vmem:[%s219 + $0x1268] sm:$0xff]
      %v815 = vld [vmem:[%s219 + $0x1270] sm:$0xff]
      %v816 = vld [vmem:[%s219 + $0x1278] sm:$0xff]
      %v817 = vld [vmem:[%s219 + $0x1280] sm:$0xff]
      %v818 = vld [vmem:[%s219 + $0x1288] sm:$0xff]
      %v819 = vld [vmem:[%s219 + $0x1290] sm:$0xff]
      %v820 = vld [vmem:[%s219 + $0x1298] sm:$0xff]
      %v821 = vld [vmem:[%s219 + $0x12a0] sm:$0xff]
      %v822 = vld [vmem:[%s219 + $0x12a8] sm:$0xff]
      %v823 = vld [vmem:[%s219 + $0x12b0] sm:$0xff]
      %v824 = vld [vmem:[%s219 + $0x12b8] sm:$0xff]
      %v825 = vld [vmem:[%s219 + $0x12c0] sm:$0xff]
      %v826 = vld [vmem:[%s219 + $0x12c8] sm:$0xff]
      %v827 = vld [vmem:[%s219 + $0x12d0] sm:$0xff]
      %v828 = vld [vmem:[%s219 + $0x12d8] sm:$0xff]
      %v829 = vld [vmem:[%s219 + $0x12e0] sm:$0xff]
      %v830 = vld [vmem:[%s219 + $0x12e8] sm:$0xff]
      %v831 = vld [vmem:[%s219 + $0x12f0] sm:$0xff]
      %v832 = vld [vmem:[%s219 + $0x12f8] sm:$0xff]
      %v833 = vld [vmem:[%s219 + $0x1300] sm:$0xff]
      %v834 = vld [vmem:[%s219 + $0x1308] sm:$0xff]
      %v835 = vld [vmem:[%s219 + $0x1310] sm:$0xff]
      %v836 = vld [vmem:[%s219 + $0x1318] sm:$0xff]
      %v837 = vld [vmem:[%s219 + $0x1320] sm:$0xff]
      %v838 = vld [vmem:[%s219 + $0x1328] sm:$0xff]
      %v839 = vld [vmem:[%s219 + $0x1330] sm:$0xff]
      %v840 = vld [vmem:[%s219 + $0x1338] sm:$0xff]
      %v841 = vld [vmem:[%s219 + $0x1340] sm:$0xff]
      %v842 = vld [vmem:[%s219 + $0x1348] sm:$0xff]
      %v843 = vld [vmem:[%s219 + $0x1350] sm:$0xff]
      %v844 = vld [vmem:[%s219 + $0x1358] sm:$0xff]
      %v845 = vld [vmem:[%s219 + $0x1360] sm:$0xff]
      %v846 = vld [vmem:[%s219 + $0x1368] sm:$0xff]
      %v847 = vld [vmem:[%s219 + $0x1370] sm:$0xff]
      %v848 = vld [vmem:[%s219 + $0x1378] sm:$0xff]
      %v849 = vld [vmem:[%s219 + $0x1380] sm:$0xff]
      %v850 = vld [vmem:[%s219 + $0x1388] sm:$0xff]
      %v851 = vld [vmem:[%s219 + $0x1390] sm:$0xff]
      %v852 = vld [vmem:[%s219 + $0x1398] sm:$0xff]
      %v853 = vld [vmem:[%s219 + $0x13a0] sm:$0xff]
      %v854 = vld [vmem:[%s219 + $0x13a8] sm:$0xff]
      %v855 = vld [vmem:[%s219 + $0x13b0] sm:$0xff]
      %v856 = vld [vmem:[%s219 + $0x13b8] sm:$0xff]
      %v857 = vld [vmem:[%s219 + $0x13c0] sm:$0xff]
      %v858 = vld [vmem:[%s219 + $0x13c8] sm:$0xff]
      %v859 = vld [vmem:[%s219 + $0x13d0] sm:$0xff]
      %v860 = vld [vmem:[%s219 + $0x13d8] sm:$0xff]
      %v861 = vld [vmem:[%s219 + $0x13e0] sm:$0xff]
      %v862 = vld [vmem:[%s219 + $0x13e8] sm:$0xff]
      %v863 = vld [vmem:[%s219 + $0x13f0] sm:$0xff]
      %v864 = vld [vmem:[%s219 + $0x13f8] sm:$0xff]
      %v865 = vld [vmem:[%s219 + $0x1400] sm:$0xff]
      %v866 = vld [vmem:[%s219 + $0x1408] sm:$0xff]
      %v867 = vld [vmem:[%s219 + $0x1410] sm:$0xff]
      %v868 = vld [vmem:[%s219 + $0x1418] sm:$0xff]
      %v869 = vld [vmem:[%s219 + $0x1420] sm:$0xff]
      %v870 = vld [vmem:[%s219 + $0x1428] sm:$0xff]
      %v871 = vld [vmem:[%s219 + $0x1430] sm:$0xff]
      %v872 = vld [vmem:[%s219 + $0x1438] sm:$0xff]
      %v873 = vld [vmem:[%s219 + $0x1440] sm:$0xff]
      %v874 = vld [vmem:[%s219 + $0x1448] sm:$0xff]
      %v875 = vld [vmem:[%s219 + $0x1450] sm:$0xff]
      %v876 = vld [vmem:[%s219 + $0x1458] sm:$0xff]
      %v877 = vld [vmem:[%s219 + $0x1460] sm:$0xff]
      %v878 = vld [vmem:[%s219 + $0x1468] sm:$0xff]
      %v879 = vld [vmem:[%s219 + $0x1470] sm:$0xff]
      %v880 = vld [vmem:[%s219 + $0x1478] sm:$0xff]
      %v881 = vld [vmem:[%s219 + $0x1480] sm:$0xff]
      %v882 = vld [vmem:[%s219 + $0x1488] sm:$0xff]
      %v883 = vld [vmem:[%s219 + $0x1490] sm:$0xff]
      %v884 = vld [vmem:[%s219 + $0x1498] sm:$0xff]
      %v885 = vld [vmem:[%s219 + $0x14a0] sm:$0xff]
      %v886 = vld [vmem:[%s219 + $0x14a8] sm:$0xff]
      %v887 = vld [vmem:[%s219 + $0x14b0] sm:$0xff]
      %v888 = vld [vmem:[%s219 + $0x14b8] sm:$0xff]
      %v889 = vld [vmem:[%s219 + $0x14c0] sm:$0xff]
      %v890 = vld [vmem:[%s219 + $0x14c8] sm:$0xff]
      %v891 = vld [vmem:[%s219 + $0x14d0] sm:$0xff]
      %v892 = vld [vmem:[%s219 + $0x14d8] sm:$0xff]
      %v893 = vld [vmem:[%s219 + $0x14e0] sm:$0xff]
      %v894 = vld [vmem:[%s219 + $0x14e8] sm:$0xff]
      %v895 = vld [vmem:[%s219 + $0x14f0] sm:$0xff]
      %v896 = vld [vmem:[%s219 + $0x14f8] sm:$0xff]
      %v897 = vld [vmem:[%s219 + $0x1500] sm:$0xff]
      %v898 = vld [vmem:[%s219 + $0x1508] sm:$0xff]
      %v899 = vld [vmem:[%s219 + $0x1510] sm:$0xff]
      %v900 = vld [vmem:[%s219 + $0x1518] sm:$0xff]
      %v901 = vld [vmem:[%s219 + $0x1520] sm:$0xff]
      %v902 = vld [vmem:[%s219 + $0x1528] sm:$0xff]
      %v903 = vld [vmem:[%s219 + $0x1530] sm:$0xff]
      %v904 = vld [vmem:[%s219 + $0x1538] sm:$0xff]
      %v905 = vld [vmem:[%s219 + $0x1540] sm:$0xff]
      %v906 = vld [vmem:[%s219 + $0x1548] sm:$0xff]
      %v907 = vld [vmem:[%s219 + $0x1550] sm:$0xff]
      %v908 = vld [vmem:[%s219 + $0x1558] sm:$0xff]
      %v909 = vld [vmem:[%s219 + $0x1560] sm:$0xff]
      %v910 = vld [vmem:[%s219 + $0x1568] sm:$0xff]
      %v911 = vld [vmem:[%s219 + $0x1570] sm:$0xff]
      %v912 = vld [vmem:[%s219 + $0x1578] sm:$0xff]
      %v913 = vld [vmem:[%s219 + $0x1580] sm:$0xff]
      %v914 = vld [vmem:[%s219 + $0x1588] sm:$0xff]
      %v915 = vld [vmem:[%s219 + $0x1590] sm:$0xff]
      %v916 = vld [vmem:[%s219 + $0x1598] sm:$0xff]
      %v917 = vld [vmem:[%s219 + $0x15a0] sm:$0xff]
      %v918 = vld [vmem:[%s219 + $0x15a8] sm:$0xff]
      %v919 = vld [vmem:[%s219 + $0x15b0] sm:$0xff]
      %v920 = vld [vmem:[%s219 + $0x15b8] sm:$0xff]
      %v921 = vld [vmem:[%s219 + $0x15c0] sm:$0xff]
      %v922 = vld [vmem:[%s219 + $0x15c8] sm:$0xff]
      %v923 = vld [vmem:[%s219 + $0x15d0] sm:$0xff]
      %v924 = vld [vmem:[%s219 + $0x15d8] sm:$0xff]
      %v925 = vld [vmem:[%s219 + $0x15e0] sm:$0xff]
      %v926 = vld [vmem:[%s219 + $0x15e8] sm:$0xff]
      %v927 = vld [vmem:[%s219 + $0x15f0] sm:$0xff]
      %v928 = vld [vmem:[%s219 + $0x15f8] sm:$0xff]
      %v929 = vld [vmem:[%s219 + $0x1600] sm:$0xff]
      %v930 = vld [vmem:[%s219 + $0x1608] sm:$0xff]
      %v931 = vld [vmem:[%s219 + $0x1610] sm:$0xff]
      %v932 = vld [vmem:[%s219 + $0x1618] sm:$0xff]
      %v933 = vld [vmem:[%s219 + $0x1620] sm:$0xff]
      %v934 = vld [vmem:[%s219 + $0x1628] sm:$0xff]
      %v935 = vld [vmem:[%s219 + $0x1630] sm:$0xff]
      %v936 = vld [vmem:[%s219 + $0x1638] sm:$0xff]
      %v937 = vld [vmem:[%s219 + $0x1640] sm:$0xff]
      %v938 = vld [vmem:[%s219 + $0x1648] sm:$0xff]
      %v939 = vld [vmem:[%s219 + $0x1650] sm:$0xff]
      %v940 = vld [vmem:[%s219 + $0x1658] sm:$0xff]
      %v941 = vld [vmem:[%s219 + $0x1660] sm:$0xff]
      %v942 = vld [vmem:[%s219 + $0x1668] sm:$0xff]
      %v943 = vld [vmem:[%s219 + $0x1670] sm:$0xff]
      %v944 = vld [vmem:[%s219 + $0x1678] sm:$0xff]
      %v945 = vld [vmem:[%s219 + $0x1680] sm:$0xff]
      %v946 = vld [vmem:[%s219 + $0x1688] sm:$0xff]
      %v947 = vld [vmem:[%s219 + $0x1690] sm:$0xff]
      %v948 = vld [vmem:[%s219 + $0x1698] sm:$0xff]
      %v949 = vld [vmem:[%s219 + $0x16a0] sm:$0xff]
      %v950 = vld [vmem:[%s219 + $0x16a8] sm:$0xff]
      %v951 = vld [vmem:[%s219 + $0x16b0] sm:$0xff]
      %v952 = vld [vmem:[%s219 + $0x16b8] sm:$0xff]
      %v953 = vld [vmem:[%s219 + $0x16c0] sm:$0xff]
      %v954 = vld [vmem:[%s219 + $0x16c8] sm:$0xff]
      %v955 = vld [vmem:[%s219 + $0x16d0] sm:$0xff]
      %v956 = vld [vmem:[%s219 + $0x16d8] sm:$0xff]
      %v957 = vld [vmem:[%s219 + $0x16e0] sm:$0xff]
      %v958 = vld [vmem:[%s219 + $0x16e8] sm:$0xff]
      %v959 = vld [vmem:[%s219 + $0x16f0] sm:$0xff]
      %v960 = vld [vmem:[%s219 + $0x16f8] sm:$0xff]
      %v961 = vld [vmem:[%s219 + $0x1700] sm:$0xff]
      %v962 = vld [vmem:[%s219 + $0x1708] sm:$0xff]
      %v963 = vld [vmem:[%s219 + $0x1710] sm:$0xff]
      %v964 = vld [vmem:[%s219 + $0x1718] sm:$0xff]
      %v965 = vld [vmem:[%s219 + $0x1720] sm:$0xff]
      %v966 = vld [vmem:[%s219 + $0x1728] sm:$0xff]
      %v967 = vld [vmem:[%s219 + $0x1730] sm:$0xff]
      %v968 = vld [vmem:[%s219 + $0x1738] sm:$0xff]
      %v969 = vld [vmem:[%s219 + $0x1740] sm:$0xff]
      %v970 = vld [vmem:[%s219 + $0x1748] sm:$0xff]
      %v971 = vld [vmem:[%s219 + $0x1750] sm:$0xff]
      %v972 = vld [vmem:[%s219 + $0x1758] sm:$0xff]
      %v973 = vld [vmem:[%s219 + $0x1760] sm:$0xff]
      %v974 = vld [vmem:[%s219 + $0x1768] sm:$0xff]
      %v975 = vld [vmem:[%s219 + $0x1770] sm:$0xff]
      %v976 = vld [vmem:[%s219 + $0x1778] sm:$0xff]
      %v977 = vld [vmem:[%s219 + $0x1780] sm:$0xff]
      %v978 = vld [vmem:[%s219 + $0x1788] sm:$0xff]
      %v979 = vld [vmem:[%s219 + $0x1790] sm:$0xff]
      %v980 = vld [vmem:[%s219 + $0x1798] sm:$0xff]
      %v981 = vld [vmem:[%s219 + $0x17a0] sm:$0xff]
      %v982 = vld [vmem:[%s219 + $0x17a8] sm:$0xff]
      %v983 = vld [vmem:[%s219 + $0x17b0] sm:$0xff]
      %v984 = vld [vmem:[%s219 + $0x17b8] sm:$0xff]
      %v985 = vld [vmem:[%s219 + $0x17c0] sm:$0xff]
      %v986 = vld [vmem:[%s219 + $0x17c8] sm:$0xff]
      %v987 = vld [vmem:[%s219 + $0x17d0] sm:$0xff]
      %v988 = vld [vmem:[%s219 + $0x17d8] sm:$0xff]
      %v989 = vld [vmem:[%s219 + $0x17e0] sm:$0xff]
      %v990 = vld [vmem:[%s219 + $0x17e8] sm:$0xff]
      %v991 = vld [vmem:[%s219 + $0x17f0] sm:$0xff]
      %v992 = vld [vmem:[%s219 + $0x17f8] sm:$0xff]
      %v993 = vld [vmem:[%s219 + $0x1800] sm:$0xff]
      %v994 = vld [vmem:[%s219 + $0x1808] sm:$0xff]
      %v995 = vld [vmem:[%s219 + $0x1810] sm:$0xff]
      %v996 = vld [vmem:[%s219 + $0x1818] sm:$0xff]
      %v997 = vld [vmem:[%s219 + $0x1820] sm:$0xff]
      %v998 = vld [vmem:[%s219 + $0x1828] sm:$0xff]
      %v999 = vld [vmem:[%s219 + $0x1830] sm:$0xff]
      %v1000 = vld [vmem:[%s219 + $0x1838] sm:$0xff]
      %v1001 = vld [vmem:[%s219 + $0x1840] sm:$0xff]
      %v1002 = vld [vmem:[%s219 + $0x1848] sm:$0xff]
      %v1003 = vld [vmem:[%s219 + $0x1850] sm:$0xff]
      %v1004 = vld [vmem:[%s219 + $0x1858] sm:$0xff]
      %v1005 = vld [vmem:[%s219 + $0x1860] sm:$0xff]
      %v1006 = vld [vmem:[%s219 + $0x1868] sm:$0xff]
      %v1007 = vld [vmem:[%s219 + $0x1870] sm:$0xff]
      %v1008 = vld [vmem:[%s219 + $0x1878] sm:$0xff]
      %v1009 = vld [vmem:[%s219 + $0x1880] sm:$0xff]
      %v1010 = vld [vmem:[%s219 + $0x1888] sm:$0xff]
      %v1011 = vld [vmem:[%s219 + $0x1890] sm:$0xff]
      %v1012 = vld [vmem:[%s219 + $0x1898] sm:$0xff]
      %v1013 = vld [vmem:[%s219 + $0x18a0] sm:$0xff]
      %v1014 = vld [vmem:[%s219 + $0x18a8] sm:$0xff]
      %v1015 = vld [vmem:[%s219 + $0x18b0] sm:$0xff]
      %v1016 = vld [vmem:[%s219 + $0x18b8] sm:$0xff]
      %v1017 = vld [vmem:[%s219 + $0x18c0] sm:$0xff]
      %v1018 = vld [vmem:[%s219 + $0x18c8] sm:$0xff]
      %v1019 = vld [vmem:[%s219 + $0x18d0] sm:$0xff]
      %v1020 = vld [vmem:[%s219 + $0x18d8] sm:$0xff]
      %v1021 = vld [vmem:[%s219 + $0x18e0] sm:$0xff]
      %v1022 = vld [vmem:[%s219 + $0x18e8] sm:$0xff]
      %v1023 = vld [vmem:[%s219 + $0x18f0] sm:$0xff]
      %v1024 = vld [vmem:[%s219 + $0x18f8] sm:$0xff]
      %v1025 = vld [vmem:[%s219 + $0x1900] sm:$0xff]
      %v1026 = vld [vmem:[%s219 + $0x1908] sm:$0xff]
      %v1027 = vld [vmem:[%s219 + $0x1910] sm:$0xff]
      %v1028 = vld [vmem:[%s219 + $0x1918] sm:$0xff]
      %v1029 = vld [vmem:[%s219 + $0x1920] sm:$0xff]
      %v1030 = vld [vmem:[%s219 + $0x1928] sm:$0xff]
      %v1031 = vld [vmem:[%s219 + $0x1930] sm:$0xff]
      %v1032 = vld [vmem:[%s219 + $0x1938] sm:$0xff]
      %v1033 = vld [vmem:[%s219 + $0x1940] sm:$0xff]
      %v1034 = vld [vmem:[%s219 + $0x1948] sm:$0xff]
      %v1035 = vld [vmem:[%s219 + $0x1950] sm:$0xff]
      %v1036 = vld [vmem:[%s219 + $0x1958] sm:$0xff]
      %v1037 = vld [vmem:[%s219 + $0x1960] sm:$0xff]
      %v1038 = vld [vmem:[%s219 + $0x1968] sm:$0xff]
      %v1039 = vld [vmem:[%s219 + $0x1970] sm:$0xff]
      %v1040 = vld [vmem:[%s219 + $0x1978] sm:$0xff]
      %v1041 = vld [vmem:[%s219 + $0x1980] sm:$0xff]
      %v1042 = vld [vmem:[%s219 + $0x1988] sm:$0xff]
      %v1043 = vld [vmem:[%s219 + $0x1990] sm:$0xff]
      %v1044 = vld [vmem:[%s219 + $0x1998] sm:$0xff]
      %v1045 = vld [vmem:[%s219 + $0x19a0] sm:$0xff]
      %v1046 = vld [vmem:[%s219 + $0x19a8] sm:$0xff]
      %v1047 = vld [vmem:[%s219 + $0x19b0] sm:$0xff]
      %v1048 = vld [vmem:[%s219 + $0x19b8] sm:$0xff]
      %v1049 = vld [vmem:[%s219 + $0x19c0] sm:$0xff]
      %v1050 = vld [vmem:[%s219 + $0x19c8] sm:$0xff]
      %v1051 = vld [vmem:[%s219 + $0x19d0] sm:$0xff]
      %v1052 = vld [vmem:[%s219 + $0x19d8] sm:$0xff]
      %v1053 = vld [vmem:[%s219 + $0x19e0] sm:$0xff]
      %v1054 = vld [vmem:[%s219 + $0x19e8] sm:$0xff]
      %v1055 = vld [vmem:[%s219 + $0x19f0] sm:$0xff]
      %v1056 = vld [vmem:[%s219 + $0x19f8] sm:$0xff]
      %v1057 = vld [vmem:[%s219 + $0x1a00] sm:$0xff]
      %v1058 = vld [vmem:[%s219 + $0x1a08] sm:$0xff]
      %v1059 = vld [vmem:[%s219 + $0x1a10] sm:$0xff]
      %v1060 = vld [vmem:[%s219 + $0x1a18] sm:$0xff]
      %v1061 = vld [vmem:[%s219 + $0x1a20] sm:$0xff]
      %v1062 = vld [vmem:[%s219 + $0x1a28] sm:$0xff]
      %v1063 = vld [vmem:[%s219 + $0x1a30] sm:$0xff]
      %v1064 = vld [vmem:[%s219 + $0x1a38] sm:$0xff]
      %v1065 = vld [vmem:[%s219 + $0x1a40] sm:$0xff]
      %v1066 = vld [vmem:[%s219 + $0x1a48] sm:$0xff]
      %v1067 = vld [vmem:[%s219 + $0x1a50] sm:$0xff]
      %v1068 = vld [vmem:[%s219 + $0x1a58] sm:$0xff]
      %v1069 = vld [vmem:[%s219 + $0x1a60] sm:$0xff]
      %v1070 = vld [vmem:[%s219 + $0x1a68] sm:$0xff]
      %v1071 = vld [vmem:[%s219 + $0x1a70] sm:$0xff]
      %v1072 = vld [vmem:[%s219 + $0x1a78] sm:$0xff]
      %v1073 = vld [vmem:[%s219 + $0x1a80] sm:$0xff]
      %v1074 = vld [vmem:[%s219 + $0x1a88] sm:$0xff]
      %v1075 = vld [vmem:[%s219 + $0x1a90] sm:$0xff]
      %v1076 = vld [vmem:[%s219 + $0x1a98] sm:$0xff]
      %v1077 = vld [vmem:[%s219 + $0x1aa0] sm:$0xff]
      %v1078 = vld [vmem:[%s219 + $0x1aa8] sm:$0xff]
      %v1079 = vld [vmem:[%s219 + $0x1ab0] sm:$0xff]
      %v1080 = vld [vmem:[%s219 + $0x1ab8] sm:$0xff]
      %v1081 = vld [vmem:[%s219 + $0x1ac0] sm:$0xff]
      %v1082 = vld [vmem:[%s219 + $0x1ac8] sm:$0xff]
      %v1083 = vld [vmem:[%s219 + $0x1ad0] sm:$0xff]
      %v1084 = vld [vmem:[%s219 + $0x1ad8] sm:$0xff]
      %v1085 = vld [vmem:[%s219 + $0x1ae0] sm:$0xff]
      %v1086 = vld [vmem:[%s219 + $0x1ae8] sm:$0xff]
      %v1087 = vld [vmem:[%s219 + $0x1af0] sm:$0xff]
      %v1088 = vld [vmem:[%s219 + $0x1af8] sm:$0xff]
      %v1089 = vld [vmem:[%s219 + $0x1b00] sm:$0xff]
      %v1090 = vld [vmem:[%s219 + $0x1b08] sm:$0xff]
      %v1091 = vld [vmem:[%s219 + $0x1b10] sm:$0xff]
      %v1092 = vld [vmem:[%s219 + $0x1b18] sm:$0xff]
      %v1093 = vld [vmem:[%s219 + $0x1b20] sm:$0xff]
      %v1094 = vld [vmem:[%s219 + $0x1b28] sm:$0xff]
      %v1095 = vld [vmem:[%s219 + $0x1b30] sm:$0xff]
      %v1096 = vld [vmem:[%s219 + $0x1b38] sm:$0xff]
      %v1097 = vld [vmem:[%s219 + $0x1b40] sm:$0xff]
      %v1098 = vld [vmem:[%s219 + $0x1b48] sm:$0xff]
      %v1099 = vld [vmem:[%s219 + $0x1b50] sm:$0xff]
      %v1100 = vld [vmem:[%s219 + $0x1b58] sm:$0xff]
      %v1101 = vld [vmem:[%s219 + $0x1b60] sm:$0xff]
      %v1102 = vld [vmem:[%s219 + $0x1b68] sm:$0xff]
      %v1103 = vld [vmem:[%s219 + $0x1b70] sm:$0xff]
      %v1104 = vld [vmem:[%s219 + $0x1b78] sm:$0xff]
      %v1105 = vld [vmem:[%s219 + $0x1b80] sm:$0xff]
      %v1106 = vld [vmem:[%s219 + $0x1b88] sm:$0xff]
      %v1107 = vld [vmem:[%s219 + $0x1b90] sm:$0xff]
      %v1108 = vld [vmem:[%s219 + $0x1b98] sm:$0xff]
      %v1109 = vld [vmem:[%s219 + $0x1ba0] sm:$0xff]
      %v1110 = vld [vmem:[%s219 + $0x1ba8] sm:$0xff]
      %v1111 = vld [vmem:[%s219 + $0x1bb0] sm:$0xff]
      %v1112 = vld [vmem:[%s219 + $0x1bb8] sm:$0xff]
      %v1113 = vld [vmem:[%s219 + $0x1bc0] sm:$0xff]
      %v1114 = vld [vmem:[%s219 + $0x1bc8] sm:$0xff]
      %v1115 = vld [vmem:[%s219 + $0x1bd0] sm:$0xff]
      %v1116 = vld [vmem:[%s219 + $0x1bd8] sm:$0xff]
      %v1117 = vld [vmem:[%s219 + $0x1be0] sm:$0xff]
      %v1118 = vld [vmem:[%s219 + $0x1be8] sm:$0xff]
      %v1119 = vld [vmem:[%s219 + $0x1bf0] sm:$0xff]
      %v1120 = vld [vmem:[%s219 + $0x1bf8] sm:$0xff]
      %v1121 = vld [vmem:[%s219 + $0x1c00] sm:$0xff]
      %v1122 = vld [vmem:[%s219 + $0x1c08] sm:$0xff]
      %v1123 = vld [vmem:[%s219 + $0x1c10] sm:$0xff]
      %v1124 = vld [vmem:[%s219 + $0x1c18] sm:$0xff]
      %v1125 = vld [vmem:[%s219 + $0x1c20] sm:$0xff]
      %v1126 = vld [vmem:[%s219 + $0x1c28] sm:$0xff]
      %v1127 = vld [vmem:[%s219 + $0x1c30] sm:$0xff]
      %v1128 = vld [vmem:[%s219 + $0x1c38] sm:$0xff]
      %v1129 = vld [vmem:[%s219 + $0x1c40] sm:$0xff]
      %v1130 = vld [vmem:[%s219 + $0x1c48] sm:$0xff]
      %v1131 = vld [vmem:[%s219 + $0x1c50] sm:$0xff]
      %v1132 = vld [vmem:[%s219 + $0x1c58] sm:$0xff]
      %v1133 = vld [vmem:[%s219 + $0x1c60] sm:$0xff]
      %v1134 = vld [vmem:[%s219 + $0x1c68] sm:$0xff]
      %v1135 = vld [vmem:[%s219 + $0x1c70] sm:$0xff]
      %v1136 = vld [vmem:[%s219 + $0x1c78] sm:$0xff]
      %v1137 = vld [vmem:[%s219 + $0x1c80] sm:$0xff]
      %v1138 = vld [vmem:[%s219 + $0x1c88] sm:$0xff]
      %v1139 = vld [vmem:[%s219 + $0x1c90] sm:$0xff]
      %v1140 = vld [vmem:[%s219 + $0x1c98] sm:$0xff]
      %v1141 = vld [vmem:[%s219 + $0x1ca0] sm:$0xff]
      %v1142 = vld [vmem:[%s219 + $0x1ca8] sm:$0xff]
      %v1143 = vld [vmem:[%s219 + $0x1cb0] sm:$0xff]
      %v1144 = vld [vmem:[%s219 + $0x1cb8] sm:$0xff]
      %v1145 = vld [vmem:[%s219 + $0x1cc0] sm:$0xff]
      %v1146 = vld [vmem:[%s219 + $0x1cc8] sm:$0xff]
      %v1147 = vld [vmem:[%s219 + $0x1cd0] sm:$0xff]
      %v1148 = vld [vmem:[%s219 + $0x1cd8] sm:$0xff]
      %v1149 = vld [vmem:[%s219 + $0x1ce0] sm:$0xff]
      %v1150 = vld [vmem:[%s219 + $0x1ce8] sm:$0xff]
      %v1151 = vld [vmem:[%s219 + $0x1cf0] sm:$0xff]
      %v1152 = vld [vmem:[%s219 + $0x1cf8] sm:$0xff]
      %v1153 = vld [vmem:[%s219 + $0x1d00] sm:$0xff]
      %v1154 = vld [vmem:[%s219 + $0x1d08] sm:$0xff]
      %v1155 = vld [vmem:[%s219 + $0x1d10] sm:$0xff]
      %v1156 = vld [vmem:[%s219 + $0x1d18] sm:$0xff]
      %v1157 = vld [vmem:[%s219 + $0x1d20] sm:$0xff]
      %v1158 = vld [vmem:[%s219 + $0x1d28] sm:$0xff]
      %v1159 = vld [vmem:[%s219 + $0x1d30] sm:$0xff]
      %v1160 = vld [vmem:[%s219 + $0x1d38] sm:$0xff]
      %v1161 = vld [vmem:[%s219 + $0x1d40] sm:$0xff]
      %v1162 = vld [vmem:[%s219 + $0x1d48] sm:$0xff]
      %v1163 = vld [vmem:[%s219 + $0x1d50] sm:$0xff]
      %v1164 = vld [vmem:[%s219 + $0x1d58] sm:$0xff]
      %v1165 = vld [vmem:[%s219 + $0x1d60] sm:$0xff]
      %v1166 = vld [vmem:[%s219 + $0x1d68] sm:$0xff]
      %v1167 = vld [vmem:[%s219 + $0x1d70] sm:$0xff]
      %v1168 = vld [vmem:[%s219 + $0x1d78] sm:$0xff]
      %v1169 = vld [vmem:[%s219 + $0x1d80] sm:$0xff]
      %v1170 = vld [vmem:[%s219 + $0x1d88] sm:$0xff]
      %v1171 = vld [vmem:[%s219 + $0x1d90] sm:$0xff]
      %v1172 = vld [vmem:[%s219 + $0x1d98] sm:$0xff]
      %v1173 = vld [vmem:[%s219 + $0x1da0] sm:$0xff]
      %v1174 = vld [vmem:[%s219 + $0x1da8] sm:$0xff]
      %v1175 = vld [vmem:[%s219 + $0x1db0] sm:$0xff]
      %v1176 = vld [vmem:[%s219 + $0x1db8] sm:$0xff]
      %v1177 = vld [vmem:[%s219 + $0x1dc0] sm:$0xff]
      %v1178 = vld [vmem:[%s219 + $0x1dc8] sm:$0xff]
      %v1179 = vld [vmem:[%s219 + $0x1dd0] sm:$0xff]
      %v1180 = vld [vmem:[%s219 + $0x1dd8] sm:$0xff]
      %v1181 = vld [vmem:[%s219 + $0x1de0] sm:$0xff]
      %v1182 = vld [vmem:[%s219 + $0x1de8] sm:$0xff]
      %v1183 = vld [vmem:[%s219 + $0x1df0] sm:$0xff]
      %v1184 = vld [vmem:[%s219 + $0x1df8] sm:$0xff]
      %v1185 = vld [vmem:[%s219 + $0x1e00] sm:$0xff]
      %v1186 = vld [vmem:[%s219 + $0x1e08] sm:$0xff]
      %v1187 = vld [vmem:[%s219 + $0x1e10] sm:$0xff]
      %v1188 = vld [vmem:[%s219 + $0x1e18] sm:$0xff]
      %v1189 = vld [vmem:[%s219 + $0x1e20] sm:$0xff]
      %v1190 = vld [vmem:[%s219 + $0x1e28] sm:$0xff]
      %v1191 = vld [vmem:[%s219 + $0x1e30] sm:$0xff]
      %v1192 = vld [vmem:[%s219 + $0x1e38] sm:$0xff]
      %v1193 = vld [vmem:[%s219 + $0x1e40] sm:$0xff]
      %v1194 = vld [vmem:[%s219 + $0x1e48] sm:$0xff]
      %v1195 = vld [vmem:[%s219 + $0x1e50] sm:$0xff]
      %v1196 = vld [vmem:[%s219 + $0x1e58] sm:$0xff]
      %v1197 = vld [vmem:[%s219 + $0x1e60] sm:$0xff]
      %v1198 = vld [vmem:[%s219 + $0x1e68] sm:$0xff]
      %v1199 = vld [vmem:[%s219 + $0x1e70] sm:$0xff]
      %v1200 = vld [vmem:[%s219 + $0x1e78] sm:$0xff]
      %v1201 = vld [vmem:[%s219 + $0x1e80] sm:$0xff]
      %v1202 = vld [vmem:[%s219 + $0x1e88] sm:$0xff]
      %v1203 = vld [vmem:[%s219 + $0x1e90] sm:$0xff]
      %v1204 = vld [vmem:[%s219 + $0x1e98] sm:$0xff]
      %v1205 = vld [vmem:[%s219 + $0x1ea0] sm:$0xff]
      %v1206 = vld [vmem:[%s219 + $0x1ea8] sm:$0xff]
      %v1207 = vld [vmem:[%s219 + $0x1eb0] sm:$0xff]
      %v1208 = vld [vmem:[%s219 + $0x1eb8] sm:$0xff]
      %v1209 = vld [vmem:[%s219 + $0x1ec0] sm:$0xff]
      %v1210 = vld [vmem:[%s219 + $0x1ec8] sm:$0xff]
      %v1211 = vld [vmem:[%s219 + $0x1ed0] sm:$0xff]
      %v1212 = vld [vmem:[%s219 + $0x1ed8] sm:$0xff]
      %v1213 = vld [vmem:[%s219 + $0x1ee0] sm:$0xff]
      %v1214 = vld [vmem:[%s219 + $0x1ee8] sm:$0xff]
      %v1215 = vld [vmem:[%s219 + $0x1ef0] sm:$0xff]
      %v1216 = vld [vmem:[%s219 + $0x1ef8] sm:$0xff]
      %v1217 = vld [vmem:[%s219 + $0x1f00] sm:$0xff]
      %v1218 = vld [vmem:[%s219 + $0x1f08] sm:$0xff]
      %v1219 = vld [vmem:[%s219 + $0x1f10] sm:$0xff]
      %v1220 = vld [vmem:[%s219 + $0x1f18] sm:$0xff]
      %v1221 = vld [vmem:[%s219 + $0x1f20] sm:$0xff]
      %v1222 = vld [vmem:[%s219 + $0x1f28] sm:$0xff]
      %v1223 = vld [vmem:[%s219 + $0x1f30] sm:$0xff]
      %v1224 = vld [vmem:[%s219 + $0x1f38] sm:$0xff]
      %v1225 = vld [vmem:[%s219 + $0x1f40] sm:$0xff]
      %v1226 = vld [vmem:[%s219 + $0x1f48] sm:$0xff]
      %v1227 = vld [vmem:[%s219 + $0x1f50] sm:$0xff]
      %v1228 = vld [vmem:[%s219 + $0x1f58] sm:$0xff]
      %v1229 = vld [vmem:[%s219 + $0x1f60] sm:$0xff]
      %v1230 = vld [vmem:[%s219 + $0x1f68] sm:$0xff]
      %v1231 = vld [vmem:[%s219 + $0x1f70] sm:$0xff]
      %v1232 = vld [vmem:[%s219 + $0x1f78] sm:$0xff]
      %v1233 = vld [vmem:[%s219 + $0x1f80] sm:$0xff]
      %v1234 = vld [vmem:[%s219 + $0x1f88] sm:$0xff]
      %v1235 = vld [vmem:[%s219 + $0x1f90] sm:$0xff]
      %v1236 = vld [vmem:[%s219 + $0x1f98] sm:$0xff]
      %v1237 = vld [vmem:[%s219 + $0x1fa0] sm:$0xff]
      %v1238 = vld [vmem:[%s219 + $0x1fa8] sm:$0xff]
      %v1239 = vld [vmem:[%s219 + $0x1fb0] sm:$0xff]
      %v1240 = vld [vmem:[%s219 + $0x1fb8] sm:$0xff]
      %v1241 = vld [vmem:[%s219 + $0x1fc0] sm:$0xff]
      %v1242 = vld [vmem:[%s219 + $0x1fc8] sm:$0xff]
      %v1243 = vld [vmem:[%s219 + $0x1fd0] sm:$0xff]
      %v1244 = vld [vmem:[%s219 + $0x1fd8] sm:$0xff]
      %v1245 = vld [vmem:[%s219 + $0x1fe0] sm:$0xff]
      %v1246 = vld [vmem:[%s219 + $0x1fe8] sm:$0xff]
      %v1247 = vld [vmem:[%s219 + $0x1ff0] sm:$0xff]
      %v1248 = vld [vmem:[%s219 + $0x1ff8] sm:$0xff]
      %v1249 = vadd.f32 %v225, %v226
      %v1250 = vadd.f32 %v1249, %v227
      %v1251 = vadd.f32 %v1250, %v228
      %v1252 = vadd.f32 %v1251, %v229
      %v1253 = vadd.f32 %v1252, %v230
      %v1254 = vadd.f32 %v1253, %v231
      %v1255 = vadd.f32 %v1254, %v232
      %v1256 = vadd.f32 %v1255, %v233
      %v1257 = vadd.f32 %v1256, %v234
      %v1258 = vadd.f32 %v1257, %v235
      %v1259 = vadd.f32 %v1258, %v236
      %v1260 = vadd.f32 %v1259, %v237
      %v1261 = vadd.f32 %v1260, %v238
      %v1262 = vadd.f32 %v1261, %v239
      %v1263 = vadd.f32 %v1262, %v240
      %1264 = vadd.xlane.f32.xlu0 %v1263
      %v1265 = vpop.xlane.xlu0 %1264
      %v1266 = vadd.f32 %v241, %v242
      %v1267 = vadd.f32 %v1266, %v243
      %v1268 = vadd.f32 %v1267, %v244
      %v1269 = vadd.f32 %v1268, %v245
      %v1270 = vadd.f32 %v1269, %v246
      %v1271 = vadd.f32 %v1270, %v247
      %v1272 = vadd.f32 %v1271, %v248
      %v1273 = vadd.f32 %v1272, %v249
      %v1274 = vadd.f32 %v1273, %v250
      %v1275 = vadd.f32 %v1274, %v251
      %v1276 = vadd.f32 %v1275, %v252
      %v1277 = vadd.f32 %v1276, %v253
      %v1278 = vadd.f32 %v1277, %v254
      %v1279 = vadd.f32 %v1278, %v255
      %v1280 = vadd.f32 %v1279, %v256
      %1281 = vadd.xlane.f32.xlu0 %v1280
      %v1282 = vpop.xlane.xlu0 %1281
      %v1283 = vadd.f32 %v257, %v258
      %v1284 = vadd.f32 %v1283, %v259
      %v1285 = vadd.f32 %v1284, %v260
      %v1286 = vadd.f32 %v1285, %v261
      %v1287 = vadd.f32 %v1286, %v262
      %v1288 = vadd.f32 %v1287, %v263
      %v1289 = vadd.f32 %v1288, %v264
      %v1290 = vadd.f32 %v1289, %v265
      %v1291 = vadd.f32 %v1290, %v266
      %v1292 = vadd.f32 %v1291, %v267
      %v1293 = vadd.f32 %v1292, %v268
      %v1294 = vadd.f32 %v1293, %v269
      %v1295 = vadd.f32 %v1294, %v270
      %v1296 = vadd.f32 %v1295, %v271
      %v1297 = vadd.f32 %v1296, %v272
      %1298 = vadd.xlane.f32.xlu0 %v1297
      %v1299 = vpop.xlane.xlu0 %1298
      %v1300 = vadd.f32 %v273, %v274
      %v1301 = vadd.f32 %v1300, %v275
      %v1302 = vadd.f32 %v1301, %v276
      %v1303 = vadd.f32 %v1302, %v277
      %v1304 = vadd.f32 %v1303, %v278
      %v1305 = vadd.f32 %v1304, %v279
      %v1306 = vadd.f32 %v1305, %v280
      %v1307 = vadd.f32 %v1306, %v281
      %v1308 = vadd.f32 %v1307, %v282
      %v1309 = vadd.f32 %v1308, %v283
      %v1310 = vadd.f32 %v1309, %v284
      %v1311 = vadd.f32 %v1310, %v285
      %v1312 = vadd.f32 %v1311, %v286
      %v1313 = vadd.f32 %v1312, %v287
      %v1314 = vadd.f32 %v1313, %v288
      %1315 = vadd.xlane.f32.xlu0 %v1314
      %v1316 = vpop.xlane.xlu0 %1315
      %v1317 = vadd.f32 %v289, %v290
      %v1318 = vadd.f32 %v1317, %v291
      %v1319 = vadd.f32 %v1318, %v292
      %v1320 = vadd.f32 %v1319, %v293
      %v1321 = vadd.f32 %v1320, %v294
      %v1322 = vadd.f32 %v1321, %v295
      %v1323 = vadd.f32 %v1322, %v296
      %v1324 = vadd.f32 %v1323, %v297
      %v1325 = vadd.f32 %v1324, %v298
      %v1326 = vadd.f32 %v1325, %v299
      %v1327 = vadd.f32 %v1326, %v300
      %v1328 = vadd.f32 %v1327, %v301
      %v1329 = vadd.f32 %v1328, %v302
      %v1330 = vadd.f32 %v1329, %v303
      %v1331 = vadd.f32 %v1330, %v304
      %1332 = vadd.xlane.f32.xlu0 %v1331
      %v1333 = vpop.xlane.xlu0 %1332
      %v1334 = vadd.f32 %v305, %v306
      %v1335 = vadd.f32 %v1334, %v307
      %v1336 = vadd.f32 %v1335, %v308
      %v1337 = vadd.f32 %v1336, %v309
      %v1338 = vadd.f32 %v1337, %v310
      %v1339 = vadd.f32 %v1338, %v311
      %v1340 = vadd.f32 %v1339, %v312
      %v1341 = vadd.f32 %v1340, %v313
      %v1342 = vadd.f32 %v1341, %v314
      %v1343 = vadd.f32 %v1342, %v315
      %v1344 = vadd.f32 %v1343, %v316
      %v1345 = vadd.f32 %v1344, %v317
      %v1346 = vadd.f32 %v1345, %v318
      %v1347 = vadd.f32 %v1346, %v319
      %v1348 = vadd.f32 %v1347, %v320
      %1349 = vadd.xlane.f32.xlu0 %v1348
      %v1350 = vpop.xlane.xlu0 %1349
      %v1351 = vadd.f32 %v321, %v322
      %v1352 = vadd.f32 %v1351, %v323
      %v1353 = vadd.f32 %v1352, %v324
      %v1354 = vadd.f32 %v1353, %v325
      %v1355 = vadd.f32 %v1354, %v326
      %v1356 = vadd.f32 %v1355, %v327
      %v1357 = vadd.f32 %v1356, %v328
      %v1358 = vadd.f32 %v1357, %v329
      %v1359 = vadd.f32 %v1358, %v330
      %v1360 = vadd.f32 %v1359, %v331
      %v1361 = vadd.f32 %v1360, %v332
      %v1362 = vadd.f32 %v1361, %v333
      %v1363 = vadd.f32 %v1362, %v334
      %v1364 = vadd.f32 %v1363, %v335
      %v1365 = vadd.f32 %v1364, %v336
      %1366 = vadd.xlane.f32.xlu0 %v1365
      %v1367 = vpop.xlane.xlu0 %1366
      %v1368 = vadd.f32 %v337, %v338
      %v1369 = vadd.f32 %v1368, %v339
      %v1370 = vadd.f32 %v1369, %v340
      %v1371 = vadd.f32 %v1370, %v341
      %v1372 = vadd.f32 %v1371, %v342
      %v1373 = vadd.f32 %v1372, %v343
      %v1374 = vadd.f32 %v1373, %v344
      %v1375 = vadd.f32 %v1374, %v345
      %v1376 = vadd.f32 %v1375, %v346
      %v1377 = vadd.f32 %v1376, %v347
      %v1378 = vadd.f32 %v1377, %v348
      %v1379 = vadd.f32 %v1378, %v349
      %v1380 = vadd.f32 %v1379, %v350
      %v1381 = vadd.f32 %v1380, %v351
      %v1382 = vadd.f32 %v1381, %v352
      %1383 = vadd.xlane.f32.xlu0 %v1382
      %v1384 = vpop.xlane.xlu0 %1383
      %v1385 = vadd.f32 %v353, %v354
      %v1386 = vadd.f32 %v1385, %v355
      %v1387 = vadd.f32 %v1386, %v356
      %v1388 = vadd.f32 %v1387, %v357
      %v1389 = vadd.f32 %v1388, %v358
      %v1390 = vadd.f32 %v1389, %v359
      %v1391 = vadd.f32 %v1390, %v360
      %v1392 = vadd.f32 %v1391, %v361
      %v1393 = vadd.f32 %v1392, %v362
      %v1394 = vadd.f32 %v1393, %v363
      %v1395 = vadd.f32 %v1394, %v364
      %v1396 = vadd.f32 %v1395, %v365
      %v1397 = vadd.f32 %v1396, %v366
      %v1398 = vadd.f32 %v1397, %v367
      %v1399 = vadd.f32 %v1398, %v368
      %1400 = vadd.xlane.f32.xlu0 %v1399
      %v1401 = vpop.xlane.xlu0 %1400
      %v1402 = vadd.f32 %v369, %v370
      %v1403 = vadd.f32 %v1402, %v371
      %v1404 = vadd.f32 %v1403, %v372
      %v1405 = vadd.f32 %v1404, %v373
      %v1406 = vadd.f32 %v1405, %v374
      %v1407 = vadd.f32 %v1406, %v375
      %v1408 = vadd.f32 %v1407, %v376
      %v1409 = vadd.f32 %v1408, %v377
      %v1410 = vadd.f32 %v1409, %v378
      %v1411 = vadd.f32 %v1410, %v379
      %v1412 = vadd.f32 %v1411, %v380
      %v1413 = vadd.f32 %v1412, %v381
      %v1414 = vadd.f32 %v1413, %v382
      %v1415 = vadd.f32 %v1414, %v383
      %v1416 = vadd.f32 %v1415, %v384
      %1417 = vadd.xlane.f32.xlu0 %v1416
      %v1418 = vpop.xlane.xlu0 %1417
      %v1419 = vadd.f32 %v385, %v386
      %v1420 = vadd.f32 %v1419, %v387
      %v1421 = vadd.f32 %v1420, %v388
      %v1422 = vadd.f32 %v1421, %v389
      %v1423 = vadd.f32 %v1422, %v390
      %v1424 = vadd.f32 %v1423, %v391
      %v1425 = vadd.f32 %v1424, %v392
      %v1426 = vadd.f32 %v1425, %v393
      %v1427 = vadd.f32 %v1426, %v394
      %v1428 = vadd.f32 %v1427, %v395
      %v1429 = vadd.f32 %v1428, %v396
      %v1430 = vadd.f32 %v1429, %v397
      %v1431 = vadd.f32 %v1430, %v398
      %v1432 = vadd.f32 %v1431, %v399
      %v1433 = vadd.f32 %v1432, %v400
      %1434 = vadd.xlane.f32.xlu0 %v1433
      %v1435 = vpop.xlane.xlu0 %1434
      %v1436 = vadd.f32 %v401, %v402
      %v1437 = vadd.f32 %v1436, %v403
      %v1438 = vadd.f32 %v1437, %v404
      %v1439 = vadd.f32 %v1438, %v405
      %v1440 = vadd.f32 %v1439, %v406
      %v1441 = vadd.f32 %v1440, %v407
      %v1442 = vadd.f32 %v1441, %v408
      %v1443 = vadd.f32 %v1442, %v409
      %v1444 = vadd.f32 %v1443, %v410
      %v1445 = vadd.f32 %v1444, %v411
      %v1446 = vadd.f32 %v1445, %v412
      %v1447 = vadd.f32 %v1446, %v413
      %v1448 = vadd.f32 %v1447, %v414
      %v1449 = vadd.f32 %v1448, %v415
      %v1450 = vadd.f32 %v1449, %v416
      %1451 = vadd.xlane.f32.xlu0 %v1450
      %v1452 = vpop.xlane.xlu0 %1451
      %v1453 = vadd.f32 %v417, %v418
      %v1454 = vadd.f32 %v1453, %v419
      %v1455 = vadd.f32 %v1454, %v420
      %v1456 = vadd.f32 %v1455, %v421
      %v1457 = vadd.f32 %v1456, %v422
      %v1458 = vadd.f32 %v1457, %v423
      %v1459 = vadd.f32 %v1458, %v424
      %v1460 = vadd.f32 %v1459, %v425
      %v1461 = vadd.f32 %v1460, %v426
      %v1462 = vadd.f32 %v1461, %v427
      %v1463 = vadd.f32 %v1462, %v428
      %v1464 = vadd.f32 %v1463, %v429
      %v1465 = vadd.f32 %v1464, %v430
      %v1466 = vadd.f32 %v1465, %v431
      %v1467 = vadd.f32 %v1466, %v432
      %1468 = vadd.xlane.f32.xlu0 %v1467
      %v1469 = vpop.xlane.xlu0 %1468
      %v1470 = vadd.f32 %v433, %v434
      %v1471 = vadd.f32 %v1470, %v435
      %v1472 = vadd.f32 %v1471, %v436
      %v1473 = vadd.f32 %v1472, %v437
      %v1474 = vadd.f32 %v1473, %v438
      %v1475 = vadd.f32 %v1474, %v439
      %v1476 = vadd.f32 %v1475, %v440
      %v1477 = vadd.f32 %v1476, %v441
      %v1478 = vadd.f32 %v1477, %v442
      %v1479 = vadd.f32 %v1478, %v443
      %v1480 = vadd.f32 %v1479, %v444
      %v1481 = vadd.f32 %v1480, %v445
      %v1482 = vadd.f32 %v1481, %v446
      %v1483 = vadd.f32 %v1482, %v447
      %v1484 = vadd.f32 %v1483, %v448
      %1485 = vadd.xlane.f32.xlu0 %v1484
      %v1486 = vpop.xlane.xlu0 %1485
      %v1487 = vadd.f32 %v449, %v450
      %v1488 = vadd.f32 %v1487, %v451
      %v1489 = vadd.f32 %v1488, %v452
      %v1490 = vadd.f32 %v1489, %v453
      %v1491 = vadd.f32 %v1490, %v454
      %v1492 = vadd.f32 %v1491, %v455
      %v1493 = vadd.f32 %v1492, %v456
      %v1494 = vadd.f32 %v1493, %v457
      %v1495 = vadd.f32 %v1494, %v458
      %v1496 = vadd.f32 %v1495, %v459
      %v1497 = vadd.f32 %v1496, %v460
      %v1498 = vadd.f32 %v1497, %v461
      %v1499 = vadd.f32 %v1498, %v462
      %v1500 = vadd.f32 %v1499, %v463
      %v1501 = vadd.f32 %v1500, %v464
      %1502 = vadd.xlane.f32.xlu0 %v1501
      %v1503 = vpop.xlane.xlu0 %1502
      %v1504 = vadd.f32 %v465, %v466
      %v1505 = vadd.f32 %v1504, %v467
      %v1506 = vadd.f32 %v1505, %v468
      %v1507 = vadd.f32 %v1506, %v469
      %v1508 = vadd.f32 %v1507, %v470
      %v1509 = vadd.f32 %v1508, %v471
      %v1510 = vadd.f32 %v1509, %v472
      %v1511 = vadd.f32 %v1510, %v473
      %v1512 = vadd.f32 %v1511, %v474
      %v1513 = vadd.f32 %v1512, %v475
      %v1514 = vadd.f32 %v1513, %v476
      %v1515 = vadd.f32 %v1514, %v477
      %v1516 = vadd.f32 %v1515, %v478
      %v1517 = vadd.f32 %v1516, %v479
      %v1518 = vadd.f32 %v1517, %v480
      %1519 = vadd.xlane.f32.xlu0 %v1518
      %v1520 = vpop.xlane.xlu0 %1519
      %v1521 = vadd.f32 %v481, %v482
      %v1522 = vadd.f32 %v1521, %v483
      %v1523 = vadd.f32 %v1522, %v484
      %v1524 = vadd.f32 %v1523, %v485
      %v1525 = vadd.f32 %v1524, %v486
      %v1526 = vadd.f32 %v1525, %v487
      %v1527 = vadd.f32 %v1526, %v488
      %v1528 = vadd.f32 %v1527, %v489
      %v1529 = vadd.f32 %v1528, %v490
      %v1530 = vadd.f32 %v1529, %v491
      %v1531 = vadd.f32 %v1530, %v492
      %v1532 = vadd.f32 %v1531, %v493
      %v1533 = vadd.f32 %v1532, %v494
      %v1534 = vadd.f32 %v1533, %v495
      %v1535 = vadd.f32 %v1534, %v496
      %1536 = vadd.xlane.f32.xlu0 %v1535
      %v1537 = vpop.xlane.xlu0 %1536
      %v1538 = vadd.f32 %v497, %v498
      %v1539 = vadd.f32 %v1538, %v499
      %v1540 = vadd.f32 %v1539, %v500
      %v1541 = vadd.f32 %v1540, %v501
      %v1542 = vadd.f32 %v1541, %v502
      %v1543 = vadd.f32 %v1542, %v503
      %v1544 = vadd.f32 %v1543, %v504
      %v1545 = vadd.f32 %v1544, %v505
      %v1546 = vadd.f32 %v1545, %v506
      %v1547 = vadd.f32 %v1546, %v507
      %v1548 = vadd.f32 %v1547, %v508
      %v1549 = vadd.f32 %v1548, %v509
      %v1550 = vadd.f32 %v1549, %v510
      %v1551 = vadd.f32 %v1550, %v511
      %v1552 = vadd.f32 %v1551, %v512
      %1553 = vadd.xlane.f32.xlu0 %v1552
      %v1554 = vpop.xlane.xlu0 %1553
      %v1555 = vadd.f32 %v513, %v514
      %v1556 = vadd.f32 %v1555, %v515
      %v1557 = vadd.f32 %v1556, %v516
      %v1558 = vadd.f32 %v1557, %v517
      %v1559 = vadd.f32 %v1558, %v518
      %v1560 = vadd.f32 %v1559, %v519
      %v1561 = vadd.f32 %v1560, %v520
      %v1562 = vadd.f32 %v1561, %v521
      %v1563 = vadd.f32 %v1562, %v522
      %v1564 = vadd.f32 %v1563, %v523
      %v1565 = vadd.f32 %v1564, %v524
      %v1566 = vadd.f32 %v1565, %v525
      %v1567 = vadd.f32 %v1566, %v526
      %v1568 = vadd.f32 %v1567, %v527
      %v1569 = vadd.f32 %v1568, %v528
      %1570 = vadd.xlane.f32.xlu0 %v1569
      %v1571 = vpop.xlane.xlu0 %1570
      %v1572 = vadd.f32 %v529, %v530
      %v1573 = vadd.f32 %v1572, %v531
      %v1574 = vadd.f32 %v1573, %v532
      %v1575 = vadd.f32 %v1574, %v533
      %v1576 = vadd.f32 %v1575, %v534
      %v1577 = vadd.f32 %v1576, %v535
      %v1578 = vadd.f32 %v1577, %v536
      %v1579 = vadd.f32 %v1578, %v537
      %v1580 = vadd.f32 %v1579, %v538
      %v1581 = vadd.f32 %v1580, %v539
      %v1582 = vadd.f32 %v1581, %v540
      %v1583 = vadd.f32 %v1582, %v541
      %v1584 = vadd.f32 %v1583, %v542
      %v1585 = vadd.f32 %v1584, %v543
      %v1586 = vadd.f32 %v1585, %v544
      %1587 = vadd.xlane.f32.xlu0 %v1586
      %v1588 = vpop.xlane.xlu0 %1587
      %v1589 = vadd.f32 %v545, %v546
      %v1590 = vadd.f32 %v1589, %v547
      %v1591 = vadd.f32 %v1590, %v548
      %v1592 = vadd.f32 %v1591, %v549
      %v1593 = vadd.f32 %v1592, %v550
      %v1594 = vadd.f32 %v1593, %v551
      %v1595 = vadd.f32 %v1594, %v552
      %v1596 = vadd.f32 %v1595, %v553
      %v1597 = vadd.f32 %v1596, %v554
      %v1598 = vadd.f32 %v1597, %v555
      %v1599 = vadd.f32 %v1598, %v556
      %v1600 = vadd.f32 %v1599, %v557
      %v1601 = vadd.f32 %v1600, %v558
      %v1602 = vadd.f32 %v1601, %v559
      %v1603 = vadd.f32 %v1602, %v560
      %1604 = vadd.xlane.f32.xlu0 %v1603
      %v1605 = vpop.xlane.xlu0 %1604
      %v1606 = vadd.f32 %v561, %v562
      %v1607 = vadd.f32 %v1606, %v563
      %v1608 = vadd.f32 %v1607, %v564
      %v1609 = vadd.f32 %v1608, %v565
      %v1610 = vadd.f32 %v1609, %v566
      %v1611 = vadd.f32 %v1610, %v567
      %v1612 = vadd.f32 %v1611, %v568
      %v1613 = vadd.f32 %v1612, %v569
      %v1614 = vadd.f32 %v1613, %v570
      %v1615 = vadd.f32 %v1614, %v571
      %v1616 = vadd.f32 %v1615, %v572
      %v1617 = vadd.f32 %v1616, %v573
      %v1618 = vadd.f32 %v1617, %v574
      %v1619 = vadd.f32 %v1618, %v575
      %v1620 = vadd.f32 %v1619, %v576
      %1621 = vadd.xlane.f32.xlu0 %v1620
      %v1622 = vpop.xlane.xlu0 %1621
      %v1623 = vadd.f32 %v577, %v578
      %v1624 = vadd.f32 %v1623, %v579
      %v1625 = vadd.f32 %v1624, %v580
      %v1626 = vadd.f32 %v1625, %v581
      %v1627 = vadd.f32 %v1626, %v582
      %v1628 = vadd.f32 %v1627, %v583
      %v1629 = vadd.f32 %v1628, %v584
      %v1630 = vadd.f32 %v1629, %v585
      %v1631 = vadd.f32 %v1630, %v586
      %v1632 = vadd.f32 %v1631, %v587
      %v1633 = vadd.f32 %v1632, %v588
      %v1634 = vadd.f32 %v1633, %v589
      %v1635 = vadd.f32 %v1634, %v590
      %v1636 = vadd.f32 %v1635, %v591
      %v1637 = vadd.f32 %v1636, %v592
      %1638 = vadd.xlane.f32.xlu0 %v1637
      %v1639 = vpop.xlane.xlu0 %1638
      %v1640 = vadd.f32 %v593, %v594
      %v1641 = vadd.f32 %v1640, %v595
      %v1642 = vadd.f32 %v1641, %v596
      %v1643 = vadd.f32 %v1642, %v597
      %v1644 = vadd.f32 %v1643, %v598
      %v1645 = vadd.f32 %v1644, %v599
      %v1646 = vadd.f32 %v1645, %v600
      %v1647 = vadd.f32 %v1646, %v601
      %v1648 = vadd.f32 %v1647, %v602
      %v1649 = vadd.f32 %v1648, %v603
      %v1650 = vadd.f32 %v1649, %v604
      %v1651 = vadd.f32 %v1650, %v605
      %v1652 = vadd.f32 %v1651, %v606
      %v1653 = vadd.f32 %v1652, %v607
      %v1654 = vadd.f32 %v1653, %v608
      %1655 = vadd.xlane.f32.xlu0 %v1654
      %v1656 = vpop.xlane.xlu0 %1655
      %v1657 = vadd.f32 %v609, %v610
      %v1658 = vadd.f32 %v1657, %v611
      %v1659 = vadd.f32 %v1658, %v612
      %v1660 = vadd.f32 %v1659, %v613
      %v1661 = vadd.f32 %v1660, %v614
      %v1662 = vadd.f32 %v1661, %v615
      %v1663 = vadd.f32 %v1662, %v616
      %v1664 = vadd.f32 %v1663, %v617
      %v1665 = vadd.f32 %v1664, %v618
      %v1666 = vadd.f32 %v1665, %v619
      %v1667 = vadd.f32 %v1666, %v620
      %v1668 = vadd.f32 %v1667, %v621
      %v1669 = vadd.f32 %v1668, %v622
      %v1670 = vadd.f32 %v1669, %v623
      %v1671 = vadd.f32 %v1670, %v624
      %1672 = vadd.xlane.f32.xlu0 %v1671
      %v1673 = vpop.xlane.xlu0 %1672
      %v1674 = vadd.f32 %v625, %v626
      %v1675 = vadd.f32 %v1674, %v627
      %v1676 = vadd.f32 %v1675, %v628
      %v1677 = vadd.f32 %v1676, %v629
      %v1678 = vadd.f32 %v1677, %v630
      %v1679 = vadd.f32 %v1678, %v631
      %v1680 = vadd.f32 %v1679, %v632
      %v1681 = vadd.f32 %v1680, %v633
      %v1682 = vadd.f32 %v1681, %v634
      %v1683 = vadd.f32 %v1682, %v635
      %v1684 = vadd.f32 %v1683, %v636
      %v1685 = vadd.f32 %v1684, %v637
      %v1686 = vadd.f32 %v1685, %v638
      %v1687 = vadd.f32 %v1686, %v639
      %v1688 = vadd.f32 %v1687, %v640
      %1689 = vadd.xlane.f32.xlu0 %v1688
      %v1690 = vpop.xlane.xlu0 %1689
      %v1691 = vadd.f32 %v641, %v642
      %v1692 = vadd.f32 %v1691, %v643
      %v1693 = vadd.f32 %v1692, %v644
      %v1694 = vadd.f32 %v1693, %v645
      %v1695 = vadd.f32 %v1694, %v646
      %v1696 = vadd.f32 %v1695, %v647
      %v1697 = vadd.f32 %v1696, %v648
      %v1698 = vadd.f32 %v1697, %v649
      %v1699 = vadd.f32 %v1698, %v650
      %v1700 = vadd.f32 %v1699, %v651
      %v1701 = vadd.f32 %v1700, %v652
      %v1702 = vadd.f32 %v1701, %v653
      %v1703 = vadd.f32 %v1702, %v654
      %v1704 = vadd.f32 %v1703, %v655
      %v1705 = vadd.f32 %v1704, %v656
      %1706 = vadd.xlane.f32.xlu0 %v1705
      %v1707 = vpop.xlane.xlu0 %1706
      %v1708 = vadd.f32 %v657, %v658
      %v1709 = vadd.f32 %v1708, %v659
      %v1710 = vadd.f32 %v1709, %v660
      %v1711 = vadd.f32 %v1710, %v661
      %v1712 = vadd.f32 %v1711, %v662
      %v1713 = vadd.f32 %v1712, %v663
      %v1714 = vadd.f32 %v1713, %v664
      %v1715 = vadd.f32 %v1714, %v665
      %v1716 = vadd.f32 %v1715, %v666
      %v1717 = vadd.f32 %v1716, %v667
      %v1718 = vadd.f32 %v1717, %v668
      %v1719 = vadd.f32 %v1718, %v669
      %v1720 = vadd.f32 %v1719, %v670
      %v1721 = vadd.f32 %v1720, %v671
      %v1722 = vadd.f32 %v1721, %v672
      %1723 = vadd.xlane.f32.xlu0 %v1722
      %v1724 = vpop.xlane.xlu0 %1723
      %v1725 = vadd.f32 %v673, %v674
      %v1726 = vadd.f32 %v1725, %v675
      %v1727 = vadd.f32 %v1726, %v676
      %v1728 = vadd.f32 %v1727, %v677
      %v1729 = vadd.f32 %v1728, %v678
      %v1730 = vadd.f32 %v1729, %v679
      %v1731 = vadd.f32 %v1730, %v680
      %v1732 = vadd.f32 %v1731, %v681
      %v1733 = vadd.f32 %v1732, %v682
      %v1734 = vadd.f32 %v1733, %v683
      %v1735 = vadd.f32 %v1734, %v684
      %v1736 = vadd.f32 %v1735, %v685
      %v1737 = vadd.f32 %v1736, %v686
      %v1738 = vadd.f32 %v1737, %v687
      %v1739 = vadd.f32 %v1738, %v688
      %1740 = vadd.xlane.f32.xlu0 %v1739
      %v1741 = vpop.xlane.xlu0 %1740
      %v1742 = vadd.f32 %v689, %v690
      %v1743 = vadd.f32 %v1742, %v691
      %v1744 = vadd.f32 %v1743, %v692
      %v1745 = vadd.f32 %v1744, %v693
      %v1746 = vadd.f32 %v1745, %v694
      %v1747 = vadd.f32 %v1746, %v695
      %v1748 = vadd.f32 %v1747, %v696
      %v1749 = vadd.f32 %v1748, %v697
      %v1750 = vadd.f32 %v1749, %v698
      %v1751 = vadd.f32 %v1750, %v699
      %v1752 = vadd.f32 %v1751, %v700
      %v1753 = vadd.f32 %v1752, %v701
      %v1754 = vadd.f32 %v1753, %v702
      %v1755 = vadd.f32 %v1754, %v703
      %v1756 = vadd.f32 %v1755, %v704
      %1757 = vadd.xlane.f32.xlu0 %v1756
      %v1758 = vpop.xlane.xlu0 %1757
      %v1759 = vadd.f32 %v705, %v706
      %v1760 = vadd.f32 %v1759, %v707
      %v1761 = vadd.f32 %v1760, %v708
      %v1762 = vadd.f32 %v1761, %v709
      %v1763 = vadd.f32 %v1762, %v710
      %v1764 = vadd.f32 %v1763, %v711
      %v1765 = vadd.f32 %v1764, %v712
      %v1766 = vadd.f32 %v1765, %v713
      %v1767 = vadd.f32 %v1766, %v714
      %v1768 = vadd.f32 %v1767, %v715
      %v1769 = vadd.f32 %v1768, %v716
      %v1770 = vadd.f32 %v1769, %v717
      %v1771 = vadd.f32 %v1770, %v718
      %v1772 = vadd.f32 %v1771, %v719
      %v1773 = vadd.f32 %v1772, %v720
      %1774 = vadd.xlane.f32.xlu0 %v1773
      %v1775 = vpop.xlane.xlu0 %1774
      %v1776 = vadd.f32 %v721, %v722
      %v1777 = vadd.f32 %v1776, %v723
      %v1778 = vadd.f32 %v1777, %v724
      %v1779 = vadd.f32 %v1778, %v725
      %v1780 = vadd.f32 %v1779, %v726
      %v1781 = vadd.f32 %v1780, %v727
      %v1782 = vadd.f32 %v1781, %v728
      %v1783 = vadd.f32 %v1782, %v729
      %v1784 = vadd.f32 %v1783, %v730
      %v1785 = vadd.f32 %v1784, %v731
      %v1786 = vadd.f32 %v1785, %v732
      %v1787 = vadd.f32 %v1786, %v733
      %v1788 = vadd.f32 %v1787, %v734
      %v1789 = vadd.f32 %v1788, %v735
      %v1790 = vadd.f32 %v1789, %v736
      %1791 = vadd.xlane.f32.xlu0 %v1790
      %v1792 = vpop.xlane.xlu0 %1791
      %v1793 = vadd.f32 %v737, %v738
      %v1794 = vadd.f32 %v1793, %v739
      %v1795 = vadd.f32 %v1794, %v740
      %v1796 = vadd.f32 %v1795, %v741
      %v1797 = vadd.f32 %v1796, %v742
      %v1798 = vadd.f32 %v1797, %v743
      %v1799 = vadd.f32 %v1798, %v744
      %v1800 = vadd.f32 %v1799, %v745
      %v1801 = vadd.f32 %v1800, %v746
      %v1802 = vadd.f32 %v1801, %v747
      %v1803 = vadd.f32 %v1802, %v748
      %v1804 = vadd.f32 %v1803, %v749
      %v1805 = vadd.f32 %v1804, %v750
      %v1806 = vadd.f32 %v1805, %v751
      %v1807 = vadd.f32 %v1806, %v752
      %1808 = vadd.xlane.f32.xlu0 %v1807
      %v1809 = vpop.xlane.xlu0 %1808
      %v1810 = vadd.f32 %v753, %v754
      %v1811 = vadd.f32 %v1810, %v755
      %v1812 = vadd.f32 %v1811, %v756
      %v1813 = vadd.f32 %v1812, %v757
      %v1814 = vadd.f32 %v1813, %v758
      %v1815 = vadd.f32 %v1814, %v759
      %v1816 = vadd.f32 %v1815, %v760
      %v1817 = vadd.f32 %v1816, %v761
      %v1818 = vadd.f32 %v1817, %v762
      %v1819 = vadd.f32 %v1818, %v763
      %v1820 = vadd.f32 %v1819, %v764
      %v1821 = vadd.f32 %v1820, %v765
      %v1822 = vadd.f32 %v1821, %v766
      %v1823 = vadd.f32 %v1822, %v767
      %v1824 = vadd.f32 %v1823, %v768
      %1825 = vadd.xlane.f32.xlu0 %v1824
      %v1826 = vpop.xlane.xlu0 %1825
      %v1827 = vadd.f32 %v769, %v770
      %v1828 = vadd.f32 %v1827, %v771
      %v1829 = vadd.f32 %v1828, %v772
      %v1830 = vadd.f32 %v1829, %v773
      %v1831 = vadd.f32 %v1830, %v774
      %v1832 = vadd.f32 %v1831, %v775
      %v1833 = vadd.f32 %v1832, %v776
      %v1834 = vadd.f32 %v1833, %v777
      %v1835 = vadd.f32 %v1834, %v778
      %v1836 = vadd.f32 %v1835, %v779
      %v1837 = vadd.f32 %v1836, %v780
      %v1838 = vadd.f32 %v1837, %v781
      %v1839 = vadd.f32 %v1838, %v782
      %v1840 = vadd.f32 %v1839, %v783
      %v1841 = vadd.f32 %v1840, %v784
      %1842 = vadd.xlane.f32.xlu0 %v1841
      %v1843 = vpop.xlane.xlu0 %1842
      %v1844 = vadd.f32 %v785, %v786
      %v1845 = vadd.f32 %v1844, %v787
      %v1846 = vadd.f32 %v1845, %v788
      %v1847 = vadd.f32 %v1846, %v789
      %v1848 = vadd.f32 %v1847, %v790
      %v1849 = vadd.f32 %v1848, %v791
      %v1850 = vadd.f32 %v1849, %v792
      %v1851 = vadd.f32 %v1850, %v793
      %v1852 = vadd.f32 %v1851, %v794
      %v1853 = vadd.f32 %v1852, %v795
      %v1854 = vadd.f32 %v1853, %v796
      %v1855 = vadd.f32 %v1854, %v797
      %v1856 = vadd.f32 %v1855, %v798
      %v1857 = vadd.f32 %v1856, %v799
      %v1858 = vadd.f32 %v1857, %v800
      %1859 = vadd.xlane.f32.xlu0 %v1858
      %v1860 = vpop.xlane.xlu0 %1859
      %v1861 = vadd.f32 %v801, %v802
      %v1862 = vadd.f32 %v1861, %v803
      %v1863 = vadd.f32 %v1862, %v804
      %v1864 = vadd.f32 %v1863, %v805
      %v1865 = vadd.f32 %v1864, %v806
      %v1866 = vadd.f32 %v1865, %v807
      %v1867 = vadd.f32 %v1866, %v808
      %v1868 = vadd.f32 %v1867, %v809
      %v1869 = vadd.f32 %v1868, %v810
      %v1870 = vadd.f32 %v1869, %v811
      %v1871 = vadd.f32 %v1870, %v812
      %v1872 = vadd.f32 %v1871, %v813
      %v1873 = vadd.f32 %v1872, %v814
      %v1874 = vadd.f32 %v1873, %v815
      %v1875 = vadd.f32 %v1874, %v816
      %1876 = vadd.xlane.f32.xlu0 %v1875
      %v1877 = vpop.xlane.xlu0 %1876
      %v1878 = vadd.f32 %v817, %v818
      %v1879 = vadd.f32 %v1878, %v819
      %v1880 = vadd.f32 %v1879, %v820
      %v1881 = vadd.f32 %v1880, %v821
      %v1882 = vadd.f32 %v1881, %v822
      %v1883 = vadd.f32 %v1882, %v823
      %v1884 = vadd.f32 %v1883, %v824
      %v1885 = vadd.f32 %v1884, %v825
      %v1886 = vadd.f32 %v1885, %v826
      %v1887 = vadd.f32 %v1886, %v827
      %v1888 = vadd.f32 %v1887, %v828
      %v1889 = vadd.f32 %v1888, %v829
      %v1890 = vadd.f32 %v1889, %v830
      %v1891 = vadd.f32 %v1890, %v831
      %v1892 = vadd.f32 %v1891, %v832
      %1893 = vadd.xlane.f32.xlu0 %v1892
      %v1894 = vpop.xlane.xlu0 %1893
      %v1895 = vadd.f32 %v833, %v834
      %v1896 = vadd.f32 %v1895, %v835
      %v1897 = vadd.f32 %v1896, %v836
      %v1898 = vadd.f32 %v1897, %v837
      %v1899 = vadd.f32 %v1898, %v838
      %v1900 = vadd.f32 %v1899, %v839
      %v1901 = vadd.f32 %v1900, %v840
      %v1902 = vadd.f32 %v1901, %v841
      %v1903 = vadd.f32 %v1902, %v842
      %v1904 = vadd.f32 %v1903, %v843
      %v1905 = vadd.f32 %v1904, %v844
      %v1906 = vadd.f32 %v1905, %v845
      %v1907 = vadd.f32 %v1906, %v846
      %v1908 = vadd.f32 %v1907, %v847
      %v1909 = vadd.f32 %v1908, %v848
      %1910 = vadd.xlane.f32.xlu0 %v1909
      %v1911 = vpop.xlane.xlu0 %1910
      %v1912 = vadd.f32 %v849, %v850
      %v1913 = vadd.f32 %v1912, %v851
      %v1914 = vadd.f32 %v1913, %v852
      %v1915 = vadd.f32 %v1914, %v853
      %v1916 = vadd.f32 %v1915, %v854
      %v1917 = vadd.f32 %v1916, %v855
      %v1918 = vadd.f32 %v1917, %v856
      %v1919 = vadd.f32 %v1918, %v857
      %v1920 = vadd.f32 %v1919, %v858
      %v1921 = vadd.f32 %v1920, %v859
      %v1922 = vadd.f32 %v1921, %v860
      %v1923 = vadd.f32 %v1922, %v861
      %v1924 = vadd.f32 %v1923, %v862
      %v1925 = vadd.f32 %v1924, %v863
      %v1926 = vadd.f32 %v1925, %v864
      %1927 = vadd.xlane.f32.xlu0 %v1926
      %v1928 = vpop.xlane.xlu0 %1927
      %v1929 = vadd.f32 %v865, %v866
      %v1930 = vadd.f32 %v1929, %v867
      %v1931 = vadd.f32 %v1930, %v868
      %v1932 = vadd.f32 %v1931, %v869
      %v1933 = vadd.f32 %v1932, %v870
      %v1934 = vadd.f32 %v1933, %v871
      %v1935 = vadd.f32 %v1934, %v872
      %v1936 = vadd.f32 %v1935, %v873
      %v1937 = vadd.f32 %v1936, %v874
      %v1938 = vadd.f32 %v1937, %v875
      %v1939 = vadd.f32 %v1938, %v876
      %v1940 = vadd.f32 %v1939, %v877
      %v1941 = vadd.f32 %v1940, %v878
      %v1942 = vadd.f32 %v1941, %v879
      %v1943 = vadd.f32 %v1942, %v880
      %1944 = vadd.xlane.f32.xlu0 %v1943
      %v1945 = vpop.xlane.xlu0 %1944
      %v1946 = vadd.f32 %v881, %v882
      %v1947 = vadd.f32 %v1946, %v883
      %v1948 = vadd.f32 %v1947, %v884
      %v1949 = vadd.f32 %v1948, %v885
      %v1950 = vadd.f32 %v1949, %v886
      %v1951 = vadd.f32 %v1950, %v887
      %v1952 = vadd.f32 %v1951, %v888
      %v1953 = vadd.f32 %v1952, %v889
      %v1954 = vadd.f32 %v1953, %v890
      %v1955 = vadd.f32 %v1954, %v891
      %v1956 = vadd.f32 %v1955, %v892
      %v1957 = vadd.f32 %v1956, %v893
      %v1958 = vadd.f32 %v1957, %v894
      %v1959 = vadd.f32 %v1958, %v895
      %v1960 = vadd.f32 %v1959, %v896
      %1961 = vadd.xlane.f32.xlu0 %v1960
      %v1962 = vpop.xlane.xlu0 %1961
      %v1963 = vadd.f32 %v897, %v898
      %v1964 = vadd.f32 %v1963, %v899
      %v1965 = vadd.f32 %v1964, %v900
      %v1966 = vadd.f32 %v1965, %v901
      %v1967 = vadd.f32 %v1966, %v902
      %v1968 = vadd.f32 %v1967, %v903
      %v1969 = vadd.f32 %v1968, %v904
      %v1970 = vadd.f32 %v1969, %v905
      %v1971 = vadd.f32 %v1970, %v906
      %v1972 = vadd.f32 %v1971, %v907
      %v1973 = vadd.f32 %v1972, %v908
      %v1974 = vadd.f32 %v1973, %v909
      %v1975 = vadd.f32 %v1974, %v910
      %v1976 = vadd.f32 %v1975, %v911
      %v1977 = vadd.f32 %v1976, %v912
      %1978 = vadd.xlane.f32.xlu0 %v1977
      %v1979 = vpop.xlane.xlu0 %1978
      %v1980 = vadd.f32 %v913, %v914
      %v1981 = vadd.f32 %v1980, %v915
      %v1982 = vadd.f32 %v1981, %v916
      %v1983 = vadd.f32 %v1982, %v917
      %v1984 = vadd.f32 %v1983, %v918
      %v1985 = vadd.f32 %v1984, %v919
      %v1986 = vadd.f32 %v1985, %v920
      %v1987 = vadd.f32 %v1986, %v921
      %v1988 = vadd.f32 %v1987, %v922
      %v1989 = vadd.f32 %v1988, %v923
      %v1990 = vadd.f32 %v1989, %v924
      %v1991 = vadd.f32 %v1990, %v925
      %v1992 = vadd.f32 %v1991, %v926
      %v1993 = vadd.f32 %v1992, %v927
      %v1994 = vadd.f32 %v1993, %v928
      %1995 = vadd.xlane.f32.xlu0 %v1994
      %v1996 = vpop.xlane.xlu0 %1995
      %v1997 = vadd.f32 %v929, %v930
      %v1998 = vadd.f32 %v1997, %v931
      %v1999 = vadd.f32 %v1998, %v932
      %v2000 = vadd.f32 %v1999, %v933
      %v2001 = vadd.f32 %v2000, %v934
      %v2002 = vadd.f32 %v2001, %v935
      %v2003 = vadd.f32 %v2002, %v936
      %v2004 = vadd.f32 %v2003, %v937
      %v2005 = vadd.f32 %v2004, %v938
      %v2006 = vadd.f32 %v2005, %v939
      %v2007 = vadd.f32 %v2006, %v940
      %v2008 = vadd.f32 %v2007, %v941
      %v2009 = vadd.f32 %v2008, %v942
      %v2010 = vadd.f32 %v2009, %v943
      %v2011 = vadd.f32 %v2010, %v944
      %2012 = vadd.xlane.f32.xlu0 %v2011
      %v2013 = vpop.xlane.xlu0 %2012
      %v2014 = vadd.f32 %v945, %v946
      %v2015 = vadd.f32 %v2014, %v947
      %v2016 = vadd.f32 %v2015, %v948
      %v2017 = vadd.f32 %v2016, %v949
      %v2018 = vadd.f32 %v2017, %v950
      %v2019 = vadd.f32 %v2018, %v951
      %v2020 = vadd.f32 %v2019, %v952
      %v2021 = vadd.f32 %v2020, %v953
      %v2022 = vadd.f32 %v2021, %v954
      %v2023 = vadd.f32 %v2022, %v955
      %v2024 = vadd.f32 %v2023, %v956
      %v2025 = vadd.f32 %v2024, %v957
      %v2026 = vadd.f32 %v2025, %v958
      %v2027 = vadd.f32 %v2026, %v959
      %v2028 = vadd.f32 %v2027, %v960
      %2029 = vadd.xlane.f32.xlu0 %v2028
      %v2030 = vpop.xlane.xlu0 %2029
      %v2031 = vadd.f32 %v961, %v962
      %v2032 = vadd.f32 %v2031, %v963
      %v2033 = vadd.f32 %v2032, %v964
      %v2034 = vadd.f32 %v2033, %v965
      %v2035 = vadd.f32 %v2034, %v966
      %v2036 = vadd.f32 %v2035, %v967
      %v2037 = vadd.f32 %v2036, %v968
      %v2038 = vadd.f32 %v2037, %v969
      %v2039 = vadd.f32 %v2038, %v970
      %v2040 = vadd.f32 %v2039, %v971
      %v2041 = vadd.f32 %v2040, %v972
      %v2042 = vadd.f32 %v2041, %v973
      %v2043 = vadd.f32 %v2042, %v974
      %v2044 = vadd.f32 %v2043, %v975
      %v2045 = vadd.f32 %v2044, %v976
      %2046 = vadd.xlane.f32.xlu0 %v2045
      %v2047 = vpop.xlane.xlu0 %2046
      %v2048 = vadd.f32 %v977, %v978
      %v2049 = vadd.f32 %v2048, %v979
      %v2050 = vadd.f32 %v2049, %v980
      %v2051 = vadd.f32 %v2050, %v981
      %v2052 = vadd.f32 %v2051, %v982
      %v2053 = vadd.f32 %v2052, %v983
      %v2054 = vadd.f32 %v2053, %v984
      %v2055 = vadd.f32 %v2054, %v985
      %v2056 = vadd.f32 %v2055, %v986
      %v2057 = vadd.f32 %v2056, %v987
      %v2058 = vadd.f32 %v2057, %v988
      %v2059 = vadd.f32 %v2058, %v989
      %v2060 = vadd.f32 %v2059, %v990
      %v2061 = vadd.f32 %v2060, %v991
      %v2062 = vadd.f32 %v2061, %v992
      %2063 = vadd.xlane.f32.xlu0 %v2062
      %v2064 = vpop.xlane.xlu0 %2063
      %v2065 = vadd.f32 %v993, %v994
      %v2066 = vadd.f32 %v2065, %v995
      %v2067 = vadd.f32 %v2066, %v996
      %v2068 = vadd.f32 %v2067, %v997
      %v2069 = vadd.f32 %v2068, %v998
      %v2070 = vadd.f32 %v2069, %v999
      %v2071 = vadd.f32 %v2070, %v1000
      %v2072 = vadd.f32 %v2071, %v1001
      %v2073 = vadd.f32 %v2072, %v1002
      %v2074 = vadd.f32 %v2073, %v1003
      %v2075 = vadd.f32 %v2074, %v1004
      %v2076 = vadd.f32 %v2075, %v1005
      %v2077 = vadd.f32 %v2076, %v1006
      %v2078 = vadd.f32 %v2077, %v1007
      %v2079 = vadd.f32 %v2078, %v1008
      %2080 = vadd.xlane.f32.xlu0 %v2079
      %v2081 = vpop.xlane.xlu0 %2080
      %v2082 = vadd.f32 %v1009, %v1010
      %v2083 = vadd.f32 %v2082, %v1011
      %v2084 = vadd.f32 %v2083, %v1012
      %v2085 = vadd.f32 %v2084, %v1013
      %v2086 = vadd.f32 %v2085, %v1014
      %v2087 = vadd.f32 %v2086, %v1015
      %v2088 = vadd.f32 %v2087, %v1016
      %v2089 = vadd.f32 %v2088, %v1017
      %v2090 = vadd.f32 %v2089, %v1018
      %v2091 = vadd.f32 %v2090, %v1019
      %v2092 = vadd.f32 %v2091, %v1020
      %v2093 = vadd.f32 %v2092, %v1021
      %v2094 = vadd.f32 %v2093, %v1022
      %v2095 = vadd.f32 %v2094, %v1023
      %v2096 = vadd.f32 %v2095, %v1024
      %2097 = vadd.xlane.f32.xlu0 %v2096
      %v2098 = vpop.xlane.xlu0 %2097
      %v2099 = vadd.f32 %v1025, %v1026
      %v2100 = vadd.f32 %v2099, %v1027
      %v2101 = vadd.f32 %v2100, %v1028
      %v2102 = vadd.f32 %v2101, %v1029
      %v2103 = vadd.f32 %v2102, %v1030
      %v2104 = vadd.f32 %v2103, %v1031
      %v2105 = vadd.f32 %v2104, %v1032
      %v2106 = vadd.f32 %v2105, %v1033
      %v2107 = vadd.f32 %v2106, %v1034
      %v2108 = vadd.f32 %v2107, %v1035
      %v2109 = vadd.f32 %v2108, %v1036
      %v2110 = vadd.f32 %v2109, %v1037
      %v2111 = vadd.f32 %v2110, %v1038
      %v2112 = vadd.f32 %v2111, %v1039
      %v2113 = vadd.f32 %v2112, %v1040
      %2114 = vadd.xlane.f32.xlu0 %v2113
      %v2115 = vpop.xlane.xlu0 %2114
      %v2116 = vadd.f32 %v1041, %v1042
      %v2117 = vadd.f32 %v2116, %v1043
      %v2118 = vadd.f32 %v2117, %v1044
      %v2119 = vadd.f32 %v2118, %v1045
      %v2120 = vadd.f32 %v2119, %v1046
      %v2121 = vadd.f32 %v2120, %v1047
      %v2122 = vadd.f32 %v2121, %v1048
      %v2123 = vadd.f32 %v2122, %v1049
      %v2124 = vadd.f32 %v2123, %v1050
      %v2125 = vadd.f32 %v2124, %v1051
      %v2126 = vadd.f32 %v2125, %v1052
      %v2127 = vadd.f32 %v2126, %v1053
      %v2128 = vadd.f32 %v2127, %v1054
      %v2129 = vadd.f32 %v2128, %v1055
      %v2130 = vadd.f32 %v2129, %v1056
      %2131 = vadd.xlane.f32.xlu0 %v2130
      %v2132 = vpop.xlane.xlu0 %2131
      %v2133 = vadd.f32 %v1057, %v1058
      %v2134 = vadd.f32 %v2133, %v1059
      %v2135 = vadd.f32 %v2134, %v1060
      %v2136 = vadd.f32 %v2135, %v1061
      %v2137 = vadd.f32 %v2136, %v1062
      %v2138 = vadd.f32 %v2137, %v1063
      %v2139 = vadd.f32 %v2138, %v1064
      %v2140 = vadd.f32 %v2139, %v1065
      %v2141 = vadd.f32 %v2140, %v1066
      %v2142 = vadd.f32 %v2141, %v1067
      %v2143 = vadd.f32 %v2142, %v1068
      %v2144 = vadd.f32 %v2143, %v1069
      %v2145 = vadd.f32 %v2144, %v1070
      %v2146 = vadd.f32 %v2145, %v1071
      %v2147 = vadd.f32 %v2146, %v1072
      %2148 = vadd.xlane.f32.xlu0 %v2147
      %v2149 = vpop.xlane.xlu0 %2148
      %v2150 = vadd.f32 %v1073, %v1074
      %v2151 = vadd.f32 %v2150, %v1075
      %v2152 = vadd.f32 %v2151, %v1076
      %v2153 = vadd.f32 %v2152, %v1077
      %v2154 = vadd.f32 %v2153, %v1078
      %v2155 = vadd.f32 %v2154, %v1079
      %v2156 = vadd.f32 %v2155, %v1080
      %v2157 = vadd.f32 %v2156, %v1081
      %v2158 = vadd.f32 %v2157, %v1082
      %v2159 = vadd.f32 %v2158, %v1083
      %v2160 = vadd.f32 %v2159, %v1084
      %v2161 = vadd.f32 %v2160, %v1085
      %v2162 = vadd.f32 %v2161, %v1086
      %v2163 = vadd.f32 %v2162, %v1087
      %v2164 = vadd.f32 %v2163, %v1088
      %2165 = vadd.xlane.f32.xlu0 %v2164
      %v2166 = vpop.xlane.xlu0 %2165
      %v2167 = vadd.f32 %v1089, %v1090
      %v2168 = vadd.f32 %v2167, %v1091
      %v2169 = vadd.f32 %v2168, %v1092
      %v2170 = vadd.f32 %v2169, %v1093
      %v2171 = vadd.f32 %v2170, %v1094
      %v2172 = vadd.f32 %v2171, %v1095
      %v2173 = vadd.f32 %v2172, %v1096
      %v2174 = vadd.f32 %v2173, %v1097
      %v2175 = vadd.f32 %v2174, %v1098
      %v2176 = vadd.f32 %v2175, %v1099
      %v2177 = vadd.f32 %v2176, %v1100
      %v2178 = vadd.f32 %v2177, %v1101
      %v2179 = vadd.f32 %v2178, %v1102
      %v2180 = vadd.f32 %v2179, %v1103
      %v2181 = vadd.f32 %v2180, %v1104
      %2182 = vadd.xlane.f32.xlu0 %v2181
      %v2183 = vpop.xlane.xlu0 %2182
      %v2184 = vadd.f32 %v1105, %v1106
      %v2185 = vadd.f32 %v2184, %v1107
      %v2186 = vadd.f32 %v2185, %v1108
      %v2187 = vadd.f32 %v2186, %v1109
      %v2188 = vadd.f32 %v2187, %v1110
      %v2189 = vadd.f32 %v2188, %v1111
      %v2190 = vadd.f32 %v2189, %v1112
      %v2191 = vadd.f32 %v2190, %v1113
      %v2192 = vadd.f32 %v2191, %v1114
      %v2193 = vadd.f32 %v2192, %v1115
      %v2194 = vadd.f32 %v2193, %v1116
      %v2195 = vadd.f32 %v2194, %v1117
      %v2196 = vadd.f32 %v2195, %v1118
      %v2197 = vadd.f32 %v2196, %v1119
      %v2198 = vadd.f32 %v2197, %v1120
      %2199 = vadd.xlane.f32.xlu0 %v2198
      %v2200 = vpop.xlane.xlu0 %2199
      %v2201 = vadd.f32 %v1121, %v1122
      %v2202 = vadd.f32 %v2201, %v1123
      %v2203 = vadd.f32 %v2202, %v1124
      %v2204 = vadd.f32 %v2203, %v1125
      %v2205 = vadd.f32 %v2204, %v1126
      %v2206 = vadd.f32 %v2205, %v1127
      %v2207 = vadd.f32 %v2206, %v1128
      %v2208 = vadd.f32 %v2207, %v1129
      %v2209 = vadd.f32 %v2208, %v1130
      %v2210 = vadd.f32 %v2209, %v1131
      %v2211 = vadd.f32 %v2210, %v1132
      %v2212 = vadd.f32 %v2211, %v1133
      %v2213 = vadd.f32 %v2212, %v1134
      %v2214 = vadd.f32 %v2213, %v1135
      %v2215 = vadd.f32 %v2214, %v1136
      %2216 = vadd.xlane.f32.xlu0 %v2215
      %v2217 = vpop.xlane.xlu0 %2216
      %v2218 = vadd.f32 %v1137, %v1138
      %v2219 = vadd.f32 %v2218, %v1139
      %v2220 = vadd.f32 %v2219, %v1140
      %v2221 = vadd.f32 %v2220, %v1141
      %v2222 = vadd.f32 %v2221, %v1142
      %v2223 = vadd.f32 %v2222, %v1143
      %v2224 = vadd.f32 %v2223, %v1144
      %v2225 = vadd.f32 %v2224, %v1145
      %v2226 = vadd.f32 %v2225, %v1146
      %v2227 = vadd.f32 %v2226, %v1147
      %v2228 = vadd.f32 %v2227, %v1148
      %v2229 = vadd.f32 %v2228, %v1149
      %v2230 = vadd.f32 %v2229, %v1150
      %v2231 = vadd.f32 %v2230, %v1151
      %v2232 = vadd.f32 %v2231, %v1152
      %2233 = vadd.xlane.f32.xlu0 %v2232
      %v2234 = vpop.xlane.xlu0 %2233
      %v2235 = vadd.f32 %v1153, %v1154
      %v2236 = vadd.f32 %v2235, %v1155
      %v2237 = vadd.f32 %v2236, %v1156
      %v2238 = vadd.f32 %v2237, %v1157
      %v2239 = vadd.f32 %v2238, %v1158
      %v2240 = vadd.f32 %v2239, %v1159
      %v2241 = vadd.f32 %v2240, %v1160
      %v2242 = vadd.f32 %v2241, %v1161
      %v2243 = vadd.f32 %v2242, %v1162
      %v2244 = vadd.f32 %v2243, %v1163
      %v2245 = vadd.f32 %v2244, %v1164
      %v2246 = vadd.f32 %v2245, %v1165
      %v2247 = vadd.f32 %v2246, %v1166
      %v2248 = vadd.f32 %v2247, %v1167
      %v2249 = vadd.f32 %v2248, %v1168
      %2250 = vadd.xlane.f32.xlu0 %v2249
      %v2251 = vpop.xlane.xlu0 %2250
      %v2252 = vadd.f32 %v1169, %v1170
      %v2253 = vadd.f32 %v2252, %v1171
      %v2254 = vadd.f32 %v2253, %v1172
      %v2255 = vadd.f32 %v2254, %v1173
      %v2256 = vadd.f32 %v2255, %v1174
      %v2257 = vadd.f32 %v2256, %v1175
      %v2258 = vadd.f32 %v2257, %v1176
      %v2259 = vadd.f32 %v2258, %v1177
      %v2260 = vadd.f32 %v2259, %v1178
      %v2261 = vadd.f32 %v2260, %v1179
      %v2262 = vadd.f32 %v2261, %v1180
      %v2263 = vadd.f32 %v2262, %v1181
      %v2264 = vadd.f32 %v2263, %v1182
      %v2265 = vadd.f32 %v2264, %v1183
      %v2266 = vadd.f32 %v2265, %v1184
      %2267 = vadd.xlane.f32.xlu0 %v2266
      %v2268 = vpop.xlane.xlu0 %2267
      %v2269 = vadd.f32 %v1185, %v1186
      %v2270 = vadd.f32 %v2269, %v1187
      %v2271 = vadd.f32 %v2270, %v1188
      %v2272 = vadd.f32 %v2271, %v1189
      %v2273 = vadd.f32 %v2272, %v1190
      %v2274 = vadd.f32 %v2273, %v1191
      %v2275 = vadd.f32 %v2274, %v1192
      %v2276 = vadd.f32 %v2275, %v1193
      %v2277 = vadd.f32 %v2276, %v1194
      %v2278 = vadd.f32 %v2277, %v1195
      %v2279 = vadd.f32 %v2278, %v1196
      %v2280 = vadd.f32 %v2279, %v1197
      %v2281 = vadd.f32 %v2280, %v1198
      %v2282 = vadd.f32 %v2281, %v1199
      %v2283 = vadd.f32 %v2282, %v1200
      %2284 = vadd.xlane.f32.xlu0 %v2283
      %v2285 = vpop.xlane.xlu0 %2284
      %v2286 = vadd.f32 %v1201, %v1202
      %v2287 = vadd.f32 %v2286, %v1203
      %v2288 = vadd.f32 %v2287, %v1204
      %v2289 = vadd.f32 %v2288, %v1205
      %v2290 = vadd.f32 %v2289, %v1206
      %v2291 = vadd.f32 %v2290, %v1207
      %v2292 = vadd.f32 %v2291, %v1208
      %v2293 = vadd.f32 %v2292, %v1209
      %v2294 = vadd.f32 %v2293, %v1210
      %v2295 = vadd.f32 %v2294, %v1211
      %v2296 = vadd.f32 %v2295, %v1212
      %v2297 = vadd.f32 %v2296, %v1213
      %v2298 = vadd.f32 %v2297, %v1214
      %v2299 = vadd.f32 %v2298, %v1215
      %v2300 = vadd.f32 %v2299, %v1216
      %2301 = vadd.xlane.f32.xlu0 %v2300
      %v2302 = vpop.xlane.xlu0 %2301
      %v2303 = vadd.f32 %v1217, %v1218
      %v2304 = vadd.f32 %v2303, %v1219
      %v2305 = vadd.f32 %v2304, %v1220
      %v2306 = vadd.f32 %v2305, %v1221
      %v2307 = vadd.f32 %v2306, %v1222
      %v2308 = vadd.f32 %v2307, %v1223
      %v2309 = vadd.f32 %v2308, %v1224
      %v2310 = vadd.f32 %v2309, %v1225
      %v2311 = vadd.f32 %v2310, %v1226
      %v2312 = vadd.f32 %v2311, %v1227
      %v2313 = vadd.f32 %v2312, %v1228
      %v2314 = vadd.f32 %v2313, %v1229
      %v2315 = vadd.f32 %v2314, %v1230
      %v2316 = vadd.f32 %v2315, %v1231
      %v2317 = vadd.f32 %v2316, %v1232
      %2318 = vadd.xlane.f32.xlu0 %v2317
      %v2319 = vpop.xlane.xlu0 %2318
      %v2320 = vadd.f32 %v1233, %v1234
      %v2321 = vadd.f32 %v2320, %v1235
      %v2322 = vadd.f32 %v2321, %v1236
      %v2323 = vadd.f32 %v2322, %v1237
      %v2324 = vadd.f32 %v2323, %v1238
      %v2325 = vadd.f32 %v2324, %v1239
      %v2326 = vadd.f32 %v2325, %v1240
      %v2327 = vadd.f32 %v2326, %v1241
      %v2328 = vadd.f32 %v2327, %v1242
      %v2329 = vadd.f32 %v2328, %v1243
      %v2330 = vadd.f32 %v2329, %v1244
      %v2331 = vadd.f32 %v2330, %v1245
      %v2332 = vadd.f32 %v2331, %v1246
      %v2333 = vadd.f32 %v2332, %v1247
      %v2334 = vadd.f32 %v2333, %v1248
      %2335 = vadd.xlane.f32.xlu0 %v2334
      %v2336 = vpop.xlane.xlu0 %2335
      %v2337 = vmul.f32 %v1265, 0.00048828125
      %v2338 = vmul.f32 %v1282, 0.00048828125
      %v2339 = vmul.f32 %v1299, 0.00048828125
      %v2340 = vmul.f32 %v1316, 0.00048828125
      %v2341 = vmul.f32 %v1333, 0.00048828125
      %v2342 = vmul.f32 %v1350, 0.00048828125
      %v2343 = vmul.f32 %v1367, 0.00048828125
      %v2344 = vmul.f32 %v1384, 0.00048828125
      %v2345 = vmul.f32 %v1401, 0.00048828125
      %v2346 = vmul.f32 %v1418, 0.00048828125
      %v2347 = vmul.f32 %v1435, 0.00048828125
      %v2348 = vmul.f32 %v1452, 0.00048828125
      %v2349 = vmul.f32 %v1469, 0.00048828125
      %v2350 = vmul.f32 %v1486, 0.00048828125
      %v2351 = vmul.f32 %v1503, 0.00048828125
      %v2352 = vmul.f32 %v1520, 0.00048828125
      %v2353 = vmul.f32 %v1537, 0.00048828125
      %v2354 = vmul.f32 %v1554, 0.00048828125
      %v2355 = vmul.f32 %v1571, 0.00048828125
      %v2356 = vmul.f32 %v1588, 0.00048828125
      %v2357 = vmul.f32 %v1605, 0.00048828125
      %v2358 = vmul.f32 %v1622, 0.00048828125
      %v2359 = vmul.f32 %v1639, 0.00048828125
      %v2360 = vmul.f32 %v1656, 0.00048828125
      %v2361 = vmul.f32 %v1673, 0.00048828125
      %v2362 = vmul.f32 %v1690, 0.00048828125
      %v2363 = vmul.f32 %v1707, 0.00048828125
      %v2364 = vmul.f32 %v1724, 0.00048828125
      %v2365 = vmul.f32 %v1741, 0.00048828125
      %v2366 = vmul.f32 %v1758, 0.00048828125
      %v2367 = vmul.f32 %v1775, 0.00048828125
      %v2368 = vmul.f32 %v1792, 0.00048828125
      %v2369 = vmul.f32 %v1809, 0.00048828125
      %v2370 = vmul.f32 %v1826, 0.00048828125
      %v2371 = vmul.f32 %v1843, 0.00048828125
      %v2372 = vmul.f32 %v1860, 0.00048828125
      %v2373 = vmul.f32 %v1877, 0.00048828125
      %v2374 = vmul.f32 %v1894, 0.00048828125
      %v2375 = vmul.f32 %v1911, 0.00048828125
      %v2376 = vmul.f32 %v1928, 0.00048828125
      %v2377 = vmul.f32 %v1945, 0.00048828125
      %v2378 = vmul.f32 %v1962, 0.00048828125
      %v2379 = vmul.f32 %v1979, 0.00048828125
      %v2380 = vmul.f32 %v1996, 0.00048828125
      %v2381 = vmul.f32 %v2013, 0.00048828125
      %v2382 = vmul.f32 %v2030, 0.00048828125
      %v2383 = vmul.f32 %v2047, 0.00048828125
      %v2384 = vmul.f32 %v2064, 0.00048828125
      %v2385 = vmul.f32 %v2081, 0.00048828125
      %v2386 = vmul.f32 %v2098, 0.00048828125
      %v2387 = vmul.f32 %v2115, 0.00048828125
      %v2388 = vmul.f32 %v2132, 0.00048828125
      %v2389 = vmul.f32 %v2149, 0.00048828125
      %v2390 = vmul.f32 %v2166, 0.00048828125
      %v2391 = vmul.f32 %v2183, 0.00048828125
      %v2392 = vmul.f32 %v2200, 0.00048828125
      %v2393 = vmul.f32 %v2217, 0.00048828125
      %v2394 = vmul.f32 %v2234, 0.00048828125
      %v2395 = vmul.f32 %v2251, 0.00048828125
      %v2396 = vmul.f32 %v2268, 0.00048828125
      %v2397 = vmul.f32 %v2285, 0.00048828125
      %v2398 = vmul.f32 %v2302, 0.00048828125
      %v2399 = vmul.f32 %v2319, 0.00048828125
      %v2400 = vmul.f32 %v2336, 0.00048828125
      %v2401 = vld [vmem:[%s1] sm:$0xff]
      %v2402 = vld [vmem:[%s1 + $0x8] sm:$0xff]
      %v2403 = vld [vmem:[%s1 + $0x10] sm:$0xff]
      %v2404 = vld [vmem:[%s1 + $0x18] sm:$0xff]
      %v2405 = vld [vmem:[%s1 + $0x20] sm:$0xff]
      %v2406 = vld [vmem:[%s1 + $0x28] sm:$0xff]
      %v2407 = vld [vmem:[%s1 + $0x30] sm:$0xff]
      %v2408 = vld [vmem:[%s1 + $0x38] sm:$0xff]
      %v2409 = vld [vmem:[%s1 + $0x40] sm:$0xff]
      %v2410 = vld [vmem:[%s1 + $0x48] sm:$0xff]
      %v2411 = vld [vmem:[%s1 + $0x50] sm:$0xff]
      %v2412 = vld [vmem:[%s1 + $0x58] sm:$0xff]
      %v2413 = vld [vmem:[%s1 + $0x60] sm:$0xff]
      %v2414 = vld [vmem:[%s1 + $0x68] sm:$0xff]
      %v2415 = vld [vmem:[%s1 + $0x70] sm:$0xff]
      %v2416 = vld [vmem:[%s1 + $0x78] sm:$0xff]
      %v2417 = vld [vmem:[%s1 + $0x80] sm:$0xff]
      %v2418 = vld [vmem:[%s1 + $0x88] sm:$0xff]
      %v2419 = vld [vmem:[%s1 + $0x90] sm:$0xff]
      %v2420 = vld [vmem:[%s1 + $0x98] sm:$0xff]
      %v2421 = vld [vmem:[%s1 + $0xa0] sm:$0xff]
      %v2422 = vld [vmem:[%s1 + $0xa8] sm:$0xff]
      %v2423 = vld [vmem:[%s1 + $0xb0] sm:$0xff]
      %v2424 = vld [vmem:[%s1 + $0xb8] sm:$0xff]
      %v2425 = vld [vmem:[%s1 + $0xc0] sm:$0xff]
      %v2426 = vld [vmem:[%s1 + $0xc8] sm:$0xff]
      %v2427 = vld [vmem:[%s1 + $0xd0] sm:$0xff]
      %v2428 = vld [vmem:[%s1 + $0xd8] sm:$0xff]
      %v2429 = vld [vmem:[%s1 + $0xe0] sm:$0xff]
      %v2430 = vld [vmem:[%s1 + $0xe8] sm:$0xff]
      %v2431 = vld [vmem:[%s1 + $0xf0] sm:$0xff]
      %v2432 = vld [vmem:[%s1 + $0xf8] sm:$0xff]
      %v2433 = vld [vmem:[%s1 + $0x100] sm:$0xff]
      %v2434 = vld [vmem:[%s1 + $0x108] sm:$0xff]
      %v2435 = vld [vmem:[%s1 + $0x110] sm:$0xff]
      %v2436 = vld [vmem:[%s1 + $0x118] sm:$0xff]
      %v2437 = vld [vmem:[%s1 + $0x120] sm:$0xff]
      %v2438 = vld [vmem:[%s1 + $0x128] sm:$0xff]
      %v2439 = vld [vmem:[%s1 + $0x130] sm:$0xff]
      %v2440 = vld [vmem:[%s1 + $0x138] sm:$0xff]
      %v2441 = vld [vmem:[%s1 + $0x140] sm:$0xff]
      %v2442 = vld [vmem:[%s1 + $0x148] sm:$0xff]
      %v2443 = vld [vmem:[%s1 + $0x150] sm:$0xff]
      %v2444 = vld [vmem:[%s1 + $0x158] sm:$0xff]
      %v2445 = vld [vmem:[%s1 + $0x160] sm:$0xff]
      %v2446 = vld [vmem:[%s1 + $0x168] sm:$0xff]
      %v2447 = vld [vmem:[%s1 + $0x170] sm:$0xff]
      %v2448 = vld [vmem:[%s1 + $0x178] sm:$0xff]
      %v2449 = vld [vmem:[%s1 + $0x180] sm:$0xff]
      %v2450 = vld [vmem:[%s1 + $0x188] sm:$0xff]
      %v2451 = vld [vmem:[%s1 + $0x190] sm:$0xff]
      %v2452 = vld [vmem:[%s1 + $0x198] sm:$0xff]
      %v2453 = vld [vmem:[%s1 + $0x1a0] sm:$0xff]
      %v2454 = vld [vmem:[%s1 + $0x1a8] sm:$0xff]
      %v2455 = vld [vmem:[%s1 + $0x1b0] sm:$0xff]
      %v2456 = vld [vmem:[%s1 + $0x1b8] sm:$0xff]
      %v2457 = vld [vmem:[%s1 + $0x1c0] sm:$0xff]
      %v2458 = vld [vmem:[%s1 + $0x1c8] sm:$0xff]
      %v2459 = vld [vmem:[%s1 + $0x1d0] sm:$0xff]
      %v2460 = vld [vmem:[%s1 + $0x1d8] sm:$0xff]
      %v2461 = vld [vmem:[%s1 + $0x1e0] sm:$0xff]
      %v2462 = vld [vmem:[%s1 + $0x1e8] sm:$0xff]
      %v2463 = vld [vmem:[%s1 + $0x1f0] sm:$0xff]
      %v2464 = vld [vmem:[%s1 + $0x1f8] sm:$0xff]
      %v2465 = vld [vmem:[%s2] sm:$0xff]
      %v2466 = vld [vmem:[%s2 + $0x8] sm:$0xff]
      %v2467 = vld [vmem:[%s2 + $0x10] sm:$0xff]
      %v2468 = vld [vmem:[%s2 + $0x18] sm:$0xff]
      %v2469 = vld [vmem:[%s2 + $0x20] sm:$0xff]
      %v2470 = vld [vmem:[%s2 + $0x28] sm:$0xff]
      %v2471 = vld [vmem:[%s2 + $0x30] sm:$0xff]
      %v2472 = vld [vmem:[%s2 + $0x38] sm:$0xff]
      %v2473 = vld [vmem:[%s2 + $0x40] sm:$0xff]
      %v2474 = vld [vmem:[%s2 + $0x48] sm:$0xff]
      %v2475 = vld [vmem:[%s2 + $0x50] sm:$0xff]
      %v2476 = vld [vmem:[%s2 + $0x58] sm:$0xff]
      %v2477 = vld [vmem:[%s2 + $0x60] sm:$0xff]
      %v2478 = vld [vmem:[%s2 + $0x68] sm:$0xff]
      %v2479 = vld [vmem:[%s2 + $0x70] sm:$0xff]
      %v2480 = vld [vmem:[%s2 + $0x78] sm:$0xff]
      %2481 = vmatprep.subr.mxu0 0.0
      %2482 = vmatpush1.msra.mxu0 %v2337
      %2483 = vmatprep.subr.mxu0 0.0
      %2484 = vmatpush1.msra.mxu0 %v2338
      %2485 = vmatprep.subr.mxu0 0.0
      %2486 = vmatpush1.msra.mxu0 %v2339
      %2487 = vmatprep.subr.mxu0 0.0
      %2488 = vmatpush1.msra.mxu0 %v2340
      %2489 = vmatprep.subr.mxu0 0.0
      %2490 = vmatpush1.msra.mxu0 %v2341
      %2491 = vmatprep.subr.mxu0 0.0
      %2492 = vmatpush1.msra.mxu0 %v2342
      %2493 = vmatprep.subr.mxu0 0.0
      %2494 = vmatpush1.msra.mxu0 %v2343
      %2495 = vmatprep.subr.mxu0 0.0
      %2496 = vmatpush1.msra.mxu0 %v2344
      %2497 = vmatprep.subr.mxu0 0.0
      %2498 = vmatpush1.msra.mxu0 %v2345
      %2499 = vmatprep.subr.mxu0 0.0
      %2500 = vmatpush1.msra.mxu0 %v2346
      %2501 = vmatprep.subr.mxu0 0.0
      %2502 = vmatpush1.msra.mxu0 %v2347
      %2503 = vmatprep.subr.mxu0 0.0
      %2504 = vmatpush1.msra.mxu0 %v2348
      %2505 = vmatprep.subr.mxu0 0.0
      %2506 = vmatpush1.msra.mxu0 %v2349
      %2507 = vmatprep.subr.mxu0 0.0
      %2508 = vmatpush1.msra.mxu0 %v2350
      %2509 = vmatprep.subr.mxu0 0.0
      %2510 = vmatpush1.msra.mxu0 %v2351
      %2511 = vmatprep.subr.mxu0 0.0
      %2512 = vmatpush1.msra.mxu0 %v2352
      %2513 = vmatprep.subr.mxu0 0.0
      %2514 = vmatpush1.msra.mxu0 %v2353
      %2515 = vmatprep.subr.mxu0 0.0
      %2516 = vmatpush1.msra.mxu0 %v2354
      %2517 = vmatprep.subr.mxu0 0.0
      %2518 = vmatpush1.msra.mxu0 %v2355
      %2519 = vmatprep.subr.mxu0 0.0
      %2520 = vmatpush1.msra.mxu0 %v2356
      %2521 = vmatprep.subr.mxu0 0.0
      %2522 = vmatpush1.msra.mxu0 %v2357
      %2523 = vmatprep.subr.mxu0 0.0
      %2524 = vmatpush1.msra.mxu0 %v2358
      %2525 = vmatprep.subr.mxu0 0.0
      %2526 = vmatpush1.msra.mxu0 %v2359
      %2527 = vmatprep.subr.mxu0 0.0
      %2528 = vmatpush1.msra.mxu0 %v2360
      %2529 = vmatprep.subr.mxu0 0.0
      %2530 = vmatpush1.msra.mxu0 %v2361
      %2531 = vmatprep.subr.mxu0 0.0
      %2532 = vmatpush1.msra.mxu0 %v2362
      %2533 = vmatprep.subr.mxu0 0.0
      %2534 = vmatpush1.msra.mxu0 %v2363
      %2535 = vmatprep.subr.mxu0 0.0
      %2536 = vmatpush1.msra.mxu0 %v2364
      %2537 = vmatprep.subr.mxu0 0.0
      %2538 = vmatpush1.msra.mxu0 %v2365
      %2539 = vmatprep.subr.mxu0 0.0
      %2540 = vmatpush1.msra.mxu0 %v2366
      %2541 = vmatprep.subr.mxu0 0.0
      %2542 = vmatpush1.msra.mxu0 %v2367
      %2543 = vmatprep.subr.mxu0 0.0
      %2544 = vmatpush1.msra.mxu0 %v2368
      %2545 = vmatprep.mubr.f32.mxu0 %v2402
      %2546 = vmatmul.mubr.f32.gmra.mrb[0].mxu0 %v2401
      %v2547 = vpop.f32.mrb[0].mxu0
      %v2548 = vadd.f32 %v2465, %v2547
      %v2549 = vpop.f32.mrb[0].mxu0
      %2550 = vmatprep.mubr.f32.mxu0 %v2406
      %2551 = vmatmul.mubr.f32.gmra.mrb[0].mxu0 %v2405
      %v2552 = vpop.f32.mrb[0].mxu0
      %v2553 = vadd.f32 %v2466, %v2552
      %v2554 = vpop.f32.mrb[0].mxu0
      %2555 = vmatprep.mubr.f32.mxu0 %v2410
      %2556 = vmatmul.mubr.f32.gmra.mrb[0].mxu0 %v2409
      %v2557 = vpop.f32.mrb[0].mxu0
      %v2558 = vadd.f32 %v2467, %v2557
      %v2559 = vpop.f32.mrb[0].mxu0
      %2560 = vmatprep.mubr.f32.mxu0 %v2414
      %2561 = vmatmul.mubr.f32.gmra.mrb[0].mxu0 %v2413
      %v2562 = vpop.f32.mrb[0].mxu0
      %v2563 = vadd.f32 %v2468, %v2562
      %v2564 = vpop.f32.mrb[0].mxu0
      %2565 = vmatprep.mubr.f32.mxu0 %v2418
      %2566 = vmatmul.mubr.f32.gmra.mrb[0].mxu0 %v2417
      %v2567 = vpop.f32.mrb[0].mxu0
      %v2568 = vadd.f32 %v2469, %v2567
      %v2569 = vpop.f32.mrb[0].mxu0
      %2570 = vmatprep.mubr.f32.mxu0 %v2422
      %2571 = vmatmul.mubr.f32.gmra.mrb[0].mxu0 %v2421
      %v2572 = vpop.f32.mrb[0].mxu0
      %v2573 = vadd.f32 %v2470, %v2572
      %v2574 = vpop.f32.mrb[0].mxu0
      %2575 = vmatprep.mubr.f32.mxu0 %v2426
      %2576 = vmatmul.mubr.f32.gmra.mrb[0].mxu0 %v2425
      %v2577 = vpop.f32.mrb[0].mxu0
      %v2578 = vadd.f32 %v2471, %v2577
      %v2579 = vpop.f32.mrb[0].mxu0
      %2580 = vmatprep.mubr.f32.mxu0 %v2430
      %2581 = vmatmul.mubr.f32.gmra.mrb[0].mxu0 %v2429
      %v2582 = vpop.f32.mrb[0].mxu0
      %v2583 = vadd.f32 %v2472, %v2582
      %v2584 = vpop.f32.mrb[0].mxu0
      %2585 = vmatprep.mubr.f32.mxu0 %v2434
      %2586 = vmatmul.mubr.f32.gmra.mrb[0].mxu0 %v2433
      %v2587 = vpop.f32.mrb[0].mxu0
      %v2588 = vadd.f32 %v2473, %v2587
      %v2589 = vpop.f32.mrb[0].mxu0
      %2590 = vmatprep.mubr.f32.mxu0 %v2438
      %2591 = vmatmul.mubr.f32.gmra.mrb[0].mxu0 %v2437
      %v2592 = vpop.f32.mrb[0].mxu0
      %v2593 = vadd.f32 %v2474, %v2592
      %v2594 = vpop.f32.mrb[0].mxu0
      %2595 = vmatprep.mubr.f32.mxu0 %v2442
      %2596 = vmatmul.mubr.f32.gmra.mrb[0].mxu0 %v2441
      %v2597 = vpop.f32.mrb[0].mxu0
      %v2598 = vadd.f32 %v2475, %v2597
      %v2599 = vpop.f32.mrb[0].mxu0
      %2600 = vmatprep.mubr.f32.mxu0 %v2446
      %2601 = vmatmul.mubr.f32.gmra.mrb[0].mxu0 %v2445
      %v2602 = vpop.f32.mrb[0].mxu0
      %v2603 = vadd.f32 %v2476, %v2602
      %v2604 = vpop.f32.mrb[0].mxu0
      %2605 = vmatprep.mubr.f32.mxu0 %v2450
      %2606 = vmatmul.mubr.f32.gmra.mrb[0].mxu0 %v2449
      %v2607 = vpop.f32.mrb[0].mxu0
      %v2608 = vadd.f32 %v2477, %v2607
      %v2609 = vpop.f32.mrb[0].mxu0
      %2610 = vmatprep.mubr.f32.mxu0 %v2454
      %2611 = vmatmul.mubr.f32.gmra.mrb[0].mxu0 %v2453
      %v2612 = vpop.f32.mrb[0].mxu0
      %v2613 = vadd.f32 %v2478, %v2612
      %v2614 = vpop.f32.mrb[0].mxu0
      %2615 = vmatprep.mubr.f32.mxu0 %v2458
      %2616 = vmatmul.mubr.f32.gmra.mrb[0].mxu0 %v2457
      %v2617 = vpop.f32.mrb[0].mxu0
      %v2618 = vadd.f32 %v2479, %v2617
      %v2619 = vpop.f32.mrb[0].mxu0
      %2620 = vmatprep.mubr.f32.mxu0 %v2462
      %2621 = vmatmul.mubr.f32.gmra.mrb[0].mxu0 %v2461
      %v2622 = vpop.f32.mrb[0].mxu0
      %v2623 = vadd.f32 %v2480, %v2622
      %v2624 = vpop.f32.mrb[0].mxu0
      %2625 = vdwg.mxu0
      %2626 = vmatprep.subr.mxu0 0.0
      %2627 = vmatpush1.msra.mxu0 %v2369
      %2628 = vmatprep.subr.mxu0 0.0
      %2629 = vmatpush1.msra.mxu0 %v2370
      %2630 = vmatprep.subr.mxu0 0.0
      %2631 = vmatpush1.msra.mxu0 %v2371
      %2632 = vmatprep.subr.mxu0 0.0
      %2633 = vmatpush1.msra.mxu0 %v2372
      %2634 = vmatprep.subr.mxu0 0.0
      %2635 = vmatpush1.msra.mxu0 %v2373
      %2636 = vmatprep.subr.mxu0 0.0
      %2637 = vmatpush1.msra.mxu0 %v2374
      %2638 = vmatprep.subr.mxu0 0.0
      %2639 = vmatpush1.msra.mxu0 %v2375
      %2640 = vmatprep.subr.mxu0 0.0
      %2641 = vmatpush1.msra.mxu0 %v2376
      %2642 = vmatprep.subr.mxu0 0.0
      %2643 = vmatpush1.msra.mxu0 %v2377
      %2644 = vmatprep.subr.mxu0 0.0
      %2645 = vmatpush1.msra.mxu0 %v2378
      %2646 = vmatprep.subr.mxu0 0.0
      %2647 = vmatpush1.msra.mxu0 %v2379
      %2648 = vmatprep.subr.mxu0 0.0
      %2649 = vmatpush1.msra.mxu0 %v2380
      %2650 = vmatprep.subr.mxu0 0.0
      %2651 = vmatpush1.msra.mxu0 %v2381
      %2652 = vmatprep.subr.mxu0 0.0
      %2653 = vmatpush1.msra.mxu0 %v2382
      %2654 = vmatprep.subr.mxu0 0.0
      %2655 = vmatpush1.msra.mxu0 %v2383
      %2656 = vmatprep.subr.mxu0 0.0
      %2657 = vmatpush1.msra.mxu0 %v2384
      %2658 = vmatprep.subr.mxu0 0.0
      %2659 = vmatpush1.msra.mxu0 %v2385
      %2660 = vmatprep.subr.mxu0 0.0
      %2661 = vmatpush1.msra.mxu0 %v2386
      %2662 = vmatprep.subr.mxu0 0.0
      %2663 = vmatpush1.msra.mxu0 %v2387
      %2664 = vmatprep.subr.mxu0 0.0
      %2665 = vmatpush1.msra.mxu0 %v2388
      %2666 = vmatprep.subr.mxu0 0.0
      %2667 = vmatpush1.msra.mxu0 %v2389
      %2668 = vmatprep.subr.mxu0 0.0
      %2669 = vmatpush1.msra.mxu0 %v2390
      %2670 = vmatprep.subr.mxu0 0.0
      %2671 = vmatpush1.msra.mxu0 %v2391
      %2672 = vmatprep.subr.mxu0 0.0
      %2673 = vmatpush1.msra.mxu0 %v2392
      %2674 = vmatprep.subr.mxu0 0.0
      %2675 = vmatpush1.msra.mxu0 %v2393
      %2676 = vmatprep.subr.mxu0 0.0
      %2677 = vmatpush1.msra.mxu0 %v2394
      %2678 = vmatprep.subr.mxu0 0.0
      %2679 = vmatpush1.msra.mxu0 %v2395
      %2680 = vmatprep.subr.mxu0 0.0
      %2681 = vmatpush1.msra.mxu0 %v2396
      %2682 = vmatprep.subr.mxu0 0.0
      %2683 = vmatpush1.msra.mxu0 %v2397
      %2684 = vmatprep.subr.mxu0 0.0
      %2685 = vmatpush1.msra.mxu0 %v2398
      %2686 = vmatprep.subr.mxu0 0.0
      %2687 = vmatpush1.msra.mxu0 %v2399
      %2688 = vmatprep.subr.mxu0 0.0
      %2689 = vmatpush1.msra.mxu0 %v2400
      %2690 = vmatprep.mubr.f32.mxu0 %v2404
      %2691 = vmatmul.mubr.f32.gmra.mrb[0].mxu0 %v2403
      %v2692 = vpop.f32.mrb[0].mxu0
      %v2693 = vadd.f32 %v2548, %v2692
      %v2694 = vpop.f32.mrb[0].mxu0
      %2695 = vmatprep.mubr.f32.mxu0 %v2408
      %2696 = vmatmul.mubr.f32.gmra.mrb[0].mxu0 %v2407
      %v2697 = vpop.f32.mrb[0].mxu0
      %v2698 = vadd.f32 %v2553, %v2697
      %v2699 = vpop.f32.mrb[0].mxu0
      %2700 = vmatprep.mubr.f32.mxu0 %v2412
      %2701 = vmatmul.mubr.f32.gmra.mrb[0].mxu0 %v2411
      %v2702 = vpop.f32.mrb[0].mxu0
      %v2703 = vadd.f32 %v2558, %v2702
      %v2704 = vpop.f32.mrb[0].mxu0
      %2705 = vmatprep.mubr.f32.mxu0 %v2416
      %2706 = vmatmul.mubr.f32.gmra.mrb[0].mxu0 %v2415
      %v2707 = vpop.f32.mrb[0].mxu0
      %v2708 = vadd.f32 %v2563, %v2707
      %v2709 = vpop.f32.mrb[0].mxu0
      %2710 = vmatprep.mubr.f32.mxu0 %v2420
      %2711 = vmatmul.mubr.f32.gmra.mrb[0].mxu0 %v2419
      %v2712 = vpop.f32.mrb[0].mxu0
      %v2713 = vadd.f32 %v2568, %v2712
      %v2714 = vpop.f32.mrb[0].mxu0
      %2715 = vmatprep.mubr.f32.mxu0 %v2424
      %2716 = vmatmul.mubr.f32.gmra.mrb[0].mxu0 %v2423
      %v2717 = vpop.f32.mrb[0].mxu0
      %v2718 = vadd.f32 %v2573, %v2717
      %v2719 = vpop.f32.mrb[0].mxu0
      %2720 = vmatprep.mubr.f32.mxu0 %v2428
      %2721 = vmatmul.mubr.f32.gmra.mrb[0].mxu0 %v2427
      %v2722 = vpop.f32.mrb[0].mxu0
      %v2723 = vadd.f32 %v2578, %v2722
      %v2724 = vpop.f32.mrb[0].mxu0
      %2725 = vmatprep.mubr.f32.mxu0 %v2432
      %2726 = vmatmul.mubr.f32.gmra.mrb[0].mxu0 %v2431
      %v2727 = vpop.f32.mrb[0].mxu0
      %v2728 = vadd.f32 %v2583, %v2727
      %v2729 = vpop.f32.mrb[0].mxu0
      %2730 = vmatprep.mubr.f32.mxu0 %v2436
      %2731 = vmatmul.mubr.f32.gmra.mrb[0].mxu0 %v2435
      %v2732 = vpop.f32.mrb[0].mxu0
      %v2733 = vadd.f32 %v2588, %v2732
      %v2734 = vpop.f32.mrb[0].mxu0
      %2735 = vmatprep.mubr.f32.mxu0 %v2440
      %2736 = vmatmul.mubr.f32.gmra.mrb[0].mxu0 %v2439
      %v2737 = vpop.f32.mrb[0].mxu0
      %v2738 = vadd.f32 %v2593, %v2737
      %v2739 = vpop.f32.mrb[0].mxu0
      %2740 = vmatprep.mubr.f32.mxu0 %v2444
      %2741 = vmatmul.mubr.f32.gmra.mrb[0].mxu0 %v2443
      %v2742 = vpop.f32.mrb[0].mxu0
      %v2743 = vadd.f32 %v2598, %v2742
      %v2744 = vpop.f32.mrb[0].mxu0
      %2745 = vmatprep.mubr.f32.mxu0 %v2448
      %2746 = vmatmul.mubr.f32.gmra.mrb[0].mxu0 %v2447
      %v2747 = vpop.f32.mrb[0].mxu0
      %v2748 = vadd.f32 %v2603, %v2747
      %v2749 = vpop.f32.mrb[0].mxu0
      %2750 = vmatprep.mubr.f32.mxu0 %v2452
      %2751 = vmatmul.mubr.f32.gmra.mrb[0].mxu0 %v2451
      %v2752 = vpop.f32.mrb[0].mxu0
      %v2753 = vadd.f32 %v2608, %v2752
      %v2754 = vpop.f32.mrb[0].mxu0
      %2755 = vmatprep.mubr.f32.mxu0 %v2456
      %2756 = vmatmul.mubr.f32.gmra.mrb[0].mxu0 %v2455
      %v2757 = vpop.f32.mrb[0].mxu0
      %v2758 = vadd.f32 %v2613, %v2757
      %v2759 = vpop.f32.mrb[0].mxu0
      %2760 = vmatprep.mubr.f32.mxu0 %v2460
      %2761 = vmatmul.mubr.f32.gmra.mrb[0].mxu0 %v2459
      %v2762 = vpop.f32.mrb[0].mxu0
      %v2763 = vadd.f32 %v2618, %v2762
      %v2764 = vpop.f32.mrb[0].mxu0
      %2765 = vmatprep.mubr.f32.mxu0 %v2464
      %2766 = vmatmul.mubr.f32.gmra.mrb[0].mxu0 %v2463
      %v2767 = vpop.f32.mrb[0].mxu0
      %v2768 = vadd.f32 %v2623, %v2767
      %v2769 = vpop.f32.mrb[0].mxu0
      %2770 = vdwg.mxu0
      %v2771 = vmax.f32 %v2693, 0.0
      %v2772 = vmax.f32 %v2698, 0.0
      %v2773 = vmax.f32 %v2703, 0.0
      %v2774 = vmax.f32 %v2708, 0.0
      %v2775 = vmax.f32 %v2713, 0.0
      %v2776 = vmax.f32 %v2718, 0.0
      %v2777 = vmax.f32 %v2723, 0.0
      %v2778 = vmax.f32 %v2728, 0.0
      %v2779 = vmax.f32 %v2733, 0.0
      %v2780 = vmax.f32 %v2738, 0.0
      %v2781 = vmax.f32 %v2743, 0.0
      %v2782 = vmax.f32 %v2748, 0.0
      %v2783 = vmax.f32 %v2753, 0.0
      %v2784 = vmax.f32 %v2758, 0.0
      %v2785 = vmax.f32 %v2763, 0.0
      %v2786 = vmax.f32 %v2768, 0.0
      %v2787 = vld [vmem:[%s3] sm:$0xff]
      %v2788 = vld [vmem:[%s3 + $0x8] sm:$0xff]
      %v2789 = vld [vmem:[%s3 + $0x10] sm:$0xff]
      %v2790 = vld [vmem:[%s3 + $0x18] sm:$0xff]
      %v2791 = vld [vmem:[%s3 + $0x20] sm:$0xff]
      %v2792 = vld [vmem:[%s3 + $0x28] sm:$0xff]
      %v2793 = vld [vmem:[%s3 + $0x30] sm:$0xff]
      %v2794 = vld [vmem:[%s3 + $0x38] sm:$0xff]
      %v2795 = vld [vmem:[%s3 + $0x40] sm:$0xff]
      %v2796 = vld [vmem:[%s3 + $0x48] sm:$0xff]
      %v2797 = vld [vmem:[%s3 + $0x50] sm:$0xff]
      %v2798 = vld [vmem:[%s3 + $0x58] sm:$0xff]
      %v2799 = vld [vmem:[%s3 + $0x60] sm:$0xff]
      %v2800 = vld [vmem:[%s3 + $0x68] sm:$0xff]
      %v2801 = vld [vmem:[%s3 + $0x70] sm:$0xff]
      %v2802 = vld [vmem:[%s3 + $0x78] sm:$0xff]
      %v2803 = vld [vmem:[%s3 + $0x80] sm:$0xff]
      %v2804 = vld [vmem:[%s3 + $0x88] sm:$0xff]
      %v2805 = vld [vmem:[%s3 + $0x90] sm:$0xff]
      %v2806 = vld [vmem:[%s3 + $0x98] sm:$0xff]
      %v2807 = vld [vmem:[%s3 + $0xa0] sm:$0xff]
      %v2808 = vld [vmem:[%s3 + $0xa8] sm:$0xff]
      %v2809 = vld [vmem:[%s3 + $0xb0] sm:$0xff]
      %v2810 = vld [vmem:[%s3 + $0xb8] sm:$0xff]
      %v2811 = vld [vmem:[%s3 + $0xc0] sm:$0xff]
      %v2812 = vld [vmem:[%s3 + $0xc8] sm:$0xff]
      %v2813 = vld [vmem:[%s3 + $0xd0] sm:$0xff]
      %v2814 = vld [vmem:[%s3 + $0xd8] sm:$0xff]
      %v2815 = vld [vmem:[%s3 + $0xe0] sm:$0xff]
      %v2816 = vld [vmem:[%s3 + $0xe8] sm:$0xff]
      %v2817 = vld [vmem:[%s3 + $0xf0] sm:$0xff]
      %v2818 = vld [vmem:[%s3 + $0xf8] sm:$0xff]
      %v2819 = vld [vmem:[%s3 + $0x100] sm:$0xff]
      %v2820 = vld [vmem:[%s3 + $0x108] sm:$0xff]
      %v2821 = vld [vmem:[%s3 + $0x110] sm:$0xff]
      %v2822 = vld [vmem:[%s3 + $0x118] sm:$0xff]
      %v2823 = vld [vmem:[%s3 + $0x120] sm:$0xff]
      %v2824 = vld [vmem:[%s3 + $0x128] sm:$0xff]
      %v2825 = vld [vmem:[%s3 + $0x130] sm:$0xff]
      %v2826 = vld [vmem:[%s3 + $0x138] sm:$0xff]
      %v2827 = vld [vmem:[%s3 + $0x140] sm:$0xff]
      %v2828 = vld [vmem:[%s3 + $0x148] sm:$0xff]
      %v2829 = vld [vmem:[%s3 + $0x150] sm:$0xff]
      %v2830 = vld [vmem:[%s3 + $0x158] sm:$0xff]
      %v2831 = vld [vmem:[%s3 + $0x160] sm:$0xff]
      %v2832 = vld [vmem:[%s3 + $0x168] sm:$0xff]
      %v2833 = vld [vmem:[%s3 + $0x170] sm:$0xff]
      %v2834 = vld [vmem:[%s3 + $0x178] sm:$0xff]
      %v2835 = vld [vmem:[%s3 + $0x180] sm:$0xff]
      %v2836 = vld [vmem:[%s3 + $0x188] sm:$0xff]
      %v2837 = vld [vmem:[%s3 + $0x190] sm:$0xff]
      %v2838 = vld [vmem:[%s3 + $0x198] sm:$0xff]
      %v2839 = vld [vmem:[%s3 + $0x1a0] sm:$0xff]
      %v2840 = vld [vmem:[%s3 + $0x1a8] sm:$0xff]
      %v2841 = vld [vmem:[%s3 + $0x1b0] sm:$0xff]
      %v2842 = vld [vmem:[%s3 + $0x1b8] sm:$0xff]
      %v2843 = vld [vmem:[%s3 + $0x1c0] sm:$0xff]
      %v2844 = vld [vmem:[%s3 + $0x1c8] sm:$0xff]
      %v2845 = vld [vmem:[%s3 + $0x1d0] sm:$0xff]
      %v2846 = vld [vmem:[%s3 + $0x1d8] sm:$0xff]
      %v2847 = vld [vmem:[%s3 + $0x1e0] sm:$0xff]
      %v2848 = vld [vmem:[%s3 + $0x1e8] sm:$0xff]
      %v2849 = vld [vmem:[%s3 + $0x1f0] sm:$0xff]
      %v2850 = vld [vmem:[%s3 + $0x1f8] sm:$0xff]
      %v2851 = vld [vmem:[%s4] sm:$0xff]
      %v2852 = vld [vmem:[%s4 + $0x8] sm:$0xff]
      %v2853 = vld [vmem:[%s4 + $0x10] sm:$0xff]
      %v2854 = vld [vmem:[%s4 + $0x18] sm:$0xff]
      %v2855 = vld [vmem:[%s4 + $0x20] sm:$0xff]
      %v2856 = vld [vmem:[%s4 + $0x28] sm:$0xff]
      %v2857 = vld [vmem:[%s4 + $0x30] sm:$0xff]
      %v2858 = vld [vmem:[%s4 + $0x38] sm:$0xff]
      %v2859 = vld [vmem:[%s4 + $0x40] sm:$0xff]
      %v2860 = vld [vmem:[%s4 + $0x48] sm:$0xff]
      %v2861 = vld [vmem:[%s4 + $0x50] sm:$0xff]
      %v2862 = vld [vmem:[%s4 + $0x58] sm:$0xff]
      %v2863 = vld [vmem:[%s4 + $0x60] sm:$0xff]
      %v2864 = vld [vmem:[%s4 + $0x68] sm:$0xff]
      %v2865 = vld [vmem:[%s4 + $0x70] sm:$0xff]
      %v2866 = vld [vmem:[%s4 + $0x78] sm:$0xff]
      %v2867 = vld [vmem:[%s4 + $0x80] sm:$0xff]
      %v2868 = vld [vmem:[%s4 + $0x88] sm:$0xff]
      %v2869 = vld [vmem:[%s4 + $0x90] sm:$0xff]
      %v2870 = vld [vmem:[%s4 + $0x98] sm:$0xff]
      %v2871 = vld [vmem:[%s4 + $0xa0] sm:$0xff]
      %v2872 = vld [vmem:[%s4 + $0xa8] sm:$0xff]
      %v2873 = vld [vmem:[%s4 + $0xb0] sm:$0xff]
      %v2874 = vld [vmem:[%s4 + $0xb8] sm:$0xff]
      %v2875 = vld [vmem:[%s4 + $0xc0] sm:$0xff]
      %v2876 = vld [vmem:[%s4 + $0xc8] sm:$0xff]
      %v2877 = vld [vmem:[%s4 + $0xd0] sm:$0xff]
      %v2878 = vld [vmem:[%s4 + $0xd8] sm:$0xff]
      %v2879 = vld [vmem:[%s4 + $0xe0] sm:$0xff]
      %v2880 = vld [vmem:[%s4 + $0xe8] sm:$0xff]
      %v2881 = vld [vmem:[%s4 + $0xf0] sm:$0xff]
      %v2882 = vld [vmem:[%s4 + $0xf8] sm:$0xff]
      %v2883 = vld [vmem:[%s4 + $0x100] sm:$0xff]
      %v2884 = vld [vmem:[%s4 + $0x108] sm:$0xff]
      %v2885 = vld [vmem:[%s4 + $0x110] sm:$0xff]
      %v2886 = vld [vmem:[%s4 + $0x118] sm:$0xff]
      %v2887 = vld [vmem:[%s4 + $0x120] sm:$0xff]
      %v2888 = vld [vmem:[%s4 + $0x128] sm:$0xff]
      %v2889 = vld [vmem:[%s4 + $0x130] sm:$0xff]
      %v2890 = vld [vmem:[%s4 + $0x138] sm:$0xff]
      %v2891 = vld [vmem:[%s4 + $0x140] sm:$0xff]
      %v2892 = vld [vmem:[%s4 + $0x148] sm:$0xff]
      %v2893 = vld [vmem:[%s4 + $0x150] sm:$0xff]
      %v2894 = vld [vmem:[%s4 + $0x158] sm:$0xff]
      %v2895 = vld [vmem:[%s4 + $0x160] sm:$0xff]
      %v2896 = vld [vmem:[%s4 + $0x168] sm:$0xff]
      %v2897 = vld [vmem:[%s4 + $0x170] sm:$0xff]
      %v2898 = vld [vmem:[%s4 + $0x178] sm:$0xff]
      %v2899 = vld [vmem:[%s4 + $0x180] sm:$0xff]
      %v2900 = vld [vmem:[%s4 + $0x188] sm:$0xff]
      %v2901 = vld [vmem:[%s4 + $0x190] sm:$0xff]
      %v2902 = vld [vmem:[%s4 + $0x198] sm:$0xff]
      %v2903 = vld [vmem:[%s4 + $0x1a0] sm:$0xff]
      %v2904 = vld [vmem:[%s4 + $0x1a8] sm:$0xff]
      %v2905 = vld [vmem:[%s4 + $0x1b0] sm:$0xff]
      %v2906 = vld [vmem:[%s4 + $0x1b8] sm:$0xff]
      %v2907 = vld [vmem:[%s4 + $0x1c0] sm:$0xff]
      %v2908 = vld [vmem:[%s4 + $0x1c8] sm:$0xff]
      %v2909 = vld [vmem:[%s4 + $0x1d0] sm:$0xff]
      %v2910 = vld [vmem:[%s4 + $0x1d8] sm:$0xff]
      %v2911 = vld [vmem:[%s4 + $0x1e0] sm:$0xff]
      %v2912 = vld [vmem:[%s4 + $0x1e8] sm:$0xff]
      %v2913 = vld [vmem:[%s4 + $0x1f0] sm:$0xff]
      %v2914 = vld [vmem:[%s4 + $0x1f8] sm:$0xff]
      %2915 = vmatprep.subr.mxu0 0.0
      %2916 = vmatpush1.msra.mxu0 %v2771
      %2917 = vmatprep.subr.mxu0 0.0
      %2918 = vmatpush1.msra.mxu0 %v2772
      %2919 = vmatprep.subr.mxu0 0.0
      %2920 = vmatpush1.msra.mxu0 %v2773
      %2921 = vmatprep.subr.mxu0 0.0
      %2922 = vmatpush1.msra.mxu0 %v2774
      %2923 = vmatprep.subr.mxu0 0.0
      %2924 = vmatpush1.msra.mxu0 %v2775
      %2925 = vmatprep.subr.mxu0 0.0
      %2926 = vmatpush1.msra.mxu0 %v2776
      %2927 = vmatprep.subr.mxu0 0.0
      %2928 = vmatpush1.msra.mxu0 %v2777
      %2929 = vmatprep.subr.mxu0 0.0
      %2930 = vmatpush1.msra.mxu0 %v2778
      %2931 = vmatprep.subr.mxu0 0.0
      %2932 = vmatpush1.msra.mxu0 %v2779
      %2933 = vmatprep.subr.mxu0 0.0
      %2934 = vmatpush1.msra.mxu0 %v2780
      %2935 = vmatprep.subr.mxu0 0.0
      %2936 = vmatpush1.msra.mxu0 %v2781
      %2937 = vmatprep.subr.mxu0 0.0
      %2938 = vmatpush1.msra.mxu0 %v2782
      %2939 = vmatprep.subr.mxu0 0.0
      %2940 = vmatpush1.msra.mxu0 %v2783
      %2941 = vmatprep.subr.mxu0 0.0
      %2942 = vmatpush1.msra.mxu0 %v2784
      %2943 = vmatprep.subr.mxu0 0.0
      %2944 = vmatpush1.msra.mxu0 %v2785
      %2945 = vmatprep.subr.mxu0 0.0
      %2946 = vmatpush1.msra.mxu0 %v2786
      %2947 = vmatprep.subr.mxu0 0.0
      %2948 = vmatpush1.msra.mxu0 0.0
      %2949 = vmatprep.subr.mxu0 0.0
      %2950 = vmatpush1.msra.mxu0 0.0
      %2951 = vmatprep.subr.mxu0 0.0
      %2952 = vmatpush1.msra.mxu0 0.0
      %2953 = vmatprep.subr.mxu0 0.0
      %2954 = vmatpush1.msra.mxu0 0.0
      %2955 = vmatprep.subr.mxu0 0.0
      %2956 = vmatpush1.msra.mxu0 0.0
      %2957 = vmatprep.subr.mxu0 0.0
      %2958 = vmatpush1.msra.mxu0 0.0
      %2959 = vmatprep.subr.mxu0 0.0
      %2960 = vmatpush1.msra.mxu0 0.0
      %2961 = vmatprep.subr.mxu0 0.0
      %2962 = vmatpush1.msra.mxu0 0.0
      %2963 = vmatprep.subr.mxu0 0.0
      %2964 = vmatpush1.msra.mxu0 0.0
      %2965 = vmatprep.subr.mxu0 0.0
      %2966 = vmatpush1.msra.mxu0 0.0
      %2967 = vmatprep.subr.mxu0 0.0
      %2968 = vmatpush1.msra.mxu0 0.0
      %2969 = vmatprep.subr.mxu0 0.0
      %2970 = vmatpush1.msra.mxu0 0.0
      %2971 = vmatprep.subr.mxu0 0.0
      %2972 = vmatpush1.msra.mxu0 0.0
      %2973 = vmatprep.subr.mxu0 0.0
      %2974 = vmatpush1.msra.mxu0 0.0
      %2975 = vmatprep.subr.mxu0 0.0
      %2976 = vmatpush1.msra.mxu0 0.0
      %2977 = vmatprep.subr.mxu0 0.0
      %2978 = vmatpush1.msra.mxu0 0.0
      %2979 = vmatprep.mubr.f32.mxu0 0.0
      %2980 = vmatmul.mubr.f32.gmra.mrb[0].mxu0 %v2787
      %v2981 = vpop.f32.mrb[0].mxu0
      %v2982 = vadd.f32 %v2851, %v2981
      %v2983 = vpop.f32.mrb[0].mxu0
      %2984 = vmatprep.mubr.f32.mxu0 0.0
      %2985 = vmatmul.mubr.f32.gmra.mrb[0].mxu0 %v2788
      %v2986 = vpop.f32.mrb[0].mxu0
      %v2987 = vadd.f32 %v2852, %v2986
      %v2988 = vpop.f32.mrb[0].mxu0
      %2989 = vmatprep.mubr.f32.mxu0 0.0
      %2990 = vmatmul.mubr.f32.gmra.mrb[0].mxu0 %v2789
      %v2991 = vpop.f32.mrb[0].mxu0
      %v2992 = vadd.f32 %v2853, %v2991
      %v2993 = vpop.f32.mrb[0].mxu0
      %2994 = vmatprep.mubr.f32.mxu0 0.0
      %2995 = vmatmul.mubr.f32.gmra.mrb[0].mxu0 %v2790
      %v2996 = vpop.f32.mrb[0].mxu0
      %v2997 = vadd.f32 %v2854, %v2996
      %v2998 = vpop.f32.mrb[0].mxu0
      %2999 = vmatprep.mubr.f32.mxu0 0.0
      %3000 = vmatmul.mubr.f32.gmra.mrb[0].mxu0 %v2791
      %v3001 = vpop.f32.mrb[0].mxu0
      %v3002 = vadd.f32 %v2855, %v3001
      %v3003 = vpop.f32.mrb[0].mxu0
      %3004 = vmatprep.mubr.f32.mxu0 0.0
      %3005 = vmatmul.mubr.f32.gmra.mrb[0].mxu0 %v2792
      %v3006 = vpop.f32.mrb[0].mxu0
      %v3007 = vadd.f32 %v2856, %v3006
      %v3008 = vpop.f32.mrb[0].mxu0
      %3009 = vmatprep.mubr.f32.mxu0 0.0
      %3010 = vmatmul.mubr.f32.gmra.mrb[0].mxu0 %v2793
      %v3011 = vpop.f32.mrb[0].mxu0
      %v3012 = vadd.f32 %v2857, %v3011
      %v3013 = vpop.f32.mrb[0].mxu0
      %3014 = vmatprep.mubr.f32.mxu0 0.0
      %3015 = vmatmul.mubr.f32.gmra.mrb[0].mxu0 %v2794
      %v3016 = vpop.f32.mrb[0].mxu0
      %v3017 = vadd.f32 %v2858, %v3016
      %v3018 = vpop.f32.mrb[0].mxu0
      %3019 = vmatprep.mubr.f32.mxu0 0.0
      %3020 = vmatmul.mubr.f32.gmra.mrb[0].mxu0 %v2795
      %v3021 = vpop.f32.mrb[0].mxu0
      %v3022 = vadd.f32 %v2859, %v3021
      %v3023 = vpop.f32.mrb[0].mxu0
      %3024 = vmatprep.mubr.f32.mxu0 0.0
      %3025 = vmatmul.mubr.f32.gmra.mrb[0].mxu0 %v2796
      %v3026 = vpop.f32.mrb[0].mxu0
      %v3027 = vadd.f32 %v2860, %v3026
      %v3028 = vpop.f32.mrb[0].mxu0
      %3029 = vmatprep.mubr.f32.mxu0 0.0
      %3030 = vmatmul.mubr.f32.gmra.mrb[0].mxu0 %v2797
      %v3031 = vpop.f32.mrb[0].mxu0
      %v3032 = vadd.f32 %v2861, %v3031
      %v3033 = vpop.f32.mrb[0].mxu0
      %3034 = vmatprep.mubr.f32.mxu0 0.0
      %3035 = vmatmul.mubr.f32.gmra.mrb[0].mxu0 %v2798
      %v3036 = vpop.f32.mrb[0].mxu0
      %v3037 = vadd.f32 %v2862, %v3036
      %v3038 = vpop.f32.mrb[0].mxu0
      %3039 = vmatprep.mubr.f32.mxu0 0.0
      %3040 = vmatmul.mubr.f32.gmra.mrb[0].mxu0 %v2799
      %v3041 = vpop.f32.mrb[0].mxu0
      %v3042 = vadd.f32 %v2863, %v3041
      %v3043 = vpop.f32.mrb[0].mxu0
      %3044 = vmatprep.mubr.f32.mxu0 0.0
      %3045 = vmatmul.mubr.f32.gmra.mrb[0].mxu0 %v2800
      %v3046 = vpop.f32.mrb[0].mxu0
      %v3047 = vadd.f32 %v2864, %v3046
      %v3048 = vpop.f32.mrb[0].mxu0
      %3049 = vmatprep.mubr.f32.mxu0 0.0
      %3050 = vmatmul.mubr.f32.gmra.mrb[0].mxu0 %v2801
      %v3051 = vpop.f32.mrb[0].mxu0
      %v3052 = vadd.f32 %v2865, %v3051
      %v3053 = vpop.f32.mrb[0].mxu0
      %3054 = vmatprep.mubr.f32.mxu0 0.0
      %3055 = vmatmul.mubr.f32.gmra.mrb[0].mxu0 %v2802
      %v3056 = vpop.f32.mrb[0].mxu0
      %v3057 = vadd.f32 %v2866, %v3056
      %v3058 = vpop.f32.mrb[0].mxu0
      %3059 = vmatprep.mubr.f32.mxu0 0.0
      %3060 = vmatmul.mubr.f32.gmra.mrb[0].mxu0 %v2803
      %v3061 = vpop.f32.mrb[0].mxu0
      %v3062 = vadd.f32 %v2867, %v3061
      %v3063 = vpop.f32.mrb[0].mxu0
      %3064 = vmatprep.mubr.f32.mxu0 0.0
      %3065 = vmatmul.mubr.f32.gmra.mrb[0].mxu0 %v2804
      %v3066 = vpop.f32.mrb[0].mxu0
      %v3067 = vadd.f32 %v2868, %v3066
      %v3068 = vpop.f32.mrb[0].mxu0
      %3069 = vmatprep.mubr.f32.mxu0 0.0
      %3070 = vmatmul.mubr.f32.gmra.mrb[0].mxu0 %v2805
      %v3071 = vpop.f32.mrb[0].mxu0
      %v3072 = vadd.f32 %v2869, %v3071
      %v3073 = vpop.f32.mrb[0].mxu0
      %3074 = vmatprep.mubr.f32.mxu0 0.0
      %3075 = vmatmul.mubr.f32.gmra.mrb[0].mxu0 %v2806
      %v3076 = vpop.f32.mrb[0].mxu0
      %v3077 = vadd.f32 %v2870, %v3076
      %v3078 = vpop.f32.mrb[0].mxu0
      %3079 = vmatprep.mubr.f32.mxu0 0.0
      %3080 = vmatmul.mubr.f32.gmra.mrb[0].mxu0 %v2807
      %v3081 = vpop.f32.mrb[0].mxu0
      %v3082 = vadd.f32 %v2871, %v3081
      %v3083 = vpop.f32.mrb[0].mxu0
      %3084 = vmatprep.mubr.f32.mxu0 0.0
      %3085 = vmatmul.mubr.f32.gmra.mrb[0].mxu0 %v2808
      %v3086 = vpop.f32.mrb[0].mxu0
      %v3087 = vadd.f32 %v2872, %v3086
      %v3088 = vpop.f32.mrb[0].mxu0
      %3089 = vmatprep.mubr.f32.mxu0 0.0
      %3090 = vmatmul.mubr.f32.gmra.mrb[0].mxu0 %v2809
      %v3091 = vpop.f32.mrb[0].mxu0
      %v3092 = vadd.f32 %v2873, %v3091
      %v3093 = vpop.f32.mrb[0].mxu0
      %3094 = vmatprep.mubr.f32.mxu0 0.0
      %3095 = vmatmul.mubr.f32.gmra.mrb[0].mxu0 %v2810
      %v3096 = vpop.f32.mrb[0].mxu0
      %v3097 = vadd.f32 %v2874, %v3096
      %v3098 = vpop.f32.mrb[0].mxu0
      %3099 = vmatprep.mubr.f32.mxu0 0.0
      %3100 = vmatmul.mubr.f32.gmra.mrb[0].mxu0 %v2811
      %v3101 = vpop.f32.mrb[0].mxu0
      %v3102 = vadd.f32 %v2875, %v3101
      %v3103 = vpop.f32.mrb[0].mxu0
      %3104 = vmatprep.mubr.f32.mxu0 0.0
      %3105 = vmatmul.mubr.f32.gmra.mrb[0].mxu0 %v2812
      %v3106 = vpop.f32.mrb[0].mxu0
      %v3107 = vadd.f32 %v2876, %v3106
      %v3108 = vpop.f32.mrb[0].mxu0
      %3109 = vmatprep.mubr.f32.mxu0 0.0
      %3110 = vmatmul.mubr.f32.gmra.mrb[0].mxu0 %v2813
      %v3111 = vpop.f32.mrb[0].mxu0
      %v3112 = vadd.f32 %v2877, %v3111
      %v3113 = vpop.f32.mrb[0].mxu0
      %3114 = vmatprep.mubr.f32.mxu0 0.0
      %3115 = vmatmul.mubr.f32.gmra.mrb[0].mxu0 %v2814
      %v3116 = vpop.f32.mrb[0].mxu0
      %v3117 = vadd.f32 %v2878, %v3116
      %v3118 = vpop.f32.mrb[0].mxu0
      %3119 = vmatprep.mubr.f32.mxu0 0.0
      %3120 = vmatmul.mubr.f32.gmra.mrb[0].mxu0 %v2815
      %v3121 = vpop.f32.mrb[0].mxu0
      %v3122 = vadd.f32 %v2879, %v3121
      %v3123 = vpop.f32.mrb[0].mxu0
      %3124 = vmatprep.mubr.f32.mxu0 0.0
      %3125 = vmatmul.mubr.f32.gmra.mrb[0].mxu0 %v2816
      %v3126 = vpop.f32.mrb[0].mxu0
      %v3127 = vadd.f32 %v2880, %v3126
      %v3128 = vpop.f32.mrb[0].mxu0
      %3129 = vmatprep.mubr.f32.mxu0 0.0
      %3130 = vmatmul.mubr.f32.gmra.mrb[0].mxu0 %v2817
      %v3131 = vpop.f32.mrb[0].mxu0
      %v3132 = vadd.f32 %v2881, %v3131
      %v3133 = vpop.f32.mrb[0].mxu0
      %3134 = vmatprep.mubr.f32.mxu0 0.0
      %3135 = vmatmul.mubr.f32.gmra.mrb[0].mxu0 %v2818
      %v3136 = vpop.f32.mrb[0].mxu0
      %v3137 = vadd.f32 %v2882, %v3136
      %v3138 = vpop.f32.mrb[0].mxu0
      %3139 = vmatprep.mubr.f32.mxu0 0.0
      %3140 = vmatmul.mubr.f32.gmra.mrb[0].mxu0 %v2819
      %v3141 = vpop.f32.mrb[0].mxu0
      %v3142 = vadd.f32 %v2883, %v3141
      %v3143 = vpop.f32.mrb[0].mxu0
      %3144 = vmatprep.mubr.f32.mxu0 0.0
      %3145 = vmatmul.mubr.f32.gmra.mrb[0].mxu0 %v2820
      %v3146 = vpop.f32.mrb[0].mxu0
      %v3147 = vadd.f32 %v2884, %v3146
      %v3148 = vpop.f32.mrb[0].mxu0
      %3149 = vmatprep.mubr.f32.mxu0 0.0
      %3150 = vmatmul.mubr.f32.gmra.mrb[0].mxu0 %v2821
      %v3151 = vpop.f32.mrb[0].mxu0
      %v3152 = vadd.f32 %v2885, %v3151
      %v3153 = vpop.f32.mrb[0].mxu0
      %3154 = vmatprep.mubr.f32.mxu0 0.0
      %3155 = vmatmul.mubr.f32.gmra.mrb[0].mxu0 %v2822
      %v3156 = vpop.f32.mrb[0].mxu0
      %v3157 = vadd.f32 %v2886, %v3156
      %v3158 = vpop.f32.mrb[0].mxu0
      %3159 = vmatprep.mubr.f32.mxu0 0.0
      %3160 = vmatmul.mubr.f32.gmra.mrb[0].mxu0 %v2823
      %v3161 = vpop.f32.mrb[0].mxu0
      %v3162 = vadd.f32 %v2887, %v3161
      %v3163 = vpop.f32.mrb[0].mxu0
      %3164 = vmatprep.mubr.f32.mxu0 0.0
      %3165 = vmatmul.mubr.f32.gmra.mrb[0].mxu0 %v2824
      %v3166 = vpop.f32.mrb[0].mxu0
      %v3167 = vadd.f32 %v2888, %v3166
      %v3168 = vpop.f32.mrb[0].mxu0
      %3169 = vmatprep.mubr.f32.mxu0 0.0
      %3170 = vmatmul.mubr.f32.gmra.mrb[0].mxu0 %v2825
      %v3171 = vpop.f32.mrb[0].mxu0
      %v3172 = vadd.f32 %v2889, %v3171
      %v3173 = vpop.f32.mrb[0].mxu0
      %3174 = vmatprep.mubr.f32.mxu0 0.0
      %3175 = vmatmul.mubr.f32.gmra.mrb[0].mxu0 %v2826
      %v3176 = vpop.f32.mrb[0].mxu0
      %v3177 = vadd.f32 %v2890, %v3176
      %v3178 = vpop.f32.mrb[0].mxu0
      %3179 = vmatprep.mubr.f32.mxu0 0.0
      %3180 = vmatmul.mubr.f32.gmra.mrb[0].mxu0 %v2827
      %v3181 = vpop.f32.mrb[0].mxu0
      %v3182 = vadd.f32 %v2891, %v3181
      %v3183 = vpop.f32.mrb[0].mxu0
      %3184 = vmatprep.mubr.f32.mxu0 0.0
      %3185 = vmatmul.mubr.f32.gmra.mrb[0].mxu0 %v2828
      %v3186 = vpop.f32.mrb[0].mxu0
      %v3187 = vadd.f32 %v2892, %v3186
      %v3188 = vpop.f32.mrb[0].mxu0
      %3189 = vmatprep.mubr.f32.mxu0 0.0
      %3190 = vmatmul.mubr.f32.gmra.mrb[0].mxu0 %v2829
      %v3191 = vpop.f32.mrb[0].mxu0
      %v3192 = vadd.f32 %v2893, %v3191
      %v3193 = vpop.f32.mrb[0].mxu0
      %3194 = vmatprep.mubr.f32.mxu0 0.0
      %3195 = vmatmul.mubr.f32.gmra.mrb[0].mxu0 %v2830
      %v3196 = vpop.f32.mrb[0].mxu0
      %v3197 = vadd.f32 %v2894, %v3196
      %v3198 = vpop.f32.mrb[0].mxu0
      %3199 = vmatprep.mubr.f32.mxu0 0.0
      %3200 = vmatmul.mubr.f32.gmra.mrb[0].mxu0 %v2831
      %v3201 = vpop.f32.mrb[0].mxu0
      %v3202 = vadd.f32 %v2895, %v3201
      %v3203 = vpop.f32.mrb[0].mxu0
      %3204 = vmatprep.mubr.f32.mxu0 0.0
      %3205 = vmatmul.mubr.f32.gmra.mrb[0].mxu0 %v2832
      %v3206 = vpop.f32.mrb[0].mxu0
      %v3207 = vadd.f32 %v2896, %v3206
      %v3208 = vpop.f32.mrb[0].mxu0
      %3209 = vmatprep.mubr.f32.mxu0 0.0
      %3210 = vmatmul.mubr.f32.gmra.mrb[0].mxu0 %v2833
      %v3211 = vpop.f32.mrb[0].mxu0
      %v3212 = vadd.f32 %v2897, %v3211
      %v3213 = vpop.f32.mrb[0].mxu0
      %3214 = vmatprep.mubr.f32.mxu0 0.0
      %3215 = vmatmul.mubr.f32.gmra.mrb[0].mxu0 %v2834
      %v3216 = vpop.f32.mrb[0].mxu0
      %v3217 = vadd.f32 %v2898, %v3216
      %v3218 = vpop.f32.mrb[0].mxu0
      %3219 = vmatprep.mubr.f32.mxu0 0.0
      %3220 = vmatmul.mubr.f32.gmra.mrb[0].mxu0 %v2835
      %v3221 = vpop.f32.mrb[0].mxu0
      %v3222 = vadd.f32 %v2899, %v3221
      %v3223 = vpop.f32.mrb[0].mxu0
      %3224 = vmatprep.mubr.f32.mxu0 0.0
      %3225 = vmatmul.mubr.f32.gmra.mrb[0].mxu0 %v2836
      %v3226 = vpop.f32.mrb[0].mxu0
      %v3227 = vadd.f32 %v2900, %v3226
      %v3228 = vpop.f32.mrb[0].mxu0
      %3229 = vmatprep.mubr.f32.mxu0 0.0
      %3230 = vmatmul.mubr.f32.gmra.mrb[0].mxu0 %v2837
      %v3231 = vpop.f32.mrb[0].mxu0
      %v3232 = vadd.f32 %v2901, %v3231
      %v3233 = vpop.f32.mrb[0].mxu0
      %3234 = vmatprep.mubr.f32.mxu0 0.0
      %3235 = vmatmul.mubr.f32.gmra.mrb[0].mxu0 %v2838
      %v3236 = vpop.f32.mrb[0].mxu0
      %v3237 = vadd.f32 %v2902, %v3236
      %v3238 = vpop.f32.mrb[0].mxu0
      %3239 = vmatprep.mubr.f32.mxu0 0.0
      %3240 = vmatmul.mubr.f32.gmra.mrb[0].mxu0 %v2839
      %v3241 = vpop.f32.mrb[0].mxu0
      %v3242 = vadd.f32 %v2903, %v3241
      %v3243 = vpop.f32.mrb[0].mxu0
      %3244 = vmatprep.mubr.f32.mxu0 0.0
      %3245 = vmatmul.mubr.f32.gmra.mrb[0].mxu0 %v2840
      %v3246 = vpop.f32.mrb[0].mxu0
      %v3247 = vadd.f32 %v2904, %v3246
      %v3248 = vpop.f32.mrb[0].mxu0
      %3249 = vmatprep.mubr.f32.mxu0 0.0
      %3250 = vmatmul.mubr.f32.gmra.mrb[0].mxu0 %v2841
      %v3251 = vpop.f32.mrb[0].mxu0
      %v3252 = vadd.f32 %v2905, %v3251
      %v3253 = vpop.f32.mrb[0].mxu0
      %3254 = vmatprep.mubr.f32.mxu0 0.0
      %3255 = vmatmul.mubr.f32.gmra.mrb[0].mxu0 %v2842
      %v3256 = vpop.f32.mrb[0].mxu0
      %v3257 = vadd.f32 %v2906, %v3256
      %v3258 = vpop.f32.mrb[0].mxu0
      %3259 = vmatprep.mubr.f32.mxu0 0.0
      %3260 = vmatmul.mubr.f32.gmra.mrb[0].mxu0 %v2843
      %v3261 = vpop.f32.mrb[0].mxu0
      %v3262 = vadd.f32 %v2907, %v3261
      %v3263 = vpop.f32.mrb[0].mxu0
      %3264 = vmatprep.mubr.f32.mxu0 0.0
      %3265 = vmatmul.mubr.f32.gmra.mrb[0].mxu0 %v2844
      %v3266 = vpop.f32.mrb[0].mxu0
      %v3267 = vadd.f32 %v2908, %v3266
      %v3268 = vpop.f32.mrb[0].mxu0
      %3269 = vmatprep.mubr.f32.mxu0 0.0
      %3270 = vmatmul.mubr.f32.gmra.mrb[0].mxu0 %v2845
      %v3271 = vpop.f32.mrb[0].mxu0
      %v3272 = vadd.f32 %v2909, %v3271
      %v3273 = vpop.f32.mrb[0].mxu0
      %3274 = vmatprep.mubr.f32.mxu0 0.0
      %3275 = vmatmul.mubr.f32.gmra.mrb[0].mxu0 %v2846
      %v3276 = vpop.f32.mrb[0].mxu0
      %v3277 = vadd.f32 %v2910, %v3276
      %v3278 = vpop.f32.mrb[0].mxu0
      %3279 = vmatprep.mubr.f32.mxu0 0.0
      %3280 = vmatmul.mubr.f32.gmra.mrb[0].mxu0 %v2847
      %v3281 = vpop.f32.mrb[0].mxu0
      %v3282 = vadd.f32 %v2911, %v3281
      %v3283 = vpop.f32.mrb[0].mxu0
      %3284 = vmatprep.mubr.f32.mxu0 0.0
      %3285 = vmatmul.mubr.f32.gmra.mrb[0].mxu0 %v2848
      %v3286 = vpop.f32.mrb[0].mxu0
      %v3287 = vadd.f32 %v2912, %v3286
      %v3288 = vpop.f32.mrb[0].mxu0
      %3289 = vmatprep.mubr.f32.mxu0 0.0
      %3290 = vmatmul.mubr.f32.gmra.mrb[0].mxu0 %v2849
      %v3291 = vpop.f32.mrb[0].mxu0
      %v3292 = vadd.f32 %v2913, %v3291
      %v3293 = vpop.f32.mrb[0].mxu0
      %3294 = vmatprep.mubr.f32.mxu0 0.0
      %3295 = vmatmul.mubr.f32.gmra.mrb[0].mxu0 %v2850
      %v3296 = vpop.f32.mrb[0].mxu0
      %v3297 = vadd.f32 %v2914, %v3296
      %v3298 = vpop.f32.mrb[0].mxu0
      %3299 = vdwg.mxu0
      %v3300 = vxor.u32 %v2982, 2147483648
      %v3301 = vxor.u32 %v2987, 2147483648
      %v3302 = vxor.u32 %v2992, 2147483648
      %v3303 = vxor.u32 %v2997, 2147483648
      %v3304 = vxor.u32 %v3002, 2147483648
      %v3305 = vxor.u32 %v3007, 2147483648
      %v3306 = vxor.u32 %v3012, 2147483648
      %v3307 = vxor.u32 %v3017, 2147483648
      %v3308 = vxor.u32 %v3022, 2147483648
      %v3309 = vxor.u32 %v3027, 2147483648
      %v3310 = vxor.u32 %v3032, 2147483648
      %v3311 = vxor.u32 %v3037, 2147483648
      %v3312 = vxor.u32 %v3042, 2147483648
      %v3313 = vxor.u32 %v3047, 2147483648
      %v3314 = vxor.u32 %v3052, 2147483648
      %v3315 = vxor.u32 %v3057, 2147483648
      %v3316 = vxor.u32 %v3062, 2147483648
      %v3317 = vxor.u32 %v3067, 2147483648
      %v3318 = vxor.u32 %v3072, 2147483648
      %v3319 = vxor.u32 %v3077, 2147483648
      %v3320 = vxor.u32 %v3082, 2147483648
      %v3321 = vxor.u32 %v3087, 2147483648
      %v3322 = vxor.u32 %v3092, 2147483648
      %v3323 = vxor.u32 %v3097, 2147483648
      %v3324 = vxor.u32 %v3102, 2147483648
      %v3325 = vxor.u32 %v3107, 2147483648
      %v3326 = vxor.u32 %v3112, 2147483648
      %v3327 = vxor.u32 %v3117, 2147483648
      %v3328 = vxor.u32 %v3122, 2147483648
      %v3329 = vxor.u32 %v3127, 2147483648
      %v3330 = vxor.u32 %v3132, 2147483648
      %v3331 = vxor.u32 %v3137, 2147483648
      %v3332 = vxor.u32 %v3142, 2147483648
      %v3333 = vxor.u32 %v3147, 2147483648
      %v3334 = vxor.u32 %v3152, 2147483648
      %v3335 = vxor.u32 %v3157, 2147483648
      %v3336 = vxor.u32 %v3162, 2147483648
      %v3337 = vxor.u32 %v3167, 2147483648
      %v3338 = vxor.u32 %v3172, 2147483648
      %v3339 = vxor.u32 %v3177, 2147483648
      %v3340 = vxor.u32 %v3182, 2147483648
      %v3341 = vxor.u32 %v3187, 2147483648
      %v3342 = vxor.u32 %v3192, 2147483648
      %v3343 = vxor.u32 %v3197, 2147483648
      %v3344 = vxor.u32 %v3202, 2147483648
      %v3345 = vxor.u32 %v3207, 2147483648
      %v3346 = vxor.u32 %v3212, 2147483648
      %v3347 = vxor.u32 %v3217, 2147483648
      %v3348 = vxor.u32 %v3222, 2147483648
      %v3349 = vxor.u32 %v3227, 2147483648
      %v3350 = vxor.u32 %v3232, 2147483648
      %v3351 = vxor.u32 %v3237, 2147483648
      %v3352 = vxor.u32 %v3242, 2147483648
      %v3353 = vxor.u32 %v3247, 2147483648
      %v3354 = vxor.u32 %v3252, 2147483648
      %v3355 = vxor.u32 %v3257, 2147483648
      %v3356 = vxor.u32 %v3262, 2147483648
      %v3357 = vxor.u32 %v3267, 2147483648
      %v3358 = vxor.u32 %v3272, 2147483648
      %v3359 = vxor.u32 %v3277, 2147483648
      %v3360 = vxor.u32 %v3282, 2147483648
      %v3361 = vxor.u32 %v3287, 2147483648
      %v3362 = vxor.u32 %v3292, 2147483648
      %v3363 = vxor.u32 %v3297, 2147483648
      %v3364 = vmul.f32 %v3300, 1.442695
      %v3365 = vpow.pop %v3364
      %v3366 = vmul.f32 %v3301, 1.442695
      %v3367 = vpow.pop %v3366
      %v3368 = vmul.f32 %v3302, 1.442695
      %v3369 = vpow.pop %v3368
      %v3370 = vmul.f32 %v3303, 1.442695
      %v3371 = vpow.pop %v3370
      %v3372 = vmul.f32 %v3304, 1.442695
      %v3373 = vpow.pop %v3372
      %v3374 = vmul.f32 %v3305, 1.442695
      %v3375 = vpow.pop %v3374
      %v3376 = vmul.f32 %v3306, 1.442695
      %v3377 = vpow.pop %v3376
      %v3378 = vmul.f32 %v3307, 1.442695
      %v3379 = vpow.pop %v3378
      %v3380 = vmul.f32 %v3308, 1.442695
      %v3381 = vpow.pop %v3380
      %v3382 = vmul.f32 %v3309, 1.442695
      %v3383 = vpow.pop %v3382
      %v3384 = vmul.f32 %v3310, 1.442695
      %v3385 = vpow.pop %v3384
      %v3386 = vmul.f32 %v3311, 1.442695
      %v3387 = vpow.pop %v3386
      %v3388 = vmul.f32 %v3312, 1.442695
      %v3389 = vpow.pop %v3388
      %v3390 = vmul.f32 %v3313, 1.442695
      %v3391 = vpow.pop %v3390
      %v3392 = vmul.f32 %v3314, 1.442695
      %v3393 = vpow.pop %v3392
      %v3394 = vmul.f32 %v3315, 1.442695
      %v3395 = vpow.pop %v3394
      %v3396 = vmul.f32 %v3316, 1.442695
      %v3397 = vpow.pop %v3396
      %v3398 = vmul.f32 %v3317, 1.442695
      %v3399 = vpow.pop %v3398
      %v3400 = vmul.f32 %v3318, 1.442695
      %v3401 = vpow.pop %v3400
      %v3402 = vmul.f32 %v3319, 1.442695
      %v3403 = vpow.pop %v3402
      %v3404 = vmul.f32 %v3320, 1.442695
      %v3405 = vpow.pop %v3404
      %v3406 = vmul.f32 %v3321, 1.442695
      %v3407 = vpow.pop %v3406
      %v3408 = vmul.f32 %v3322, 1.442695
      %v3409 = vpow.pop %v3408
      %v3410 = vmul.f32 %v3323, 1.442695
      %v3411 = vpow.pop %v3410
      %v3412 = vmul.f32 %v3324, 1.442695
      %v3413 = vpow.pop %v3412
      %v3414 = vmul.f32 %v3325, 1.442695
      %v3415 = vpow.pop %v3414
      %v3416 = vmul.f32 %v3326, 1.442695
      %v3417 = vpow.pop %v3416
      %v3418 = vmul.f32 %v3327, 1.442695
      %v3419 = vpow.pop %v3418
      %v3420 = vmul.f32 %v3328, 1.442695
      %v3421 = vpow.pop %v3420
      %v3422 = vmul.f32 %v3329, 1.442695
      %v3423 = vpow.pop %v3422
      %v3424 = vmul.f32 %v3330, 1.442695
      %v3425 = vpow.pop %v3424
      %v3426 = vmul.f32 %v3331, 1.442695
      %v3427 = vpow.pop %v3426
      %v3428 = vmul.f32 %v3332, 1.442695
      %v3429 = vpow.pop %v3428
      %v3430 = vmul.f32 %v3333, 1.442695
      %v3431 = vpow.pop %v3430
      %v3432 = vmul.f32 %v3334, 1.442695
      %v3433 = vpow.pop %v3432
      %v3434 = vmul.f32 %v3335, 1.442695
      %v3435 = vpow.pop %v3434
      %v3436 = vmul.f32 %v3336, 1.442695
      %v3437 = vpow.pop %v3436
      %v3438 = vmul.f32 %v3337, 1.442695
      %v3439 = vpow.pop %v3438
      %v3440 = vmul.f32 %v3338, 1.442695
      %v3441 = vpow.pop %v3440
      %v3442 = vmul.f32 %v3339, 1.442695
      %v3443 = vpow.pop %v3442
      %v3444 = vmul.f32 %v3340, 1.442695
      %v3445 = vpow.pop %v3444
      %v3446 = vmul.f32 %v3341, 1.442695
      %v3447 = vpow.pop %v3446
      %v3448 = vmul.f32 %v3342, 1.442695
      %v3449 = vpow.pop %v3448
      %v3450 = vmul.f32 %v3343, 1.442695
      %v3451 = vpow.pop %v3450
      %v3452 = vmul.f32 %v3344, 1.442695
      %v3453 = vpow.pop %v3452
      %v3454 = vmul.f32 %v3345, 1.442695
      %v3455 = vpow.pop %v3454
      %v3456 = vmul.f32 %v3346, 1.442695
      %v3457 = vpow.pop %v3456
      %v3458 = vmul.f32 %v3347, 1.442695
      %v3459 = vpow.pop %v3458
      %v3460 = vmul.f32 %v3348, 1.442695
      %v3461 = vpow.pop %v3460
      %v3462 = vmul.f32 %v3349, 1.442695
      %v3463 = vpow.pop %v3462
      %v3464 = vmul.f32 %v3350, 1.442695
      %v3465 = vpow.pop %v3464
      %v3466 = vmul.f32 %v3351, 1.442695
      %v3467 = vpow.pop %v3466
      %v3468 = vmul.f32 %v3352, 1.442695
      %v3469 = vpow.pop %v3468
      %v3470 = vmul.f32 %v3353, 1.442695
      %v3471 = vpow.pop %v3470
      %v3472 = vmul.f32 %v3354, 1.442695
      %v3473 = vpow.pop %v3472
      %v3474 = vmul.f32 %v3355, 1.442695
      %v3475 = vpow.pop %v3474
      %v3476 = vmul.f32 %v3356, 1.442695
      %v3477 = vpow.pop %v3476
      %v3478 = vmul.f32 %v3357, 1.442695
      %v3479 = vpow.pop %v3478
      %v3480 = vmul.f32 %v3358, 1.442695
      %v3481 = vpow.pop %v3480
      %v3482 = vmul.f32 %v3359, 1.442695
      %v3483 = vpow.pop %v3482
      %v3484 = vmul.f32 %v3360, 1.442695
      %v3485 = vpow.pop %v3484
      %v3486 = vmul.f32 %v3361, 1.442695
      %v3487 = vpow.pop %v3486
      %v3488 = vmul.f32 %v3362, 1.442695
      %v3489 = vpow.pop %v3488
      %v3490 = vmul.f32 %v3363, 1.442695
      %v3491 = vpow.pop %v3490
      %v3492 = vadd.f32 %v3365, 1.0
      %v3493 = vadd.f32 %v3367, 1.0
      %v3494 = vadd.f32 %v3369, 1.0
      %v3495 = vadd.f32 %v3371, 1.0
      %v3496 = vadd.f32 %v3373, 1.0
      %v3497 = vadd.f32 %v3375, 1.0
      %v3498 = vadd.f32 %v3377, 1.0
      %v3499 = vadd.f32 %v3379, 1.0
      %v3500 = vadd.f32 %v3381, 1.0
      %v3501 = vadd.f32 %v3383, 1.0
      %v3502 = vadd.f32 %v3385, 1.0
      %v3503 = vadd.f32 %v3387, 1.0
      %v3504 = vadd.f32 %v3389, 1.0
      %v3505 = vadd.f32 %v3391, 1.0
      %v3506 = vadd.f32 %v3393, 1.0
      %v3507 = vadd.f32 %v3395, 1.0
      %v3508 = vadd.f32 %v3397, 1.0
      %v3509 = vadd.f32 %v3399, 1.0
      %v3510 = vadd.f32 %v3401, 1.0
      %v3511 = vadd.f32 %v3403, 1.0
      %v3512 = vadd.f32 %v3405, 1.0
      %v3513 = vadd.f32 %v3407, 1.0
      %v3514 = vadd.f32 %v3409, 1.0
      %v3515 = vadd.f32 %v3411, 1.0
      %v3516 = vadd.f32 %v3413, 1.0
      %v3517 = vadd.f32 %v3415, 1.0
      %v3518 = vadd.f32 %v3417, 1.0
      %v3519 = vadd.f32 %v3419, 1.0
      %v3520 = vadd.f32 %v3421, 1.0
      %v3521 = vadd.f32 %v3423, 1.0
      %v3522 = vadd.f32 %v3425, 1.0
      %v3523 = vadd.f32 %v3427, 1.0
      %v3524 = vadd.f32 %v3429, 1.0
      %v3525 = vadd.f32 %v3431, 1.0
      %v3526 = vadd.f32 %v3433, 1.0
      %v3527 = vadd.f32 %v3435, 1.0
      %v3528 = vadd.f32 %v3437, 1.0
      %v3529 = vadd.f32 %v3439, 1.0
      %v3530 = vadd.f32 %v3441, 1.0
      %v3531 = vadd.f32 %v3443, 1.0
      %v3532 = vadd.f32 %v3445, 1.0
      %v3533 = vadd.f32 %v3447, 1.0
      %v3534 = vadd.f32 %v3449, 1.0
      %v3535 = vadd.f32 %v3451, 1.0
      %v3536 = vadd.f32 %v3453, 1.0
      %v3537 = vadd.f32 %v3455, 1.0
      %v3538 = vadd.f32 %v3457, 1.0
      %v3539 = vadd.f32 %v3459, 1.0
      %v3540 = vadd.f32 %v3461, 1.0
      %v3541 = vadd.f32 %v3463, 1.0
      %v3542 = vadd.f32 %v3465, 1.0
      %v3543 = vadd.f32 %v3467, 1.0
      %v3544 = vadd.f32 %v3469, 1.0
      %v3545 = vadd.f32 %v3471, 1.0
      %v3546 = vadd.f32 %v3473, 1.0
      %v3547 = vadd.f32 %v3475, 1.0
      %v3548 = vadd.f32 %v3477, 1.0
      %v3549 = vadd.f32 %v3479, 1.0
      %v3550 = vadd.f32 %v3481, 1.0
      %v3551 = vadd.f32 %v3483, 1.0
      %v3552 = vadd.f32 %v3485, 1.0
      %v3553 = vadd.f32 %v3487, 1.0
      %v3554 = vadd.f32 %v3489, 1.0
      %v3555 = vadd.f32 %v3491, 1.0
      %v3556 = vrcp.pop %v3492
      %v3557 = vmul.f32 1.0, %v3556
      %v3558 = vrcp.pop %v3493
      %v3559 = vmul.f32 1.0, %v3558
      %v3560 = vrcp.pop %v3494
      %v3561 = vmul.f32 1.0, %v3560
      %v3562 = vrcp.pop %v3495
      %v3563 = vmul.f32 1.0, %v3562
      %v3564 = vrcp.pop %v3496
      %v3565 = vmul.f32 1.0, %v3564
      %v3566 = vrcp.pop %v3497
      %v3567 = vmul.f32 1.0, %v3566
      %v3568 = vrcp.pop %v3498
      %v3569 = vmul.f32 1.0, %v3568
      %v3570 = vrcp.pop %v3499
      %v3571 = vmul.f32 1.0, %v3570
      %v3572 = vrcp.pop %v3500
      %v3573 = vmul.f32 1.0, %v3572
      %v3574 = vrcp.pop %v3501
      %v3575 = vmul.f32 1.0, %v3574
      %v3576 = vrcp.pop %v3502
      %v3577 = vmul.f32 1.0, %v3576
      %v3578 = vrcp.pop %v3503
      %v3579 = vmul.f32 1.0, %v3578
      %v3580 = vrcp.pop %v3504
      %v3581 = vmul.f32 1.0, %v3580
      %v3582 = vrcp.pop %v3505
      %v3583 = vmul.f32 1.0, %v3582
      %v3584 = vrcp.pop %v3506
      %v3585 = vmul.f32 1.0, %v3584
      %v3586 = vrcp.pop %v3507
      %v3587 = vmul.f32 1.0, %v3586
      %v3588 = vrcp.pop %v3508
      %v3589 = vmul.f32 1.0, %v3588
      %v3590 = vrcp.pop %v3509
      %v3591 = vmul.f32 1.0, %v3590
      %v3592 = vrcp.pop %v3510
      %v3593 = vmul.f32 1.0, %v3592
      %v3594 = vrcp.pop %v3511
      %v3595 = vmul.f32 1.0, %v3594
      %v3596 = vrcp.pop %v3512
      %v3597 = vmul.f32 1.0, %v3596
      %v3598 = vrcp.pop %v3513
      %v3599 = vmul.f32 1.0, %v3598
      %v3600 = vrcp.pop %v3514
      %v3601 = vmul.f32 1.0, %v3600
      %v3602 = vrcp.pop %v3515
      %v3603 = vmul.f32 1.0, %v3602
      %v3604 = vrcp.pop %v3516
      %v3605 = vmul.f32 1.0, %v3604
      %v3606 = vrcp.pop %v3517
      %v3607 = vmul.f32 1.0, %v3606
      %v3608 = vrcp.pop %v3518
      %v3609 = vmul.f32 1.0, %v3608
      %v3610 = vrcp.pop %v3519
      %v3611 = vmul.f32 1.0, %v3610
      %v3612 = vrcp.pop %v3520
      %v3613 = vmul.f32 1.0, %v3612
      %v3614 = vrcp.pop %v3521
      %v3615 = vmul.f32 1.0, %v3614
      %v3616 = vrcp.pop %v3522
      %v3617 = vmul.f32 1.0, %v3616
      %v3618 = vrcp.pop %v3523
      %v3619 = vmul.f32 1.0, %v3618
      %v3620 = vrcp.pop %v3524
      %v3621 = vmul.f32 1.0, %v3620
      %v3622 = vrcp.pop %v3525
      %v3623 = vmul.f32 1.0, %v3622
      %v3624 = vrcp.pop %v3526
      %v3625 = vmul.f32 1.0, %v3624
      %v3626 = vrcp.pop %v3527
      %v3627 = vmul.f32 1.0, %v3626
      %v3628 = vrcp.pop %v3528
      %v3629 = vmul.f32 1.0, %v3628
      %v3630 = vrcp.pop %v3529
      %v3631 = vmul.f32 1.0, %v3630
      %v3632 = vrcp.pop %v3530
      %v3633 = vmul.f32 1.0, %v3632
      %v3634 = vrcp.pop %v3531
      %v3635 = vmul.f32 1.0, %v3634
      %v3636 = vrcp.pop %v3532
      %v3637 = vmul.f32 1.0, %v3636
      %v3638 = vrcp.pop %v3533
      %v3639 = vmul.f32 1.0, %v3638
      %v3640 = vrcp.pop %v3534
      %v3641 = vmul.f32 1.0, %v3640
      %v3642 = vrcp.pop %v3535
      %v3643 = vmul.f32 1.0, %v3642
      %v3644 = vrcp.pop %v3536
      %v3645 = vmul.f32 1.0, %v3644
      %v3646 = vrcp.pop %v3537
      %v3647 = vmul.f32 1.0, %v3646
      %v3648 = vrcp.pop %v3538
      %v3649 = vmul.f32 1.0, %v3648
      %v3650 = vrcp.pop %v3539
      %v3651 = vmul.f32 1.0, %v3650
      %v3652 = vrcp.pop %v3540
      %v3653 = vmul.f32 1.0, %v3652
      %v3654 = vrcp.pop %v3541
      %v3655 = vmul.f32 1.0, %v3654
      %v3656 = vrcp.pop %v3542
      %v3657 = vmul.f32 1.0, %v3656
      %v3658 = vrcp.pop %v3543
      %v3659 = vmul.f32 1.0, %v3658
      %v3660 = vrcp.pop %v3544
      %v3661 = vmul.f32 1.0, %v3660
      %v3662 = vrcp.pop %v3545
      %v3663 = vmul.f32 1.0, %v3662
      %v3664 = vrcp.pop %v3546
      %v3665 = vmul.f32 1.0, %v3664
      %v3666 = vrcp.pop %v3547
      %v3667 = vmul.f32 1.0, %v3666
      %v3668 = vrcp.pop %v3548
      %v3669 = vmul.f32 1.0, %v3668
      %v3670 = vrcp.pop %v3549
      %v3671 = vmul.f32 1.0, %v3670
      %v3672 = vrcp.pop %v3550
      %v3673 = vmul.f32 1.0, %v3672
      %v3674 = vrcp.pop %v3551
      %v3675 = vmul.f32 1.0, %v3674
      %v3676 = vrcp.pop %v3552
      %v3677 = vmul.f32 1.0, %v3676
      %v3678 = vrcp.pop %v3553
      %v3679 = vmul.f32 1.0, %v3678
      %v3680 = vrcp.pop %v3554
      %v3681 = vmul.f32 1.0, %v3680
      %v3682 = vrcp.pop %v3555
      %v3683 = vmul.f32 1.0, %v3682
      %3685 = vset.pattern.permute.xlu0 0
      %3686 = vperm.xlu0 %3685, %v3557
      %v3687 = vpop.permute.xlu0 %3686
      %3690 = vset.pattern.permute.xlu0 0
      %3691 = vperm.xlu0 %3690, %v3559
      %v3692 = vpop.permute.xlu0 %3691
      %3695 = vset.pattern.permute.xlu0 0
      %3696 = vperm.xlu0 %3695, %v3561
      %v3697 = vpop.permute.xlu0 %3696
      %3700 = vset.pattern.permute.xlu0 0
      %3701 = vperm.xlu0 %3700, %v3563
      %v3702 = vpop.permute.xlu0 %3701
      %3705 = vset.pattern.permute.xlu0 0
      %3706 = vperm.xlu0 %3705, %v3565
      %v3707 = vpop.permute.xlu0 %3706
      %3710 = vset.pattern.permute.xlu0 0
      %3711 = vperm.xlu0 %3710, %v3567
      %v3712 = vpop.permute.xlu0 %3711
      %3715 = vset.pattern.permute.xlu0 0
      %3716 = vperm.xlu0 %3715, %v3569
      %v3717 = vpop.permute.xlu0 %3716
      %3720 = vset.pattern.permute.xlu0 0
      %3721 = vperm.xlu0 %3720, %v3571
      %v3722 = vpop.permute.xlu0 %3721
      %3725 = vset.pattern.permute.xlu0 0
      %3726 = vperm.xlu0 %3725, %v3573
      %v3727 = vpop.permute.xlu0 %3726
      %3730 = vset.pattern.permute.xlu0 0
      %3731 = vperm.xlu0 %3730, %v3575
      %v3732 = vpop.permute.xlu0 %3731
      %3735 = vset.pattern.permute.xlu0 0
      %3736 = vperm.xlu0 %3735, %v3577
      %v3737 = vpop.permute.xlu0 %3736
      %3740 = vset.pattern.permute.xlu0 0
      %3741 = vperm.xlu0 %3740, %v3579
      %v3742 = vpop.permute.xlu0 %3741
      %3745 = vset.pattern.permute.xlu0 0
      %3746 = vperm.xlu0 %3745, %v3581
      %v3747 = vpop.permute.xlu0 %3746
      %3750 = vset.pattern.permute.xlu0 0
      %3751 = vperm.xlu0 %3750, %v3583
      %v3752 = vpop.permute.xlu0 %3751
      %3755 = vset.pattern.permute.xlu0 0
      %3756 = vperm.xlu0 %3755, %v3585
      %v3757 = vpop.permute.xlu0 %3756
      %3760 = vset.pattern.permute.xlu0 0
      %3761 = vperm.xlu0 %3760, %v3587
      %v3762 = vpop.permute.xlu0 %3761
      %3765 = vset.pattern.permute.xlu0 0
      %3766 = vperm.xlu0 %3765, %v3589
      %v3767 = vpop.permute.xlu0 %3766
      %3770 = vset.pattern.permute.xlu0 0
      %3771 = vperm.xlu0 %3770, %v3591
      %v3772 = vpop.permute.xlu0 %3771
      %3775 = vset.pattern.permute.xlu0 0
      %3776 = vperm.xlu0 %3775, %v3593
      %v3777 = vpop.permute.xlu0 %3776
      %3780 = vset.pattern.permute.xlu0 0
      %3781 = vperm.xlu0 %3780, %v3595
      %v3782 = vpop.permute.xlu0 %3781
      %3785 = vset.pattern.permute.xlu0 0
      %3786 = vperm.xlu0 %3785, %v3597
      %v3787 = vpop.permute.xlu0 %3786
      %3790 = vset.pattern.permute.xlu0 0
      %3791 = vperm.xlu0 %3790, %v3599
      %v3792 = vpop.permute.xlu0 %3791
      %3795 = vset.pattern.permute.xlu0 0
      %3796 = vperm.xlu0 %3795, %v3601
      %v3797 = vpop.permute.xlu0 %3796
      %3800 = vset.pattern.permute.xlu0 0
      %3801 = vperm.xlu0 %3800, %v3603
      %v3802 = vpop.permute.xlu0 %3801
      %3805 = vset.pattern.permute.xlu0 0
      %3806 = vperm.xlu0 %3805, %v3605
      %v3807 = vpop.permute.xlu0 %3806
      %3810 = vset.pattern.permute.xlu0 0
      %3811 = vperm.xlu0 %3810, %v3607
      %v3812 = vpop.permute.xlu0 %3811
      %3815 = vset.pattern.permute.xlu0 0
      %3816 = vperm.xlu0 %3815, %v3609
      %v3817 = vpop.permute.xlu0 %3816
      %3820 = vset.pattern.permute.xlu0 0
      %3821 = vperm.xlu0 %3820, %v3611
      %v3822 = vpop.permute.xlu0 %3821
      %3825 = vset.pattern.permute.xlu0 0
      %3826 = vperm.xlu0 %3825, %v3613
      %v3827 = vpop.permute.xlu0 %3826
      %3830 = vset.pattern.permute.xlu0 0
      %3831 = vperm.xlu0 %3830, %v3615
      %v3832 = vpop.permute.xlu0 %3831
      %3835 = vset.pattern.permute.xlu0 0
      %3836 = vperm.xlu0 %3835, %v3617
      %v3837 = vpop.permute.xlu0 %3836
      %3840 = vset.pattern.permute.xlu0 0
      %3841 = vperm.xlu0 %3840, %v3619
      %v3842 = vpop.permute.xlu0 %3841
      %3845 = vset.pattern.permute.xlu0 0
      %3846 = vperm.xlu0 %3845, %v3621
      %v3847 = vpop.permute.xlu0 %3846
      %3850 = vset.pattern.permute.xlu0 0
      %3851 = vperm.xlu0 %3850, %v3623
      %v3852 = vpop.permute.xlu0 %3851
      %3855 = vset.pattern.permute.xlu0 0
      %3856 = vperm.xlu0 %3855, %v3625
      %v3857 = vpop.permute.xlu0 %3856
      %3860 = vset.pattern.permute.xlu0 0
      %3861 = vperm.xlu0 %3860, %v3627
      %v3862 = vpop.permute.xlu0 %3861
      %3865 = vset.pattern.permute.xlu0 0
      %3866 = vperm.xlu0 %3865, %v3629
      %v3867 = vpop.permute.xlu0 %3866
      %3870 = vset.pattern.permute.xlu0 0
      %3871 = vperm.xlu0 %3870, %v3631
      %v3872 = vpop.permute.xlu0 %3871
      %3875 = vset.pattern.permute.xlu0 0
      %3876 = vperm.xlu0 %3875, %v3633
      %v3877 = vpop.permute.xlu0 %3876
      %3880 = vset.pattern.permute.xlu0 0
      %3881 = vperm.xlu0 %3880, %v3635
      %v3882 = vpop.permute.xlu0 %3881
      %3885 = vset.pattern.permute.xlu0 0
      %3886 = vperm.xlu0 %3885, %v3637
      %v3887 = vpop.permute.xlu0 %3886
      %3890 = vset.pattern.permute.xlu0 0
      %3891 = vperm.xlu0 %3890, %v3639
      %v3892 = vpop.permute.xlu0 %3891
      %3895 = vset.pattern.permute.xlu0 0
      %3896 = vperm.xlu0 %3895, %v3641
      %v3897 = vpop.permute.xlu0 %3896
      %3900 = vset.pattern.permute.xlu0 0
      %3901 = vperm.xlu0 %3900, %v3643
      %v3902 = vpop.permute.xlu0 %3901
      %3905 = vset.pattern.permute.xlu0 0
      %3906 = vperm.xlu0 %3905, %v3645
      %v3907 = vpop.permute.xlu0 %3906
      %3910 = vset.pattern.permute.xlu0 0
      %3911 = vperm.xlu0 %3910, %v3647
      %v3912 = vpop.permute.xlu0 %3911
      %3915 = vset.pattern.permute.xlu0 0
      %3916 = vperm.xlu0 %3915, %v3649
      %v3917 = vpop.permute.xlu0 %3916
      %3920 = vset.pattern.permute.xlu0 0
      %3921 = vperm.xlu0 %3920, %v3651
      %v3922 = vpop.permute.xlu0 %3921
      %3925 = vset.pattern.permute.xlu0 0
      %3926 = vperm.xlu0 %3925, %v3653
      %v3927 = vpop.permute.xlu0 %3926
      %3930 = vset.pattern.permute.xlu0 0
      %3931 = vperm.xlu0 %3930, %v3655
      %v3932 = vpop.permute.xlu0 %3931
      %3935 = vset.pattern.permute.xlu0 0
      %3936 = vperm.xlu0 %3935, %v3657
      %v3937 = vpop.permute.xlu0 %3936
      %3940 = vset.pattern.permute.xlu0 0
      %3941 = vperm.xlu0 %3940, %v3659
      %v3942 = vpop.permute.xlu0 %3941
      %3945 = vset.pattern.permute.xlu0 0
      %3946 = vperm.xlu0 %3945, %v3661
      %v3947 = vpop.permute.xlu0 %3946
      %3950 = vset.pattern.permute.xlu0 0
      %3951 = vperm.xlu0 %3950, %v3663
      %v3952 = vpop.permute.xlu0 %3951
      %3955 = vset.pattern.permute.xlu0 0
      %3956 = vperm.xlu0 %3955, %v3665
      %v3957 = vpop.permute.xlu0 %3956
      %3960 = vset.pattern.permute.xlu0 0
      %3961 = vperm.xlu0 %3960, %v3667
      %v3962 = vpop.permute.xlu0 %3961
      %3965 = vset.pattern.permute.xlu0 0
      %3966 = vperm.xlu0 %3965, %v3669
      %v3967 = vpop.permute.xlu0 %3966
      %3970 = vset.pattern.permute.xlu0 0
      %3971 = vperm.xlu0 %3970, %v3671
      %v3972 = vpop.permute.xlu0 %3971
      %3975 = vset.pattern.permute.xlu0 0
      %3976 = vperm.xlu0 %3975, %v3673
      %v3977 = vpop.permute.xlu0 %3976
      %3980 = vset.pattern.permute.xlu0 0
      %3981 = vperm.xlu0 %3980, %v3675
      %v3982 = vpop.permute.xlu0 %3981
      %3985 = vset.pattern.permute.xlu0 0
      %3986 = vperm.xlu0 %3985, %v3677
      %v3987 = vpop.permute.xlu0 %3986
      %3990 = vset.pattern.permute.xlu0 0
      %3991 = vperm.xlu0 %3990, %v3679
      %v3992 = vpop.permute.xlu0 %3991
      %3995 = vset.pattern.permute.xlu0 0
      %3996 = vperm.xlu0 %3995, %v3681
      %v3997 = vpop.permute.xlu0 %3996
      %4000 = vset.pattern.permute.xlu0 0
      %4001 = vperm.xlu0 %4000, %v3683
      %v4002 = vpop.permute.xlu0 %4001
      %v4004 = vmul.f32 %v225, %v3687
      %v4005 = vmul.f32 %v226, %v3687
      %v4006 = vmul.f32 %v227, %v3687
      %v4007 = vmul.f32 %v228, %v3687
      %v4008 = vmul.f32 %v229, %v3687
      %v4009 = vmul.f32 %v230, %v3687
      %v4010 = vmul.f32 %v231, %v3687
      %v4011 = vmul.f32 %v232, %v3687
      %v4012 = vmul.f32 %v233, %v3687
      %v4013 = vmul.f32 %v234, %v3687
      %v4014 = vmul.f32 %v235, %v3687
      %v4015 = vmul.f32 %v236, %v3687
      %v4016 = vmul.f32 %v237, %v3687
      %v4017 = vmul.f32 %v238, %v3687
      %v4018 = vmul.f32 %v239, %v3687
      %v4019 = vmul.f32 %v240, %v3687
      %v4020 = vmul.f32 %v241, %v3692
      %v4021 = vmul.f32 %v242, %v3692
      %v4022 = vmul.f32 %v243, %v3692
      %v4023 = vmul.f32 %v244, %v3692
      %v4024 = vmul.f32 %v245, %v3692
      %v4025 = vmul.f32 %v246, %v3692
      %v4026 = vmul.f32 %v247, %v3692
      %v4027 = vmul.f32 %v248, %v3692
      %v4028 = vmul.f32 %v249, %v3692
      %v4029 = vmul.f32 %v250, %v3692
      %v4030 = vmul.f32 %v251, %v3692
      %v4031 = vmul.f32 %v252, %v3692
      %v4032 = vmul.f32 %v253, %v3692
      %v4033 = vmul.f32 %v254, %v3692
      %v4034 = vmul.f32 %v255, %v3692
      %v4035 = vmul.f32 %v256, %v3692
      %v4036 = vmul.f32 %v257, %v3697
      %v4037 = vmul.f32 %v258, %v3697
      %v4038 = vmul.f32 %v259, %v3697
      %v4039 = vmul.f32 %v260, %v3697
      %v4040 = vmul.f32 %v261, %v3697
      %v4041 = vmul.f32 %v262, %v3697
      %v4042 = vmul.f32 %v263, %v3697
      %v4043 = vmul.f32 %v264, %v3697
      %v4044 = vmul.f32 %v265, %v3697
      %v4045 = vmul.f32 %v266, %v3697
      %v4046 = vmul.f32 %v267, %v3697
      %v4047 = vmul.f32 %v268, %v3697
      %v4048 = vmul.f32 %v269, %v3697
      %v4049 = vmul.f32 %v270, %v3697
      %v4050 = vmul.f32 %v271, %v3697
      %v4051 = vmul.f32 %v272, %v3697
      %v4052 = vmul.f32 %v273, %v3702
      %v4053 = vmul.f32 %v274, %v3702
      %v4054 = vmul.f32 %v275, %v3702
      %v4055 = vmul.f32 %v276, %v3702
      %v4056 = vmul.f32 %v277, %v3702
      %v4057 = vmul.f32 %v278, %v3702
      %v4058 = vmul.f32 %v279, %v3702
      %v4059 = vmul.f32 %v280, %v3702
      %v4060 = vmul.f32 %v281, %v3702
      %v4061 = vmul.f32 %v282, %v3702
      %v4062 = vmul.f32 %v283, %v3702
      %v4063 = vmul.f32 %v284, %v3702
      %v4064 = vmul.f32 %v285, %v3702
      %v4065 = vmul.f32 %v286, %v3702
      %v4066 = vmul.f32 %v287, %v3702
      %v4067 = vmul.f32 %v288, %v3702
      %v4068 = vmul.f32 %v289, %v3707
      %v4069 = vmul.f32 %v290, %v3707
      %v4070 = vmul.f32 %v291, %v3707
      %v4071 = vmul.f32 %v292, %v3707
      %v4072 = vmul.f32 %v293, %v3707
      %v4073 = vmul.f32 %v294, %v3707
      %v4074 = vmul.f32 %v295, %v3707
      %v4075 = vmul.f32 %v296, %v3707
      %v4076 = vmul.f32 %v297, %v3707
      %v4077 = vmul.f32 %v298, %v3707
      %v4078 = vmul.f32 %v299, %v3707
      %v4079 = vmul.f32 %v300, %v3707
      %v4080 = vmul.f32 %v301, %v3707
      %v4081 = vmul.f32 %v302, %v3707
      %v4082 = vmul.f32 %v303, %v3707
      %v4083 = vmul.f32 %v304, %v3707
      %v4084 = vmul.f32 %v305, %v3712
      %v4085 = vmul.f32 %v306, %v3712
      %v4086 = vmul.f32 %v307, %v3712
      %v4087 = vmul.f32 %v308, %v3712
      %v4088 = vmul.f32 %v309, %v3712
      %v4089 = vmul.f32 %v310, %v3712
      %v4090 = vmul.f32 %v311, %v3712
      %v4091 = vmul.f32 %v312, %v3712
      %v4092 = vmul.f32 %v313, %v3712
      %v4093 = vmul.f32 %v314, %v3712
      %v4094 = vmul.f32 %v315, %v3712
      %v4095 = vmul.f32 %v316, %v3712
      %v4096 = vmul.f32 %v317, %v3712
      %v4097 = vmul.f32 %v318, %v3712
      %v4098 = vmul.f32 %v319, %v3712
      %v4099 = vmul.f32 %v320, %v3712
      %v4100 = vmul.f32 %v321, %v3717
      %v4101 = vmul.f32 %v322, %v3717
      %v4102 = vmul.f32 %v323, %v3717
      %v4103 = vmul.f32 %v324, %v3717
      %v4104 = vmul.f32 %v325, %v3717
      %v4105 = vmul.f32 %v326, %v3717
      %v4106 = vmul.f32 %v327, %v3717
      %v4107 = vmul.f32 %v328, %v3717
      %v4108 = vmul.f32 %v329, %v3717
      %v4109 = vmul.f32 %v330, %v3717
      %v4110 = vmul.f32 %v331, %v3717
      %v4111 = vmul.f32 %v332, %v3717
      %v4112 = vmul.f32 %v333, %v3717
      %v4113 = vmul.f32 %v334, %v3717
      %v4114 = vmul.f32 %v335, %v3717
      %v4115 = vmul.f32 %v336, %v3717
      %v4116 = vmul.f32 %v337, %v3722
      %v4117 = vmul.f32 %v338, %v3722
      %v4118 = vmul.f32 %v339, %v3722
      %v4119 = vmul.f32 %v340, %v3722
      %v4120 = vmul.f32 %v341, %v3722
      %v4121 = vmul.f32 %v342, %v3722
      %v4122 = vmul.f32 %v343, %v3722
      %v4123 = vmul.f32 %v344, %v3722
      %v4124 = vmul.f32 %v345, %v3722
      %v4125 = vmul.f32 %v346, %v3722
      %v4126 = vmul.f32 %v347, %v3722
      %v4127 = vmul.f32 %v348, %v3722
      %v4128 = vmul.f32 %v349, %v3722
      %v4129 = vmul.f32 %v350, %v3722
      %v4130 = vmul.f32 %v351, %v3722
      %v4131 = vmul.f32 %v352, %v3722
      %v4132 = vmul.f32 %v353, %v3727
      %v4133 = vmul.f32 %v354, %v3727
      %v4134 = vmul.f32 %v355, %v3727
      %v4135 = vmul.f32 %v356, %v3727
      %v4136 = vmul.f32 %v357, %v3727
      %v4137 = vmul.f32 %v358, %v3727
      %v4138 = vmul.f32 %v359, %v3727
      %v4139 = vmul.f32 %v360, %v3727
      %v4140 = vmul.f32 %v361, %v3727
      %v4141 = vmul.f32 %v362, %v3727
      %v4142 = vmul.f32 %v363, %v3727
      %v4143 = vmul.f32 %v364, %v3727
      %v4144 = vmul.f32 %v365, %v3727
      %v4145 = vmul.f32 %v366, %v3727
      %v4146 = vmul.f32 %v367, %v3727
      %v4147 = vmul.f32 %v368, %v3727
      %v4148 = vmul.f32 %v369, %v3732
      %v4149 = vmul.f32 %v370, %v3732
      %v4150 = vmul.f32 %v371, %v3732
      %v4151 = vmul.f32 %v372, %v3732
      %v4152 = vmul.f32 %v373, %v3732
      %v4153 = vmul.f32 %v374, %v3732
      %v4154 = vmul.f32 %v375, %v3732
      %v4155 = vmul.f32 %v376, %v3732
      %v4156 = vmul.f32 %v377, %v3732
      %v4157 = vmul.f32 %v378, %v3732
      %v4158 = vmul.f32 %v379, %v3732
      %v4159 = vmul.f32 %v380, %v3732
      %v4160 = vmul.f32 %v381, %v3732
      %v4161 = vmul.f32 %v382, %v3732
      %v4162 = vmul.f32 %v383, %v3732
      %v4163 = vmul.f32 %v384, %v3732
      %v4164 = vmul.f32 %v385, %v3737
      %v4165 = vmul.f32 %v386, %v3737
      %v4166 = vmul.f32 %v387, %v3737
      %v4167 = vmul.f32 %v388, %v3737
      %v4168 = vmul.f32 %v389, %v3737
      %v4169 = vmul.f32 %v390, %v3737
      %v4170 = vmul.f32 %v391, %v3737
      %v4171 = vmul.f32 %v392, %v3737
      %v4172 = vmul.f32 %v393, %v3737
      %v4173 = vmul.f32 %v394, %v3737
      %v4174 = vmul.f32 %v395, %v3737
      %v4175 = vmul.f32 %v396, %v3737
      %v4176 = vmul.f32 %v397, %v3737
      %v4177 = vmul.f32 %v398, %v3737
      %v4178 = vmul.f32 %v399, %v3737
      %v4179 = vmul.f32 %v400, %v3737
      %v4180 = vmul.f32 %v401, %v3742
      %v4181 = vmul.f32 %v402, %v3742
      %v4182 = vmul.f32 %v403, %v3742
      %v4183 = vmul.f32 %v404, %v3742
      %v4184 = vmul.f32 %v405, %v3742
      %v4185 = vmul.f32 %v406, %v3742
      %v4186 = vmul.f32 %v407, %v3742
      %v4187 = vmul.f32 %v408, %v3742
      %v4188 = vmul.f32 %v409, %v3742
      %v4189 = vmul.f32 %v410, %v3742
      %v4190 = vmul.f32 %v411, %v3742
      %v4191 = vmul.f32 %v412, %v3742
      %v4192 = vmul.f32 %v413, %v3742
      %v4193 = vmul.f32 %v414, %v3742
      %v4194 = vmul.f32 %v415, %v3742
      %v4195 = vmul.f32 %v416, %v3742
      %v4196 = vmul.f32 %v417, %v3747
      %v4197 = vmul.f32 %v418, %v3747
      %v4198 = vmul.f32 %v419, %v3747
      %v4199 = vmul.f32 %v420, %v3747
      %v4200 = vmul.f32 %v421, %v3747
      %v4201 = vmul.f32 %v422, %v3747
      %v4202 = vmul.f32 %v423, %v3747
      %v4203 = vmul.f32 %v424, %v3747
      %v4204 = vmul.f32 %v425, %v3747
      %v4205 = vmul.f32 %v426, %v3747
      %v4206 = vmul.f32 %v427, %v3747
      %v4207 = vmul.f32 %v428, %v3747
      %v4208 = vmul.f32 %v429, %v3747
      %v4209 = vmul.f32 %v430, %v3747
      %v4210 = vmul.f32 %v431, %v3747
      %v4211 = vmul.f32 %v432, %v3747
      %v4212 = vmul.f32 %v433, %v3752
      %v4213 = vmul.f32 %v434, %v3752
      %v4214 = vmul.f32 %v435, %v3752
      %v4215 = vmul.f32 %v436, %v3752
      %v4216 = vmul.f32 %v437, %v3752
      %v4217 = vmul.f32 %v438, %v3752
      %v4218 = vmul.f32 %v439, %v3752
      %v4219 = vmul.f32 %v440, %v3752
      %v4220 = vmul.f32 %v441, %v3752
      %v4221 = vmul.f32 %v442, %v3752
      %v4222 = vmul.f32 %v443, %v3752
      %v4223 = vmul.f32 %v444, %v3752
      %v4224 = vmul.f32 %v445, %v3752
      %v4225 = vmul.f32 %v446, %v3752
      %v4226 = vmul.f32 %v447, %v3752
      %v4227 = vmul.f32 %v448, %v3752
      %v4228 = vmul.f32 %v449, %v3757
      %v4229 = vmul.f32 %v450, %v3757
      %v4230 = vmul.f32 %v451, %v3757
      %v4231 = vmul.f32 %v452, %v3757
      %v4232 = vmul.f32 %v453, %v3757
      %v4233 = vmul.f32 %v454, %v3757
      %v4234 = vmul.f32 %v455, %v3757
      %v4235 = vmul.f32 %v456, %v3757
      %v4236 = vmul.f32 %v457, %v3757
      %v4237 = vmul.f32 %v458, %v3757
      %v4238 = vmul.f32 %v459, %v3757
      %v4239 = vmul.f32 %v460, %v3757
      %v4240 = vmul.f32 %v461, %v3757
      %v4241 = vmul.f32 %v462, %v3757
      %v4242 = vmul.f32 %v463, %v3757
      %v4243 = vmul.f32 %v464, %v3757
      %v4244 = vmul.f32 %v465, %v3762
      %v4245 = vmul.f32 %v466, %v3762
      %v4246 = vmul.f32 %v467, %v3762
      %v4247 = vmul.f32 %v468, %v3762
      %v4248 = vmul.f32 %v469, %v3762
      %v4249 = vmul.f32 %v470, %v3762
      %v4250 = vmul.f32 %v471, %v3762
      %v4251 = vmul.f32 %v472, %v3762
      %v4252 = vmul.f32 %v473, %v3762
      %v4253 = vmul.f32 %v474, %v3762
      %v4254 = vmul.f32 %v475, %v3762
      %v4255 = vmul.f32 %v476, %v3762
      %v4256 = vmul.f32 %v477, %v3762
      %v4257 = vmul.f32 %v478, %v3762
      %v4258 = vmul.f32 %v479, %v3762
      %v4259 = vmul.f32 %v480, %v3762
      %v4260 = vmul.f32 %v481, %v3767
      %v4261 = vmul.f32 %v482, %v3767
      %v4262 = vmul.f32 %v483, %v3767
      %v4263 = vmul.f32 %v484, %v3767
      %v4264 = vmul.f32 %v485, %v3767
      %v4265 = vmul.f32 %v486, %v3767
      %v4266 = vmul.f32 %v487, %v3767
      %v4267 = vmul.f32 %v488, %v3767
      %v4268 = vmul.f32 %v489, %v3767
      %v4269 = vmul.f32 %v490, %v3767
      %v4270 = vmul.f32 %v491, %v3767
      %v4271 = vmul.f32 %v492, %v3767
      %v4272 = vmul.f32 %v493, %v3767
      %v4273 = vmul.f32 %v494, %v3767
      %v4274 = vmul.f32 %v495, %v3767
      %v4275 = vmul.f32 %v496, %v3767
      %v4276 = vmul.f32 %v497, %v3772
      %v4277 = vmul.f32 %v498, %v3772
      %v4278 = vmul.f32 %v499, %v3772
      %v4279 = vmul.f32 %v500, %v3772
      %v4280 = vmul.f32 %v501, %v3772
      %v4281 = vmul.f32 %v502, %v3772
      %v4282 = vmul.f32 %v503, %v3772
      %v4283 = vmul.f32 %v504, %v3772
      %v4284 = vmul.f32 %v505, %v3772
      %v4285 = vmul.f32 %v506, %v3772
      %v4286 = vmul.f32 %v507, %v3772
      %v4287 = vmul.f32 %v508, %v3772
      %v4288 = vmul.f32 %v509, %v3772
      %v4289 = vmul.f32 %v510, %v3772
      %v4290 = vmul.f32 %v511, %v3772
      %v4291 = vmul.f32 %v512, %v3772
      %v4292 = vmul.f32 %v513, %v3777
      %v4293 = vmul.f32 %v514, %v3777
      %v4294 = vmul.f32 %v515, %v3777
      %v4295 = vmul.f32 %v516, %v3777
      %v4296 = vmul.f32 %v517, %v3777
      %v4297 = vmul.f32 %v518, %v3777
      %v4298 = vmul.f32 %v519, %v3777
      %v4299 = vmul.f32 %v520, %v3777
      %v4300 = vmul.f32 %v521, %v3777
      %v4301 = vmul.f32 %v522, %v3777
      %v4302 = vmul.f32 %v523, %v3777
      %v4303 = vmul.f32 %v524, %v3777
      %v4304 = vmul.f32 %v525, %v3777
      %v4305 = vmul.f32 %v526, %v3777
      %v4306 = vmul.f32 %v527, %v3777
      %v4307 = vmul.f32 %v528, %v3777
      %v4308 = vmul.f32 %v529, %v3782
      %v4309 = vmul.f32 %v530, %v3782
      %v4310 = vmul.f32 %v531, %v3782
      %v4311 = vmul.f32 %v532, %v3782
      %v4312 = vmul.f32 %v533, %v3782
      %v4313 = vmul.f32 %v534, %v3782
      %v4314 = vmul.f32 %v535, %v3782
      %v4315 = vmul.f32 %v536, %v3782
      %v4316 = vmul.f32 %v537, %v3782
      %v4317 = vmul.f32 %v538, %v3782
      %v4318 = vmul.f32 %v539, %v3782
      %v4319 = vmul.f32 %v540, %v3782
      %v4320 = vmul.f32 %v541, %v3782
      %v4321 = vmul.f32 %v542, %v3782
      %v4322 = vmul.f32 %v543, %v3782
      %v4323 = vmul.f32 %v544, %v3782
      %v4324 = vmul.f32 %v545, %v3787
      %v4325 = vmul.f32 %v546, %v3787
      %v4326 = vmul.f32 %v547, %v3787
      %v4327 = vmul.f32 %v548, %v3787
      %v4328 = vmul.f32 %v549, %v3787
      %v4329 = vmul.f32 %v550, %v3787
      %v4330 = vmul.f32 %v551, %v3787
      %v4331 = vmul.f32 %v552, %v3787
      %v4332 = vmul.f32 %v553, %v3787
      %v4333 = vmul.f32 %v554, %v3787
      %v4334 = vmul.f32 %v555, %v3787
      %v4335 = vmul.f32 %v556, %v3787
      %v4336 = vmul.f32 %v557, %v3787
      %v4337 = vmul.f32 %v558, %v3787
      %v4338 = vmul.f32 %v559, %v3787
      %v4339 = vmul.f32 %v560, %v3787
      %v4340 = vmul.f32 %v561, %v3792
      %v4341 = vmul.f32 %v562, %v3792
      %v4342 = vmul.f32 %v563, %v3792
      %v4343 = vmul.f32 %v564, %v3792
      %v4344 = vmul.f32 %v565, %v3792
      %v4345 = vmul.f32 %v566, %v3792
      %v4346 = vmul.f32 %v567, %v3792
      %v4347 = vmul.f32 %v568, %v3792
      %v4348 = vmul.f32 %v569, %v3792
      %v4349 = vmul.f32 %v570, %v3792
      %v4350 = vmul.f32 %v571, %v3792
      %v4351 = vmul.f32 %v572, %v3792
      %v4352 = vmul.f32 %v573, %v3792
      %v4353 = vmul.f32 %v574, %v3792
      %v4354 = vmul.f32 %v575, %v3792
      %v4355 = vmul.f32 %v576, %v3792
      %v4356 = vmul.f32 %v577, %v3797
      %v4357 = vmul.f32 %v578, %v3797
      %v4358 = vmul.f32 %v579, %v3797
      %v4359 = vmul.f32 %v580, %v3797
      %v4360 = vmul.f32 %v581, %v3797
      %v4361 = vmul.f32 %v582, %v3797
      %v4362 = vmul.f32 %v583, %v3797
      %v4363 = vmul.f32 %v584, %v3797
      %v4364 = vmul.f32 %v585, %v3797
      %v4365 = vmul.f32 %v586, %v3797
      %v4366 = vmul.f32 %v587, %v3797
      %v4367 = vmul.f32 %v588, %v3797
      %v4368 = vmul.f32 %v589, %v3797
      %v4369 = vmul.f32 %v590, %v3797
      %v4370 = vmul.f32 %v591, %v3797
      %v4371 = vmul.f32 %v592, %v3797
      %v4372 = vmul.f32 %v593, %v3802
      %v4373 = vmul.f32 %v594, %v3802
      %v4374 = vmul.f32 %v595, %v3802
      %v4375 = vmul.f32 %v596, %v3802
      %v4376 = vmul.f32 %v597, %v3802
      %v4377 = vmul.f32 %v598, %v3802
      %v4378 = vmul.f32 %v599, %v3802
      %v4379 = vmul.f32 %v600, %v3802
      %v4380 = vmul.f32 %v601, %v3802
      %v4381 = vmul.f32 %v602, %v3802
      %v4382 = vmul.f32 %v603, %v3802
      %v4383 = vmul.f32 %v604, %v3802
      %v4384 = vmul.f32 %v605, %v3802
      %v4385 = vmul.f32 %v606, %v3802
      %v4386 = vmul.f32 %v607, %v3802
      %v4387 = vmul.f32 %v608, %v3802
      %v4388 = vmul.f32 %v609, %v3807
      %v4389 = vmul.f32 %v610, %v3807
      %v4390 = vmul.f32 %v611, %v3807
      %v4391 = vmul.f32 %v612, %v3807
      %v4392 = vmul.f32 %v613, %v3807
      %v4393 = vmul.f32 %v614, %v3807
      %v4394 = vmul.f32 %v615, %v3807
      %v4395 = vmul.f32 %v616, %v3807
      %v4396 = vmul.f32 %v617, %v3807
      %v4397 = vmul.f32 %v618, %v3807
      %v4398 = vmul.f32 %v619, %v3807
      %v4399 = vmul.f32 %v620, %v3807
      %v4400 = vmul.f32 %v621, %v3807
      %v4401 = vmul.f32 %v622, %v3807
      %v4402 = vmul.f32 %v623, %v3807
      %v4403 = vmul.f32 %v624, %v3807
      %v4404 = vmul.f32 %v625, %v3812
      %v4405 = vmul.f32 %v626, %v3812
      %v4406 = vmul.f32 %v627, %v3812
      %v4407 = vmul.f32 %v628, %v3812
      %v4408 = vmul.f32 %v629, %v3812
      %v4409 = vmul.f32 %v630, %v3812
      %v4410 = vmul.f32 %v631, %v3812
      %v4411 = vmul.f32 %v632, %v3812
      %v4412 = vmul.f32 %v633, %v3812
      %v4413 = vmul.f32 %v634, %v3812
      %v4414 = vmul.f32 %v635, %v3812
      %v4415 = vmul.f32 %v636, %v3812
      %v4416 = vmul.f32 %v637, %v3812
      %v4417 = vmul.f32 %v638, %v3812
      %v4418 = vmul.f32 %v639, %v3812
      %v4419 = vmul.f32 %v640, %v3812
      %v4420 = vmul.f32 %v641, %v3817
      %v4421 = vmul.f32 %v642, %v3817
      %v4422 = vmul.f32 %v643, %v3817
      %v4423 = vmul.f32 %v644, %v3817
      %v4424 = vmul.f32 %v645, %v3817
      %v4425 = vmul.f32 %v646, %v3817
      %v4426 = vmul.f32 %v647, %v3817
      %v4427 = vmul.f32 %v648, %v3817
      %v4428 = vmul.f32 %v649, %v3817
      %v4429 = vmul.f32 %v650, %v3817
      %v4430 = vmul.f32 %v651, %v3817
      %v4431 = vmul.f32 %v652, %v3817
      %v4432 = vmul.f32 %v653, %v3817
      %v4433 = vmul.f32 %v654, %v3817
      %v4434 = vmul.f32 %v655, %v3817
      %v4435 = vmul.f32 %v656, %v3817
      %v4436 = vmul.f32 %v657, %v3822
      %v4437 = vmul.f32 %v658, %v3822
      %v4438 = vmul.f32 %v659, %v3822
      %v4439 = vmul.f32 %v660, %v3822
      %v4440 = vmul.f32 %v661, %v3822
      %v4441 = vmul.f32 %v662, %v3822
      %v4442 = vmul.f32 %v663, %v3822
      %v4443 = vmul.f32 %v664, %v3822
      %v4444 = vmul.f32 %v665, %v3822
      %v4445 = vmul.f32 %v666, %v3822
      %v4446 = vmul.f32 %v667, %v3822
      %v4447 = vmul.f32 %v668, %v3822
      %v4448 = vmul.f32 %v669, %v3822
      %v4449 = vmul.f32 %v670, %v3822
      %v4450 = vmul.f32 %v671, %v3822
      %v4451 = vmul.f32 %v672, %v3822
      %v4452 = vmul.f32 %v673, %v3827
      %v4453 = vmul.f32 %v674, %v3827
      %v4454 = vmul.f32 %v675, %v3827
      %v4455 = vmul.f32 %v676, %v3827
      %v4456 = vmul.f32 %v677, %v3827
      %v4457 = vmul.f32 %v678, %v3827
      %v4458 = vmul.f32 %v679, %v3827
      %v4459 = vmul.f32 %v680, %v3827
      %v4460 = vmul.f32 %v681, %v3827
      %v4461 = vmul.f32 %v682, %v3827
      %v4462 = vmul.f32 %v683, %v3827
      %v4463 = vmul.f32 %v684, %v3827
      %v4464 = vmul.f32 %v685, %v3827
      %v4465 = vmul.f32 %v686, %v3827
      %v4466 = vmul.f32 %v687, %v3827
      %v4467 = vmul.f32 %v688, %v3827
      %v4468 = vmul.f32 %v689, %v3832
      %v4469 = vmul.f32 %v690, %v3832
      %v4470 = vmul.f32 %v691, %v3832
      %v4471 = vmul.f32 %v692, %v3832
      %v4472 = vmul.f32 %v693, %v3832
      %v4473 = vmul.f32 %v694, %v3832
      %v4474 = vmul.f32 %v695, %v3832
      %v4475 = vmul.f32 %v696, %v3832
      %v4476 = vmul.f32 %v697, %v3832
      %v4477 = vmul.f32 %v698, %v3832
      %v4478 = vmul.f32 %v699, %v3832
      %v4479 = vmul.f32 %v700, %v3832
      %v4480 = vmul.f32 %v701, %v3832
      %v4481 = vmul.f32 %v702, %v3832
      %v4482 = vmul.f32 %v703, %v3832
      %v4483 = vmul.f32 %v704, %v3832
      %v4484 = vmul.f32 %v705, %v3837
      %v4485 = vmul.f32 %v706, %v3837
      %v4486 = vmul.f32 %v707, %v3837
      %v4487 = vmul.f32 %v708, %v3837
      %v4488 = vmul.f32 %v709, %v3837
      %v4489 = vmul.f32 %v710, %v3837
      %v4490 = vmul.f32 %v711, %v3837
      %v4491 = vmul.f32 %v712, %v3837
      %v4492 = vmul.f32 %v713, %v3837
      %v4493 = vmul.f32 %v714, %v3837
      %v4494 = vmul.f32 %v715, %v3837
      %v4495 = vmul.f32 %v716, %v3837
      %v4496 = vmul.f32 %v717, %v3837
      %v4497 = vmul.f32 %v718, %v3837
      %v4498 = vmul.f32 %v719, %v3837
      %v4499 = vmul.f32 %v720, %v3837
      %v4500 = vmul.f32 %v721, %v3842
      %v4501 = vmul.f32 %v722, %v3842
      %v4502 = vmul.f32 %v723, %v3842
      %v4503 = vmul.f32 %v724, %v3842
      %v4504 = vmul.f32 %v725, %v3842
      %v4505 = vmul.f32 %v726, %v3842
      %v4506 = vmul.f32 %v727, %v3842
      %v4507 = vmul.f32 %v728, %v3842
      %v4508 = vmul.f32 %v729, %v3842
      %v4509 = vmul.f32 %v730, %v3842
      %v4510 = vmul.f32 %v731, %v3842
      %v4511 = vmul.f32 %v732, %v3842
      %v4512 = vmul.f32 %v733, %v3842
      %v4513 = vmul.f32 %v734, %v3842
      %v4514 = vmul.f32 %v735, %v3842
      %v4515 = vmul.f32 %v736, %v3842
      %v4516 = vmul.f32 %v737, %v3847
      %v4517 = vmul.f32 %v738, %v3847
      %v4518 = vmul.f32 %v739, %v3847
      %v4519 = vmul.f32 %v740, %v3847
      %v4520 = vmul.f32 %v741, %v3847
      %v4521 = vmul.f32 %v742, %v3847
      %v4522 = vmul.f32 %v743, %v3847
      %v4523 = vmul.f32 %v744, %v3847
      %v4524 = vmul.f32 %v745, %v3847
      %v4525 = vmul.f32 %v746, %v3847
      %v4526 = vmul.f32 %v747, %v3847
      %v4527 = vmul.f32 %v748, %v3847
      %v4528 = vmul.f32 %v749, %v3847
      %v4529 = vmul.f32 %v750, %v3847
      %v4530 = vmul.f32 %v751, %v3847
      %v4531 = vmul.f32 %v752, %v3847
      %v4532 = vmul.f32 %v753, %v3852
      %v4533 = vmul.f32 %v754, %v3852
      %v4534 = vmul.f32 %v755, %v3852
      %v4535 = vmul.f32 %v756, %v3852
      %v4536 = vmul.f32 %v757, %v3852
      %v4537 = vmul.f32 %v758, %v3852
      %v4538 = vmul.f32 %v759, %v3852
      %v4539 = vmul.f32 %v760, %v3852
      %v4540 = vmul.f32 %v761, %v3852
      %v4541 = vmul.f32 %v762, %v3852
      %v4542 = vmul.f32 %v763, %v3852
      %v4543 = vmul.f32 %v764, %v3852
      %v4544 = vmul.f32 %v765, %v3852
      %v4545 = vmul.f32 %v766, %v3852
      %v4546 = vmul.f32 %v767, %v3852
      %v4547 = vmul.f32 %v768, %v3852
      %v4548 = vmul.f32 %v769, %v3857
      %v4549 = vmul.f32 %v770, %v3857
      %v4550 = vmul.f32 %v771, %v3857
      %v4551 = vmul.f32 %v772, %v3857
      %v4552 = vmul.f32 %v773, %v3857
      %v4553 = vmul.f32 %v774, %v3857
      %v4554 = vmul.f32 %v775, %v3857
      %v4555 = vmul.f32 %v776, %v3857
      %v4556 = vmul.f32 %v777, %v3857
      %v4557 = vmul.f32 %v778, %v3857
      %v4558 = vmul.f32 %v779, %v3857
      %v4559 = vmul.f32 %v780, %v3857
      %v4560 = vmul.f32 %v781, %v3857
      %v4561 = vmul.f32 %v782, %v3857
      %v4562 = vmul.f32 %v783, %v3857
      %v4563 = vmul.f32 %v784, %v3857
      %v4564 = vmul.f32 %v785, %v3862
      %v4565 = vmul.f32 %v786, %v3862
      %v4566 = vmul.f32 %v787, %v3862
      %v4567 = vmul.f32 %v788, %v3862
      %v4568 = vmul.f32 %v789, %v3862
      %v4569 = vmul.f32 %v790, %v3862
      %v4570 = vmul.f32 %v791, %v3862
      %v4571 = vmul.f32 %v792, %v3862
      %v4572 = vmul.f32 %v793, %v3862
      %v4573 = vmul.f32 %v794, %v3862
      %v4574 = vmul.f32 %v795, %v3862
      %v4575 = vmul.f32 %v796, %v3862
      %v4576 = vmul.f32 %v797, %v3862
      %v4577 = vmul.f32 %v798, %v3862
      %v4578 = vmul.f32 %v799, %v3862
      %v4579 = vmul.f32 %v800, %v3862
      %v4580 = vmul.f32 %v801, %v3867
      %v4581 = vmul.f32 %v802, %v3867
      %v4582 = vmul.f32 %v803, %v3867
      %v4583 = vmul.f32 %v804, %v3867
      %v4584 = vmul.f32 %v805, %v3867
      %v4585 = vmul.f32 %v806, %v3867
      %v4586 = vmul.f32 %v807, %v3867
      %v4587 = vmul.f32 %v808, %v3867
      %v4588 = vmul.f32 %v809, %v3867
      %v4589 = vmul.f32 %v810, %v3867
      %v4590 = vmul.f32 %v811, %v3867
      %v4591 = vmul.f32 %v812, %v3867
      %v4592 = vmul.f32 %v813, %v3867
      %v4593 = vmul.f32 %v814, %v3867
      %v4594 = vmul.f32 %v815, %v3867
      %v4595 = vmul.f32 %v816, %v3867
      %v4596 = vmul.f32 %v817, %v3872
      %v4597 = vmul.f32 %v818, %v3872
      %v4598 = vmul.f32 %v819, %v3872
      %v4599 = vmul.f32 %v820, %v3872
      %v4600 = vmul.f32 %v821, %v3872
      %v4601 = vmul.f32 %v822, %v3872
      %v4602 = vmul.f32 %v823, %v3872
      %v4603 = vmul.f32 %v824, %v3872
      %v4604 = vmul.f32 %v825, %v3872
      %v4605 = vmul.f32 %v826, %v3872
      %v4606 = vmul.f32 %v827, %v3872
      %v4607 = vmul.f32 %v828, %v3872
      %v4608 = vmul.f32 %v829, %v3872
      %v4609 = vmul.f32 %v830, %v3872
      %v4610 = vmul.f32 %v831, %v3872
      %v4611 = vmul.f32 %v832, %v3872
      %v4612 = vmul.f32 %v833, %v3877
      %v4613 = vmul.f32 %v834, %v3877
      %v4614 = vmul.f32 %v835, %v3877
      %v4615 = vmul.f32 %v836, %v3877
      %v4616 = vmul.f32 %v837, %v3877
      %v4617 = vmul.f32 %v838, %v3877
      %v4618 = vmul.f32 %v839, %v3877
      %v4619 = vmul.f32 %v840, %v3877
      %v4620 = vmul.f32 %v841, %v3877
      %v4621 = vmul.f32 %v842, %v3877
      %v4622 = vmul.f32 %v843, %v3877
      %v4623 = vmul.f32 %v844, %v3877
      %v4624 = vmul.f32 %v845, %v3877
      %v4625 = vmul.f32 %v846, %v3877
      %v4626 = vmul.f32 %v847, %v3877
      %v4627 = vmul.f32 %v848, %v3877
      %v4628 = vmul.f32 %v849, %v3882
      %v4629 = vmul.f32 %v850, %v3882
      %v4630 = vmul.f32 %v851, %v3882
      %v4631 = vmul.f32 %v852, %v3882
      %v4632 = vmul.f32 %v853, %v3882
      %v4633 = vmul.f32 %v854, %v3882
      %v4634 = vmul.f32 %v855, %v3882
      %v4635 = vmul.f32 %v856, %v3882
      %v4636 = vmul.f32 %v857, %v3882
      %v4637 = vmul.f32 %v858, %v3882
      %v4638 = vmul.f32 %v859, %v3882
      %v4639 = vmul.f32 %v860, %v3882
      %v4640 = vmul.f32 %v861, %v3882
      %v4641 = vmul.f32 %v862, %v3882
      %v4642 = vmul.f32 %v863, %v3882
      %v4643 = vmul.f32 %v864, %v3882
      %v4644 = vmul.f32 %v865, %v3887
      %v4645 = vmul.f32 %v866, %v3887
      %v4646 = vmul.f32 %v867, %v3887
      %v4647 = vmul.f32 %v868, %v3887
      %v4648 = vmul.f32 %v869, %v3887
      %v4649 = vmul.f32 %v870, %v3887
      %v4650 = vmul.f32 %v871, %v3887
      %v4651 = vmul.f32 %v872, %v3887
      %v4652 = vmul.f32 %v873, %v3887
      %v4653 = vmul.f32 %v874, %v3887
      %v4654 = vmul.f32 %v875, %v3887
      %v4655 = vmul.f32 %v876, %v3887
      %v4656 = vmul.f32 %v877, %v3887
      %v4657 = vmul.f32 %v878, %v3887
      %v4658 = vmul.f32 %v879, %v3887
      %v4659 = vmul.f32 %v880, %v3887
      %v4660 = vmul.f32 %v881, %v3892
      %v4661 = vmul.f32 %v882, %v3892
      %v4662 = vmul.f32 %v883, %v3892
      %v4663 = vmul.f32 %v884, %v3892
      %v4664 = vmul.f32 %v885, %v3892
      %v4665 = vmul.f32 %v886, %v3892
      %v4666 = vmul.f32 %v887, %v3892
      %v4667 = vmul.f32 %v888, %v3892
      %v4668 = vmul.f32 %v889, %v3892
      %v4669 = vmul.f32 %v890, %v3892
      %v4670 = vmul.f32 %v891, %v3892
      %v4671 = vmul.f32 %v892, %v3892
      %v4672 = vmul.f32 %v893, %v3892
      %v4673 = vmul.f32 %v894, %v3892
      %v4674 = vmul.f32 %v895, %v3892
      %v4675 = vmul.f32 %v896, %v3892
      %v4676 = vmul.f32 %v897, %v3897
      %v4677 = vmul.f32 %v898, %v3897
      %v4678 = vmul.f32 %v899, %v3897
      %v4679 = vmul.f32 %v900, %v3897
      %v4680 = vmul.f32 %v901, %v3897
      %v4681 = vmul.f32 %v902, %v3897
      %v4682 = vmul.f32 %v903, %v3897
      %v4683 = vmul.f32 %v904, %v3897
      %v4684 = vmul.f32 %v905, %v3897
      %v4685 = vmul.f32 %v906, %v3897
      %v4686 = vmul.f32 %v907, %v3897
      %v4687 = vmul.f32 %v908, %v3897
      %v4688 = vmul.f32 %v909, %v3897
      %v4689 = vmul.f32 %v910, %v3897
      %v4690 = vmul.f32 %v911, %v3897
      %v4691 = vmul.f32 %v912, %v3897
      %v4692 = vmul.f32 %v913, %v3902
      %v4693 = vmul.f32 %v914, %v3902
      %v4694 = vmul.f32 %v915, %v3902
      %v4695 = vmul.f32 %v916, %v3902
      %v4696 = vmul.f32 %v917, %v3902
      %v4697 = vmul.f32 %v918, %v3902
      %v4698 = vmul.f32 %v919, %v3902
      %v4699 = vmul.f32 %v920, %v3902
      %v4700 = vmul.f32 %v921, %v3902
      %v4701 = vmul.f32 %v922, %v3902
      %v4702 = vmul.f32 %v923, %v3902
      %v4703 = vmul.f32 %v924, %v3902
      %v4704 = vmul.f32 %v925, %v3902
      %v4705 = vmul.f32 %v926, %v3902
      %v4706 = vmul.f32 %v927, %v3902
      %v4707 = vmul.f32 %v928, %v3902
      %v4708 = vmul.f32 %v929, %v3907
      %v4709 = vmul.f32 %v930, %v3907
      %v4710 = vmul.f32 %v931, %v3907
      %v4711 = vmul.f32 %v932, %v3907
      %v4712 = vmul.f32 %v933, %v3907
      %v4713 = vmul.f32 %v934, %v3907
      %v4714 = vmul.f32 %v935, %v3907
      %v4715 = vmul.f32 %v936, %v3907
      %v4716 = vmul.f32 %v937, %v3907
      %v4717 = vmul.f32 %v938, %v3907
      %v4718 = vmul.f32 %v939, %v3907
      %v4719 = vmul.f32 %v940, %v3907
      %v4720 = vmul.f32 %v941, %v3907
      %v4721 = vmul.f32 %v942, %v3907
      %v4722 = vmul.f32 %v943, %v3907
      %v4723 = vmul.f32 %v944, %v3907
      %v4724 = vmul.f32 %v945, %v3912
      %v4725 = vmul.f32 %v946, %v3912
      %v4726 = vmul.f32 %v947, %v3912
      %v4727 = vmul.f32 %v948, %v3912
      %v4728 = vmul.f32 %v949, %v3912
      %v4729 = vmul.f32 %v950, %v3912
      %v4730 = vmul.f32 %v951, %v3912
      %v4731 = vmul.f32 %v952, %v3912
      %v4732 = vmul.f32 %v953, %v3912
      %v4733 = vmul.f32 %v954, %v3912
      %v4734 = vmul.f32 %v955, %v3912
      %v4735 = vmul.f32 %v956, %v3912
      %v4736 = vmul.f32 %v957, %v3912
      %v4737 = vmul.f32 %v958, %v3912
      %v4738 = vmul.f32 %v959, %v3912
      %v4739 = vmul.f32 %v960, %v3912
      %v4740 = vmul.f32 %v961, %v3917
      %v4741 = vmul.f32 %v962, %v3917
      %v4742 = vmul.f32 %v963, %v3917
      %v4743 = vmul.f32 %v964, %v3917
      %v4744 = vmul.f32 %v965, %v3917
      %v4745 = vmul.f32 %v966, %v3917
      %v4746 = vmul.f32 %v967, %v3917
      %v4747 = vmul.f32 %v968, %v3917
      %v4748 = vmul.f32 %v969, %v3917
      %v4749 = vmul.f32 %v970, %v3917
      %v4750 = vmul.f32 %v971, %v3917
      %v4751 = vmul.f32 %v972, %v3917
      %v4752 = vmul.f32 %v973, %v3917
      %v4753 = vmul.f32 %v974, %v3917
      %v4754 = vmul.f32 %v975, %v3917
      %v4755 = vmul.f32 %v976, %v3917
      %v4756 = vmul.f32 %v977, %v3922
      %v4757 = vmul.f32 %v978, %v3922
      %v4758 = vmul.f32 %v979, %v3922
      %v4759 = vmul.f32 %v980, %v3922
      %v4760 = vmul.f32 %v981, %v3922
      %v4761 = vmul.f32 %v982, %v3922
      %v4762 = vmul.f32 %v983, %v3922
      %v4763 = vmul.f32 %v984, %v3922
      %v4764 = vmul.f32 %v985, %v3922
      %v4765 = vmul.f32 %v986, %v3922
      %v4766 = vmul.f32 %v987, %v3922
      %v4767 = vmul.f32 %v988, %v3922
      %v4768 = vmul.f32 %v989, %v3922
      %v4769 = vmul.f32 %v990, %v3922
      %v4770 = vmul.f32 %v991, %v3922
      %v4771 = vmul.f32 %v992, %v3922
      %v4772 = vmul.f32 %v993, %v3927
      %v4773 = vmul.f32 %v994, %v3927
      %v4774 = vmul.f32 %v995, %v3927
      %v4775 = vmul.f32 %v996, %v3927
      %v4776 = vmul.f32 %v997, %v3927
      %v4777 = vmul.f32 %v998, %v3927
      %v4778 = vmul.f32 %v999, %v3927
      %v4779 = vmul.f32 %v1000, %v3927
      %v4780 = vmul.f32 %v1001, %v3927
      %v4781 = vmul.f32 %v1002, %v3927
      %v4782 = vmul.f32 %v1003, %v3927
      %v4783 = vmul.f32 %v1004, %v3927
      %v4784 = vmul.f32 %v1005, %v3927
      %v4785 = vmul.f32 %v1006, %v3927
      %v4786 = vmul.f32 %v1007, %v3927
      %v4787 = vmul.f32 %v1008, %v3927
      %v4788 = vmul.f32 %v1009, %v3932
      %v4789 = vmul.f32 %v1010, %v3932
      %v4790 = vmul.f32 %v1011, %v3932
      %v4791 = vmul.f32 %v1012, %v3932
      %v4792 = vmul.f32 %v1013, %v3932
      %v4793 = vmul.f32 %v1014, %v3932
      %v4794 = vmul.f32 %v1015, %v3932
      %v4795 = vmul.f32 %v1016, %v3932
      %v4796 = vmul.f32 %v1017, %v3932
      %v4797 = vmul.f32 %v1018, %v3932
      %v4798 = vmul.f32 %v1019, %v3932
      %v4799 = vmul.f32 %v1020, %v3932
      %v4800 = vmul.f32 %v1021, %v3932
      %v4801 = vmul.f32 %v1022, %v3932
      %v4802 = vmul.f32 %v1023, %v3932
      %v4803 = vmul.f32 %v1024, %v3932
      %v4804 = vmul.f32 %v1025, %v3937
      %v4805 = vmul.f32 %v1026, %v3937
      %v4806 = vmul.f32 %v1027, %v3937
      %v4807 = vmul.f32 %v1028, %v3937
      %v4808 = vmul.f32 %v1029, %v3937
      %v4809 = vmul.f32 %v1030, %v3937
      %v4810 = vmul.f32 %v1031, %v3937
      %v4811 = vmul.f32 %v1032, %v3937
      %v4812 = vmul.f32 %v1033, %v3937
      %v4813 = vmul.f32 %v1034, %v3937
      %v4814 = vmul.f32 %v1035, %v3937
      %v4815 = vmul.f32 %v1036, %v3937
      %v4816 = vmul.f32 %v1037, %v3937
      %v4817 = vmul.f32 %v1038, %v3937
      %v4818 = vmul.f32 %v1039, %v3937
      %v4819 = vmul.f32 %v1040, %v3937
      %v4820 = vmul.f32 %v1041, %v3942
      %v4821 = vmul.f32 %v1042, %v3942
      %v4822 = vmul.f32 %v1043, %v3942
      %v4823 = vmul.f32 %v1044, %v3942
      %v4824 = vmul.f32 %v1045, %v3942
      %v4825 = vmul.f32 %v1046, %v3942
      %v4826 = vmul.f32 %v1047, %v3942
      %v4827 = vmul.f32 %v1048, %v3942
      %v4828 = vmul.f32 %v1049, %v3942
      %v4829 = vmul.f32 %v1050, %v3942
      %v4830 = vmul.f32 %v1051, %v3942
      %v4831 = vmul.f32 %v1052, %v3942
      %v4832 = vmul.f32 %v1053, %v3942
      %v4833 = vmul.f32 %v1054, %v3942
      %v4834 = vmul.f32 %v1055, %v3942
      %v4835 = vmul.f32 %v1056, %v3942
      %v4836 = vmul.f32 %v1057, %v3947
      %v4837 = vmul.f32 %v1058, %v3947
      %v4838 = vmul.f32 %v1059, %v3947
      %v4839 = vmul.f32 %v1060, %v3947
      %v4840 = vmul.f32 %v1061, %v3947
      %v4841 = vmul.f32 %v1062, %v3947
      %v4842 = vmul.f32 %v1063, %v3947
      %v4843 = vmul.f32 %v1064, %v3947
      %v4844 = vmul.f32 %v1065, %v3947
      %v4845 = vmul.f32 %v1066, %v3947
      %v4846 = vmul.f32 %v1067, %v3947
      %v4847 = vmul.f32 %v1068, %v3947
      %v4848 = vmul.f32 %v1069, %v3947
      %v4849 = vmul.f32 %v1070, %v3947
      %v4850 = vmul.f32 %v1071, %v3947
      %v4851 = vmul.f32 %v1072, %v3947
      %v4852 = vmul.f32 %v1073, %v3952
      %v4853 = vmul.f32 %v1074, %v3952
      %v4854 = vmul.f32 %v1075, %v3952
      %v4855 = vmul.f32 %v1076, %v3952
      %v4856 = vmul.f32 %v1077, %v3952
      %v4857 = vmul.f32 %v1078, %v3952
      %v4858 = vmul.f32 %v1079, %v3952
      %v4859 = vmul.f32 %v1080, %v3952
      %v4860 = vmul.f32 %v1081, %v3952
      %v4861 = vmul.f32 %v1082, %v3952
      %v4862 = vmul.f32 %v1083, %v3952
      %v4863 = vmul.f32 %v1084, %v3952
      %v4864 = vmul.f32 %v1085, %v3952
      %v4865 = vmul.f32 %v1086, %v3952
      %v4866 = vmul.f32 %v1087, %v3952
      %v4867 = vmul.f32 %v1088, %v3952
      %v4868 = vmul.f32 %v1089, %v3957
      %v4869 = vmul.f32 %v1090, %v3957
      %v4870 = vmul.f32 %v1091, %v3957
      %v4871 = vmul.f32 %v1092, %v3957
      %v4872 = vmul.f32 %v1093, %v3957
      %v4873 = vmul.f32 %v1094, %v3957
      %v4874 = vmul.f32 %v1095, %v3957
      %v4875 = vmul.f32 %v1096, %v3957
      %v4876 = vmul.f32 %v1097, %v3957
      %v4877 = vmul.f32 %v1098, %v3957
      %v4878 = vmul.f32 %v1099, %v3957
      %v4879 = vmul.f32 %v1100, %v3957
      %v4880 = vmul.f32 %v1101, %v3957
      %v4881 = vmul.f32 %v1102, %v3957
      %v4882 = vmul.f32 %v1103, %v3957
      %v4883 = vmul.f32 %v1104, %v3957
      %v4884 = vmul.f32 %v1105, %v3962
      %v4885 = vmul.f32 %v1106, %v3962
      %v4886 = vmul.f32 %v1107, %v3962
      %v4887 = vmul.f32 %v1108, %v3962
      %v4888 = vmul.f32 %v1109, %v3962
      %v4889 = vmul.f32 %v1110, %v3962
      %v4890 = vmul.f32 %v1111, %v3962
      %v4891 = vmul.f32 %v1112, %v3962
      %v4892 = vmul.f32 %v1113, %v3962
      %v4893 = vmul.f32 %v1114, %v3962
      %v4894 = vmul.f32 %v1115, %v3962
      %v4895 = vmul.f32 %v1116, %v3962
      %v4896 = vmul.f32 %v1117, %v3962
      %v4897 = vmul.f32 %v1118, %v3962
      %v4898 = vmul.f32 %v1119, %v3962
      %v4899 = vmul.f32 %v1120, %v3962
      %v4900 = vmul.f32 %v1121, %v3967
      %v4901 = vmul.f32 %v1122, %v3967
      %v4902 = vmul.f32 %v1123, %v3967
      %v4903 = vmul.f32 %v1124, %v3967
      %v4904 = vmul.f32 %v1125, %v3967
      %v4905 = vmul.f32 %v1126, %v3967
      %v4906 = vmul.f32 %v1127, %v3967
      %v4907 = vmul.f32 %v1128, %v3967
      %v4908 = vmul.f32 %v1129, %v3967
      %v4909 = vmul.f32 %v1130, %v3967
      %v4910 = vmul.f32 %v1131, %v3967
      %v4911 = vmul.f32 %v1132, %v3967
      %v4912 = vmul.f32 %v1133, %v3967
      %v4913 = vmul.f32 %v1134, %v3967
      %v4914 = vmul.f32 %v1135, %v3967
      %v4915 = vmul.f32 %v1136, %v3967
      %v4916 = vmul.f32 %v1137, %v3972
      %v4917 = vmul.f32 %v1138, %v3972
      %v4918 = vmul.f32 %v1139, %v3972
      %v4919 = vmul.f32 %v1140, %v3972
      %v4920 = vmul.f32 %v1141, %v3972
      %v4921 = vmul.f32 %v1142, %v3972
      %v4922 = vmul.f32 %v1143, %v3972
      %v4923 = vmul.f32 %v1144, %v3972
      %v4924 = vmul.f32 %v1145, %v3972
      %v4925 = vmul.f32 %v1146, %v3972
      %v4926 = vmul.f32 %v1147, %v3972
      %v4927 = vmul.f32 %v1148, %v3972
      %v4928 = vmul.f32 %v1149, %v3972
      %v4929 = vmul.f32 %v1150, %v3972
      %v4930 = vmul.f32 %v1151, %v3972
      %v4931 = vmul.f32 %v1152, %v3972
      %v4932 = vmul.f32 %v1153, %v3977
      %v4933 = vmul.f32 %v1154, %v3977
      %v4934 = vmul.f32 %v1155, %v3977
      %v4935 = vmul.f32 %v1156, %v3977
      %v4936 = vmul.f32 %v1157, %v3977
      %v4937 = vmul.f32 %v1158, %v3977
      %v4938 = vmul.f32 %v1159, %v3977
      %v4939 = vmul.f32 %v1160, %v3977
      %v4940 = vmul.f32 %v1161, %v3977
      %v4941 = vmul.f32 %v1162, %v3977
      %v4942 = vmul.f32 %v1163, %v3977
      %v4943 = vmul.f32 %v1164, %v3977
      %v4944 = vmul.f32 %v1165, %v3977
      %v4945 = vmul.f32 %v1166, %v3977
      %v4946 = vmul.f32 %v1167, %v3977
      %v4947 = vmul.f32 %v1168, %v3977
      %v4948 = vmul.f32 %v1169, %v3982
      %v4949 = vmul.f32 %v1170, %v3982
      %v4950 = vmul.f32 %v1171, %v3982
      %v4951 = vmul.f32 %v1172, %v3982
      %v4952 = vmul.f32 %v1173, %v3982
      %v4953 = vmul.f32 %v1174, %v3982
      %v4954 = vmul.f32 %v1175, %v3982
      %v4955 = vmul.f32 %v1176, %v3982
      %v4956 = vmul.f32 %v1177, %v3982
      %v4957 = vmul.f32 %v1178, %v3982
      %v4958 = vmul.f32 %v1179, %v3982
      %v4959 = vmul.f32 %v1180, %v3982
      %v4960 = vmul.f32 %v1181, %v3982
      %v4961 = vmul.f32 %v1182, %v3982
      %v4962 = vmul.f32 %v1183, %v3982
      %v4963 = vmul.f32 %v1184, %v3982
      %v4964 = vmul.f32 %v1185, %v3987
      %v4965 = vmul.f32 %v1186, %v3987
      %v4966 = vmul.f32 %v1187, %v3987
      %v4967 = vmul.f32 %v1188, %v3987
      %v4968 = vmul.f32 %v1189, %v3987
      %v4969 = vmul.f32 %v1190, %v3987
      %v4970 = vmul.f32 %v1191, %v3987
      %v4971 = vmul.f32 %v1192, %v3987
      %v4972 = vmul.f32 %v1193, %v3987
      %v4973 = vmul.f32 %v1194, %v3987
      %v4974 = vmul.f32 %v1195, %v3987
      %v4975 = vmul.f32 %v1196, %v3987
      %v4976 = vmul.f32 %v1197, %v3987
      %v4977 = vmul.f32 %v1198, %v3987
      %v4978 = vmul.f32 %v1199, %v3987
      %v4979 = vmul.f32 %v1200, %v3987
      %v4980 = vmul.f32 %v1201, %v3992
      %v4981 = vmul.f32 %v1202, %v3992
      %v4982 = vmul.f32 %v1203, %v3992
      %v4983 = vmul.f32 %v1204, %v3992
      %v4984 = vmul.f32 %v1205, %v3992
      %v4985 = vmul.f32 %v1206, %v3992
      %v4986 = vmul.f32 %v1207, %v3992
      %v4987 = vmul.f32 %v1208, %v3992
      %v4988 = vmul.f32 %v1209, %v3992
      %v4989 = vmul.f32 %v1210, %v3992
      %v4990 = vmul.f32 %v1211, %v3992
      %v4991 = vmul.f32 %v1212, %v3992
      %v4992 = vmul.f32 %v1213, %v3992
      %v4993 = vmul.f32 %v1214, %v3992
      %v4994 = vmul.f32 %v1215, %v3992
      %v4995 = vmul.f32 %v1216, %v3992
      %v4996 = vmul.f32 %v1217, %v3997
      %v4997 = vmul.f32 %v1218, %v3997
      %v4998 = vmul.f32 %v1219, %v3997
      %v4999 = vmul.f32 %v1220, %v3997
      %v5000 = vmul.f32 %v1221, %v3997
      %v5001 = vmul.f32 %v1222, %v3997
      %v5002 = vmul.f32 %v1223, %v3997
      %v5003 = vmul.f32 %v1224, %v3997
      %v5004 = vmul.f32 %v1225, %v3997
      %v5005 = vmul.f32 %v1226, %v3997
      %v5006 = vmul.f32 %v1227, %v3997
      %v5007 = vmul.f32 %v1228, %v3997
      %v5008 = vmul.f32 %v1229, %v3997
      %v5009 = vmul.f32 %v1230, %v3997
      %v5010 = vmul.f32 %v1231, %v3997
      %v5011 = vmul.f32 %v1232, %v3997
      %v5012 = vmul.f32 %v1233, %v4002
      %v5013 = vmul.f32 %v1234, %v4002
      %v5014 = vmul.f32 %v1235, %v4002
      %v5015 = vmul.f32 %v1236, %v4002
      %v5016 = vmul.f32 %v1237, %v4002
      %v5017 = vmul.f32 %v1238, %v4002
      %v5018 = vmul.f32 %v1239, %v4002
      %v5019 = vmul.f32 %v1240, %v4002
      %v5020 = vmul.f32 %v1241, %v4002
      %v5021 = vmul.f32 %v1242, %v4002
      %v5022 = vmul.f32 %v1243, %v4002
      %v5023 = vmul.f32 %v1244, %v4002
      %v5024 = vmul.f32 %v1245, %v4002
      %v5025 = vmul.f32 %v1246, %v4002
      %v5026 = vmul.f32 %v1247, %v4002
      %v5027 = vmul.f32 %v1248, %v4002
      %5028 = vst [vmem:[%s224] sm:$0xff] %v4004
      %5029 = vst [vmem:[%s224 + $0x8] sm:$0xff] %v4005
      %5030 = vst [vmem:[%s224 + $0x10] sm:$0xff] %v4006
      %5031 = vst [vmem:[%s224 + $0x18] sm:$0xff] %v4007
      %5032 = vst [vmem:[%s224 + $0x20] sm:$0xff] %v4008
      %5033 = vst [vmem:[%s224 + $0x28] sm:$0xff] %v4009
      %5034 = vst [vmem:[%s224 + $0x30] sm:$0xff] %v4010
      %5035 = vst [vmem:[%s224 + $0x38] sm:$0xff] %v4011
      %5036 = vst [vmem:[%s224 + $0x40] sm:$0xff] %v4012
      %5037 = vst [vmem:[%s224 + $0x48] sm:$0xff] %v4013
      %5038 = vst [vmem:[%s224 + $0x50] sm:$0xff] %v4014
      %5039 = vst [vmem:[%s224 + $0x58] sm:$0xff] %v4015
      %5040 = vst [vmem:[%s224 + $0x60] sm:$0xff] %v4016
      %5041 = vst [vmem:[%s224 + $0x68] sm:$0xff] %v4017
      %5042 = vst [vmem:[%s224 + $0x70] sm:$0xff] %v4018
      %5043 = vst [vmem:[%s224 + $0x78] sm:$0xff] %v4019
      %5044 = vst [vmem:[%s224 + $0x80] sm:$0xff] %v4020
      %5045 = vst [vmem:[%s224 + $0x88] sm:$0xff] %v4021
      %5046 = vst [vmem:[%s224 + $0x90] sm:$0xff] %v4022
      %5047 = vst [vmem:[%s224 + $0x98] sm:$0xff] %v4023
      %5048 = vst [vmem:[%s224 + $0xa0] sm:$0xff] %v4024
      %5049 = vst [vmem:[%s224 + $0xa8] sm:$0xff] %v4025
      %5050 = vst [vmem:[%s224 + $0xb0] sm:$0xff] %v4026
      %5051 = vst [vmem:[%s224 + $0xb8] sm:$0xff] %v4027
      %5052 = vst [vmem:[%s224 + $0xc0] sm:$0xff] %v4028
      %5053 = vst [vmem:[%s224 + $0xc8] sm:$0xff] %v4029
      %5054 = vst [vmem:[%s224 + $0xd0] sm:$0xff] %v4030
      %5055 = vst [vmem:[%s224 + $0xd8] sm:$0xff] %v4031
      %5056 = vst [vmem:[%s224 + $0xe0] sm:$0xff] %v4032
      %5057 = vst [vmem:[%s224 + $0xe8] sm:$0xff] %v4033
      %5058 = vst [vmem:[%s224 + $0xf0] sm:$0xff] %v4034
      %5059 = vst [vmem:[%s224 + $0xf8] sm:$0xff] %v4035
      %5060 = vst [vmem:[%s224 + $0x100] sm:$0xff] %v4036
      %5061 = vst [vmem:[%s224 + $0x108] sm:$0xff] %v4037
      %5062 = vst [vmem:[%s224 + $0x110] sm:$0xff] %v4038
      %5063 = vst [vmem:[%s224 + $0x118] sm:$0xff] %v4039
      %5064 = vst [vmem:[%s224 + $0x120] sm:$0xff] %v4040
      %5065 = vst [vmem:[%s224 + $0x128] sm:$0xff] %v4041
      %5066 = vst [vmem:[%s224 + $0x130] sm:$0xff] %v4042
      %5067 = vst [vmem:[%s224 + $0x138] sm:$0xff] %v4043
      %5068 = vst [vmem:[%s224 + $0x140] sm:$0xff] %v4044
      %5069 = vst [vmem:[%s224 + $0x148] sm:$0xff] %v4045
      %5070 = vst [vmem:[%s224 + $0x150] sm:$0xff] %v4046
      %5071 = vst [vmem:[%s224 + $0x158] sm:$0xff] %v4047
      %5072 = vst [vmem:[%s224 + $0x160] sm:$0xff] %v4048
      %5073 = vst [vmem:[%s224 + $0x168] sm:$0xff] %v4049
      %5074 = vst [vmem:[%s224 + $0x170] sm:$0xff] %v4050
      %5075 = vst [vmem:[%s224 + $0x178] sm:$0xff] %v4051
      %5076 = vst [vmem:[%s224 + $0x180] sm:$0xff] %v4052
      %5077 = vst [vmem:[%s224 + $0x188] sm:$0xff] %v4053
      %5078 = vst [vmem:[%s224 + $0x190] sm:$0xff] %v4054
      %5079 = vst [vmem:[%s224 + $0x198] sm:$0xff] %v4055
      %5080 = vst [vmem:[%s224 + $0x1a0] sm:$0xff] %v4056
      %5081 = vst [vmem:[%s224 + $0x1a8] sm:$0xff] %v4057
      %5082 = vst [vmem:[%s224 + $0x1b0] sm:$0xff] %v4058
      %5083 = vst [vmem:[%s224 + $0x1b8] sm:$0xff] %v4059
      %5084 = vst [vmem:[%s224 + $0x1c0] sm:$0xff] %v4060
      %5085 = vst [vmem:[%s224 + $0x1c8] sm:$0xff] %v4061
      %5086 = vst [vmem:[%s224 + $0x1d0] sm:$0xff] %v4062
      %5087 = vst [vmem:[%s224 + $0x1d8] sm:$0xff] %v4063
      %5088 = vst [vmem:[%s224 + $0x1e0] sm:$0xff] %v4064
      %5089 = vst [vmem:[%s224 + $0x1e8] sm:$0xff] %v4065
      %5090 = vst [vmem:[%s224 + $0x1f0] sm:$0xff] %v4066
      %5091 = vst [vmem:[%s224 + $0x1f8] sm:$0xff] %v4067
      %5092 = vst [vmem:[%s224 + $0x200] sm:$0xff] %v4068
      %5093 = vst [vmem:[%s224 + $0x208] sm:$0xff] %v4069
      %5094 = vst [vmem:[%s224 + $0x210] sm:$0xff] %v4070
      %5095 = vst [vmem:[%s224 + $0x218] sm:$0xff] %v4071
      %5096 = vst [vmem:[%s224 + $0x220] sm:$0xff] %v4072
      %5097 = vst [vmem:[%s224 + $0x228] sm:$0xff] %v4073
      %5098 = vst [vmem:[%s224 + $0x230] sm:$0xff] %v4074
      %5099 = vst [vmem:[%s224 + $0x238] sm:$0xff] %v4075
      %5100 = vst [vmem:[%s224 + $0x240] sm:$0xff] %v4076
      %5101 = vst [vmem:[%s224 + $0x248] sm:$0xff] %v4077
      %5102 = vst [vmem:[%s224 + $0x250] sm:$0xff] %v4078
      %5103 = vst [vmem:[%s224 + $0x258] sm:$0xff] %v4079
      %5104 = vst [vmem:[%s224 + $0x260] sm:$0xff] %v4080
      %5105 = vst [vmem:[%s224 + $0x268] sm:$0xff] %v4081
      %5106 = vst [vmem:[%s224 + $0x270] sm:$0xff] %v4082
      %5107 = vst [vmem:[%s224 + $0x278] sm:$0xff] %v4083
      %5108 = vst [vmem:[%s224 + $0x280] sm:$0xff] %v4084
      %5109 = vst [vmem:[%s224 + $0x288] sm:$0xff] %v4085
      %5110 = vst [vmem:[%s224 + $0x290] sm:$0xff] %v4086
      %5111 = vst [vmem:[%s224 + $0x298] sm:$0xff] %v4087
      %5112 = vst [vmem:[%s224 + $0x2a0] sm:$0xff] %v4088
      %5113 = vst [vmem:[%s224 + $0x2a8] sm:$0xff] %v4089
      %5114 = vst [vmem:[%s224 + $0x2b0] sm:$0xff] %v4090
      %5115 = vst [vmem:[%s224 + $0x2b8] sm:$0xff] %v4091
      %5116 = vst [vmem:[%s224 + $0x2c0] sm:$0xff] %v4092
      %5117 = vst [vmem:[%s224 + $0x2c8] sm:$0xff] %v4093
      %5118 = vst [vmem:[%s224 + $0x2d0] sm:$0xff] %v4094
      %5119 = vst [vmem:[%s224 + $0x2d8] sm:$0xff] %v4095
      %5120 = vst [vmem:[%s224 + $0x2e0] sm:$0xff] %v4096
      %5121 = vst [vmem:[%s224 + $0x2e8] sm:$0xff] %v4097
      %5122 = vst [vmem:[%s224 + $0x2f0] sm:$0xff] %v4098
      %5123 = vst [vmem:[%s224 + $0x2f8] sm:$0xff] %v4099
      %5124 = vst [vmem:[%s224 + $0x300] sm:$0xff] %v4100
      %5125 = vst [vmem:[%s224 + $0x308] sm:$0xff] %v4101
      %5126 = vst [vmem:[%s224 + $0x310] sm:$0xff] %v4102
      %5127 = vst [vmem:[%s224 + $0x318] sm:$0xff] %v4103
      %5128 = vst [vmem:[%s224 + $0x320] sm:$0xff] %v4104
      %5129 = vst [vmem:[%s224 + $0x328] sm:$0xff] %v4105
      %5130 = vst [vmem:[%s224 + $0x330] sm:$0xff] %v4106
      %5131 = vst [vmem:[%s224 + $0x338] sm:$0xff] %v4107
      %5132 = vst [vmem:[%s224 + $0x340] sm:$0xff] %v4108
      %5133 = vst [vmem:[%s224 + $0x348] sm:$0xff] %v4109
      %5134 = vst [vmem:[%s224 + $0x350] sm:$0xff] %v4110
      %5135 = vst [vmem:[%s224 + $0x358] sm:$0xff] %v4111
      %5136 = vst [vmem:[%s224 + $0x360] sm:$0xff] %v4112
      %5137 = vst [vmem:[%s224 + $0x368] sm:$0xff] %v4113
      %5138 = vst [vmem:[%s224 + $0x370] sm:$0xff] %v4114
      %5139 = vst [vmem:[%s224 + $0x378] sm:$0xff] %v4115
      %5140 = vst [vmem:[%s224 + $0x380] sm:$0xff] %v4116
      %5141 = vst [vmem:[%s224 + $0x388] sm:$0xff] %v4117
      %5142 = vst [vmem:[%s224 + $0x390] sm:$0xff] %v4118
      %5143 = vst [vmem:[%s224 + $0x398] sm:$0xff] %v4119
      %5144 = vst [vmem:[%s224 + $0x3a0] sm:$0xff] %v4120
      %5145 = vst [vmem:[%s224 + $0x3a8] sm:$0xff] %v4121
      %5146 = vst [vmem:[%s224 + $0x3b0] sm:$0xff] %v4122
      %5147 = vst [vmem:[%s224 + $0x3b8] sm:$0xff] %v4123
      %5148 = vst [vmem:[%s224 + $0x3c0] sm:$0xff] %v4124
      %5149 = vst [vmem:[%s224 + $0x3c8] sm:$0xff] %v4125
      %5150 = vst [vmem:[%s224 + $0x3d0] sm:$0xff] %v4126
      %5151 = vst [vmem:[%s224 + $0x3d8] sm:$0xff] %v4127
      %5152 = vst [vmem:[%s224 + $0x3e0] sm:$0xff] %v4128
      %5153 = vst [vmem:[%s224 + $0x3e8] sm:$0xff] %v4129
      %5154 = vst [vmem:[%s224 + $0x3f0] sm:$0xff] %v4130
      %5155 = vst [vmem:[%s224 + $0x3f8] sm:$0xff] %v4131
      %5156 = vst [vmem:[%s224 + $0x400] sm:$0xff] %v4132
      %5157 = vst [vmem:[%s224 + $0x408] sm:$0xff] %v4133
      %5158 = vst [vmem:[%s224 + $0x410] sm:$0xff] %v4134
      %5159 = vst [vmem:[%s224 + $0x418] sm:$0xff] %v4135
      %5160 = vst [vmem:[%s224 + $0x420] sm:$0xff] %v4136
      %5161 = vst [vmem:[%s224 + $0x428] sm:$0xff] %v4137
      %5162 = vst [vmem:[%s224 + $0x430] sm:$0xff] %v4138
      %5163 = vst [vmem:[%s224 + $0x438] sm:$0xff] %v4139
      %5164 = vst [vmem:[%s224 + $0x440] sm:$0xff] %v4140
      %5165 = vst [vmem:[%s224 + $0x448] sm:$0xff] %v4141
      %5166 = vst [vmem:[%s224 + $0x450] sm:$0xff] %v4142
      %5167 = vst [vmem:[%s224 + $0x458] sm:$0xff] %v4143
      %5168 = vst [vmem:[%s224 + $0x460] sm:$0xff] %v4144
      %5169 = vst [vmem:[%s224 + $0x468] sm:$0xff] %v4145
      %5170 = vst [vmem:[%s224 + $0x470] sm:$0xff] %v4146
      %5171 = vst [vmem:[%s224 + $0x478] sm:$0xff] %v4147
      %5172 = vst [vmem:[%s224 + $0x480] sm:$0xff] %v4148
      %5173 = vst [vmem:[%s224 + $0x488] sm:$0xff] %v4149
      %5174 = vst [vmem:[%s224 + $0x490] sm:$0xff] %v4150
      %5175 = vst [vmem:[%s224 + $0x498] sm:$0xff] %v4151
      %5176 = vst [vmem:[%s224 + $0x4a0] sm:$0xff] %v4152
      %5177 = vst [vmem:[%s224 + $0x4a8] sm:$0xff] %v4153
      %5178 = vst [vmem:[%s224 + $0x4b0] sm:$0xff] %v4154
      %5179 = vst [vmem:[%s224 + $0x4b8] sm:$0xff] %v4155
      %5180 = vst [vmem:[%s224 + $0x4c0] sm:$0xff] %v4156
      %5181 = vst [vmem:[%s224 + $0x4c8] sm:$0xff] %v4157
      %5182 = vst [vmem:[%s224 + $0x4d0] sm:$0xff] %v4158
      %5183 = vst [vmem:[%s224 + $0x4d8] sm:$0xff] %v4159
      %5184 = vst [vmem:[%s224 + $0x4e0] sm:$0xff] %v4160
      %5185 = vst [vmem:[%s224 + $0x4e8] sm:$0xff] %v4161
      %5186 = vst [vmem:[%s224 + $0x4f0] sm:$0xff] %v4162
      %5187 = vst [vmem:[%s224 + $0x4f8] sm:$0xff] %v4163
      %5188 = vst [vmem:[%s224 + $0x500] sm:$0xff] %v4164
      %5189 = vst [vmem:[%s224 + $0x508] sm:$0xff] %v4165
      %5190 = vst [vmem:[%s224 + $0x510] sm:$0xff] %v4166
      %5191 = vst [vmem:[%s224 + $0x518] sm:$0xff] %v4167
      %5192 = vst [vmem:[%s224 + $0x520] sm:$0xff] %v4168
      %5193 = vst [vmem:[%s224 + $0x528] sm:$0xff] %v4169
      %5194 = vst [vmem:[%s224 + $0x530] sm:$0xff] %v4170
      %5195 = vst [vmem:[%s224 + $0x538] sm:$0xff] %v4171
      %5196 = vst [vmem:[%s224 + $0x540] sm:$0xff] %v4172
      %5197 = vst [vmem:[%s224 + $0x548] sm:$0xff] %v4173
      %5198 = vst [vmem:[%s224 + $0x550] sm:$0xff] %v4174
      %5199 = vst [vmem:[%s224 + $0x558] sm:$0xff] %v4175
      %5200 = vst [vmem:[%s224 + $0x560] sm:$0xff] %v4176
      %5201 = vst [vmem:[%s224 + $0x568] sm:$0xff] %v4177
      %5202 = vst [vmem:[%s224 + $0x570] sm:$0xff] %v4178
      %5203 = vst [vmem:[%s224 + $0x578] sm:$0xff] %v4179
      %5204 = vst [vmem:[%s224 + $0x580] sm:$0xff] %v4180
      %5205 = vst [vmem:[%s224 + $0x588] sm:$0xff] %v4181
      %5206 = vst [vmem:[%s224 + $0x590] sm:$0xff] %v4182
      %5207 = vst [vmem:[%s224 + $0x598] sm:$0xff] %v4183
      %5208 = vst [vmem:[%s224 + $0x5a0] sm:$0xff] %v4184
      %5209 = vst [vmem:[%s224 + $0x5a8] sm:$0xff] %v4185
      %5210 = vst [vmem:[%s224 + $0x5b0] sm:$0xff] %v4186
      %5211 = vst [vmem:[%s224 + $0x5b8] sm:$0xff] %v4187
      %5212 = vst [vmem:[%s224 + $0x5c0] sm:$0xff] %v4188
      %5213 = vst [vmem:[%s224 + $0x5c8] sm:$0xff] %v4189
      %5214 = vst [vmem:[%s224 + $0x5d0] sm:$0xff] %v4190
      %5215 = vst [vmem:[%s224 + $0x5d8] sm:$0xff] %v4191
      %5216 = vst [vmem:[%s224 + $0x5e0] sm:$0xff] %v4192
      %5217 = vst [vmem:[%s224 + $0x5e8] sm:$0xff] %v4193
      %5218 = vst [vmem:[%s224 + $0x5f0] sm:$0xff] %v4194
      %5219 = vst [vmem:[%s224 + $0x5f8] sm:$0xff] %v4195
      %5220 = vst [vmem:[%s224 + $0x600] sm:$0xff] %v4196
      %5221 = vst [vmem:[%s224 + $0x608] sm:$0xff] %v4197
      %5222 = vst [vmem:[%s224 + $0x610] sm:$0xff] %v4198
      %5223 = vst [vmem:[%s224 + $0x618] sm:$0xff] %v4199
      %5224 = vst [vmem:[%s224 + $0x620] sm:$0xff] %v4200
      %5225 = vst [vmem:[%s224 + $0x628] sm:$0xff] %v4201
      %5226 = vst [vmem:[%s224 + $0x630] sm:$0xff] %v4202
      %5227 = vst [vmem:[%s224 + $0x638] sm:$0xff] %v4203
      %5228 = vst [vmem:[%s224 + $0x640] sm:$0xff] %v4204
      %5229 = vst [vmem:[%s224 + $0x648] sm:$0xff] %v4205
      %5230 = vst [vmem:[%s224 + $0x650] sm:$0xff] %v4206
      %5231 = vst [vmem:[%s224 + $0x658] sm:$0xff] %v4207
      %5232 = vst [vmem:[%s224 + $0x660] sm:$0xff] %v4208
      %5233 = vst [vmem:[%s224 + $0x668] sm:$0xff] %v4209
      %5234 = vst [vmem:[%s224 + $0x670] sm:$0xff] %v4210
      %5235 = vst [vmem:[%s224 + $0x678] sm:$0xff] %v4211
      %5236 = vst [vmem:[%s224 + $0x680] sm:$0xff] %v4212
      %5237 = vst [vmem:[%s224 + $0x688] sm:$0xff] %v4213
      %5238 = vst [vmem:[%s224 + $0x690] sm:$0xff] %v4214
      %5239 = vst [vmem:[%s224 + $0x698] sm:$0xff] %v4215
      %5240 = vst [vmem:[%s224 + $0x6a0] sm:$0xff] %v4216
      %5241 = vst [vmem:[%s224 + $0x6a8] sm:$0xff] %v4217
      %5242 = vst [vmem:[%s224 + $0x6b0] sm:$0xff] %v4218
      %5243 = vst [vmem:[%s224 + $0x6b8] sm:$0xff] %v4219
      %5244 = vst [vmem:[%s224 + $0x6c0] sm:$0xff] %v4220
      %5245 = vst [vmem:[%s224 + $0x6c8] sm:$0xff] %v4221
      %5246 = vst [vmem:[%s224 + $0x6d0] sm:$0xff] %v4222
      %5247 = vst [vmem:[%s224 + $0x6d8] sm:$0xff] %v4223
      %5248 = vst [vmem:[%s224 + $0x6e0] sm:$0xff] %v4224
      %5249 = vst [vmem:[%s224 + $0x6e8] sm:$0xff] %v4225
      %5250 = vst [vmem:[%s224 + $0x6f0] sm:$0xff] %v4226
      %5251 = vst [vmem:[%s224 + $0x6f8] sm:$0xff] %v4227
      %5252 = vst [vmem:[%s224 + $0x700] sm:$0xff] %v4228
      %5253 = vst [vmem:[%s224 + $0x708] sm:$0xff] %v4229
      %5254 = vst [vmem:[%s224 + $0x710] sm:$0xff] %v4230
      %5255 = vst [vmem:[%s224 + $0x718] sm:$0xff] %v4231
      %5256 = vst [vmem:[%s224 + $0x720] sm:$0xff] %v4232
      %5257 = vst [vmem:[%s224 + $0x728] sm:$0xff] %v4233
      %5258 = vst [vmem:[%s224 + $0x730] sm:$0xff] %v4234
      %5259 = vst [vmem:[%s224 + $0x738] sm:$0xff] %v4235
      %5260 = vst [vmem:[%s224 + $0x740] sm:$0xff] %v4236
      %5261 = vst [vmem:[%s224 + $0x748] sm:$0xff] %v4237
      %5262 = vst [vmem:[%s224 + $0x750] sm:$0xff] %v4238
      %5263 = vst [vmem:[%s224 + $0x758] sm:$0xff] %v4239
      %5264 = vst [vmem:[%s224 + $0x760] sm:$0xff] %v4240
      %5265 = vst [vmem:[%s224 + $0x768] sm:$0xff] %v4241
      %5266 = vst [vmem:[%s224 + $0x770] sm:$0xff] %v4242
      %5267 = vst [vmem:[%s224 + $0x778] sm:$0xff] %v4243
      %5268 = vst [vmem:[%s224 + $0x780] sm:$0xff] %v4244
      %5269 = vst [vmem:[%s224 + $0x788] sm:$0xff] %v4245
      %5270 = vst [vmem:[%s224 + $0x790] sm:$0xff] %v4246
      %5271 = vst [vmem:[%s224 + $0x798] sm:$0xff] %v4247
      %5272 = vst [vmem:[%s224 + $0x7a0] sm:$0xff] %v4248
      %5273 = vst [vmem:[%s224 + $0x7a8] sm:$0xff] %v4249
      %5274 = vst [vmem:[%s224 + $0x7b0] sm:$0xff] %v4250
      %5275 = vst [vmem:[%s224 + $0x7b8] sm:$0xff] %v4251
      %5276 = vst [vmem:[%s224 + $0x7c0] sm:$0xff] %v4252
      %5277 = vst [vmem:[%s224 + $0x7c8] sm:$0xff] %v4253
      %5278 = vst [vmem:[%s224 + $0x7d0] sm:$0xff] %v4254
      %5279 = vst [vmem:[%s224 + $0x7d8] sm:$0xff] %v4255
      %5280 = vst [vmem:[%s224 + $0x7e0] sm:$0xff] %v4256
      %5281 = vst [vmem:[%s224 + $0x7e8] sm:$0xff] %v4257
      %5282 = vst [vmem:[%s224 + $0x7f0] sm:$0xff] %v4258
      %5283 = vst [vmem:[%s224 + $0x7f8] sm:$0xff] %v4259
      %5284 = vst [vmem:[%s224 + $0x800] sm:$0xff] %v4260
      %5285 = vst [vmem:[%s224 + $0x808] sm:$0xff] %v4261
      %5286 = vst [vmem:[%s224 + $0x810] sm:$0xff] %v4262
      %5287 = vst [vmem:[%s224 + $0x818] sm:$0xff] %v4263
      %5288 = vst [vmem:[%s224 + $0x820] sm:$0xff] %v4264
      %5289 = vst [vmem:[%s224 + $0x828] sm:$0xff] %v4265
      %5290 = vst [vmem:[%s224 + $0x830] sm:$0xff] %v4266
      %5291 = vst [vmem:[%s224 + $0x838] sm:$0xff] %v4267
      %5292 = vst [vmem:[%s224 + $0x840] sm:$0xff] %v4268
      %5293 = vst [vmem:[%s224 + $0x848] sm:$0xff] %v4269
      %5294 = vst [vmem:[%s224 + $0x850] sm:$0xff] %v4270
      %5295 = vst [vmem:[%s224 + $0x858] sm:$0xff] %v4271
      %5296 = vst [vmem:[%s224 + $0x860] sm:$0xff] %v4272
      %5297 = vst [vmem:[%s224 + $0x868] sm:$0xff] %v4273
      %5298 = vst [vmem:[%s224 + $0x870] sm:$0xff] %v4274
      %5299 = vst [vmem:[%s224 + $0x878] sm:$0xff] %v4275
      %5300 = vst [vmem:[%s224 + $0x880] sm:$0xff] %v4276
      %5301 = vst [vmem:[%s224 + $0x888] sm:$0xff] %v4277
      %5302 = vst [vmem:[%s224 + $0x890] sm:$0xff] %v4278
      %5303 = vst [vmem:[%s224 + $0x898] sm:$0xff] %v4279
      %5304 = vst [vmem:[%s224 + $0x8a0] sm:$0xff] %v4280
      %5305 = vst [vmem:[%s224 + $0x8a8] sm:$0xff] %v4281
      %5306 = vst [vmem:[%s224 + $0x8b0] sm:$0xff] %v4282
      %5307 = vst [vmem:[%s224 + $0x8b8] sm:$0xff] %v4283
      %5308 = vst [vmem:[%s224 + $0x8c0] sm:$0xff] %v4284
      %5309 = vst [vmem:[%s224 + $0x8c8] sm:$0xff] %v4285
      %5310 = vst [vmem:[%s224 + $0x8d0] sm:$0xff] %v4286
      %5311 = vst [vmem:[%s224 + $0x8d8] sm:$0xff] %v4287
      %5312 = vst [vmem:[%s224 + $0x8e0] sm:$0xff] %v4288
      %5313 = vst [vmem:[%s224 + $0x8e8] sm:$0xff] %v4289
      %5314 = vst [vmem:[%s224 + $0x8f0] sm:$0xff] %v4290
      %5315 = vst [vmem:[%s224 + $0x8f8] sm:$0xff] %v4291
      %5316 = vst [vmem:[%s224 + $0x900] sm:$0xff] %v4292
      %5317 = vst [vmem:[%s224 + $0x908] sm:$0xff] %v4293
      %5318 = vst [vmem:[%s224 + $0x910] sm:$0xff] %v4294
      %5319 = vst [vmem:[%s224 + $0x918] sm:$0xff] %v4295
      %5320 = vst [vmem:[%s224 + $0x920] sm:$0xff] %v4296
      %5321 = vst [vmem:[%s224 + $0x928] sm:$0xff] %v4297
      %5322 = vst [vmem:[%s224 + $0x930] sm:$0xff] %v4298
      %5323 = vst [vmem:[%s224 + $0x938] sm:$0xff] %v4299
      %5324 = vst [vmem:[%s224 + $0x940] sm:$0xff] %v4300
      %5325 = vst [vmem:[%s224 + $0x948] sm:$0xff] %v4301
      %5326 = vst [vmem:[%s224 + $0x950] sm:$0xff] %v4302
      %5327 = vst [vmem:[%s224 + $0x958] sm:$0xff] %v4303
      %5328 = vst [vmem:[%s224 + $0x960] sm:$0xff] %v4304
      %5329 = vst [vmem:[%s224 + $0x968] sm:$0xff] %v4305
      %5330 = vst [vmem:[%s224 + $0x970] sm:$0xff] %v4306
      %5331 = vst [vmem:[%s224 + $0x978] sm:$0xff] %v4307
      %5332 = vst [vmem:[%s224 + $0x980] sm:$0xff] %v4308
      %5333 = vst [vmem:[%s224 + $0x988] sm:$0xff] %v4309
      %5334 = vst [vmem:[%s224 + $0x990] sm:$0xff] %v4310
      %5335 = vst [vmem:[%s224 + $0x998] sm:$0xff] %v4311
      %5336 = vst [vmem:[%s224 + $0x9a0] sm:$0xff] %v4312
      %5337 = vst [vmem:[%s224 + $0x9a8] sm:$0xff] %v4313
      %5338 = vst [vmem:[%s224 + $0x9b0] sm:$0xff] %v4314
      %5339 = vst [vmem:[%s224 + $0x9b8] sm:$0xff] %v4315
      %5340 = vst [vmem:[%s224 + $0x9c0] sm:$0xff] %v4316
      %5341 = vst [vmem:[%s224 + $0x9c8] sm:$0xff] %v4317
      %5342 = vst [vmem:[%s224 + $0x9d0] sm:$0xff] %v4318
      %5343 = vst [vmem:[%s224 + $0x9d8] sm:$0xff] %v4319
      %5344 = vst [vmem:[%s224 + $0x9e0] sm:$0xff] %v4320
      %5345 = vst [vmem:[%s224 + $0x9e8] sm:$0xff] %v4321
      %5346 = vst [vmem:[%s224 + $0x9f0] sm:$0xff] %v4322
      %5347 = vst [vmem:[%s224 + $0x9f8] sm:$0xff] %v4323
      %5348 = vst [vmem:[%s224 + $0xa00] sm:$0xff] %v4324
      %5349 = vst [vmem:[%s224 + $0xa08] sm:$0xff] %v4325
      %5350 = vst [vmem:[%s224 + $0xa10] sm:$0xff] %v4326
      %5351 = vst [vmem:[%s224 + $0xa18] sm:$0xff] %v4327
      %5352 = vst [vmem:[%s224 + $0xa20] sm:$0xff] %v4328
      %5353 = vst [vmem:[%s224 + $0xa28] sm:$0xff] %v4329
      %5354 = vst [vmem:[%s224 + $0xa30] sm:$0xff] %v4330
      %5355 = vst [vmem:[%s224 + $0xa38] sm:$0xff] %v4331
      %5356 = vst [vmem:[%s224 + $0xa40] sm:$0xff] %v4332
      %5357 = vst [vmem:[%s224 + $0xa48] sm:$0xff] %v4333
      %5358 = vst [vmem:[%s224 + $0xa50] sm:$0xff] %v4334
      %5359 = vst [vmem:[%s224 + $0xa58] sm:$0xff] %v4335
      %5360 = vst [vmem:[%s224 + $0xa60] sm:$0xff] %v4336
      %5361 = vst [vmem:[%s224 + $0xa68] sm:$0xff] %v4337
      %5362 = vst [vmem:[%s224 + $0xa70] sm:$0xff] %v4338
      %5363 = vst [vmem:[%s224 + $0xa78] sm:$0xff] %v4339
      %5364 = vst [vmem:[%s224 + $0xa80] sm:$0xff] %v4340
      %5365 = vst [vmem:[%s224 + $0xa88] sm:$0xff] %v4341
      %5366 = vst [vmem:[%s224 + $0xa90] sm:$0xff] %v4342
      %5367 = vst [vmem:[%s224 + $0xa98] sm:$0xff] %v4343
      %5368 = vst [vmem:[%s224 + $0xaa0] sm:$0xff] %v4344
      %5369 = vst [vmem:[%s224 + $0xaa8] sm:$0xff] %v4345
      %5370 = vst [vmem:[%s224 + $0xab0] sm:$0xff] %v4346
      %5371 = vst [vmem:[%s224 + $0xab8] sm:$0xff] %v4347
      %5372 = vst [vmem:[%s224 + $0xac0] sm:$0xff] %v4348
      %5373 = vst [vmem:[%s224 + $0xac8] sm:$0xff] %v4349
      %5374 = vst [vmem:[%s224 + $0xad0] sm:$0xff] %v4350
      %5375 = vst [vmem:[%s224 + $0xad8] sm:$0xff] %v4351
      %5376 = vst [vmem:[%s224 + $0xae0] sm:$0xff] %v4352
      %5377 = vst [vmem:[%s224 + $0xae8] sm:$0xff] %v4353
      %5378 = vst [vmem:[%s224 + $0xaf0] sm:$0xff] %v4354
      %5379 = vst [vmem:[%s224 + $0xaf8] sm:$0xff] %v4355
      %5380 = vst [vmem:[%s224 + $0xb00] sm:$0xff] %v4356
      %5381 = vst [vmem:[%s224 + $0xb08] sm:$0xff] %v4357
      %5382 = vst [vmem:[%s224 + $0xb10] sm:$0xff] %v4358
      %5383 = vst [vmem:[%s224 + $0xb18] sm:$0xff] %v4359
      %5384 = vst [vmem:[%s224 + $0xb20] sm:$0xff] %v4360
      %5385 = vst [vmem:[%s224 + $0xb28] sm:$0xff] %v4361
      %5386 = vst [vmem:[%s224 + $0xb30] sm:$0xff] %v4362
      %5387 = vst [vmem:[%s224 + $0xb38] sm:$0xff] %v4363
      %5388 = vst [vmem:[%s224 + $0xb40] sm:$0xff] %v4364
      %5389 = vst [vmem:[%s224 + $0xb48] sm:$0xff] %v4365
      %5390 = vst [vmem:[%s224 + $0xb50] sm:$0xff] %v4366
      %5391 = vst [vmem:[%s224 + $0xb58] sm:$0xff] %v4367
      %5392 = vst [vmem:[%s224 + $0xb60] sm:$0xff] %v4368
      %5393 = vst [vmem:[%s224 + $0xb68] sm:$0xff] %v4369
      %5394 = vst [vmem:[%s224 + $0xb70] sm:$0xff] %v4370
      %5395 = vst [vmem:[%s224 + $0xb78] sm:$0xff] %v4371
      %5396 = vst [vmem:[%s224 + $0xb80] sm:$0xff] %v4372
      %5397 = vst [vmem:[%s224 + $0xb88] sm:$0xff] %v4373
      %5398 = vst [vmem:[%s224 + $0xb90] sm:$0xff] %v4374
      %5399 = vst [vmem:[%s224 + $0xb98] sm:$0xff] %v4375
      %5400 = vst [vmem:[%s224 + $0xba0] sm:$0xff] %v4376
      %5401 = vst [vmem:[%s224 + $0xba8] sm:$0xff] %v4377
      %5402 = vst [vmem:[%s224 + $0xbb0] sm:$0xff] %v4378
      %5403 = vst [vmem:[%s224 + $0xbb8] sm:$0xff] %v4379
      %5404 = vst [vmem:[%s224 + $0xbc0] sm:$0xff] %v4380
      %5405 = vst [vmem:[%s224 + $0xbc8] sm:$0xff] %v4381
      %5406 = vst [vmem:[%s224 + $0xbd0] sm:$0xff] %v4382
      %5407 = vst [vmem:[%s224 + $0xbd8] sm:$0xff] %v4383
      %5408 = vst [vmem:[%s224 + $0xbe0] sm:$0xff] %v4384
      %5409 = vst [vmem:[%s224 + $0xbe8] sm:$0xff] %v4385
      %5410 = vst [vmem:[%s224 + $0xbf0] sm:$0xff] %v4386
      %5411 = vst [vmem:[%s224 + $0xbf8] sm:$0xff] %v4387
      %5412 = vst [vmem:[%s224 + $0xc00] sm:$0xff] %v4388
      %5413 = vst [vmem:[%s224 + $0xc08] sm:$0xff] %v4389
      %5414 = vst [vmem:[%s224 + $0xc10] sm:$0xff] %v4390
      %5415 = vst [vmem:[%s224 + $0xc18] sm:$0xff] %v4391
      %5416 = vst [vmem:[%s224 + $0xc20] sm:$0xff] %v4392
      %5417 = vst [vmem:[%s224 + $0xc28] sm:$0xff] %v4393
      %5418 = vst [vmem:[%s224 + $0xc30] sm:$0xff] %v4394
      %5419 = vst [vmem:[%s224 + $0xc38] sm:$0xff] %v4395
      %5420 = vst [vmem:[%s224 + $0xc40] sm:$0xff] %v4396
      %5421 = vst [vmem:[%s224 + $0xc48] sm:$0xff] %v4397
      %5422 = vst [vmem:[%s224 + $0xc50] sm:$0xff] %v4398
      %5423 = vst [vmem:[%s224 + $0xc58] sm:$0xff] %v4399
      %5424 = vst [vmem:[%s224 + $0xc60] sm:$0xff] %v4400
      %5425 = vst [vmem:[%s224 + $0xc68] sm:$0xff] %v4401
      %5426 = vst [vmem:[%s224 + $0xc70] sm:$0xff] %v4402
      %5427 = vst [vmem:[%s224 + $0xc78] sm:$0xff] %v4403
      %5428 = vst [vmem:[%s224 + $0xc80] sm:$0xff] %v4404
      %5429 = vst [vmem:[%s224 + $0xc88] sm:$0xff] %v4405
      %5430 = vst [vmem:[%s224 + $0xc90] sm:$0xff] %v4406
      %5431 = vst [vmem:[%s224 + $0xc98] sm:$0xff] %v4407
      %5432 = vst [vmem:[%s224 + $0xca0] sm:$0xff] %v4408
      %5433 = vst [vmem:[%s224 + $0xca8] sm:$0xff] %v4409
      %5434 = vst [vmem:[%s224 + $0xcb0] sm:$0xff] %v4410
      %5435 = vst [vmem:[%s224 + $0xcb8] sm:$0xff] %v4411
      %5436 = vst [vmem:[%s224 + $0xcc0] sm:$0xff] %v4412
      %5437 = vst [vmem:[%s224 + $0xcc8] sm:$0xff] %v4413
      %5438 = vst [vmem:[%s224 + $0xcd0] sm:$0xff] %v4414
      %5439 = vst [vmem:[%s224 + $0xcd8] sm:$0xff] %v4415
      %5440 = vst [vmem:[%s224 + $0xce0] sm:$0xff] %v4416
      %5441 = vst [vmem:[%s224 + $0xce8] sm:$0xff] %v4417
      %5442 = vst [vmem:[%s224 + $0xcf0] sm:$0xff] %v4418
      %5443 = vst [vmem:[%s224 + $0xcf8] sm:$0xff] %v4419
      %5444 = vst [vmem:[%s224 + $0xd00] sm:$0xff] %v4420
      %5445 = vst [vmem:[%s224 + $0xd08] sm:$0xff] %v4421
      %5446 = vst [vmem:[%s224 + $0xd10] sm:$0xff] %v4422
      %5447 = vst [vmem:[%s224 + $0xd18] sm:$0xff] %v4423
      %5448 = vst [vmem:[%s224 + $0xd20] sm:$0xff] %v4424
      %5449 = vst [vmem:[%s224 + $0xd28] sm:$0xff] %v4425
      %5450 = vst [vmem:[%s224 + $0xd30] sm:$0xff] %v4426
      %5451 = vst [vmem:[%s224 + $0xd38] sm:$0xff] %v4427
      %5452 = vst [vmem:[%s224 + $0xd40] sm:$0xff] %v4428
      %5453 = vst [vmem:[%s224 + $0xd48] sm:$0xff] %v4429
      %5454 = vst [vmem:[%s224 + $0xd50] sm:$0xff] %v4430
      %5455 = vst [vmem:[%s224 + $0xd58] sm:$0xff] %v4431
      %5456 = vst [vmem:[%s224 + $0xd60] sm:$0xff] %v4432
      %5457 = vst [vmem:[%s224 + $0xd68] sm:$0xff] %v4433
      %5458 = vst [vmem:[%s224 + $0xd70] sm:$0xff] %v4434
      %5459 = vst [vmem:[%s224 + $0xd78] sm:$0xff] %v4435
      %5460 = vst [vmem:[%s224 + $0xd80] sm:$0xff] %v4436
      %5461 = vst [vmem:[%s224 + $0xd88] sm:$0xff] %v4437
      %5462 = vst [vmem:[%s224 + $0xd90] sm:$0xff] %v4438
      %5463 = vst [vmem:[%s224 + $0xd98] sm:$0xff] %v4439
      %5464 = vst [vmem:[%s224 + $0xda0] sm:$0xff] %v4440
      %5465 = vst [vmem:[%s224 + $0xda8] sm:$0xff] %v4441
      %5466 = vst [vmem:[%s224 + $0xdb0] sm:$0xff] %v4442
      %5467 = vst [vmem:[%s224 + $0xdb8] sm:$0xff] %v4443
      %5468 = vst [vmem:[%s224 + $0xdc0] sm:$0xff] %v4444
      %5469 = vst [vmem:[%s224 + $0xdc8] sm:$0xff] %v4445
      %5470 = vst [vmem:[%s224 + $0xdd0] sm:$0xff] %v4446
      %5471 = vst [vmem:[%s224 + $0xdd8] sm:$0xff] %v4447
      %5472 = vst [vmem:[%s224 + $0xde0] sm:$0xff] %v4448
      %5473 = vst [vmem:[%s224 + $0xde8] sm:$0xff] %v4449
      %5474 = vst [vmem:[%s224 + $0xdf0] sm:$0xff] %v4450
      %5475 = vst [vmem:[%s224 + $0xdf8] sm:$0xff] %v4451
      %5476 = vst [vmem:[%s224 + $0xe00] sm:$0xff] %v4452
      %5477 = vst [vmem:[%s224 + $0xe08] sm:$0xff] %v4453
      %5478 = vst [vmem:[%s224 + $0xe10] sm:$0xff] %v4454
      %5479 = vst [vmem:[%s224 + $0xe18] sm:$0xff] %v4455
      %5480 = vst [vmem:[%s224 + $0xe20] sm:$0xff] %v4456
      %5481 = vst [vmem:[%s224 + $0xe28] sm:$0xff] %v4457
      %5482 = vst [vmem:[%s224 + $0xe30] sm:$0xff] %v4458
      %5483 = vst [vmem:[%s224 + $0xe38] sm:$0xff] %v4459
      %5484 = vst [vmem:[%s224 + $0xe40] sm:$0xff] %v4460
      %5485 = vst [vmem:[%s224 + $0xe48] sm:$0xff] %v4461
      %5486 = vst [vmem:[%s224 + $0xe50] sm:$0xff] %v4462
      %5487 = vst [vmem:[%s224 + $0xe58] sm:$0xff] %v4463
      %5488 = vst [vmem:[%s224 + $0xe60] sm:$0xff] %v4464
      %5489 = vst [vmem:[%s224 + $0xe68] sm:$0xff] %v4465
      %5490 = vst [vmem:[%s224 + $0xe70] sm:$0xff] %v4466
      %5491 = vst [vmem:[%s224 + $0xe78] sm:$0xff] %v4467
      %5492 = vst [vmem:[%s224 + $0xe80] sm:$0xff] %v4468
      %5493 = vst [vmem:[%s224 + $0xe88] sm:$0xff] %v4469
      %5494 = vst [vmem:[%s224 + $0xe90] sm:$0xff] %v4470
      %5495 = vst [vmem:[%s224 + $0xe98] sm:$0xff] %v4471
      %5496 = vst [vmem:[%s224 + $0xea0] sm:$0xff] %v4472
      %5497 = vst [vmem:[%s224 + $0xea8] sm:$0xff] %v4473
      %5498 = vst [vmem:[%s224 + $0xeb0] sm:$0xff] %v4474
      %5499 = vst [vmem:[%s224 + $0xeb8] sm:$0xff] %v4475
      %5500 = vst [vmem:[%s224 + $0xec0] sm:$0xff] %v4476
      %5501 = vst [vmem:[%s224 + $0xec8] sm:$0xff] %v4477
      %5502 = vst [vmem:[%s224 + $0xed0] sm:$0xff] %v4478
      %5503 = vst [vmem:[%s224 + $0xed8] sm:$0xff] %v4479
      %5504 = vst [vmem:[%s224 + $0xee0] sm:$0xff] %v4480
      %5505 = vst [vmem:[%s224 + $0xee8] sm:$0xff] %v4481
      %5506 = vst [vmem:[%s224 + $0xef0] sm:$0xff] %v4482
      %5507 = vst [vmem:[%s224 + $0xef8] sm:$0xff] %v4483
      %5508 = vst [vmem:[%s224 + $0xf00] sm:$0xff] %v4484
      %5509 = vst [vmem:[%s224 + $0xf08] sm:$0xff] %v4485
      %5510 = vst [vmem:[%s224 + $0xf10] sm:$0xff] %v4486
      %5511 = vst [vmem:[%s224 + $0xf18] sm:$0xff] %v4487
      %5512 = vst [vmem:[%s224 + $0xf20] sm:$0xff] %v4488
      %5513 = vst [vmem:[%s224 + $0xf28] sm:$0xff] %v4489
      %5514 = vst [vmem:[%s224 + $0xf30] sm:$0xff] %v4490
      %5515 = vst [vmem:[%s224 + $0xf38] sm:$0xff] %v4491
      %5516 = vst [vmem:[%s224 + $0xf40] sm:$0xff] %v4492
      %5517 = vst [vmem:[%s224 + $0xf48] sm:$0xff] %v4493
      %5518 = vst [vmem:[%s224 + $0xf50] sm:$0xff] %v4494
      %5519 = vst [vmem:[%s224 + $0xf58] sm:$0xff] %v4495
      %5520 = vst [vmem:[%s224 + $0xf60] sm:$0xff] %v4496
      %5521 = vst [vmem:[%s224 + $0xf68] sm:$0xff] %v4497
      %5522 = vst [vmem:[%s224 + $0xf70] sm:$0xff] %v4498
      %5523 = vst [vmem:[%s224 + $0xf78] sm:$0xff] %v4499
      %5524 = vst [vmem:[%s224 + $0xf80] sm:$0xff] %v4500
      %5525 = vst [vmem:[%s224 + $0xf88] sm:$0xff] %v4501
      %5526 = vst [vmem:[%s224 + $0xf90] sm:$0xff] %v4502
      %5527 = vst [vmem:[%s224 + $0xf98] sm:$0xff] %v4503
      %5528 = vst [vmem:[%s224 + $0xfa0] sm:$0xff] %v4504
      %5529 = vst [vmem:[%s224 + $0xfa8] sm:$0xff] %v4505
      %5530 = vst [vmem:[%s224 + $0xfb0] sm:$0xff] %v4506
      %5531 = vst [vmem:[%s224 + $0xfb8] sm:$0xff] %v4507
      %5532 = vst [vmem:[%s224 + $0xfc0] sm:$0xff] %v4508
      %5533 = vst [vmem:[%s224 + $0xfc8] sm:$0xff] %v4509
      %5534 = vst [vmem:[%s224 + $0xfd0] sm:$0xff] %v4510
      %5535 = vst [vmem:[%s224 + $0xfd8] sm:$0xff] %v4511
      %5536 = vst [vmem:[%s224 + $0xfe0] sm:$0xff] %v4512
      %5537 = vst [vmem:[%s224 + $0xfe8] sm:$0xff] %v4513
      %5538 = vst [vmem:[%s224 + $0xff0] sm:$0xff] %v4514
      %5539 = vst [vmem:[%s224 + $0xff8] sm:$0xff] %v4515
      %5540 = vst [vmem:[%s224 + $0x1000] sm:$0xff] %v4516
      %5541 = vst [vmem:[%s224 + $0x1008] sm:$0xff] %v4517
      %5542 = vst [vmem:[%s224 + $0x1010] sm:$0xff] %v4518
      %5543 = vst [vmem:[%s224 + $0x1018] sm:$0xff] %v4519
      %5544 = vst [vmem:[%s224 + $0x1020] sm:$0xff] %v4520
      %5545 = vst [vmem:[%s224 + $0x1028] sm:$0xff] %v4521
      %5546 = vst [vmem:[%s224 + $0x1030] sm:$0xff] %v4522
      %5547 = vst [vmem:[%s224 + $0x1038] sm:$0xff] %v4523
      %5548 = vst [vmem:[%s224 + $0x1040] sm:$0xff] %v4524
      %5549 = vst [vmem:[%s224 + $0x1048] sm:$0xff] %v4525
      %5550 = vst [vmem:[%s224 + $0x1050] sm:$0xff] %v4526
      %5551 = vst [vmem:[%s224 + $0x1058] sm:$0xff] %v4527
      %5552 = vst [vmem:[%s224 + $0x1060] sm:$0xff] %v4528
      %5553 = vst [vmem:[%s224 + $0x1068] sm:$0xff] %v4529
      %5554 = vst [vmem:[%s224 + $0x1070] sm:$0xff] %v4530
      %5555 = vst [vmem:[%s224 + $0x1078] sm:$0xff] %v4531
      %5556 = vst [vmem:[%s224 + $0x1080] sm:$0xff] %v4532
      %5557 = vst [vmem:[%s224 + $0x1088] sm:$0xff] %v4533
      %5558 = vst [vmem:[%s224 + $0x1090] sm:$0xff] %v4534
      %5559 = vst [vmem:[%s224 + $0x1098] sm:$0xff] %v4535
      %5560 = vst [vmem:[%s224 + $0x10a0] sm:$0xff] %v4536
      %5561 = vst [vmem:[%s224 + $0x10a8] sm:$0xff] %v4537
      %5562 = vst [vmem:[%s224 + $0x10b0] sm:$0xff] %v4538
      %5563 = vst [vmem:[%s224 + $0x10b8] sm:$0xff] %v4539
      %5564 = vst [vmem:[%s224 + $0x10c0] sm:$0xff] %v4540
      %5565 = vst [vmem:[%s224 + $0x10c8] sm:$0xff] %v4541
      %5566 = vst [vmem:[%s224 + $0x10d0] sm:$0xff] %v4542
      %5567 = vst [vmem:[%s224 + $0x10d8] sm:$0xff] %v4543
      %5568 = vst [vmem:[%s224 + $0x10e0] sm:$0xff] %v4544
      %5569 = vst [vmem:[%s224 + $0x10e8] sm:$0xff] %v4545
      %5570 = vst [vmem:[%s224 + $0x10f0] sm:$0xff] %v4546
      %5571 = vst [vmem:[%s224 + $0x10f8] sm:$0xff] %v4547
      %5572 = vst [vmem:[%s224 + $0x1100] sm:$0xff] %v4548
      %5573 = vst [vmem:[%s224 + $0x1108] sm:$0xff] %v4549
      %5574 = vst [vmem:[%s224 + $0x1110] sm:$0xff] %v4550
      %5575 = vst [vmem:[%s224 + $0x1118] sm:$0xff] %v4551
      %5576 = vst [vmem:[%s224 + $0x1120] sm:$0xff] %v4552
      %5577 = vst [vmem:[%s224 + $0x1128] sm:$0xff] %v4553
      %5578 = vst [vmem:[%s224 + $0x1130] sm:$0xff] %v4554
      %5579 = vst [vmem:[%s224 + $0x1138] sm:$0xff] %v4555
      %5580 = vst [vmem:[%s224 + $0x1140] sm:$0xff] %v4556
      %5581 = vst [vmem:[%s224 + $0x1148] sm:$0xff] %v4557
      %5582 = vst [vmem:[%s224 + $0x1150] sm:$0xff] %v4558
      %5583 = vst [vmem:[%s224 + $0x1158] sm:$0xff] %v4559
      %5584 = vst [vmem:[%s224 + $0x1160] sm:$0xff] %v4560
      %5585 = vst [vmem:[%s224 + $0x1168] sm:$0xff] %v4561
      %5586 = vst [vmem:[%s224 + $0x1170] sm:$0xff] %v4562
      %5587 = vst [vmem:[%s224 + $0x1178] sm:$0xff] %v4563
      %5588 = vst [vmem:[%s224 + $0x1180] sm:$0xff] %v4564
      %5589 = vst [vmem:[%s224 + $0x1188] sm:$0xff] %v4565
      %5590 = vst [vmem:[%s224 + $0x1190] sm:$0xff] %v4566
      %5591 = vst [vmem:[%s224 + $0x1198] sm:$0xff] %v4567
      %5592 = vst [vmem:[%s224 + $0x11a0] sm:$0xff] %v4568
      %5593 = vst [vmem:[%s224 + $0x11a8] sm:$0xff] %v4569
      %5594 = vst [vmem:[%s224 + $0x11b0] sm:$0xff] %v4570
      %5595 = vst [vmem:[%s224 + $0x11b8] sm:$0xff] %v4571
      %5596 = vst [vmem:[%s224 + $0x11c0] sm:$0xff] %v4572
      %5597 = vst [vmem:[%s224 + $0x11c8] sm:$0xff] %v4573
      %5598 = vst [vmem:[%s224 + $0x11d0] sm:$0xff] %v4574
      %5599 = vst [vmem:[%s224 + $0x11d8] sm:$0xff] %v4575
      %5600 = vst [vmem:[%s224 + $0x11e0] sm:$0xff] %v4576
      %5601 = vst [vmem:[%s224 + $0x11e8] sm:$0xff] %v4577
      %5602 = vst [vmem:[%s224 + $0x11f0] sm:$0xff] %v4578
      %5603 = vst [vmem:[%s224 + $0x11f8] sm:$0xff] %v4579
      %5604 = vst [vmem:[%s224 + $0x1200] sm:$0xff] %v4580
      %5605 = vst [vmem:[%s224 + $0x1208] sm:$0xff] %v4581
      %5606 = vst [vmem:[%s224 + $0x1210] sm:$0xff] %v4582
      %5607 = vst [vmem:[%s224 + $0x1218] sm:$0xff] %v4583
      %5608 = vst [vmem:[%s224 + $0x1220] sm:$0xff] %v4584
      %5609 = vst [vmem:[%s224 + $0x1228] sm:$0xff] %v4585
      %5610 = vst [vmem:[%s224 + $0x1230] sm:$0xff] %v4586
      %5611 = vst [vmem:[%s224 + $0x1238] sm:$0xff] %v4587
      %5612 = vst [vmem:[%s224 + $0x1240] sm:$0xff] %v4588
      %5613 = vst [vmem:[%s224 + $0x1248] sm:$0xff] %v4589
      %5614 = vst [vmem:[%s224 + $0x1250] sm:$0xff] %v4590
      %5615 = vst [vmem:[%s224 + $0x1258] sm:$0xff] %v4591
      %5616 = vst [vmem:[%s224 + $0x1260] sm:$0xff] %v4592
      %5617 = vst [vmem:[%s224 + $0x1268] sm:$0xff] %v4593
      %5618 = vst [vmem:[%s224 + $0x1270] sm:$0xff] %v4594
      %5619 = vst [vmem:[%s224 + $0x1278] sm:$0xff] %v4595
      %5620 = vst [vmem:[%s224 + $0x1280] sm:$0xff] %v4596
      %5621 = vst [vmem:[%s224 + $0x1288] sm:$0xff] %v4597
      %5622 = vst [vmem:[%s224 + $0x1290] sm:$0xff] %v4598
      %5623 = vst [vmem:[%s224 + $0x1298] sm:$0xff] %v4599
      %5624 = vst [vmem:[%s224 + $0x12a0] sm:$0xff] %v4600
      %5625 = vst [vmem:[%s224 + $0x12a8] sm:$0xff] %v4601
      %5626 = vst [vmem:[%s224 + $0x12b0] sm:$0xff] %v4602
      %5627 = vst [vmem:[%s224 + $0x12b8] sm:$0xff] %v4603
      %5628 = vst [vmem:[%s224 + $0x12c0] sm:$0xff] %v4604
      %5629 = vst [vmem:[%s224 + $0x12c8] sm:$0xff] %v4605
      %5630 = vst [vmem:[%s224 + $0x12d0] sm:$0xff] %v4606
      %5631 = vst [vmem:[%s224 + $0x12d8] sm:$0xff] %v4607
      %5632 = vst [vmem:[%s224 + $0x12e0] sm:$0xff] %v4608
      %5633 = vst [vmem:[%s224 + $0x12e8] sm:$0xff] %v4609
      %5634 = vst [vmem:[%s224 + $0x12f0] sm:$0xff] %v4610
      %5635 = vst [vmem:[%s224 + $0x12f8] sm:$0xff] %v4611
      %5636 = vst [vmem:[%s224 + $0x1300] sm:$0xff] %v4612
      %5637 = vst [vmem:[%s224 + $0x1308] sm:$0xff] %v4613
      %5638 = vst [vmem:[%s224 + $0x1310] sm:$0xff] %v4614
      %5639 = vst [vmem:[%s224 + $0x1318] sm:$0xff] %v4615
      %5640 = vst [vmem:[%s224 + $0x1320] sm:$0xff] %v4616
      %5641 = vst [vmem:[%s224 + $0x1328] sm:$0xff] %v4617
      %5642 = vst [vmem:[%s224 + $0x1330] sm:$0xff] %v4618
      %5643 = vst [vmem:[%s224 + $0x1338] sm:$0xff] %v4619
      %5644 = vst [vmem:[%s224 + $0x1340] sm:$0xff] %v4620
      %5645 = vst [vmem:[%s224 + $0x1348] sm:$0xff] %v4621
      %5646 = vst [vmem:[%s224 + $0x1350] sm:$0xff] %v4622
      %5647 = vst [vmem:[%s224 + $0x1358] sm:$0xff] %v4623
      %5648 = vst [vmem:[%s224 + $0x1360] sm:$0xff] %v4624
      %5649 = vst [vmem:[%s224 + $0x1368] sm:$0xff] %v4625
      %5650 = vst [vmem:[%s224 + $0x1370] sm:$0xff] %v4626
      %5651 = vst [vmem:[%s224 + $0x1378] sm:$0xff] %v4627
      %5652 = vst [vmem:[%s224 + $0x1380] sm:$0xff] %v4628
      %5653 = vst [vmem:[%s224 + $0x1388] sm:$0xff] %v4629
      %5654 = vst [vmem:[%s224 + $0x1390] sm:$0xff] %v4630
      %5655 = vst [vmem:[%s224 + $0x1398] sm:$0xff] %v4631
      %5656 = vst [vmem:[%s224 + $0x13a0] sm:$0xff] %v4632
      %5657 = vst [vmem:[%s224 + $0x13a8] sm:$0xff] %v4633
      %5658 = vst [vmem:[%s224 + $0x13b0] sm:$0xff] %v4634
      %5659 = vst [vmem:[%s224 + $0x13b8] sm:$0xff] %v4635
      %5660 = vst [vmem:[%s224 + $0x13c0] sm:$0xff] %v4636
      %5661 = vst [vmem:[%s224 + $0x13c8] sm:$0xff] %v4637
      %5662 = vst [vmem:[%s224 + $0x13d0] sm:$0xff] %v4638
      %5663 = vst [vmem:[%s224 + $0x13d8] sm:$0xff] %v4639
      %5664 = vst [vmem:[%s224 + $0x13e0] sm:$0xff] %v4640
      %5665 = vst [vmem:[%s224 + $0x13e8] sm:$0xff] %v4641
      %5666 = vst [vmem:[%s224 + $0x13f0] sm:$0xff] %v4642
      %5667 = vst [vmem:[%s224 + $0x13f8] sm:$0xff] %v4643
      %5668 = vst [vmem:[%s224 + $0x1400] sm:$0xff] %v4644
      %5669 = vst [vmem:[%s224 + $0x1408] sm:$0xff] %v4645
      %5670 = vst [vmem:[%s224 + $0x1410] sm:$0xff] %v4646
      %5671 = vst [vmem:[%s224 + $0x1418] sm:$0xff] %v4647
      %5672 = vst [vmem:[%s224 + $0x1420] sm:$0xff] %v4648
      %5673 = vst [vmem:[%s224 + $0x1428] sm:$0xff] %v4649
      %5674 = vst [vmem:[%s224 + $0x1430] sm:$0xff] %v4650
      %5675 = vst [vmem:[%s224 + $0x1438] sm:$0xff] %v4651
      %5676 = vst [vmem:[%s224 + $0x1440] sm:$0xff] %v4652
      %5677 = vst [vmem:[%s224 + $0x1448] sm:$0xff] %v4653
      %5678 = vst [vmem:[%s224 + $0x1450] sm:$0xff] %v4654
      %5679 = vst [vmem:[%s224 + $0x1458] sm:$0xff] %v4655
      %5680 = vst [vmem:[%s224 + $0x1460] sm:$0xff] %v4656
      %5681 = vst [vmem:[%s224 + $0x1468] sm:$0xff] %v4657
      %5682 = vst [vmem:[%s224 + $0x1470] sm:$0xff] %v4658
      %5683 = vst [vmem:[%s224 + $0x1478] sm:$0xff] %v4659
      %5684 = vst [vmem:[%s224 + $0x1480] sm:$0xff] %v4660
      %5685 = vst [vmem:[%s224 + $0x1488] sm:$0xff] %v4661
      %5686 = vst [vmem:[%s224 + $0x1490] sm:$0xff] %v4662
      %5687 = vst [vmem:[%s224 + $0x1498] sm:$0xff] %v4663
      %5688 = vst [vmem:[%s224 + $0x14a0] sm:$0xff] %v4664
      %5689 = vst [vmem:[%s224 + $0x14a8] sm:$0xff] %v4665
      %5690 = vst [vmem:[%s224 + $0x14b0] sm:$0xff] %v4666
      %5691 = vst [vmem:[%s224 + $0x14b8] sm:$0xff] %v4667
      %5692 = vst [vmem:[%s224 + $0x14c0] sm:$0xff] %v4668
      %5693 = vst [vmem:[%s224 + $0x14c8] sm:$0xff] %v4669
      %5694 = vst [vmem:[%s224 + $0x14d0] sm:$0xff] %v4670
      %5695 = vst [vmem:[%s224 + $0x14d8] sm:$0xff] %v4671
      %5696 = vst [vmem:[%s224 + $0x14e0] sm:$0xff] %v4672
      %5697 = vst [vmem:[%s224 + $0x14e8] sm:$0xff] %v4673
      %5698 = vst [vmem:[%s224 + $0x14f0] sm:$0xff] %v4674
      %5699 = vst [vmem:[%s224 + $0x14f8] sm:$0xff] %v4675
      %5700 = vst [vmem:[%s224 + $0x1500] sm:$0xff] %v4676
      %5701 = vst [vmem:[%s224 + $0x1508] sm:$0xff] %v4677
      %5702 = vst [vmem:[%s224 + $0x1510] sm:$0xff] %v4678
      %5703 = vst [vmem:[%s224 + $0x1518] sm:$0xff] %v4679
      %5704 = vst [vmem:[%s224 + $0x1520] sm:$0xff] %v4680
      %5705 = vst [vmem:[%s224 + $0x1528] sm:$0xff] %v4681
      %5706 = vst [vmem:[%s224 + $0x1530] sm:$0xff] %v4682
      %5707 = vst [vmem:[%s224 + $0x1538] sm:$0xff] %v4683
      %5708 = vst [vmem:[%s224 + $0x1540] sm:$0xff] %v4684
      %5709 = vst [vmem:[%s224 + $0x1548] sm:$0xff] %v4685
      %5710 = vst [vmem:[%s224 + $0x1550] sm:$0xff] %v4686
      %5711 = vst [vmem:[%s224 + $0x1558] sm:$0xff] %v4687
      %5712 = vst [vmem:[%s224 + $0x1560] sm:$0xff] %v4688
      %5713 = vst [vmem:[%s224 + $0x1568] sm:$0xff] %v4689
      %5714 = vst [vmem:[%s224 + $0x1570] sm:$0xff] %v4690
      %5715 = vst [vmem:[%s224 + $0x1578] sm:$0xff] %v4691
      %5716 = vst [vmem:[%s224 + $0x1580] sm:$0xff] %v4692
      %5717 = vst [vmem:[%s224 + $0x1588] sm:$0xff] %v4693
      %5718 = vst [vmem:[%s224 + $0x1590] sm:$0xff] %v4694
      %5719 = vst [vmem:[%s224 + $0x1598] sm:$0xff] %v4695
      %5720 = vst [vmem:[%s224 + $0x15a0] sm:$0xff] %v4696
      %5721 = vst [vmem:[%s224 + $0x15a8] sm:$0xff] %v4697
      %5722 = vst [vmem:[%s224 + $0x15b0] sm:$0xff] %v4698
      %5723 = vst [vmem:[%s224 + $0x15b8] sm:$0xff] %v4699
      %5724 = vst [vmem:[%s224 + $0x15c0] sm:$0xff] %v4700
      %5725 = vst [vmem:[%s224 + $0x15c8] sm:$0xff] %v4701
      %5726 = vst [vmem:[%s224 + $0x15d0] sm:$0xff] %v4702
      %5727 = vst [vmem:[%s224 + $0x15d8] sm:$0xff] %v4703
      %5728 = vst [vmem:[%s224 + $0x15e0] sm:$0xff] %v4704
      %5729 = vst [vmem:[%s224 + $0x15e8] sm:$0xff] %v4705
      %5730 = vst [vmem:[%s224 + $0x15f0] sm:$0xff] %v4706
      %5731 = vst [vmem:[%s224 + $0x15f8] sm:$0xff] %v4707
      %5732 = vst [vmem:[%s224 + $0x1600] sm:$0xff] %v4708
      %5733 = vst [vmem:[%s224 + $0x1608] sm:$0xff] %v4709
      %5734 = vst [vmem:[%s224 + $0x1610] sm:$0xff] %v4710
      %5735 = vst [vmem:[%s224 + $0x1618] sm:$0xff] %v4711
      %5736 = vst [vmem:[%s224 + $0x1620] sm:$0xff] %v4712
      %5737 = vst [vmem:[%s224 + $0x1628] sm:$0xff] %v4713
      %5738 = vst [vmem:[%s224 + $0x1630] sm:$0xff] %v4714
      %5739 = vst [vmem:[%s224 + $0x1638] sm:$0xff] %v4715
      %5740 = vst [vmem:[%s224 + $0x1640] sm:$0xff] %v4716
      %5741 = vst [vmem:[%s224 + $0x1648] sm:$0xff] %v4717
      %5742 = vst [vmem:[%s224 + $0x1650] sm:$0xff] %v4718
      %5743 = vst [vmem:[%s224 + $0x1658] sm:$0xff] %v4719
      %5744 = vst [vmem:[%s224 + $0x1660] sm:$0xff] %v4720
      %5745 = vst [vmem:[%s224 + $0x1668] sm:$0xff] %v4721
      %5746 = vst [vmem:[%s224 + $0x1670] sm:$0xff] %v4722
      %5747 = vst [vmem:[%s224 + $0x1678] sm:$0xff] %v4723
      %5748 = vst [vmem:[%s224 + $0x1680] sm:$0xff] %v4724
      %5749 = vst [vmem:[%s224 + $0x1688] sm:$0xff] %v4725
      %5750 = vst [vmem:[%s224 + $0x1690] sm:$0xff] %v4726
      %5751 = vst [vmem:[%s224 + $0x1698] sm:$0xff] %v4727
      %5752 = vst [vmem:[%s224 + $0x16a0] sm:$0xff] %v4728
      %5753 = vst [vmem:[%s224 + $0x16a8] sm:$0xff] %v4729
      %5754 = vst [vmem:[%s224 + $0x16b0] sm:$0xff] %v4730
      %5755 = vst [vmem:[%s224 + $0x16b8] sm:$0xff] %v4731
      %5756 = vst [vmem:[%s224 + $0x16c0] sm:$0xff] %v4732
      %5757 = vst [vmem:[%s224 + $0x16c8] sm:$0xff] %v4733
      %5758 = vst [vmem:[%s224 + $0x16d0] sm:$0xff] %v4734
      %5759 = vst [vmem:[%s224 + $0x16d8] sm:$0xff] %v4735
      %5760 = vst [vmem:[%s224 + $0x16e0] sm:$0xff] %v4736
      %5761 = vst [vmem:[%s224 + $0x16e8] sm:$0xff] %v4737
      %5762 = vst [vmem:[%s224 + $0x16f0] sm:$0xff] %v4738
      %5763 = vst [vmem:[%s224 + $0x16f8] sm:$0xff] %v4739
      %5764 = vst [vmem:[%s224 + $0x1700] sm:$0xff] %v4740
      %5765 = vst [vmem:[%s224 + $0x1708] sm:$0xff] %v4741
      %5766 = vst [vmem:[%s224 + $0x1710] sm:$0xff] %v4742
      %5767 = vst [vmem:[%s224 + $0x1718] sm:$0xff] %v4743
      %5768 = vst [vmem:[%s224 + $0x1720] sm:$0xff] %v4744
      %5769 = vst [vmem:[%s224 + $0x1728] sm:$0xff] %v4745
      %5770 = vst [vmem:[%s224 + $0x1730] sm:$0xff] %v4746
      %5771 = vst [vmem:[%s224 + $0x1738] sm:$0xff] %v4747
      %5772 = vst [vmem:[%s224 + $0x1740] sm:$0xff] %v4748
      %5773 = vst [vmem:[%s224 + $0x1748] sm:$0xff] %v4749
      %5774 = vst [vmem:[%s224 + $0x1750] sm:$0xff] %v4750
      %5775 = vst [vmem:[%s224 + $0x1758] sm:$0xff] %v4751
      %5776 = vst [vmem:[%s224 + $0x1760] sm:$0xff] %v4752
      %5777 = vst [vmem:[%s224 + $0x1768] sm:$0xff] %v4753
      %5778 = vst [vmem:[%s224 + $0x1770] sm:$0xff] %v4754
      %5779 = vst [vmem:[%s224 + $0x1778] sm:$0xff] %v4755
      %5780 = vst [vmem:[%s224 + $0x1780] sm:$0xff] %v4756
      %5781 = vst [vmem:[%s224 + $0x1788] sm:$0xff] %v4757
      %5782 = vst [vmem:[%s224 + $0x1790] sm:$0xff] %v4758
      %5783 = vst [vmem:[%s224 + $0x1798] sm:$0xff] %v4759
      %5784 = vst [vmem:[%s224 + $0x17a0] sm:$0xff] %v4760
      %5785 = vst [vmem:[%s224 + $0x17a8] sm:$0xff] %v4761
      %5786 = vst [vmem:[%s224 + $0x17b0] sm:$0xff] %v4762
      %5787 = vst [vmem:[%s224 + $0x17b8] sm:$0xff] %v4763
      %5788 = vst [vmem:[%s224 + $0x17c0] sm:$0xff] %v4764
      %5789 = vst [vmem:[%s224 + $0x17c8] sm:$0xff] %v4765
      %5790 = vst [vmem:[%s224 + $0x17d0] sm:$0xff] %v4766
      %5791 = vst [vmem:[%s224 + $0x17d8] sm:$0xff] %v4767
      %5792 = vst [vmem:[%s224 + $0x17e0] sm:$0xff] %v4768
      %5793 = vst [vmem:[%s224 + $0x17e8] sm:$0xff] %v4769
      %5794 = vst [vmem:[%s224 + $0x17f0] sm:$0xff] %v4770
      %5795 = vst [vmem:[%s224 + $0x17f8] sm:$0xff] %v4771
      %5796 = vst [vmem:[%s224 + $0x1800] sm:$0xff] %v4772
      %5797 = vst [vmem:[%s224 + $0x1808] sm:$0xff] %v4773
      %5798 = vst [vmem:[%s224 + $0x1810] sm:$0xff] %v4774
      %5799 = vst [vmem:[%s224 + $0x1818] sm:$0xff] %v4775
      %5800 = vst [vmem:[%s224 + $0x1820] sm:$0xff] %v4776
      %5801 = vst [vmem:[%s224 + $0x1828] sm:$0xff] %v4777
      %5802 = vst [vmem:[%s224 + $0x1830] sm:$0xff] %v4778
      %5803 = vst [vmem:[%s224 + $0x1838] sm:$0xff] %v4779
      %5804 = vst [vmem:[%s224 + $0x1840] sm:$0xff] %v4780
      %5805 = vst [vmem:[%s224 + $0x1848] sm:$0xff] %v4781
      %5806 = vst [vmem:[%s224 + $0x1850] sm:$0xff] %v4782
      %5807 = vst [vmem:[%s224 + $0x1858] sm:$0xff] %v4783
      %5808 = vst [vmem:[%s224 + $0x1860] sm:$0xff] %v4784
      %5809 = vst [vmem:[%s224 + $0x1868] sm:$0xff] %v4785
      %5810 = vst [vmem:[%s224 + $0x1870] sm:$0xff] %v4786
      %5811 = vst [vmem:[%s224 + $0x1878] sm:$0xff] %v4787
      %5812 = vst [vmem:[%s224 + $0x1880] sm:$0xff] %v4788
      %5813 = vst [vmem:[%s224 + $0x1888] sm:$0xff] %v4789
      %5814 = vst [vmem:[%s224 + $0x1890] sm:$0xff] %v4790
      %5815 = vst [vmem:[%s224 + $0x1898] sm:$0xff] %v4791
      %5816 = vst [vmem:[%s224 + $0x18a0] sm:$0xff] %v4792
      %5817 = vst [vmem:[%s224 + $0x18a8] sm:$0xff] %v4793
      %5818 = vst [vmem:[%s224 + $0x18b0] sm:$0xff] %v4794
      %5819 = vst [vmem:[%s224 + $0x18b8] sm:$0xff] %v4795
      %5820 = vst [vmem:[%s224 + $0x18c0] sm:$0xff] %v4796
      %5821 = vst [vmem:[%s224 + $0x18c8] sm:$0xff] %v4797
      %5822 = vst [vmem:[%s224 + $0x18d0] sm:$0xff] %v4798
      %5823 = vst [vmem:[%s224 + $0x18d8] sm:$0xff] %v4799
      %5824 = vst [vmem:[%s224 + $0x18e0] sm:$0xff] %v4800
      %5825 = vst [vmem:[%s224 + $0x18e8] sm:$0xff] %v4801
      %5826 = vst [vmem:[%s224 + $0x18f0] sm:$0xff] %v4802
      %5827 = vst [vmem:[%s224 + $0x18f8] sm:$0xff] %v4803
      %5828 = vst [vmem:[%s224 + $0x1900] sm:$0xff] %v4804
      %5829 = vst [vmem:[%s224 + $0x1908] sm:$0xff] %v4805
      %5830 = vst [vmem:[%s224 + $0x1910] sm:$0xff] %v4806
      %5831 = vst [vmem:[%s224 + $0x1918] sm:$0xff] %v4807
      %5832 = vst [vmem:[%s224 + $0x1920] sm:$0xff] %v4808
      %5833 = vst [vmem:[%s224 + $0x1928] sm:$0xff] %v4809
      %5834 = vst [vmem:[%s224 + $0x1930] sm:$0xff] %v4810
      %5835 = vst [vmem:[%s224 + $0x1938] sm:$0xff] %v4811
      %5836 = vst [vmem:[%s224 + $0x1940] sm:$0xff] %v4812
      %5837 = vst [vmem:[%s224 + $0x1948] sm:$0xff] %v4813
      %5838 = vst [vmem:[%s224 + $0x1950] sm:$0xff] %v4814
      %5839 = vst [vmem:[%s224 + $0x1958] sm:$0xff] %v4815
      %5840 = vst [vmem:[%s224 + $0x1960] sm:$0xff] %v4816
      %5841 = vst [vmem:[%s224 + $0x1968] sm:$0xff] %v4817
      %5842 = vst [vmem:[%s224 + $0x1970] sm:$0xff] %v4818
      %5843 = vst [vmem:[%s224 + $0x1978] sm:$0xff] %v4819
      %5844 = vst [vmem:[%s224 + $0x1980] sm:$0xff] %v4820
      %5845 = vst [vmem:[%s224 + $0x1988] sm:$0xff] %v4821
      %5846 = vst [vmem:[%s224 + $0x1990] sm:$0xff] %v4822
      %5847 = vst [vmem:[%s224 + $0x1998] sm:$0xff] %v4823
      %5848 = vst [vmem:[%s224 + $0x19a0] sm:$0xff] %v4824
      %5849 = vst [vmem:[%s224 + $0x19a8] sm:$0xff] %v4825
      %5850 = vst [vmem:[%s224 + $0x19b0] sm:$0xff] %v4826
      %5851 = vst [vmem:[%s224 + $0x19b8] sm:$0xff] %v4827
      %5852 = vst [vmem:[%s224 + $0x19c0] sm:$0xff] %v4828
      %5853 = vst [vmem:[%s224 + $0x19c8] sm:$0xff] %v4829
      %5854 = vst [vmem:[%s224 + $0x19d0] sm:$0xff] %v4830
      %5855 = vst [vmem:[%s224 + $0x19d8] sm:$0xff] %v4831
      %5856 = vst [vmem:[%s224 + $0x19e0] sm:$0xff] %v4832
      %5857 = vst [vmem:[%s224 + $0x19e8] sm:$0xff] %v4833
      %5858 = vst [vmem:[%s224 + $0x19f0] sm:$0xff] %v4834
      %5859 = vst [vmem:[%s224 + $0x19f8] sm:$0xff] %v4835
      %5860 = vst [vmem:[%s224 + $0x1a00] sm:$0xff] %v4836
      %5861 = vst [vmem:[%s224 + $0x1a08] sm:$0xff] %v4837
      %5862 = vst [vmem:[%s224 + $0x1a10] sm:$0xff] %v4838
      %5863 = vst [vmem:[%s224 + $0x1a18] sm:$0xff] %v4839
      %5864 = vst [vmem:[%s224 + $0x1a20] sm:$0xff] %v4840
      %5865 = vst [vmem:[%s224 + $0x1a28] sm:$0xff] %v4841
      %5866 = vst [vmem:[%s224 + $0x1a30] sm:$0xff] %v4842
      %5867 = vst [vmem:[%s224 + $0x1a38] sm:$0xff] %v4843
      %5868 = vst [vmem:[%s224 + $0x1a40] sm:$0xff] %v4844
      %5869 = vst [vmem:[%s224 + $0x1a48] sm:$0xff] %v4845
      %5870 = vst [vmem:[%s224 + $0x1a50] sm:$0xff] %v4846
      %5871 = vst [vmem:[%s224 + $0x1a58] sm:$0xff] %v4847
      %5872 = vst [vmem:[%s224 + $0x1a60] sm:$0xff] %v4848
      %5873 = vst [vmem:[%s224 + $0x1a68] sm:$0xff] %v4849
      %5874 = vst [vmem:[%s224 + $0x1a70] sm:$0xff] %v4850
      %5875 = vst [vmem:[%s224 + $0x1a78] sm:$0xff] %v4851
      %5876 = vst [vmem:[%s224 + $0x1a80] sm:$0xff] %v4852
      %5877 = vst [vmem:[%s224 + $0x1a88] sm:$0xff] %v4853
      %5878 = vst [vmem:[%s224 + $0x1a90] sm:$0xff] %v4854
      %5879 = vst [vmem:[%s224 + $0x1a98] sm:$0xff] %v4855
      %5880 = vst [vmem:[%s224 + $0x1aa0] sm:$0xff] %v4856
      %5881 = vst [vmem:[%s224 + $0x1aa8] sm:$0xff] %v4857
      %5882 = vst [vmem:[%s224 + $0x1ab0] sm:$0xff] %v4858
      %5883 = vst [vmem:[%s224 + $0x1ab8] sm:$0xff] %v4859
      %5884 = vst [vmem:[%s224 + $0x1ac0] sm:$0xff] %v4860
      %5885 = vst [vmem:[%s224 + $0x1ac8] sm:$0xff] %v4861
      %5886 = vst [vmem:[%s224 + $0x1ad0] sm:$0xff] %v4862
      %5887 = vst [vmem:[%s224 + $0x1ad8] sm:$0xff] %v4863
      %5888 = vst [vmem:[%s224 + $0x1ae0] sm:$0xff] %v4864
      %5889 = vst [vmem:[%s224 + $0x1ae8] sm:$0xff] %v4865
      %5890 = vst [vmem:[%s224 + $0x1af0] sm:$0xff] %v4866
      %5891 = vst [vmem:[%s224 + $0x1af8] sm:$0xff] %v4867
      %5892 = vst [vmem:[%s224 + $0x1b00] sm:$0xff] %v4868
      %5893 = vst [vmem:[%s224 + $0x1b08] sm:$0xff] %v4869
      %5894 = vst [vmem:[%s224 + $0x1b10] sm:$0xff] %v4870
      %5895 = vst [vmem:[%s224 + $0x1b18] sm:$0xff] %v4871
      %5896 = vst [vmem:[%s224 + $0x1b20] sm:$0xff] %v4872
      %5897 = vst [vmem:[%s224 + $0x1b28] sm:$0xff] %v4873
      %5898 = vst [vmem:[%s224 + $0x1b30] sm:$0xff] %v4874
      %5899 = vst [vmem:[%s224 + $0x1b38] sm:$0xff] %v4875
      %5900 = vst [vmem:[%s224 + $0x1b40] sm:$0xff] %v4876
      %5901 = vst [vmem:[%s224 + $0x1b48] sm:$0xff] %v4877
      %5902 = vst [vmem:[%s224 + $0x1b50] sm:$0xff] %v4878
      %5903 = vst [vmem:[%s224 + $0x1b58] sm:$0xff] %v4879
      %5904 = vst [vmem:[%s224 + $0x1b60] sm:$0xff] %v4880
      %5905 = vst [vmem:[%s224 + $0x1b68] sm:$0xff] %v4881
      %5906 = vst [vmem:[%s224 + $0x1b70] sm:$0xff] %v4882
      %5907 = vst [vmem:[%s224 + $0x1b78] sm:$0xff] %v4883
      %5908 = vst [vmem:[%s224 + $0x1b80] sm:$0xff] %v4884
      %5909 = vst [vmem:[%s224 + $0x1b88] sm:$0xff] %v4885
      %5910 = vst [vmem:[%s224 + $0x1b90] sm:$0xff] %v4886
      %5911 = vst [vmem:[%s224 + $0x1b98] sm:$0xff] %v4887
      %5912 = vst [vmem:[%s224 + $0x1ba0] sm:$0xff] %v4888
      %5913 = vst [vmem:[%s224 + $0x1ba8] sm:$0xff] %v4889
      %5914 = vst [vmem:[%s224 + $0x1bb0] sm:$0xff] %v4890
      %5915 = vst [vmem:[%s224 + $0x1bb8] sm:$0xff] %v4891
      %5916 = vst [vmem:[%s224 + $0x1bc0] sm:$0xff] %v4892
      %5917 = vst [vmem:[%s224 + $0x1bc8] sm:$0xff] %v4893
      %5918 = vst [vmem:[%s224 + $0x1bd0] sm:$0xff] %v4894
      %5919 = vst [vmem:[%s224 + $0x1bd8] sm:$0xff] %v4895
      %5920 = vst [vmem:[%s224 + $0x1be0] sm:$0xff] %v4896
      %5921 = vst [vmem:[%s224 + $0x1be8] sm:$0xff] %v4897
      %5922 = vst [vmem:[%s224 + $0x1bf0] sm:$0xff] %v4898
      %5923 = vst [vmem:[%s224 + $0x1bf8] sm:$0xff] %v4899
      %5924 = vst [vmem:[%s224 + $0x1c00] sm:$0xff] %v4900
      %5925 = vst [vmem:[%s224 + $0x1c08] sm:$0xff] %v4901
      %5926 = vst [vmem:[%s224 + $0x1c10] sm:$0xff] %v4902
      %5927 = vst [vmem:[%s224 + $0x1c18] sm:$0xff] %v4903
      %5928 = vst [vmem:[%s224 + $0x1c20] sm:$0xff] %v4904
      %5929 = vst [vmem:[%s224 + $0x1c28] sm:$0xff] %v4905
      %5930 = vst [vmem:[%s224 + $0x1c30] sm:$0xff] %v4906
      %5931 = vst [vmem:[%s224 + $0x1c38] sm:$0xff] %v4907
      %5932 = vst [vmem:[%s224 + $0x1c40] sm:$0xff] %v4908
      %5933 = vst [vmem:[%s224 + $0x1c48] sm:$0xff] %v4909
      %5934 = vst [vmem:[%s224 + $0x1c50] sm:$0xff] %v4910
      %5935 = vst [vmem:[%s224 + $0x1c58] sm:$0xff] %v4911
      %5936 = vst [vmem:[%s224 + $0x1c60] sm:$0xff] %v4912
      %5937 = vst [vmem:[%s224 + $0x1c68] sm:$0xff] %v4913
      %5938 = vst [vmem:[%s224 + $0x1c70] sm:$0xff] %v4914
      %5939 = vst [vmem:[%s224 + $0x1c78] sm:$0xff] %v4915
      %5940 = vst [vmem:[%s224 + $0x1c80] sm:$0xff] %v4916
      %5941 = vst [vmem:[%s224 + $0x1c88] sm:$0xff] %v4917
      %5942 = vst [vmem:[%s224 + $0x1c90] sm:$0xff] %v4918
      %5943 = vst [vmem:[%s224 + $0x1c98] sm:$0xff] %v4919
      %5944 = vst [vmem:[%s224 + $0x1ca0] sm:$0xff] %v4920
      %5945 = vst [vmem:[%s224 + $0x1ca8] sm:$0xff] %v4921
      %5946 = vst [vmem:[%s224 + $0x1cb0] sm:$0xff] %v4922
      %5947 = vst [vmem:[%s224 + $0x1cb8] sm:$0xff] %v4923
      %5948 = vst [vmem:[%s224 + $0x1cc0] sm:$0xff] %v4924
      %5949 = vst [vmem:[%s224 + $0x1cc8] sm:$0xff] %v4925
      %5950 = vst [vmem:[%s224 + $0x1cd0] sm:$0xff] %v4926
      %5951 = vst [vmem:[%s224 + $0x1cd8] sm:$0xff] %v4927
      %5952 = vst [vmem:[%s224 + $0x1ce0] sm:$0xff] %v4928
      %5953 = vst [vmem:[%s224 + $0x1ce8] sm:$0xff] %v4929
      %5954 = vst [vmem:[%s224 + $0x1cf0] sm:$0xff] %v4930
      %5955 = vst [vmem:[%s224 + $0x1cf8] sm:$0xff] %v4931
      %5956 = vst [vmem:[%s224 + $0x1d00] sm:$0xff] %v4932
      %5957 = vst [vmem:[%s224 + $0x1d08] sm:$0xff] %v4933
      %5958 = vst [vmem:[%s224 + $0x1d10] sm:$0xff] %v4934
      %5959 = vst [vmem:[%s224 + $0x1d18] sm:$0xff] %v4935
      %5960 = vst [vmem:[%s224 + $0x1d20] sm:$0xff] %v4936
      %5961 = vst [vmem:[%s224 + $0x1d28] sm:$0xff] %v4937
      %5962 = vst [vmem:[%s224 + $0x1d30] sm:$0xff] %v4938
      %5963 = vst [vmem:[%s224 + $0x1d38] sm:$0xff] %v4939
      %5964 = vst [vmem:[%s224 + $0x1d40] sm:$0xff] %v4940
      %5965 = vst [vmem:[%s224 + $0x1d48] sm:$0xff] %v4941
      %5966 = vst [vmem:[%s224 + $0x1d50] sm:$0xff] %v4942
      %5967 = vst [vmem:[%s224 + $0x1d58] sm:$0xff] %v4943
      %5968 = vst [vmem:[%s224 + $0x1d60] sm:$0xff] %v4944
      %5969 = vst [vmem:[%s224 + $0x1d68] sm:$0xff] %v4945
      %5970 = vst [vmem:[%s224 + $0x1d70] sm:$0xff] %v4946
      %5971 = vst [vmem:[%s224 + $0x1d78] sm:$0xff] %v4947
      %5972 = vst [vmem:[%s224 + $0x1d80] sm:$0xff] %v4948
      %5973 = vst [vmem:[%s224 + $0x1d88] sm:$0xff] %v4949
      %5974 = vst [vmem:[%s224 + $0x1d90] sm:$0xff] %v4950
      %5975 = vst [vmem:[%s224 + $0x1d98] sm:$0xff] %v4951
      %5976 = vst [vmem:[%s224 + $0x1da0] sm:$0xff] %v4952
      %5977 = vst [vmem:[%s224 + $0x1da8] sm:$0xff] %v4953
      %5978 = vst [vmem:[%s224 + $0x1db0] sm:$0xff] %v4954
      %5979 = vst [vmem:[%s224 + $0x1db8] sm:$0xff] %v4955
      %5980 = vst [vmem:[%s224 + $0x1dc0] sm:$0xff] %v4956
      %5981 = vst [vmem:[%s224 + $0x1dc8] sm:$0xff] %v4957
      %5982 = vst [vmem:[%s224 + $0x1dd0] sm:$0xff] %v4958
      %5983 = vst [vmem:[%s224 + $0x1dd8] sm:$0xff] %v4959
      %5984 = vst [vmem:[%s224 + $0x1de0] sm:$0xff] %v4960
      %5985 = vst [vmem:[%s224 + $0x1de8] sm:$0xff] %v4961
      %5986 = vst [vmem:[%s224 + $0x1df0] sm:$0xff] %v4962
      %5987 = vst [vmem:[%s224 + $0x1df8] sm:$0xff] %v4963
      %5988 = vst [vmem:[%s224 + $0x1e00] sm:$0xff] %v4964
      %5989 = vst [vmem:[%s224 + $0x1e08] sm:$0xff] %v4965
      %5990 = vst [vmem:[%s224 + $0x1e10] sm:$0xff] %v4966
      %5991 = vst [vmem:[%s224 + $0x1e18] sm:$0xff] %v4967
      %5992 = vst [vmem:[%s224 + $0x1e20] sm:$0xff] %v4968
      %5993 = vst [vmem:[%s224 + $0x1e28] sm:$0xff] %v4969
      %5994 = vst [vmem:[%s224 + $0x1e30] sm:$0xff] %v4970
      %5995 = vst [vmem:[%s224 + $0x1e38] sm:$0xff] %v4971
      %5996 = vst [vmem:[%s224 + $0x1e40] sm:$0xff] %v4972
      %5997 = vst [vmem:[%s224 + $0x1e48] sm:$0xff] %v4973
      %5998 = vst [vmem:[%s224 + $0x1e50] sm:$0xff] %v4974
      %5999 = vst [vmem:[%s224 + $0x1e58] sm:$0xff] %v4975
      %6000 = vst [vmem:[%s224 + $0x1e60] sm:$0xff] %v4976
      %6001 = vst [vmem:[%s224 + $0x1e68] sm:$0xff] %v4977
      %6002 = vst [vmem:[%s224 + $0x1e70] sm:$0xff] %v4978
      %6003 = vst [vmem:[%s224 + $0x1e78] sm:$0xff] %v4979
      %6004 = vst [vmem:[%s224 + $0x1e80] sm:$0xff] %v4980
      %6005 = vst [vmem:[%s224 + $0x1e88] sm:$0xff] %v4981
      %6006 = vst [vmem:[%s224 + $0x1e90] sm:$0xff] %v4982
      %6007 = vst [vmem:[%s224 + $0x1e98] sm:$0xff] %v4983
      %6008 = vst [vmem:[%s224 + $0x1ea0] sm:$0xff] %v4984
      %6009 = vst [vmem:[%s224 + $0x1ea8] sm:$0xff] %v4985
      %6010 = vst [vmem:[%s224 + $0x1eb0] sm:$0xff] %v4986
      %6011 = vst [vmem:[%s224 + $0x1eb8] sm:$0xff] %v4987
      %6012 = vst [vmem:[%s224 + $0x1ec0] sm:$0xff] %v4988
      %6013 = vst [vmem:[%s224 + $0x1ec8] sm:$0xff] %v4989
      %6014 = vst [vmem:[%s224 + $0x1ed0] sm:$0xff] %v4990
      %6015 = vst [vmem:[%s224 + $0x1ed8] sm:$0xff] %v4991
      %6016 = vst [vmem:[%s224 + $0x1ee0] sm:$0xff] %v4992
      %6017 = vst [vmem:[%s224 + $0x1ee8] sm:$0xff] %v4993
      %6018 = vst [vmem:[%s224 + $0x1ef0] sm:$0xff] %v4994
      %6019 = vst [vmem:[%s224 + $0x1ef8] sm:$0xff] %v4995
      %6020 = vst [vmem:[%s224 + $0x1f00] sm:$0xff] %v4996
      %6021 = vst [vmem:[%s224 + $0x1f08] sm:$0xff] %v4997
      %6022 = vst [vmem:[%s224 + $0x1f10] sm:$0xff] %v4998
      %6023 = vst [vmem:[%s224 + $0x1f18] sm:$0xff] %v4999
      %6024 = vst [vmem:[%s224 + $0x1f20] sm:$0xff] %v5000
      %6025 = vst [vmem:[%s224 + $0x1f28] sm:$0xff] %v5001
      %6026 = vst [vmem:[%s224 + $0x1f30] sm:$0xff] %v5002
      %6027 = vst [vmem:[%s224 + $0x1f38] sm:$0xff] %v5003
      %6028 = vst [vmem:[%s224 + $0x1f40] sm:$0xff] %v5004
      %6029 = vst [vmem:[%s224 + $0x1f48] sm:$0xff] %v5005
      %6030 = vst [vmem:[%s224 + $0x1f50] sm:$0xff] %v5006
      %6031 = vst [vmem:[%s224 + $0x1f58] sm:$0xff] %v5007
      %6032 = vst [vmem:[%s224 + $0x1f60] sm:$0xff] %v5008
      %6033 = vst [vmem:[%s224 + $0x1f68] sm:$0xff] %v5009
      %6034 = vst [vmem:[%s224 + $0x1f70] sm:$0xff] %v5010
      %6035 = vst [vmem:[%s224 + $0x1f78] sm:$0xff] %v5011
      %6036 = vst [vmem:[%s224 + $0x1f80] sm:$0xff] %v5012
      %6037 = vst [vmem:[%s224 + $0x1f88] sm:$0xff] %v5013
      %6038 = vst [vmem:[%s224 + $0x1f90] sm:$0xff] %v5014
      %6039 = vst [vmem:[%s224 + $0x1f98] sm:$0xff] %v5015
      %6040 = vst [vmem:[%s224 + $0x1fa0] sm:$0xff] %v5016
      %6041 = vst [vmem:[%s224 + $0x1fa8] sm:$0xff] %v5017
      %6042 = vst [vmem:[%s224 + $0x1fb0] sm:$0xff] %v5018
      %6043 = vst [vmem:[%s224 + $0x1fb8] sm:$0xff] %v5019
      %6044 = vst [vmem:[%s224 + $0x1fc0] sm:$0xff] %v5020
      %6045 = vst [vmem:[%s224 + $0x1fc8] sm:$0xff] %v5021
      %6046 = vst [vmem:[%s224 + $0x1fd0] sm:$0xff] %v5022
      %6047 = vst [vmem:[%s224 + $0x1fd8] sm:$0xff] %v5023
      %6048 = vst [vmem:[%s224 + $0x1fe0] sm:$0xff] %v5024
      %6049 = vst [vmem:[%s224 + $0x1fe8] sm:$0xff] %v5025
      %6050 = vst [vmem:[%s224 + $0x1ff0] sm:$0xff] %v5026
      %6051 = vst [vmem:[%s224 + $0x1ff8] sm:$0xff] %v5027
      %p6052 = scmp.lt.s32.totalorder %s16, 1
      %s6053 = scalar_select %p6052, %s16, 1
      %s6054 = smul.addr %s6053, 1024
      %s6055 = smul.addr %s6054, 8
      %s6056 = scalar_lea.vmem %s5, %s6055
      // Predicated region
      $region41: #{temporal_channel_aware_block.1} parent=39 // pred_check
        %p6057 = pneg %p144
      $region42: #{temporal_channel_aware_block.1} parent=39 // pred_check_branch
        %6059 = sbr.rel (%p6057) target = $region44
      $region43: #{temporal_channel_aware_block.1} parent=39 // pred_region
        _
      $region44: #{temporal_channel_aware_block.1} parent=39 // pred_fallthru
        _
    $region40: #{temporal_channel_aware_block.1} parent=5 // pred_fallthru
      _
    %p6060 = scmp.le.s32.totalorder 2, %s11
    // Predicated region
    $region45: #{temporal_channel_aware_block.1} parent=5 // pred_check
      %p6061 = pneg %p6060
    $region46: #{temporal_channel_aware_block.1} parent=5 // pred_check_branch
      %6063 = sbr.rel (%p6061) target = $region48
    $region47: #{temporal_channel_aware_block.1} parent=5 // pred_region
      %s6064 = ssub.s32 %s11, 2
      // Predicated region
      $region49: #{temporal_channel_aware_block.1} parent=47 // pred_check
        %p6065 = pneg %p150
      $region50: #{temporal_channel_aware_block.1} parent=47 // pred_check_branch
        %6067 = sbr.rel (%p6065) target = $region52
      $region51: #{temporal_channel_aware_block.1} parent=47 // pred_region
        %p6068 = scmp.lt.s32.totalorder %s17, 1
        %s6069 = scalar_select %p6068, %s17, 1
        %s6070 = smul.addr %s6069, 1024
        %s6071 = smul.addr %s6070, 8
        %s6072 = scalar_lea.vmem %s5, %s6071
      $region52: #{temporal_channel_aware_block.1} parent=47 // pred_fallthru
        _
    $region48: #{temporal_channel_aware_block.1} parent=5 // pred_fallthru
      _
  $region6: #{temporal_channel_aware_block.1} parent=0 // loop_footer
    %s15 = sadd.s32 1, %s11
  $region7: #{temporal_channel_aware_block.1} parent=0 // loop_footer_branch
    %10 = sbr.rel target = $region3
  $region8: #{temporal_channel_aware_block.1} parent=0 // loop_exit
    _

</llo_original>
